<compile_context>
chip_gen: v6e
topology: v6e:2x2x1
jax: 0.10.0
libtpu: 0.0.40
codegen_flags: <defaults>
</compile_context>

<pallas_src>
import numpy as np
import jax
import jax.numpy as jnp
from jax.experimental import pallas as pl
from jax.experimental.pallas import tpu as pltpu

C = 512  # channel width hard-coded inside the module


def _first_block_kernel(x_ref, w1_ref, b1_ref, w2_ref, b2_ref, out_ref, hpad_ref):
    """ProGAN generator first block (single program, everything resident in VMEM).

    x_ref    : (B, L)        bf16 latent vectors
    w1_ref   : (L, 16*C)     bf16 ConvTranspose2d weight, columns ordered (i, j, c)
    b1_ref   : (1, C)        f32
    w2_ref   : (9, C, C)     bf16 3x3 Conv2d weight, tap-major (t = di*3+dj), (ci, co)
    b2_ref   : (1, C)        f32
    out_ref  : (B, 4, 4, C)  f32 NHWC output
    hpad_ref : (B, 6, 6, C)  bf16 zero-padded intermediate feature map (scratch)
    """
    B = x_ref.shape[0]

    # ---- stage 1: ConvTranspose2d(L -> C, k=4) on a 1x1 input == a single matmul
    # producing all 16 output pixels at once, then bias + LeakyReLU fused and one
    # lane-dense store into the padded interior.
    h = jnp.dot(x_ref[...], w1_ref[...],
                preferred_element_type=jnp.float32)          # (B, 16*C) f32
    h = h.reshape(B, 4, 4, C) + b1_ref[...]                  # (B,4,4,C) + (1,C)
    h = jnp.maximum(h, 0.2 * h)                              # LeakyReLU(0.2)

    hpad_ref[...] = jnp.zeros_like(hpad_ref)                 # zero the border (scratch is uninit)
    hpad_ref[:, 1:5, 1:5, :] = h.astype(hpad_ref.dtype)      # one interior store

    # ---- stage 2: Conv2d(C -> C, k=3, pad=1) as 9 shifted (B*16, C) @ (C, C)
    # matmuls (M = all output pixels), accumulated in a single f32 accumulator.
    hpad = hpad_ref[...]                                     # (B,6,6,C) bf16
    acc = jnp.zeros((B * 16, C), jnp.float32)
    for di in range(3):
        for dj in range(3):
            t = di * 3 + dj
            patch = hpad[:, di:di + 4, dj:dj + 4, :].reshape(B * 16, C)
            acc = acc + jnp.dot(patch, w2_ref[t],
                                preferred_element_type=jnp.float32)

    acc = acc + b2_ref[...]                                  # (B*16,C) + (1,C)
    acc = jnp.maximum(acc, 0.2 * acc)                        # LeakyReLU(0.2)
    out_ref[...] = acc.reshape(B, 4, 4, C)                   # one full-block store


def prepare_params(wt, bt, wc, bc):
    """One-time parameter re-layout + bf16 cast (call at init, NOT per step).

    wt: (L, C, 4, 4) ConvTranspose2d.weight (PyTorch layout)
    bt: (C,)         ConvTranspose2d.bias
    wc: (C, C, 3, 3) Conv2d.weight          (PyTorch layout)
    bc: (C,)         Conv2d.bias
    """
    L = wt.shape[0]
    # (l, c, i, j) -> (l, i, j, c) -> (L, 16*C): column index = (i*4 + j)*C + c
    w1 = jnp.transpose(wt, (0, 2, 3, 1)).reshape(L, 16 * C).astype(jnp.bfloat16)
    # (co, ci, di, dj) -> (di, dj, ci, co) -> (9, C, C): tap-major, (ci, co)
    w2 = jnp.transpose(wc, (2, 3, 1, 0)).reshape(9, C, C).astype(jnp.bfloat16)
    b1 = bt.reshape(1, C).astype(jnp.float32)
    b2 = bc.reshape(1, C).astype(jnp.float32)
    return w1, b1, w2, b2


@jax.jit
def generator_first_block(x, w1, b1, w2, b2):
    """x: (B, L) f32.  (w1, b1, w2, b2) from prepare_params().
       Returns (B, C, 4, 4) f32 NCHW, matching the PyTorch module."""
    B = x.shape[0]
    out_nhwc = pl.pallas_call(
        _first_block_kernel,
        out_shape=jax.ShapeDtypeStruct((B, 4, 4, C), jnp.float32),
        in_specs=[pl.BlockSpec(memory_space=pltpu.MemorySpace.VMEM)] * 5,
        out_specs=pl.BlockSpec(memory_space=pltpu.MemorySpace.VMEM),
        scratch_shapes=[pltpu.VMEM((B, 6, 6, C), jnp.bfloat16)],
        compiler_params=pltpu.CompilerParams(vmem_limit_bytes=32 * 1024 * 1024),
    )(x.astype(jnp.bfloat16), w1, b1, w2, b2)

    return jnp.transpose(out_nhwc, (0, 3, 1, 2))             # NHWC -> NCHW


if __name__ == "__main__":
    key = jax.random.PRNGKey(0)
    B, L = 2, 64  # small batch / latent size (module fixes the 512-channel width)
    k1, k2, k3, k4, k5 = jax.random.split(key, 5)

    # Deterministic synthetic parameters (shapes follow the module's __init__).
    x = jax.random.normal(k1, (B, L), jnp.float32)
    wt = jax.random.normal(k2, (L, C, 4, 4), jnp.float32) * 0.05   # ConvTranspose2d.weight
    bt = jax.random.normal(k3, (C,), jnp.float32) * 0.05           # ConvTranspose2d.bias
    wc = jax.random.normal(k4, (C, C, 3, 3), jnp.float32) * 0.05   # Conv2d.weight
    bc = jax.random.normal(k5, (C,), jnp.float32) * 0.05           # Conv2d.bias

    params = prepare_params(wt, bt, wc, bc)   # one-time re-layout + bf16 cast
    out = generator_first_block(x, *params)
    out = jax.block_until_ready(out)
    assert out.shape == (B, C, 4, 4)

    # NumPy reference with exact PyTorch (NCHW, f64) semantics.
    xn, wtn, btn, wcn, bcn = (np.asarray(a, np.float64) for a in (x, wt, bt, wc, bc))
    h1 = np.einsum("bl,lcij->bcij", xn, wtn) + btn[None, :, None, None]
    h1 = np.where(h1 > 0, h1, 0.2 * h1)
    hp = np.pad(h1, ((0, 0), (0, 0), (1, 1), (1, 1)))
    h2 = np.zeros((B, C, 4, 4))
    for di in range(3):
        for dj in range(3):
            h2 += np.einsum("bcij,oc->boij",
                            hp[:, :, di:di + 4, dj:dj + 4], wcn[:, :, di, dj])
    h2 = h2 + bcn[None, :, None, None]
    ref = np.where(h2 > 0, h2, 0.2 * h2)

    # bf16 weights/activations with f32 accumulation -> slightly looser tolerance.
    np.testing.assert_allclose(np.asarray(out), ref, rtol=2e-2, atol=2e-2)
    print("KERNEL_OK")
</pallas_src>

<mosaic_0001>
module attributes {stable_mosaic.version = 11 : i64} {
  func.func @_first_block_kernel(%arg0: memref<2x64xbf16, #tpu.memory_space<vmem>>, %arg1: memref<64x8192xbf16, #tpu.memory_space<vmem>>, %arg2: memref<1x512xf32, #tpu.memory_space<vmem>>, %arg3: memref<9x512x512xbf16, #tpu.memory_space<vmem>>, %arg4: memref<1x512xf32, #tpu.memory_space<vmem>>, %arg5: memref<2x4x4x512xf32, #tpu.memory_space<vmem>>, %arg6: memref<2x6x6x512xbf16, #tpu.memory_space<vmem>>) attributes {dimension_semantics = [], scalar_prefetch = 0 : i64, scratch_operands = 1 : i64, tpu.core_type = #tpu.core_type<tc>} {
    %c0 = arith.constant 0 : index
    %c0_0 = arith.constant 0 : index
    %0 = vector.load %arg0[%c0, %c0_0] : memref<2x64xbf16, #tpu.memory_space<vmem>>, vector<2x64xbf16>
    %c0_1 = arith.constant 0 : index
    %c0_2 = arith.constant 0 : index
    %1 = vector.load %arg1[%c0_1, %c0_2] : memref<64x8192xbf16, #tpu.memory_space<vmem>>, vector<64x8192xbf16>
    %cst = arith.constant dense<0.000000e+00> : vector<2x8192xf32>
    %2 = tpu.matmul %0, %1, %cst {dimension_numbers = #tpu.dot_dimension_numbers<[1], [0], [0], [1], [0, 0, 1, 1], [], []>} : vector<2x64xbf16>, vector<64x8192xbf16>, vector<2x8192xf32> -> vector<2x8192xf32>
    %3 = vector.shape_cast %2 : vector<2x8192xf32> to vector<2x4x4x512xf32>
    %c0_3 = arith.constant 0 : index
    %c0_4 = arith.constant 0 : index
    %4 = vector.load %arg2[%c0_3, %c0_4] : memref<1x512xf32, #tpu.memory_space<vmem>>, vector<1x512xf32>
    %5 = vector.shape_cast %4 : vector<1x512xf32> to vector<1x1x1x512xf32>
    %6 = vector.broadcast %5 : vector<1x1x1x512xf32> to vector<2x4x4x512xf32>
    %7 = arith.addf %3, %6 : vector<2x4x4x512xf32>
    %cst_5 = arith.constant 2.000000e-01 : f32
    %8 = vector.broadcast %cst_5 : f32 to vector<2x4x4x512xf32>
    %9 = arith.mulf %8, %7 : vector<2x4x4x512xf32>
    %10 = arith.maximumf %7, %9 : vector<2x4x4x512xf32>
    %cst_6 = arith.constant 0.000000e+00 : bf16
    %11 = vector.broadcast %cst_6 : bf16 to vector<2x6x6x512xbf16>
    %c0_7 = arith.constant 0 : index
    %c0_8 = arith.constant 0 : index
    %c0_9 = arith.constant 0 : index
    %c0_10 = arith.constant 0 : index
    %12 = vector.load %arg6[%c0_7, %c0_8, %c0_9, %c0_10] : memref<2x6x6x512xbf16, #tpu.memory_space<vmem>>, vector<2x6x6x512xbf16>
    tpu.vector_store %arg6[%c0_7, %c0_8, %c0_9, %c0_10], %11 {strides = array<i32>} : memref<2x6x6x512xbf16, #tpu.memory_space<vmem>>, vector<2x6x6x512xbf16>,
    %13 = arith.truncf %10 : vector<2x4x4x512xf32> to vector<2x4x4x512xbf16>
    %c0_11 = arith.constant 0 : index
    %c1 = arith.constant 1 : index
    %c1_12 = arith.constant 1 : index
    %c0_13 = arith.constant 0 : index
    %14 = vector.load %arg6[%c0_11, %c1, %c1_12, %c0_13] : memref<2x6x6x512xbf16, #tpu.memory_space<vmem>>, vector<2x4x4x512xbf16>
    tpu.vector_store %arg6[%c0_11, %c1, %c1_12, %c0_13], %13 {strides = array<i32>} : memref<2x6x6x512xbf16, #tpu.memory_space<vmem>>, vector<2x4x4x512xbf16>,
    %c0_14 = arith.constant 0 : index
    %c0_15 = arith.constant 0 : index
    %c0_16 = arith.constant 0 : index
    %c0_17 = arith.constant 0 : index
    %15 = vector.load %arg6[%c0_14, %c0_15, %c0_16, %c0_17] : memref<2x6x6x512xbf16, #tpu.memory_space<vmem>>, vector<2x6x6x512xbf16>
    %cst_18 = arith.constant 0.000000e+00 : f32
    %16 = vector.broadcast %cst_18 : f32 to vector<32x512xf32>
    %17 = vector.extract_strided_slice %15 {offsets = [0, 0, 0, 0], sizes = [2, 4, 4, 512], strides = [1, 1, 1, 1]} : vector<2x6x6x512xbf16> to vector<2x4x4x512xbf16>
    %18 = vector.shape_cast %17 : vector<2x4x4x512xbf16> to vector<32x512xbf16>
    %c0_19 = arith.constant 0 : index
    %c0_20 = arith.constant 0 : index
    %c0_21 = arith.constant 0 : index
    %19 = vector.load %arg3[%c0_19, %c0_20, %c0_21] : memref<9x512x512xbf16, #tpu.memory_space<vmem>>, vector<1x512x512xbf16>
    %20 = vector.shape_cast %19 : vector<1x512x512xbf16> to vector<512x512xbf16>
    %cst_22 = arith.constant dense<0.000000e+00> : vector<32x512xf32>
    %21 = tpu.matmul %18, %20, %cst_22 {dimension_numbers = #tpu.dot_dimension_numbers<[1], [0], [0], [1], [0, 0, 1, 1], [], []>} : vector<32x512xbf16>, vector<512x512xbf16>, vector<32x512xf32> -> vector<32x512xf32>
    %22 = arith.addf %16, %21 : vector<32x512xf32>
    %23 = vector.extract_strided_slice %15 {offsets = [0, 0, 1, 0], sizes = [2, 4, 4, 512], strides = [1, 1, 1, 1]} : vector<2x6x6x512xbf16> to vector<2x4x4x512xbf16>
    %24 = vector.shape_cast %23 : vector<2x4x4x512xbf16> to vector<32x512xbf16>
    %c1_23 = arith.constant 1 : index
    %c0_24 = arith.constant 0 : index
    %c0_25 = arith.constant 0 : index
    %25 = vector.load %arg3[%c1_23, %c0_24, %c0_25] : memref<9x512x512xbf16, #tpu.memory_space<vmem>>, vector<1x512x512xbf16>
    %26 = vector.shape_cast %25 : vector<1x512x512xbf16> to vector<512x512xbf16>
    %cst_26 = arith.constant dense<0.000000e+00> : vector<32x512xf32>
    %27 = tpu.matmul %24, %26, %cst_26 {dimension_numbers = #tpu.dot_dimension_numbers<[1], [0], [0], [1], [0, 0, 1, 1], [], []>} : vector<32x512xbf16>, vector<512x512xbf16>, vector<32x512xf32> -> vector<32x512xf32>
    %28 = arith.addf %22, %27 : vector<32x512xf32>
    %29 = vector.extract_strided_slice %15 {offsets = [0, 0, 2, 0], sizes = [2, 4, 4, 512], strides = [1, 1, 1, 1]} : vector<2x6x6x512xbf16> to vector<2x4x4x512xbf16>
    %30 = vector.shape_cast %29 : vector<2x4x4x512xbf16> to vector<32x512xbf16>
    %c2 = arith.constant 2 : index
    %c0_27 = arith.constant 0 : index
    %c0_28 = arith.constant 0 : index
    %31 = vector.load %arg3[%c2, %c0_27, %c0_28] : memref<9x512x512xbf16, #tpu.memory_space<vmem>>, vector<1x512x512xbf16>
    %32 = vector.shape_cast %31 : vector<1x512x512xbf16> to vector<512x512xbf16>
    %cst_29 = arith.constant dense<0.000000e+00> : vector<32x512xf32>
    %33 = tpu.matmul %30, %32, %cst_29 {dimension_numbers = #tpu.dot_dimension_numbers<[1], [0], [0], [1], [0, 0, 1, 1], [], []>} : vector<32x512xbf16>, vector<512x512xbf16>, vector<32x512xf32> -> vector<32x512xf32>
    %34 = arith.addf %28, %33 : vector<32x512xf32>
    %35 = vector.extract_strided_slice %15 {offsets = [0, 1, 0, 0], sizes = [2, 4, 4, 512], strides = [1, 1, 1, 1]} : vector<2x6x6x512xbf16> to vector<2x4x4x512xbf16>
    %36 = vector.shape_cast %35 : vector<2x4x4x512xbf16> to vector<32x512xbf16>
    %c3 = arith.constant 3 : index
    %c0_30 = arith.constant 0 : index
    %c0_31 = arith.constant 0 : index
    %37 = vector.load %arg3[%c3, %c0_30, %c0_31] : memref<9x512x512xbf16, #tpu.memory_space<vmem>>, vector<1x512x512xbf16>
    %38 = vector.shape_cast %37 : vector<1x512x512xbf16> to vector<512x512xbf16>
    %cst_32 = arith.constant dense<0.000000e+00> : vector<32x512xf32>
    %39 = tpu.matmul %36, %38, %cst_32 {dimension_numbers = #tpu.dot_dimension_numbers<[1], [0], [0], [1], [0, 0, 1, 1], [], []>} : vector<32x512xbf16>, vector<512x512xbf16>, vector<32x512xf32> -> vector<32x512xf32>
    %40 = arith.addf %34, %39 : vector<32x512xf32>
    %41 = vector.extract_strided_slice %15 {offsets = [0, 1, 1, 0], sizes = [2, 4, 4, 512], strides = [1, 1, 1, 1]} : vector<2x6x6x512xbf16> to vector<2x4x4x512xbf16>
    %42 = vector.shape_cast %41 : vector<2x4x4x512xbf16> to vector<32x512xbf16>
    %c4 = arith.constant 4 : index
    %c0_33 = arith.constant 0 : index
    %c0_34 = arith.constant 0 : index
    %43 = vector.load %arg3[%c4, %c0_33, %c0_34] : memref<9x512x512xbf16, #tpu.memory_space<vmem>>, vector<1x512x512xbf16>
    %44 = vector.shape_cast %43 : vector<1x512x512xbf16> to vector<512x512xbf16>
    %cst_35 = arith.constant dense<0.000000e+00> : vector<32x512xf32>
    %45 = tpu.matmul %42, %44, %cst_35 {dimension_numbers = #tpu.dot_dimension_numbers<[1], [0], [0], [1], [0, 0, 1, 1], [], []>} : vector<32x512xbf16>, vector<512x512xbf16>, vector<32x512xf32> -> vector<32x512xf32>
    %46 = arith.addf %40, %45 : vector<32x512xf32>
    %47 = vector.extract_strided_slice %15 {offsets = [0, 1, 2, 0], sizes = [2, 4, 4, 512], strides = [1, 1, 1, 1]} : vector<2x6x6x512xbf16> to vector<2x4x4x512xbf16>
    %48 = vector.shape_cast %47 : vector<2x4x4x512xbf16> to vector<32x512xbf16>
    %c5 = arith.constant 5 : index
    %c0_36 = arith.constant 0 : index
    %c0_37 = arith.constant 0 : index
    %49 = vector.load %arg3[%c5, %c0_36, %c0_37] : memref<9x512x512xbf16, #tpu.memory_space<vmem>>, vector<1x512x512xbf16>
    %50 = vector.shape_cast %49 : vector<1x512x512xbf16> to vector<512x512xbf16>
    %cst_38 = arith.constant dense<0.000000e+00> : vector<32x512xf32>
    %51 = tpu.matmul %48, %50, %cst_38 {dimension_numbers = #tpu.dot_dimension_numbers<[1], [0], [0], [1], [0, 0, 1, 1], [], []>} : vector<32x512xbf16>, vector<512x512xbf16>, vector<32x512xf32> -> vector<32x512xf32>
    %52 = arith.addf %46, %51 : vector<32x512xf32>
    %53 = vector.extract_strided_slice %15 {offsets = [0, 2, 0, 0], sizes = [2, 4, 4, 512], strides = [1, 1, 1, 1]} : vector<2x6x6x512xbf16> to vector<2x4x4x512xbf16>
    %54 = vector.shape_cast %53 : vector<2x4x4x512xbf16> to vector<32x512xbf16>
    %c6 = arith.constant 6 : index
    %c0_39 = arith.constant 0 : index
    %c0_40 = arith.constant 0 : index
    %55 = vector.load %arg3[%c6, %c0_39, %c0_40] : memref<9x512x512xbf16, #tpu.memory_space<vmem>>, vector<1x512x512xbf16>
    %56 = vector.shape_cast %55 : vector<1x512x512xbf16> to vector<512x512xbf16>
    %cst_41 = arith.constant dense<0.000000e+00> : vector<32x512xf32>
    %57 = tpu.matmul %54, %56, %cst_41 {dimension_numbers = #tpu.dot_dimension_numbers<[1], [0], [0], [1], [0, 0, 1, 1], [], []>} : vector<32x512xbf16>, vector<512x512xbf16>, vector<32x512xf32> -> vector<32x512xf32>
    %58 = arith.addf %52, %57 : vector<32x512xf32>
    %59 = vector.extract_strided_slice %15 {offsets = [0, 2, 1, 0], sizes = [2, 4, 4, 512], strides = [1, 1, 1, 1]} : vector<2x6x6x512xbf16> to vector<2x4x4x512xbf16>
    %60 = vector.shape_cast %59 : vector<2x4x4x512xbf16> to vector<32x512xbf16>
    %c7 = arith.constant 7 : index
    %c0_42 = arith.constant 0 : index
    %c0_43 = arith.constant 0 : index
    %61 = vector.load %arg3[%c7, %c0_42, %c0_43] : memref<9x512x512xbf16, #tpu.memory_space<vmem>>, vector<1x512x512xbf16>
    %62 = vector.shape_cast %61 : vector<1x512x512xbf16> to vector<512x512xbf16>
    %cst_44 = arith.constant dense<0.000000e+00> : vector<32x512xf32>
    %63 = tpu.matmul %60, %62, %cst_44 {dimension_numbers = #tpu.dot_dimension_numbers<[1], [0], [0], [1], [0, 0, 1, 1], [], []>} : vector<32x512xbf16>, vector<512x512xbf16>, vector<32x512xf32> -> vector<32x512xf32>
    %64 = arith.addf %58, %63 : vector<32x512xf32>
    %65 = vector.extract_strided_slice %15 {offsets = [0, 2, 2, 0], sizes = [2, 4, 4, 512], strides = [1, 1, 1, 1]} : vector<2x6x6x512xbf16> to vector<2x4x4x512xbf16>
    %66 = vector.shape_cast %65 : vector<2x4x4x512xbf16> to vector<32x512xbf16>
    %c8 = arith.constant 8 : index
    %c0_45 = arith.constant 0 : index
    %c0_46 = arith.constant 0 : index
    %67 = vector.load %arg3[%c8, %c0_45, %c0_46] : memref<9x512x512xbf16, #tpu.memory_space<vmem>>, vector<1x512x512xbf16>
    %68 = vector.shape_cast %67 : vector<1x512x512xbf16> to vector<512x512xbf16>
    %cst_47 = arith.constant dense<0.000000e+00> : vector<32x512xf32>
    %69 = tpu.matmul %66, %68, %cst_47 {dimension_numbers = #tpu.dot_dimension_numbers<[1], [0], [0], [1], [0, 0, 1, 1], [], []>} : vector<32x512xbf16>, vector<512x512xbf16>, vector<32x512xf32> -> vector<32x512xf32>
    %70 = arith.addf %64, %69 : vector<32x512xf32>
    %c0_48 = arith.constant 0 : index
    %c0_49 = arith.constant 0 : index
    %71 = vector.load %arg4[%c0_48, %c0_49] : memref<1x512xf32, #tpu.memory_space<vmem>>, vector<1x512xf32>
    %72 = vector.broadcast %71 : vector<1x512xf32> to vector<32x512xf32>
    %73 = arith.addf %70, %72 : vector<32x512xf32>
    %cst_50 = arith.constant 2.000000e-01 : f32
    %74 = vector.broadcast %cst_50 : f32 to vector<32x512xf32>
    %75 = arith.mulf %74, %73 : vector<32x512xf32>
    %76 = arith.maximumf %73, %75 : vector<32x512xf32>
    %77 = vector.shape_cast %76 : vector<32x512xf32> to vector<2x4x4x512xf32>
    %c0_51 = arith.constant 0 : index
    %c0_52 = arith.constant 0 : index
    %c0_53 = arith.constant 0 : index
    %c0_54 = arith.constant 0 : index
    %78 = vector.load %arg5[%c0_51, %c0_52, %c0_53, %c0_54] : memref<2x4x4x512xf32, #tpu.memory_space<vmem>>, vector<2x4x4x512xf32>
    tpu.vector_store %arg5[%c0_51, %c0_52, %c0_53, %c0_54], %77 {strides = array<i32>} : memref<2x4x4x512xf32, #tpu.memory_space<vmem>>, vector<2x4x4x512xf32>,
    return
  }
}

</mosaic_0001>

<llo_original>
// kernel: generator_first_block.1
$region0: #{generator_first_block.1}
  #allocation0 [shape = 'u32[]', space=smem, size = 0x4, offset = 0x4, fixed_abs, tag = 'smem constant byte address 0x4 - core index']
  #allocation1 [shape = 'u32[144,128]{1,0:T(1,128)}', space=vmem, size = 0x12000, scoped, tag = 'internal scratch']
  #allocation2 [shape = 'bf16[2,6,6,512]{3,2,1,0:T(8,128)(2,1)}', space=vmem, size = 0x18000, scoped, tag = 'scratch operand']
  %s0 = inlined_call_operand.vmem [shape: bf16[2,64], index: 0, kind: input, shape index: {}]
  %s1 = inlined_call_operand.hbm [shape: bf16[64,8192], index: 1, kind: input, shape index: {}]
  %s2 = inlined_call_operand.hbm [shape: f32[1,512], index: 2, kind: input, shape index: {}]
  %s3 = inlined_call_operand.hbm [shape: bf16[9,512,512], index: 3, kind: input, shape index: {}]
  %s4 = inlined_call_operand.hbm [shape: f32[1,512], index: 4, kind: input, shape index: {}]
  %s5 = inlined_call_operand.hbm [shape: f32[2,4,4,512], index: 5, kind: output, shape index: {}]
  %s6 = sld [smem:[#allocation0]]
  $region46: #{generator_first_block.1} parent=0
    _
  %s8 = ssub.s32 1, %s6
  %s9 = scalar_select 0, %s8, %s6
  $region1: #{generator_first_block.1} parent=0
    #allocation3 [shape = 'u8[1048576]{0}', space=vmem, size = 0x100000, scoped, tag = 'input window, operand 1, single buffered']
    #allocation4 [shape = 's32[1]{0}', space=sflag, size = 0x4, scoped, tag = 'scoped memory for generator_first_block.1']
    #allocation5 [shape = 's32[1]{0}', space=sflag, size = 0x4, scoped, tag = 'scoped memory for generator_first_block.1']
    #allocation6 [shape = 'u8[2048]{0}', space=vmem, size = 0x800, scoped, tag = 'input window, operand 2, single buffered']
    #allocation7 [shape = 's32[1]{0}', space=sflag, size = 0x4, scoped, tag = 'scoped memory for generator_first_block.1']
    #allocation8 [shape = 'u8[4718592]{0}', space=vmem, size = 0x480000, scoped, tag = 'input window, operand 3, single buffered']
    #allocation9 [shape = 'u8[2048]{0}', space=vmem, size = 0x800, scoped, tag = 'input window, operand 4, single buffered']
    #allocation10 [shape = 's32[1]{0}', space=sflag, size = 0x4, scoped, tag = 'scoped memory for generator_first_block.1']
    #allocation11 [shape = 'u8[65536]{0}', space=vmem, size = 0x10000, scoped, tag = 'output window, operand 0, single buffered']
    %10 = vsyncpa [#allocation4], 0
    %11 = vsyncpa [#allocation7], 0
    %12 = vsyncpa [#allocation10], 0
    %13 = vsyncpa [#allocation5], 0
    // Predicated region
    $region2: #{generator_first_block.1} parent=1 // pred_check
      _
    $region3: #{generator_first_block.1} parent=1 // pred_check_branch
      %15 = sbr.rel (0) target = $region5
    $region4: #{generator_first_block.1} parent=1 // pred_region
      _
    $region5: #{generator_first_block.1} parent=1 // pred_fallthru
      _
    // Predicated region
    $region6: #{generator_first_block.1} parent=1 // pred_check
      _
    $region7: #{generator_first_block.1} parent=1 // pred_check_branch
      %17 = sbr.rel (0) target = $region9
    $region8: #{generator_first_block.1} parent=1 // pred_region
      %s19 = ssub.s32 32768, 32768
      %20 = vsyncadd [#allocation4], %s19
      %s21 = sshll.u32 [#allocation3], 4
      %s22 = int_to_ptr.vmem [resolvable:$true] %s21
      %27 = dma.hbm_to_vmem [thread:$0]  %s1, 32768, %s22, [#allocation4], 4096, 4096, 256
    $region9: #{generator_first_block.1} parent=1 // pred_fallthru
      _
    // Predicated region
    $region10: #{generator_first_block.1} parent=1 // pred_check
      _
    $region11: #{generator_first_block.1} parent=1 // pred_check_branch
      %29 = sbr.rel (0) target = $region13
    $region12: #{generator_first_block.1} parent=1 // pred_region
      %s31 = ssub.s32 64, 64
      %32 = vsyncadd [#allocation7], %s31
      %s34 = sshll.u32 [#allocation6], 4
      %s35 = int_to_ptr.vmem [resolvable:$true] %s34
      %37 = dma.hbm_to_vmem [thread:$0]  %s2, 64, %s35, [#allocation7]
    $region13: #{generator_first_block.1} parent=1 // pred_fallthru
      _
    // Predicated region
    $region14: #{generator_first_block.1} parent=1 // pred_check
      _
    $region15: #{generator_first_block.1} parent=1 // pred_check_branch
      %39 = sbr.rel (0) target = $region17
    $region16: #{generator_first_block.1} parent=1 // pred_region
      %s41 = ssub.s32 147456, 147456
      %42 = vsyncadd [#allocation7], %s41
      %s43 = sshll.u32 [#allocation8], 4
      %s44 = int_to_ptr.vmem [resolvable:$true] %s43
      %49 = dma.hbm_to_vmem [thread:$0]  %s3, 147456, %s44, [#allocation7], 256, 256, 16
    $region17: #{generator_first_block.1} parent=1 // pred_fallthru
      _
    // Predicated region
    $region18: #{generator_first_block.1} parent=1 // pred_check
      _
    $region19: #{generator_first_block.1} parent=1 // pred_check_branch
      %51 = sbr.rel (0) target = $region21
    $region20: #{generator_first_block.1} parent=1 // pred_region
      %s53 = ssub.s32 64, 64
      %54 = vsyncadd [#allocation10], %s53
      %s56 = sshll.u32 [#allocation9], 4
      %s57 = int_to_ptr.vmem [resolvable:$true] %s56
      %59 = dma.hbm_to_vmem [thread:$0]  %s4, 64, %s57, [#allocation10]
    $region21: #{generator_first_block.1} parent=1 // pred_fallthru
      _
    // Predicated region
    $region22: #{generator_first_block.1} parent=1 // pred_check
      _
    $region23: #{generator_first_block.1} parent=1 // pred_check_branch
      %61 = sbr.rel (0) target = $region25
    $region24: #{generator_first_block.1} parent=1 // pred_region
      %62 = dma.done [#allocation4], 32768
    $region25: #{generator_first_block.1} parent=1 // pred_fallthru
      _
    // Predicated region
    $region26: #{generator_first_block.1} parent=1 // pred_check
      _
    $region27: #{generator_first_block.1} parent=1 // pred_check_branch
      %64 = sbr.rel (0) target = $region29
    $region28: #{generator_first_block.1} parent=1 // pred_region
      %65 = dma.done [#allocation7], 64
    $region29: #{generator_first_block.1} parent=1 // pred_fallthru
      _
    // Predicated region
    $region30: #{generator_first_block.1} parent=1 // pred_check
      _
    $region31: #{generator_first_block.1} parent=1 // pred_check_branch
      %67 = sbr.rel (0) target = $region33
    $region32: #{generator_first_block.1} parent=1 // pred_region
      %68 = dma.done [#allocation7], 147456
    $region33: #{generator_first_block.1} parent=1 // pred_fallthru
      _
    // Predicated region
    $region34: #{generator_first_block.1} parent=1 // pred_check
      _
    $region35: #{generator_first_block.1} parent=1 // pred_check_branch
      %70 = sbr.rel (0) target = $region37
    $region36: #{generator_first_block.1} parent=1 // pred_region
      %71 = dma.done [#allocation10], 64
    $region37: #{generator_first_block.1} parent=1 // pred_fallthru
      _
    %v73 = vld [vmem:[%s0] sm:$0x1]
    %v74 = vld [vmem:[#allocation3] sm:$0xff]
    %v75 = vld [vmem:[#allocation3 + $0x8] sm:$0xff]
    %v76 = vld [vmem:[#allocation3 + $0x10] sm:$0xff]
    %v77 = vld [vmem:[#allocation3 + $0x18] sm:$0xff]
    %v78 = vld [vmem:[#allocation3 + $0x20] sm:$0xff]
    %v79 = vld [vmem:[#allocation3 + $0x28] sm:$0xff]
    %v80 = vld [vmem:[#allocation3 + $0x30] sm:$0xff]
    %v81 = vld [vmem:[#allocation3 + $0x38] sm:$0xff]
    %v82 = vld [vmem:[#allocation3 + $0x40] sm:$0xff]
    %v83 = vld [vmem:[#allocation3 + $0x48] sm:$0xff]
    %v84 = vld [vmem:[#allocation3 + $0x50] sm:$0xff]
    %v85 = vld [vmem:[#allocation3 + $0x58] sm:$0xff]
    %v86 = vld [vmem:[#allocation3 + $0x60] sm:$0xff]
    %v87 = vld [vmem:[#allocation3 + $0x68] sm:$0xff]
    %v88 = vld [vmem:[#allocation3 + $0x70] sm:$0xff]
    %v89 = vld [vmem:[#allocation3 + $0x78] sm:$0xff]
    %v90 = vld [vmem:[#allocation3 + $0x80] sm:$0xff]
    %v91 = vld [vmem:[#allocation3 + $0x88] sm:$0xff]
    %v92 = vld [vmem:[#allocation3 + $0x90] sm:$0xff]
    %v93 = vld [vmem:[#allocation3 + $0x98] sm:$0xff]
    %v94 = vld [vmem:[#allocation3 + $0xa0] sm:$0xff]
    %v95 = vld [vmem:[#allocation3 + $0xa8] sm:$0xff]
    %v96 = vld [vmem:[#allocation3 + $0xb0] sm:$0xff]
    %v97 = vld [vmem:[#allocation3 + $0xb8] sm:$0xff]
    %v98 = vld [vmem:[#allocation3 + $0xc0] sm:$0xff]
    %v99 = vld [vmem:[#allocation3 + $0xc8] sm:$0xff]
    %v100 = vld [vmem:[#allocation3 + $0xd0] sm:$0xff]
    %v101 = vld [vmem:[#allocation3 + $0xd8] sm:$0xff]
    %v102 = vld [vmem:[#allocation3 + $0xe0] sm:$0xff]
    %v103 = vld [vmem:[#allocation3 + $0xe8] sm:$0xff]
    %v104 = vld [vmem:[#allocation3 + $0xf0] sm:$0xff]
    %v105 = vld [vmem:[#allocation3 + $0xf8] sm:$0xff]
    %v106 = vld [vmem:[#allocation3 + $0x100] sm:$0xff]
    %v107 = vld [vmem:[#allocation3 + $0x108] sm:$0xff]
    %v108 = vld [vmem:[#allocation3 + $0x110] sm:$0xff]
    %v109 = vld [vmem:[#allocation3 + $0x118] sm:$0xff]
    %v110 = vld [vmem:[#allocation3 + $0x120] sm:$0xff]
    %v111 = vld [vmem:[#allocation3 + $0x128] sm:$0xff]
    %v112 = vld [vmem:[#allocation3 + $0x130] sm:$0xff]
    %v113 = vld [vmem:[#allocation3 + $0x138] sm:$0xff]
    %v114 = vld [vmem:[#allocation3 + $0x140] sm:$0xff]
    %v115 = vld [vmem:[#allocation3 + $0x148] sm:$0xff]
    %v116 = vld [vmem:[#allocation3 + $0x150] sm:$0xff]
    %v117 = vld [vmem:[#allocation3 + $0x158] sm:$0xff]
    %v118 = vld [vmem:[#allocation3 + $0x160] sm:$0xff]
    %v119 = vld [vmem:[#allocation3 + $0x168] sm:$0xff]
    %v120 = vld [vmem:[#allocation3 + $0x170] sm:$0xff]
    %v121 = vld [vmem:[#allocation3 + $0x178] sm:$0xff]
    %v122 = vld [vmem:[#allocation3 + $0x180] sm:$0xff]
    %v123 = vld [vmem:[#allocation3 + $0x188] sm:$0xff]
    %v124 = vld [vmem:[#allocation3 + $0x190] sm:$0xff]
    %v125 = vld [vmem:[#allocation3 + $0x198] sm:$0xff]
    %v126 = vld [vmem:[#allocation3 + $0x1a0] sm:$0xff]
    %v127 = vld [vmem:[#allocation3 + $0x1a8] sm:$0xff]
    %v128 = vld [vmem:[#allocation3 + $0x1b0] sm:$0xff]
    %v129 = vld [vmem:[#allocation3 + $0x1b8] sm:$0xff]
    %v130 = vld [vmem:[#allocation3 + $0x1c0] sm:$0xff]
    %v131 = vld [vmem:[#allocation3 + $0x1c8] sm:$0xff]
    %v132 = vld [vmem:[#allocation3 + $0x1d0] sm:$0xff]
    %v133 = vld [vmem:[#allocation3 + $0x1d8] sm:$0xff]
    %v134 = vld [vmem:[#allocation3 + $0x1e0] sm:$0xff]
    %v135 = vld [vmem:[#allocation3 + $0x1e8] sm:$0xff]
    %v136 = vld [vmem:[#allocation3 + $0x1f0] sm:$0xff]
    %v137 = vld [vmem:[#allocation3 + $0x1f8] sm:$0xff]
    %v138 = vld [vmem:[#allocation3 + $0x200] sm:$0xff]
    %v139 = vld [vmem:[#allocation3 + $0x208] sm:$0xff]
    %v140 = vld [vmem:[#allocation3 + $0x210] sm:$0xff]
    %v141 = vld [vmem:[#allocation3 + $0x218] sm:$0xff]
    %v142 = vld [vmem:[#allocation3 + $0x220] sm:$0xff]
    %v143 = vld [vmem:[#allocation3 + $0x228] sm:$0xff]
    %v144 = vld [vmem:[#allocation3 + $0x230] sm:$0xff]
    %v145 = vld [vmem:[#allocation3 + $0x238] sm:$0xff]
    %v146 = vld [vmem:[#allocation3 + $0x240] sm:$0xff]
    %v147 = vld [vmem:[#allocation3 + $0x248] sm:$0xff]
    %v148 = vld [vmem:[#allocation3 + $0x250] sm:$0xff]
    %v149 = vld [vmem:[#allocation3 + $0x258] sm:$0xff]
    %v150 = vld [vmem:[#allocation3 + $0x260] sm:$0xff]
    %v151 = vld [vmem:[#allocation3 + $0x268] sm:$0xff]
    %v152 = vld [vmem:[#allocation3 + $0x270] sm:$0xff]
    %v153 = vld [vmem:[#allocation3 + $0x278] sm:$0xff]
    %v154 = vld [vmem:[#allocation3 + $0x280] sm:$0xff]
    %v155 = vld [vmem:[#allocation3 + $0x288] sm:$0xff]
    %v156 = vld [vmem:[#allocation3 + $0x290] sm:$0xff]
    %v157 = vld [vmem:[#allocation3 + $0x298] sm:$0xff]
    %v158 = vld [vmem:[#allocation3 + $0x2a0] sm:$0xff]
    %v159 = vld [vmem:[#allocation3 + $0x2a8] sm:$0xff]
    %v160 = vld [vmem:[#allocation3 + $0x2b0] sm:$0xff]
    %v161 = vld [vmem:[#allocation3 + $0x2b8] sm:$0xff]
    %v162 = vld [vmem:[#allocation3 + $0x2c0] sm:$0xff]
    %v163 = vld [vmem:[#allocation3 + $0x2c8] sm:$0xff]
    %v164 = vld [vmem:[#allocation3 + $0x2d0] sm:$0xff]
    %v165 = vld [vmem:[#allocation3 + $0x2d8] sm:$0xff]
    %v166 = vld [vmem:[#allocation3 + $0x2e0] sm:$0xff]
    %v167 = vld [vmem:[#allocation3 + $0x2e8] sm:$0xff]
    %v168 = vld [vmem:[#allocation3 + $0x2f0] sm:$0xff]
    %v169 = vld [vmem:[#allocation3 + $0x2f8] sm:$0xff]
    %v170 = vld [vmem:[#allocation3 + $0x300] sm:$0xff]
    %v171 = vld [vmem:[#allocation3 + $0x308] sm:$0xff]
    %v172 = vld [vmem:[#allocation3 + $0x310] sm:$0xff]
    %v173 = vld [vmem:[#allocation3 + $0x318] sm:$0xff]
    %v174 = vld [vmem:[#allocation3 + $0x320] sm:$0xff]
    %v175 = vld [vmem:[#allocation3 + $0x328] sm:$0xff]
    %v176 = vld [vmem:[#allocation3 + $0x330] sm:$0xff]
    %v177 = vld [vmem:[#allocation3 + $0x338] sm:$0xff]
    %v178 = vld [vmem:[#allocation3 + $0x340] sm:$0xff]
    %v179 = vld [vmem:[#allocation3 + $0x348] sm:$0xff]
    %v180 = vld [vmem:[#allocation3 + $0x350] sm:$0xff]
    %v181 = vld [vmem:[#allocation3 + $0x358] sm:$0xff]
    %v182 = vld [vmem:[#allocation3 + $0x360] sm:$0xff]
    %v183 = vld [vmem:[#allocation3 + $0x368] sm:$0xff]
    %v184 = vld [vmem:[#allocation3 + $0x370] sm:$0xff]
    %v185 = vld [vmem:[#allocation3 + $0x378] sm:$0xff]
    %v186 = vld [vmem:[#allocation3 + $0x380] sm:$0xff]
    %v187 = vld [vmem:[#allocation3 + $0x388] sm:$0xff]
    %v188 = vld [vmem:[#allocation3 + $0x390] sm:$0xff]
    %v189 = vld [vmem:[#allocation3 + $0x398] sm:$0xff]
    %v190 = vld [vmem:[#allocation3 + $0x3a0] sm:$0xff]
    %v191 = vld [vmem:[#allocation3 + $0x3a8] sm:$0xff]
    %v192 = vld [vmem:[#allocation3 + $0x3b0] sm:$0xff]
    %v193 = vld [vmem:[#allocation3 + $0x3b8] sm:$0xff]
    %v194 = vld [vmem:[#allocation3 + $0x3c0] sm:$0xff]
    %v195 = vld [vmem:[#allocation3 + $0x3c8] sm:$0xff]
    %v196 = vld [vmem:[#allocation3 + $0x3d0] sm:$0xff]
    %v197 = vld [vmem:[#allocation3 + $0x3d8] sm:$0xff]
    %v198 = vld [vmem:[#allocation3 + $0x3e0] sm:$0xff]
    %v199 = vld [vmem:[#allocation3 + $0x3e8] sm:$0xff]
    %v200 = vld [vmem:[#allocation3 + $0x3f0] sm:$0xff]
    %v201 = vld [vmem:[#allocation3 + $0x3f8] sm:$0xff]
    %v202 = vld [vmem:[#allocation3 + $0x400] sm:$0xff]
    %v203 = vld [vmem:[#allocation3 + $0x408] sm:$0xff]
    %v204 = vld [vmem:[#allocation3 + $0x410] sm:$0xff]
    %v205 = vld [vmem:[#allocation3 + $0x418] sm:$0xff]
    %v206 = vld [vmem:[#allocation3 + $0x420] sm:$0xff]
    %v207 = vld [vmem:[#allocation3 + $0x428] sm:$0xff]
    %v208 = vld [vmem:[#allocation3 + $0x430] sm:$0xff]
    %v209 = vld [vmem:[#allocation3 + $0x438] sm:$0xff]
    %v210 = vld [vmem:[#allocation3 + $0x440] sm:$0xff]
    %v211 = vld [vmem:[#allocation3 + $0x448] sm:$0xff]
    %v212 = vld [vmem:[#allocation3 + $0x450] sm:$0xff]
    %v213 = vld [vmem:[#allocation3 + $0x458] sm:$0xff]
    %v214 = vld [vmem:[#allocation3 + $0x460] sm:$0xff]
    %v215 = vld [vmem:[#allocation3 + $0x468] sm:$0xff]
    %v216 = vld [vmem:[#allocation3 + $0x470] sm:$0xff]
    %v217 = vld [vmem:[#allocation3 + $0x478] sm:$0xff]
    %v218 = vld [vmem:[#allocation3 + $0x480] sm:$0xff]
    %v219 = vld [vmem:[#allocation3 + $0x488] sm:$0xff]
    %v220 = vld [vmem:[#allocation3 + $0x490] sm:$0xff]
    %v221 = vld [vmem:[#allocation3 + $0x498] sm:$0xff]
    %v222 = vld [vmem:[#allocation3 + $0x4a0] sm:$0xff]
    %v223 = vld [vmem:[#allocation3 + $0x4a8] sm:$0xff]
    %v224 = vld [vmem:[#allocation3 + $0x4b0] sm:$0xff]
    %v225 = vld [vmem:[#allocation3 + $0x4b8] sm:$0xff]
    %v226 = vld [vmem:[#allocation3 + $0x4c0] sm:$0xff]
    %v227 = vld [vmem:[#allocation3 + $0x4c8] sm:$0xff]
    %v228 = vld [vmem:[#allocation3 + $0x4d0] sm:$0xff]
    %v229 = vld [vmem:[#allocation3 + $0x4d8] sm:$0xff]
    %v230 = vld [vmem:[#allocation3 + $0x4e0] sm:$0xff]
    %v231 = vld [vmem:[#allocation3 + $0x4e8] sm:$0xff]
    %v232 = vld [vmem:[#allocation3 + $0x4f0] sm:$0xff]
    %v233 = vld [vmem:[#allocation3 + $0x4f8] sm:$0xff]
    %v234 = vld [vmem:[#allocation3 + $0x500] sm:$0xff]
    %v235 = vld [vmem:[#allocation3 + $0x508] sm:$0xff]
    %v236 = vld [vmem:[#allocation3 + $0x510] sm:$0xff]
    %v237 = vld [vmem:[#allocation3 + $0x518] sm:$0xff]
    %v238 = vld [vmem:[#allocation3 + $0x520] sm:$0xff]
    %v239 = vld [vmem:[#allocation3 + $0x528] sm:$0xff]
    %v240 = vld [vmem:[#allocation3 + $0x530] sm:$0xff]
    %v241 = vld [vmem:[#allocation3 + $0x538] sm:$0xff]
    %v242 = vld [vmem:[#allocation3 + $0x540] sm:$0xff]
    %v243 = vld [vmem:[#allocation3 + $0x548] sm:$0xff]
    %v244 = vld [vmem:[#allocation3 + $0x550] sm:$0xff]
    %v245 = vld [vmem:[#allocation3 + $0x558] sm:$0xff]
    %v246 = vld [vmem:[#allocation3 + $0x560] sm:$0xff]
    %v247 = vld [vmem:[#allocation3 + $0x568] sm:$0xff]
    %v248 = vld [vmem:[#allocation3 + $0x570] sm:$0xff]
    %v249 = vld [vmem:[#allocation3 + $0x578] sm:$0xff]
    %v250 = vld [vmem:[#allocation3 + $0x580] sm:$0xff]
    %v251 = vld [vmem:[#allocation3 + $0x588] sm:$0xff]
    %v252 = vld [vmem:[#allocation3 + $0x590] sm:$0xff]
    %v253 = vld [vmem:[#allocation3 + $0x598] sm:$0xff]
    %v254 = vld [vmem:[#allocation3 + $0x5a0] sm:$0xff]
    %v255 = vld [vmem:[#allocation3 + $0x5a8] sm:$0xff]
    %v256 = vld [vmem:[#allocation3 + $0x5b0] sm:$0xff]
    %v257 = vld [vmem:[#allocation3 + $0x5b8] sm:$0xff]
    %v258 = vld [vmem:[#allocation3 + $0x5c0] sm:$0xff]
    %v259 = vld [vmem:[#allocation3 + $0x5c8] sm:$0xff]
    %v260 = vld [vmem:[#allocation3 + $0x5d0] sm:$0xff]
    %v261 = vld [vmem:[#allocation3 + $0x5d8] sm:$0xff]
    %v262 = vld [vmem:[#allocation3 + $0x5e0] sm:$0xff]
    %v263 = vld [vmem:[#allocation3 + $0x5e8] sm:$0xff]
    %v264 = vld [vmem:[#allocation3 + $0x5f0] sm:$0xff]
    %v265 = vld [vmem:[#allocation3 + $0x5f8] sm:$0xff]
    %v266 = vld [vmem:[#allocation3 + $0x600] sm:$0xff]
    %v267 = vld [vmem:[#allocation3 + $0x608] sm:$0xff]
    %v268 = vld [vmem:[#allocation3 + $0x610] sm:$0xff]
    %v269 = vld [vmem:[#allocation3 + $0x618] sm:$0xff]
    %v270 = vld [vmem:[#allocation3 + $0x620] sm:$0xff]
    %v271 = vld [vmem:[#allocation3 + $0x628] sm:$0xff]
    %v272 = vld [vmem:[#allocation3 + $0x630] sm:$0xff]
    %v273 = vld [vmem:[#allocation3 + $0x638] sm:$0xff]
    %v274 = vld [vmem:[#allocation3 + $0x640] sm:$0xff]
    %v275 = vld [vmem:[#allocation3 + $0x648] sm:$0xff]
    %v276 = vld [vmem:[#allocation3 + $0x650] sm:$0xff]
    %v277 = vld [vmem:[#allocation3 + $0x658] sm:$0xff]
    %v278 = vld [vmem:[#allocation3 + $0x660] sm:$0xff]
    %v279 = vld [vmem:[#allocation3 + $0x668] sm:$0xff]
    %v280 = vld [vmem:[#allocation3 + $0x670] sm:$0xff]
    %v281 = vld [vmem:[#allocation3 + $0x678] sm:$0xff]
    %v282 = vld [vmem:[#allocation3 + $0x680] sm:$0xff]
    %v283 = vld [vmem:[#allocation3 + $0x688] sm:$0xff]
    %v284 = vld [vmem:[#allocation3 + $0x690] sm:$0xff]
    %v285 = vld [vmem:[#allocation3 + $0x698] sm:$0xff]
    %v286 = vld [vmem:[#allocation3 + $0x6a0] sm:$0xff]
    %v287 = vld [vmem:[#allocation3 + $0x6a8] sm:$0xff]
    %v288 = vld [vmem:[#allocation3 + $0x6b0] sm:$0xff]
    %v289 = vld [vmem:[#allocation3 + $0x6b8] sm:$0xff]
    %v290 = vld [vmem:[#allocation3 + $0x6c0] sm:$0xff]
    %v291 = vld [vmem:[#allocation3 + $0x6c8] sm:$0xff]
    %v292 = vld [vmem:[#allocation3 + $0x6d0] sm:$0xff]
    %v293 = vld [vmem:[#allocation3 + $0x6d8] sm:$0xff]
    %v294 = vld [vmem:[#allocation3 + $0x6e0] sm:$0xff]
    %v295 = vld [vmem:[#allocation3 + $0x6e8] sm:$0xff]
    %v296 = vld [vmem:[#allocation3 + $0x6f0] sm:$0xff]
    %v297 = vld [vmem:[#allocation3 + $0x6f8] sm:$0xff]
    %v298 = vld [vmem:[#allocation3 + $0x700] sm:$0xff]
    %v299 = vld [vmem:[#allocation3 + $0x708] sm:$0xff]
    %v300 = vld [vmem:[#allocation3 + $0x710] sm:$0xff]
    %v301 = vld [vmem:[#allocation3 + $0x718] sm:$0xff]
    %v302 = vld [vmem:[#allocation3 + $0x720] sm:$0xff]
    %v303 = vld [vmem:[#allocation3 + $0x728] sm:$0xff]
    %v304 = vld [vmem:[#allocation3 + $0x730] sm:$0xff]
    %v305 = vld [vmem:[#allocation3 + $0x738] sm:$0xff]
    %v306 = vld [vmem:[#allocation3 + $0x740] sm:$0xff]
    %v307 = vld [vmem:[#allocation3 + $0x748] sm:$0xff]
    %v308 = vld [vmem:[#allocation3 + $0x750] sm:$0xff]
    %v309 = vld [vmem:[#allocation3 + $0x758] sm:$0xff]
    %v310 = vld [vmem:[#allocation3 + $0x760] sm:$0xff]
    %v311 = vld [vmem:[#allocation3 + $0x768] sm:$0xff]
    %v312 = vld [vmem:[#allocation3 + $0x770] sm:$0xff]
    %v313 = vld [vmem:[#allocation3 + $0x778] sm:$0xff]
    %v314 = vld [vmem:[#allocation3 + $0x780] sm:$0xff]
    %v315 = vld [vmem:[#allocation3 + $0x788] sm:$0xff]
    %v316 = vld [vmem:[#allocation3 + $0x790] sm:$0xff]
    %v317 = vld [vmem:[#allocation3 + $0x798] sm:$0xff]
    %v318 = vld [vmem:[#allocation3 + $0x7a0] sm:$0xff]
    %v319 = vld [vmem:[#allocation3 + $0x7a8] sm:$0xff]
    %v320 = vld [vmem:[#allocation3 + $0x7b0] sm:$0xff]
    %v321 = vld [vmem:[#allocation3 + $0x7b8] sm:$0xff]
    %v322 = vld [vmem:[#allocation3 + $0x7c0] sm:$0xff]
    %v323 = vld [vmem:[#allocation3 + $0x7c8] sm:$0xff]
    %v324 = vld [vmem:[#allocation3 + $0x7d0] sm:$0xff]
    %v325 = vld [vmem:[#allocation3 + $0x7d8] sm:$0xff]
    %v326 = vld [vmem:[#allocation3 + $0x7e0] sm:$0xff]
    %v327 = vld [vmem:[#allocation3 + $0x7e8] sm:$0xff]
    %v328 = vld [vmem:[#allocation3 + $0x7f0] sm:$0xff]
    %v329 = vld [vmem:[#allocation3 + $0x7f8] sm:$0xff]
    %v586 = vunpack.c.l.b16 %v74
    %v587 = vunpack.c.h.b16 %v74
    %v588 = vunpack.c.l.b16 %v75
    %v589 = vunpack.c.h.b16 %v75
    %v590 = vunpack.c.l.b16 %v76
    %v591 = vunpack.c.h.b16 %v76
    %v592 = vunpack.c.l.b16 %v77
    %v593 = vunpack.c.h.b16 %v77
    %v594 = vunpack.c.l.b16 %v78
    %v595 = vunpack.c.h.b16 %v78
    %v596 = vunpack.c.l.b16 %v79
    %v597 = vunpack.c.h.b16 %v79
    %v598 = vunpack.c.l.b16 %v80
    %v599 = vunpack.c.h.b16 %v80
    %v600 = vunpack.c.l.b16 %v81
    %v601 = vunpack.c.h.b16 %v81
    %v602 = vunpack.c.l.b16 %v82
    %v603 = vunpack.c.h.b16 %v82
    %v604 = vunpack.c.l.b16 %v83
    %v605 = vunpack.c.h.b16 %v83
    %v606 = vunpack.c.l.b16 %v84
    %v607 = vunpack.c.h.b16 %v84
    %v608 = vunpack.c.l.b16 %v85
    %v609 = vunpack.c.h.b16 %v85
    %v610 = vunpack.c.l.b16 %v86
    %v611 = vunpack.c.h.b16 %v86
    %v612 = vunpack.c.l.b16 %v87
    %v613 = vunpack.c.h.b16 %v87
    %v614 = vunpack.c.l.b16 %v88
    %v615 = vunpack.c.h.b16 %v88
    %v616 = vunpack.c.l.b16 %v89
    %v617 = vunpack.c.h.b16 %v89
    %v618 = vunpack.c.l.b16 %v90
    %v619 = vunpack.c.h.b16 %v90
    %v620 = vunpack.c.l.b16 %v91
    %v621 = vunpack.c.h.b16 %v91
    %v622 = vunpack.c.l.b16 %v92
    %v623 = vunpack.c.h.b16 %v92
    %v624 = vunpack.c.l.b16 %v93
    %v625 = vunpack.c.h.b16 %v93
    %v626 = vunpack.c.l.b16 %v94
    %v627 = vunpack.c.h.b16 %v94
    %v628 = vunpack.c.l.b16 %v95
    %v629 = vunpack.c.h.b16 %v95
    %v630 = vunpack.c.l.b16 %v96
    %v631 = vunpack.c.h.b16 %v96
    %v632 = vunpack.c.l.b16 %v97
    %v633 = vunpack.c.h.b16 %v97
    %v634 = vunpack.c.l.b16 %v98
    %v635 = vunpack.c.h.b16 %v98
    %v636 = vunpack.c.l.b16 %v99
    %v637 = vunpack.c.h.b16 %v99
    %v638 = vunpack.c.l.b16 %v100
    %v639 = vunpack.c.h.b16 %v100
    %v640 = vunpack.c.l.b16 %v101
    %v641 = vunpack.c.h.b16 %v101
    %v642 = vunpack.c.l.b16 %v102
    %v643 = vunpack.c.h.b16 %v102
    %v644 = vunpack.c.l.b16 %v103
    %v645 = vunpack.c.h.b16 %v103
    %v646 = vunpack.c.l.b16 %v104
    %v647 = vunpack.c.h.b16 %v104
    %v648 = vunpack.c.l.b16 %v105
    %v649 = vunpack.c.h.b16 %v105
    %v650 = vunpack.c.l.b16 %v106
    %v651 = vunpack.c.h.b16 %v106
    %v652 = vunpack.c.l.b16 %v107
    %v653 = vunpack.c.h.b16 %v107
    %v654 = vunpack.c.l.b16 %v108
    %v655 = vunpack.c.h.b16 %v108
    %v656 = vunpack.c.l.b16 %v109
    %v657 = vunpack.c.h.b16 %v109
    %v658 = vunpack.c.l.b16 %v110
    %v659 = vunpack.c.h.b16 %v110
    %v660 = vunpack.c.l.b16 %v111
    %v661 = vunpack.c.h.b16 %v111
    %v662 = vunpack.c.l.b16 %v112
    %v663 = vunpack.c.h.b16 %v112
    %v664 = vunpack.c.l.b16 %v113
    %v665 = vunpack.c.h.b16 %v113
    %v666 = vunpack.c.l.b16 %v114
    %v667 = vunpack.c.h.b16 %v114
    %v668 = vunpack.c.l.b16 %v115
    %v669 = vunpack.c.h.b16 %v115
    %v670 = vunpack.c.l.b16 %v116
    %v671 = vunpack.c.h.b16 %v116
    %v672 = vunpack.c.l.b16 %v117
    %v673 = vunpack.c.h.b16 %v117
    %v674 = vunpack.c.l.b16 %v118
    %v675 = vunpack.c.h.b16 %v118
    %v676 = vunpack.c.l.b16 %v119
    %v677 = vunpack.c.h.b16 %v119
    %v678 = vunpack.c.l.b16 %v120
    %v679 = vunpack.c.h.b16 %v120
    %v680 = vunpack.c.l.b16 %v121
    %v681 = vunpack.c.h.b16 %v121
    %v682 = vunpack.c.l.b16 %v122
    %v683 = vunpack.c.h.b16 %v122
    %v684 = vunpack.c.l.b16 %v123
    %v685 = vunpack.c.h.b16 %v123
    %v686 = vunpack.c.l.b16 %v124
    %v687 = vunpack.c.h.b16 %v124
    %v688 = vunpack.c.l.b16 %v125
    %v689 = vunpack.c.h.b16 %v125
    %v690 = vunpack.c.l.b16 %v126
    %v691 = vunpack.c.h.b16 %v126
    %v692 = vunpack.c.l.b16 %v127
    %v693 = vunpack.c.h.b16 %v127
    %v694 = vunpack.c.l.b16 %v128
    %v695 = vunpack.c.h.b16 %v128
    %v696 = vunpack.c.l.b16 %v129
    %v697 = vunpack.c.h.b16 %v129
    %v698 = vunpack.c.l.b16 %v130
    %v699 = vunpack.c.h.b16 %v130
    %v700 = vunpack.c.l.b16 %v131
    %v701 = vunpack.c.h.b16 %v131
    %v702 = vunpack.c.l.b16 %v132
    %v703 = vunpack.c.h.b16 %v132
    %v704 = vunpack.c.l.b16 %v133
    %v705 = vunpack.c.h.b16 %v133
    %v706 = vunpack.c.l.b16 %v134
    %v707 = vunpack.c.h.b16 %v134
    %v708 = vunpack.c.l.b16 %v135
    %v709 = vunpack.c.h.b16 %v135
    %v710 = vunpack.c.l.b16 %v136
    %v711 = vunpack.c.h.b16 %v136
    %v712 = vunpack.c.l.b16 %v137
    %v713 = vunpack.c.h.b16 %v137
    %v714 = vunpack.c.l.b16 %v138
    %v715 = vunpack.c.h.b16 %v138
    %v716 = vunpack.c.l.b16 %v139
    %v717 = vunpack.c.h.b16 %v139
    %v718 = vunpack.c.l.b16 %v140
    %v719 = vunpack.c.h.b16 %v140
    %v720 = vunpack.c.l.b16 %v141
    %v721 = vunpack.c.h.b16 %v141
    %v722 = vunpack.c.l.b16 %v142
    %v723 = vunpack.c.h.b16 %v142
    %v724 = vunpack.c.l.b16 %v143
    %v725 = vunpack.c.h.b16 %v143
    %v726 = vunpack.c.l.b16 %v144
    %v727 = vunpack.c.h.b16 %v144
    %v728 = vunpack.c.l.b16 %v145
    %v729 = vunpack.c.h.b16 %v145
    %v730 = vunpack.c.l.b16 %v146
    %v731 = vunpack.c.h.b16 %v146
    %v732 = vunpack.c.l.b16 %v147
    %v733 = vunpack.c.h.b16 %v147
    %v734 = vunpack.c.l.b16 %v148
    %v735 = vunpack.c.h.b16 %v148
    %v736 = vunpack.c.l.b16 %v149
    %v737 = vunpack.c.h.b16 %v149
    %v738 = vunpack.c.l.b16 %v150
    %v739 = vunpack.c.h.b16 %v150
    %v740 = vunpack.c.l.b16 %v151
    %v741 = vunpack.c.h.b16 %v151
    %v742 = vunpack.c.l.b16 %v152
    %v743 = vunpack.c.h.b16 %v152
    %v744 = vunpack.c.l.b16 %v153
    %v745 = vunpack.c.h.b16 %v153
    %v746 = vunpack.c.l.b16 %v154
    %v747 = vunpack.c.h.b16 %v154
    %v748 = vunpack.c.l.b16 %v155
    %v749 = vunpack.c.h.b16 %v155
    %v750 = vunpack.c.l.b16 %v156
    %v751 = vunpack.c.h.b16 %v156
    %v752 = vunpack.c.l.b16 %v157
    %v753 = vunpack.c.h.b16 %v157
    %v754 = vunpack.c.l.b16 %v158
    %v755 = vunpack.c.h.b16 %v158
    %v756 = vunpack.c.l.b16 %v159
    %v757 = vunpack.c.h.b16 %v159
    %v758 = vunpack.c.l.b16 %v160
    %v759 = vunpack.c.h.b16 %v160
    %v760 = vunpack.c.l.b16 %v161
    %v761 = vunpack.c.h.b16 %v161
    %v762 = vunpack.c.l.b16 %v162
    %v763 = vunpack.c.h.b16 %v162
    %v764 = vunpack.c.l.b16 %v163
    %v765 = vunpack.c.h.b16 %v163
    %v766 = vunpack.c.l.b16 %v164
    %v767 = vunpack.c.h.b16 %v164
    %v768 = vunpack.c.l.b16 %v165
    %v769 = vunpack.c.h.b16 %v165
    %v770 = vunpack.c.l.b16 %v166
    %v771 = vunpack.c.h.b16 %v166
    %v772 = vunpack.c.l.b16 %v167
    %v773 = vunpack.c.h.b16 %v167
    %v774 = vunpack.c.l.b16 %v168
    %v775 = vunpack.c.h.b16 %v168
    %v776 = vunpack.c.l.b16 %v169
    %v777 = vunpack.c.h.b16 %v169
    %v778 = vunpack.c.l.b16 %v170
    %v779 = vunpack.c.h.b16 %v170
    %v780 = vunpack.c.l.b16 %v171
    %v781 = vunpack.c.h.b16 %v171
    %v782 = vunpack.c.l.b16 %v172
    %v783 = vunpack.c.h.b16 %v172
    %v784 = vunpack.c.l.b16 %v173
    %v785 = vunpack.c.h.b16 %v173
    %v786 = vunpack.c.l.b16 %v174
    %v787 = vunpack.c.h.b16 %v174
    %v788 = vunpack.c.l.b16 %v175
    %v789 = vunpack.c.h.b16 %v175
    %v790 = vunpack.c.l.b16 %v176
    %v791 = vunpack.c.h.b16 %v176
    %v792 = vunpack.c.l.b16 %v177
    %v793 = vunpack.c.h.b16 %v177
    %v794 = vunpack.c.l.b16 %v178
    %v795 = vunpack.c.h.b16 %v178
    %v796 = vunpack.c.l.b16 %v179
    %v797 = vunpack.c.h.b16 %v179
    %v798 = vunpack.c.l.b16 %v180
    %v799 = vunpack.c.h.b16 %v180
    %v800 = vunpack.c.l.b16 %v181
    %v801 = vunpack.c.h.b16 %v181
    %v802 = vunpack.c.l.b16 %v182
    %v803 = vunpack.c.h.b16 %v182
    %v804 = vunpack.c.l.b16 %v183
    %v805 = vunpack.c.h.b16 %v183
    %v806 = vunpack.c.l.b16 %v184
    %v807 = vunpack.c.h.b16 %v184
    %v808 = vunpack.c.l.b16 %v185
    %v809 = vunpack.c.h.b16 %v185
    %v810 = vunpack.c.l.b16 %v186
    %v811 = vunpack.c.h.b16 %v186
    %v812 = vunpack.c.l.b16 %v187
    %v813 = vunpack.c.h.b16 %v187
    %v814 = vunpack.c.l.b16 %v188
    %v815 = vunpack.c.h.b16 %v188
    %v816 = vunpack.c.l.b16 %v189
    %v817 = vunpack.c.h.b16 %v189
    %v818 = vunpack.c.l.b16 %v190
    %v819 = vunpack.c.h.b16 %v190
    %v820 = vunpack.c.l.b16 %v191
    %v821 = vunpack.c.h.b16 %v191
    %v822 = vunpack.c.l.b16 %v192
    %v823 = vunpack.c.h.b16 %v192
    %v824 = vunpack.c.l.b16 %v193
    %v825 = vunpack.c.h.b16 %v193
    %v826 = vunpack.c.l.b16 %v194
    %v827 = vunpack.c.h.b16 %v194
    %v828 = vunpack.c.l.b16 %v195
    %v829 = vunpack.c.h.b16 %v195
    %v830 = vunpack.c.l.b16 %v196
    %v831 = vunpack.c.h.b16 %v196
    %v832 = vunpack.c.l.b16 %v197
    %v833 = vunpack.c.h.b16 %v197
    %v834 = vunpack.c.l.b16 %v198
    %v835 = vunpack.c.h.b16 %v198
    %v836 = vunpack.c.l.b16 %v199
    %v837 = vunpack.c.h.b16 %v199
    %v838 = vunpack.c.l.b16 %v200
    %v839 = vunpack.c.h.b16 %v200
    %v840 = vunpack.c.l.b16 %v201
    %v841 = vunpack.c.h.b16 %v201
    %v842 = vunpack.c.l.b16 %v202
    %v843 = vunpack.c.h.b16 %v202
    %v844 = vunpack.c.l.b16 %v203
    %v845 = vunpack.c.h.b16 %v203
    %v846 = vunpack.c.l.b16 %v204
    %v847 = vunpack.c.h.b16 %v204
    %v848 = vunpack.c.l.b16 %v205
    %v849 = vunpack.c.h.b16 %v205
    %v850 = vunpack.c.l.b16 %v206
    %v851 = vunpack.c.h.b16 %v206
    %v852 = vunpack.c.l.b16 %v207
    %v853 = vunpack.c.h.b16 %v207
    %v854 = vunpack.c.l.b16 %v208
    %v855 = vunpack.c.h.b16 %v208
    %v856 = vunpack.c.l.b16 %v209
    %v857 = vunpack.c.h.b16 %v209
    %v858 = vunpack.c.l.b16 %v210
    %v859 = vunpack.c.h.b16 %v210
    %v860 = vunpack.c.l.b16 %v211
    %v861 = vunpack.c.h.b16 %v211
    %v862 = vunpack.c.l.b16 %v212
    %v863 = vunpack.c.h.b16 %v212
    %v864 = vunpack.c.l.b16 %v213
    %v865 = vunpack.c.h.b16 %v213
    %v866 = vunpack.c.l.b16 %v214
    %v867 = vunpack.c.h.b16 %v214
    %v868 = vunpack.c.l.b16 %v215
    %v869 = vunpack.c.h.b16 %v215
    %v870 = vunpack.c.l.b16 %v216
    %v871 = vunpack.c.h.b16 %v216
    %v872 = vunpack.c.l.b16 %v217
    %v873 = vunpack.c.h.b16 %v217
    %v874 = vunpack.c.l.b16 %v218
    %v875 = vunpack.c.h.b16 %v218
    %v876 = vunpack.c.l.b16 %v219
    %v877 = vunpack.c.h.b16 %v219
    %v878 = vunpack.c.l.b16 %v220
    %v879 = vunpack.c.h.b16 %v220
    %v880 = vunpack.c.l.b16 %v221
    %v881 = vunpack.c.h.b16 %v221
    %v882 = vunpack.c.l.b16 %v222
    %v883 = vunpack.c.h.b16 %v222
    %v884 = vunpack.c.l.b16 %v223
    %v885 = vunpack.c.h.b16 %v223
    %v886 = vunpack.c.l.b16 %v224
    %v887 = vunpack.c.h.b16 %v224
    %v888 = vunpack.c.l.b16 %v225
    %v889 = vunpack.c.h.b16 %v225
    %v890 = vunpack.c.l.b16 %v226
    %v891 = vunpack.c.h.b16 %v226
    %v892 = vunpack.c.l.b16 %v227
    %v893 = vunpack.c.h.b16 %v227
    %v894 = vunpack.c.l.b16 %v228
    %v895 = vunpack.c.h.b16 %v228
    %v896 = vunpack.c.l.b16 %v229
    %v897 = vunpack.c.h.b16 %v229
    %v898 = vunpack.c.l.b16 %v230
    %v899 = vunpack.c.h.b16 %v230
    %v900 = vunpack.c.l.b16 %v231
    %v901 = vunpack.c.h.b16 %v231
    %v902 = vunpack.c.l.b16 %v232
    %v903 = vunpack.c.h.b16 %v232
    %v904 = vunpack.c.l.b16 %v233
    %v905 = vunpack.c.h.b16 %v233
    %v906 = vunpack.c.l.b16 %v234
    %v907 = vunpack.c.h.b16 %v234
    %v908 = vunpack.c.l.b16 %v235
    %v909 = vunpack.c.h.b16 %v235
    %v910 = vunpack.c.l.b16 %v236
    %v911 = vunpack.c.h.b16 %v236
    %v912 = vunpack.c.l.b16 %v237
    %v913 = vunpack.c.h.b16 %v237
    %v914 = vunpack.c.l.b16 %v238
    %v915 = vunpack.c.h.b16 %v238
    %v916 = vunpack.c.l.b16 %v239
    %v917 = vunpack.c.h.b16 %v239
    %v918 = vunpack.c.l.b16 %v240
    %v919 = vunpack.c.h.b16 %v240
    %v920 = vunpack.c.l.b16 %v241
    %v921 = vunpack.c.h.b16 %v241
    %v922 = vunpack.c.l.b16 %v242
    %v923 = vunpack.c.h.b16 %v242
    %v924 = vunpack.c.l.b16 %v243
    %v925 = vunpack.c.h.b16 %v243
    %v926 = vunpack.c.l.b16 %v244
    %v927 = vunpack.c.h.b16 %v244
    %v928 = vunpack.c.l.b16 %v245
    %v929 = vunpack.c.h.b16 %v245
    %v930 = vunpack.c.l.b16 %v246
    %v931 = vunpack.c.h.b16 %v246
    %v932 = vunpack.c.l.b16 %v247
    %v933 = vunpack.c.h.b16 %v247
    %v934 = vunpack.c.l.b16 %v248
    %v935 = vunpack.c.h.b16 %v248
    %v936 = vunpack.c.l.b16 %v249
    %v937 = vunpack.c.h.b16 %v249
    %v938 = vunpack.c.l.b16 %v250
    %v939 = vunpack.c.h.b16 %v250
    %v940 = vunpack.c.l.b16 %v251
    %v941 = vunpack.c.h.b16 %v251
    %v942 = vunpack.c.l.b16 %v252
    %v943 = vunpack.c.h.b16 %v252
    %v944 = vunpack.c.l.b16 %v253
    %v945 = vunpack.c.h.b16 %v253
    %v946 = vunpack.c.l.b16 %v254
    %v947 = vunpack.c.h.b16 %v254
    %v948 = vunpack.c.l.b16 %v255
    %v949 = vunpack.c.h.b16 %v255
    %v950 = vunpack.c.l.b16 %v256
    %v951 = vunpack.c.h.b16 %v256
    %v952 = vunpack.c.l.b16 %v257
    %v953 = vunpack.c.h.b16 %v257
    %v954 = vunpack.c.l.b16 %v258
    %v955 = vunpack.c.h.b16 %v258
    %v956 = vunpack.c.l.b16 %v259
    %v957 = vunpack.c.h.b16 %v259
    %v958 = vunpack.c.l.b16 %v260
    %v959 = vunpack.c.h.b16 %v260
    %v960 = vunpack.c.l.b16 %v261
    %v961 = vunpack.c.h.b16 %v261
    %v962 = vunpack.c.l.b16 %v262
    %v963 = vunpack.c.h.b16 %v262
    %v964 = vunpack.c.l.b16 %v263
    %v965 = vunpack.c.h.b16 %v263
    %v966 = vunpack.c.l.b16 %v264
    %v967 = vunpack.c.h.b16 %v264
    %v968 = vunpack.c.l.b16 %v265
    %v969 = vunpack.c.h.b16 %v265
    %v970 = vunpack.c.l.b16 %v266
    %v971 = vunpack.c.h.b16 %v266
    %v972 = vunpack.c.l.b16 %v267
    %v973 = vunpack.c.h.b16 %v267
    %v974 = vunpack.c.l.b16 %v268
    %v975 = vunpack.c.h.b16 %v268
    %v976 = vunpack.c.l.b16 %v269
    %v977 = vunpack.c.h.b16 %v269
    %v978 = vunpack.c.l.b16 %v270
    %v979 = vunpack.c.h.b16 %v270
    %v980 = vunpack.c.l.b16 %v271
    %v981 = vunpack.c.h.b16 %v271
    %v982 = vunpack.c.l.b16 %v272
    %v983 = vunpack.c.h.b16 %v272
    %v984 = vunpack.c.l.b16 %v273
    %v985 = vunpack.c.h.b16 %v273
    %v986 = vunpack.c.l.b16 %v274
    %v987 = vunpack.c.h.b16 %v274
    %v988 = vunpack.c.l.b16 %v275
    %v989 = vunpack.c.h.b16 %v275
    %v990 = vunpack.c.l.b16 %v276
    %v991 = vunpack.c.h.b16 %v276
    %v992 = vunpack.c.l.b16 %v277
    %v993 = vunpack.c.h.b16 %v277
    %v994 = vunpack.c.l.b16 %v278
    %v995 = vunpack.c.h.b16 %v278
    %v996 = vunpack.c.l.b16 %v279
    %v997 = vunpack.c.h.b16 %v279
    %v998 = vunpack.c.l.b16 %v280
    %v999 = vunpack.c.h.b16 %v280
    %v1000 = vunpack.c.l.b16 %v281
    %v1001 = vunpack.c.h.b16 %v281
    %v1002 = vunpack.c.l.b16 %v282
    %v1003 = vunpack.c.h.b16 %v282
    %v1004 = vunpack.c.l.b16 %v283
    %v1005 = vunpack.c.h.b16 %v283
    %v1006 = vunpack.c.l.b16 %v284
    %v1007 = vunpack.c.h.b16 %v284
    %v1008 = vunpack.c.l.b16 %v285
    %v1009 = vunpack.c.h.b16 %v285
    %v1010 = vunpack.c.l.b16 %v286
    %v1011 = vunpack.c.h.b16 %v286
    %v1012 = vunpack.c.l.b16 %v287
    %v1013 = vunpack.c.h.b16 %v287
    %v1014 = vunpack.c.l.b16 %v288
    %v1015 = vunpack.c.h.b16 %v288
    %v1016 = vunpack.c.l.b16 %v289
    %v1017 = vunpack.c.h.b16 %v289
    %v1018 = vunpack.c.l.b16 %v290
    %v1019 = vunpack.c.h.b16 %v290
    %v1020 = vunpack.c.l.b16 %v291
    %v1021 = vunpack.c.h.b16 %v291
    %v1022 = vunpack.c.l.b16 %v292
    %v1023 = vunpack.c.h.b16 %v292
    %v1024 = vunpack.c.l.b16 %v293
    %v1025 = vunpack.c.h.b16 %v293
    %v1026 = vunpack.c.l.b16 %v294
    %v1027 = vunpack.c.h.b16 %v294
    %v1028 = vunpack.c.l.b16 %v295
    %v1029 = vunpack.c.h.b16 %v295
    %v1030 = vunpack.c.l.b16 %v296
    %v1031 = vunpack.c.h.b16 %v296
    %v1032 = vunpack.c.l.b16 %v297
    %v1033 = vunpack.c.h.b16 %v297
    %v1034 = vunpack.c.l.b16 %v298
    %v1035 = vunpack.c.h.b16 %v298
    %v1036 = vunpack.c.l.b16 %v299
    %v1037 = vunpack.c.h.b16 %v299
    %v1038 = vunpack.c.l.b16 %v300
    %v1039 = vunpack.c.h.b16 %v300
    %v1040 = vunpack.c.l.b16 %v301
    %v1041 = vunpack.c.h.b16 %v301
    %v1042 = vunpack.c.l.b16 %v302
    %v1043 = vunpack.c.h.b16 %v302
    %v1044 = vunpack.c.l.b16 %v303
    %v1045 = vunpack.c.h.b16 %v303
    %v1046 = vunpack.c.l.b16 %v304
    %v1047 = vunpack.c.h.b16 %v304
    %v1048 = vunpack.c.l.b16 %v305
    %v1049 = vunpack.c.h.b16 %v305
    %v1050 = vunpack.c.l.b16 %v306
    %v1051 = vunpack.c.h.b16 %v306
    %v1052 = vunpack.c.l.b16 %v307
    %v1053 = vunpack.c.h.b16 %v307
    %v1054 = vunpack.c.l.b16 %v308
    %v1055 = vunpack.c.h.b16 %v308
    %v1056 = vunpack.c.l.b16 %v309
    %v1057 = vunpack.c.h.b16 %v309
    %v1058 = vunpack.c.l.b16 %v310
    %v1059 = vunpack.c.h.b16 %v310
    %v1060 = vunpack.c.l.b16 %v311
    %v1061 = vunpack.c.h.b16 %v311
    %v1062 = vunpack.c.l.b16 %v312
    %v1063 = vunpack.c.h.b16 %v312
    %v1064 = vunpack.c.l.b16 %v313
    %v1065 = vunpack.c.h.b16 %v313
    %v1066 = vunpack.c.l.b16 %v314
    %v1067 = vunpack.c.h.b16 %v314
    %v1068 = vunpack.c.l.b16 %v315
    %v1069 = vunpack.c.h.b16 %v315
    %v1070 = vunpack.c.l.b16 %v316
    %v1071 = vunpack.c.h.b16 %v316
    %v1072 = vunpack.c.l.b16 %v317
    %v1073 = vunpack.c.h.b16 %v317
    %v1074 = vunpack.c.l.b16 %v318
    %v1075 = vunpack.c.h.b16 %v318
    %v1076 = vunpack.c.l.b16 %v319
    %v1077 = vunpack.c.h.b16 %v319
    %v1078 = vunpack.c.l.b16 %v320
    %v1079 = vunpack.c.h.b16 %v320
    %v1080 = vunpack.c.l.b16 %v321
    %v1081 = vunpack.c.h.b16 %v321
    %v1082 = vunpack.c.l.b16 %v322
    %v1083 = vunpack.c.h.b16 %v322
    %v1084 = vunpack.c.l.b16 %v323
    %v1085 = vunpack.c.h.b16 %v323
    %v1086 = vunpack.c.l.b16 %v324
    %v1087 = vunpack.c.h.b16 %v324
    %v1088 = vunpack.c.l.b16 %v325
    %v1089 = vunpack.c.h.b16 %v325
    %v1090 = vunpack.c.l.b16 %v326
    %v1091 = vunpack.c.h.b16 %v326
    %v1092 = vunpack.c.l.b16 %v327
    %v1093 = vunpack.c.h.b16 %v327
    %v1094 = vunpack.c.l.b16 %v328
    %v1095 = vunpack.c.h.b16 %v328
    %v1096 = vunpack.c.l.b16 %v329
    %v1097 = vunpack.c.h.b16 %v329
    %v1098 = vpack.c.b16 %v650, %v586
    %v1099 = vpack.c.b16 %v651, %v587
    %v1100 = vpack.c.b16 %v652, %v588
    %v1101 = vpack.c.b16 %v653, %v589
    %v1102 = vpack.c.b16 %v654, %v590
    %v1103 = vpack.c.b16 %v655, %v591
    %v1104 = vpack.c.b16 %v656, %v592
    %v1105 = vpack.c.b16 %v657, %v593
    %v1106 = vpack.c.b16 %v658, %v594
    %v1107 = vpack.c.b16 %v659, %v595
    %v1108 = vpack.c.b16 %v660, %v596
    %v1109 = vpack.c.b16 %v661, %v597
    %v1110 = vpack.c.b16 %v662, %v598
    %v1111 = vpack.c.b16 %v663, %v599
    %v1112 = vpack.c.b16 %v664, %v600
    %v1113 = vpack.c.b16 %v665, %v601
    %v1114 = vpack.c.b16 %v666, %v602
    %v1115 = vpack.c.b16 %v667, %v603
    %v1116 = vpack.c.b16 %v668, %v604
    %v1117 = vpack.c.b16 %v669, %v605
    %v1118 = vpack.c.b16 %v670, %v606
    %v1119 = vpack.c.b16 %v671, %v607
    %v1120 = vpack.c.b16 %v672, %v608
    %v1121 = vpack.c.b16 %v673, %v609
    %v1122 = vpack.c.b16 %v674, %v610
    %v1123 = vpack.c.b16 %v675, %v611
    %v1124 = vpack.c.b16 %v676, %v612
    %v1125 = vpack.c.b16 %v677, %v613
    %v1126 = vpack.c.b16 %v678, %v614
    %v1127 = vpack.c.b16 %v679, %v615
    %v1128 = vpack.c.b16 %v680, %v616
    %v1129 = vpack.c.b16 %v681, %v617
    %v1130 = vpack.c.b16 %v682, %v618
    %v1131 = vpack.c.b16 %v683, %v619
    %v1132 = vpack.c.b16 %v684, %v620
    %v1133 = vpack.c.b16 %v685, %v621
    %v1134 = vpack.c.b16 %v686, %v622
    %v1135 = vpack.c.b16 %v687, %v623
    %v1136 = vpack.c.b16 %v688, %v624
    %v1137 = vpack.c.b16 %v689, %v625
    %v1138 = vpack.c.b16 %v690, %v626
    %v1139 = vpack.c.b16 %v691, %v627
    %v1140 = vpack.c.b16 %v692, %v628
    %v1141 = vpack.c.b16 %v693, %v629
    %v1142 = vpack.c.b16 %v694, %v630
    %v1143 = vpack.c.b16 %v695, %v631
    %v1144 = vpack.c.b16 %v696, %v632
    %v1145 = vpack.c.b16 %v697, %v633
    %v1146 = vpack.c.b16 %v698, %v634
    %v1147 = vpack.c.b16 %v699, %v635
    %v1148 = vpack.c.b16 %v700, %v636
    %v1149 = vpack.c.b16 %v701, %v637
    %v1150 = vpack.c.b16 %v702, %v638
    %v1151 = vpack.c.b16 %v703, %v639
    %v1152 = vpack.c.b16 %v704, %v640
    %v1153 = vpack.c.b16 %v705, %v641
    %v1154 = vpack.c.b16 %v706, %v642
    %v1155 = vpack.c.b16 %v707, %v643
    %v1156 = vpack.c.b16 %v708, %v644
    %v1157 = vpack.c.b16 %v709, %v645
    %v1158 = vpack.c.b16 %v710, %v646
    %v1159 = vpack.c.b16 %v711, %v647
    %v1160 = vpack.c.b16 %v712, %v648
    %v1161 = vpack.c.b16 %v713, %v649
    %v1162 = vpack.c.b16 %v778, %v714
    %v1163 = vpack.c.b16 %v779, %v715
    %v1164 = vpack.c.b16 %v780, %v716
    %v1165 = vpack.c.b16 %v781, %v717
    %v1166 = vpack.c.b16 %v782, %v718
    %v1167 = vpack.c.b16 %v783, %v719
    %v1168 = vpack.c.b16 %v784, %v720
    %v1169 = vpack.c.b16 %v785, %v721
    %v1170 = vpack.c.b16 %v786, %v722
    %v1171 = vpack.c.b16 %v787, %v723
    %v1172 = vpack.c.b16 %v788, %v724
    %v1173 = vpack.c.b16 %v789, %v725
    %v1174 = vpack.c.b16 %v790, %v726
    %v1175 = vpack.c.b16 %v791, %v727
    %v1176 = vpack.c.b16 %v792, %v728
    %v1177 = vpack.c.b16 %v793, %v729
    %v1178 = vpack.c.b16 %v794, %v730
    %v1179 = vpack.c.b16 %v795, %v731
    %v1180 = vpack.c.b16 %v796, %v732
    %v1181 = vpack.c.b16 %v797, %v733
    %v1182 = vpack.c.b16 %v798, %v734
    %v1183 = vpack.c.b16 %v799, %v735
    %v1184 = vpack.c.b16 %v800, %v736
    %v1185 = vpack.c.b16 %v801, %v737
    %v1186 = vpack.c.b16 %v802, %v738
    %v1187 = vpack.c.b16 %v803, %v739
    %v1188 = vpack.c.b16 %v804, %v740
    %v1189 = vpack.c.b16 %v805, %v741
    %v1190 = vpack.c.b16 %v806, %v742
    %v1191 = vpack.c.b16 %v807, %v743
    %v1192 = vpack.c.b16 %v808, %v744
    %v1193 = vpack.c.b16 %v809, %v745
    %v1194 = vpack.c.b16 %v810, %v746
    %v1195 = vpack.c.b16 %v811, %v747
    %v1196 = vpack.c.b16 %v812, %v748
    %v1197 = vpack.c.b16 %v813, %v749
    %v1198 = vpack.c.b16 %v814, %v750
    %v1199 = vpack.c.b16 %v815, %v751
    %v1200 = vpack.c.b16 %v816, %v752
    %v1201 = vpack.c.b16 %v817, %v753
    %v1202 = vpack.c.b16 %v818, %v754
    %v1203 = vpack.c.b16 %v819, %v755
    %v1204 = vpack.c.b16 %v820, %v756
    %v1205 = vpack.c.b16 %v821, %v757
    %v1206 = vpack.c.b16 %v822, %v758
    %v1207 = vpack.c.b16 %v823, %v759
    %v1208 = vpack.c.b16 %v824, %v760
    %v1209 = vpack.c.b16 %v825, %v761
    %v1210 = vpack.c.b16 %v826, %v762
    %v1211 = vpack.c.b16 %v827, %v763
    %v1212 = vpack.c.b16 %v828, %v764
    %v1213 = vpack.c.b16 %v829, %v765
    %v1214 = vpack.c.b16 %v830, %v766
    %v1215 = vpack.c.b16 %v831, %v767
    %v1216 = vpack.c.b16 %v832, %v768
    %v1217 = vpack.c.b16 %v833, %v769
    %v1218 = vpack.c.b16 %v834, %v770
    %v1219 = vpack.c.b16 %v835, %v771
    %v1220 = vpack.c.b16 %v836, %v772
    %v1221 = vpack.c.b16 %v837, %v773
    %v1222 = vpack.c.b16 %v838, %v774
    %v1223 = vpack.c.b16 %v839, %v775
    %v1224 = vpack.c.b16 %v840, %v776
    %v1225 = vpack.c.b16 %v841, %v777
    %v1226 = vpack.c.b16 %v906, %v842
    %v1227 = vpack.c.b16 %v907, %v843
    %v1228 = vpack.c.b16 %v908, %v844
    %v1229 = vpack.c.b16 %v909, %v845
    %v1230 = vpack.c.b16 %v910, %v846
    %v1231 = vpack.c.b16 %v911, %v847
    %v1232 = vpack.c.b16 %v912, %v848
    %v1233 = vpack.c.b16 %v913, %v849
    %v1234 = vpack.c.b16 %v914, %v850
    %v1235 = vpack.c.b16 %v915, %v851
    %v1236 = vpack.c.b16 %v916, %v852
    %v1237 = vpack.c.b16 %v917, %v853
    %v1238 = vpack.c.b16 %v918, %v854
    %v1239 = vpack.c.b16 %v919, %v855
    %v1240 = vpack.c.b16 %v920, %v856
    %v1241 = vpack.c.b16 %v921, %v857
    %v1242 = vpack.c.b16 %v922, %v858
    %v1243 = vpack.c.b16 %v923, %v859
    %v1244 = vpack.c.b16 %v924, %v860
    %v1245 = vpack.c.b16 %v925, %v861
    %v1246 = vpack.c.b16 %v926, %v862
    %v1247 = vpack.c.b16 %v927, %v863
    %v1248 = vpack.c.b16 %v928, %v864
    %v1249 = vpack.c.b16 %v929, %v865
    %v1250 = vpack.c.b16 %v930, %v866
    %v1251 = vpack.c.b16 %v931, %v867
    %v1252 = vpack.c.b16 %v932, %v868
    %v1253 = vpack.c.b16 %v933, %v869
    %v1254 = vpack.c.b16 %v934, %v870
    %v1255 = vpack.c.b16 %v935, %v871
    %v1256 = vpack.c.b16 %v936, %v872
    %v1257 = vpack.c.b16 %v937, %v873
    %v1258 = vpack.c.b16 %v938, %v874
    %v1259 = vpack.c.b16 %v939, %v875
    %v1260 = vpack.c.b16 %v940, %v876
    %v1261 = vpack.c.b16 %v941, %v877
    %v1262 = vpack.c.b16 %v942, %v878
    %v1263 = vpack.c.b16 %v943, %v879
    %v1264 = vpack.c.b16 %v944, %v880
    %v1265 = vpack.c.b16 %v945, %v881
    %v1266 = vpack.c.b16 %v946, %v882
    %v1267 = vpack.c.b16 %v947, %v883
    %v1268 = vpack.c.b16 %v948, %v884
    %v1269 = vpack.c.b16 %v949, %v885
    %v1270 = vpack.c.b16 %v950, %v886
    %v1271 = vpack.c.b16 %v951, %v887
    %v1272 = vpack.c.b16 %v952, %v888
    %v1273 = vpack.c.b16 %v953, %v889
    %v1274 = vpack.c.b16 %v954, %v890
    %v1275 = vpack.c.b16 %v955, %v891
    %v1276 = vpack.c.b16 %v956, %v892
    %v1277 = vpack.c.b16 %v957, %v893
    %v1278 = vpack.c.b16 %v958, %v894
    %v1279 = vpack.c.b16 %v959, %v895
    %v1280 = vpack.c.b16 %v960, %v896
    %v1281 = vpack.c.b16 %v961, %v897
    %v1282 = vpack.c.b16 %v962, %v898
    %v1283 = vpack.c.b16 %v963, %v899
    %v1284 = vpack.c.b16 %v964, %v900
    %v1285 = vpack.c.b16 %v965, %v901
    %v1286 = vpack.c.b16 %v966, %v902
    %v1287 = vpack.c.b16 %v967, %v903
    %v1288 = vpack.c.b16 %v968, %v904
    %v1289 = vpack.c.b16 %v969, %v905
    %v1290 = vpack.c.b16 %v1034, %v970
    %v1291 = vpack.c.b16 %v1035, %v971
    %v1292 = vpack.c.b16 %v1036, %v972
    %v1293 = vpack.c.b16 %v1037, %v973
    %v1294 = vpack.c.b16 %v1038, %v974
    %v1295 = vpack.c.b16 %v1039, %v975
    %v1296 = vpack.c.b16 %v1040, %v976
    %v1297 = vpack.c.b16 %v1041, %v977
    %v1298 = vpack.c.b16 %v1042, %v978
    %v1299 = vpack.c.b16 %v1043, %v979
    %v1300 = vpack.c.b16 %v1044, %v980
    %v1301 = vpack.c.b16 %v1045, %v981
    %v1302 = vpack.c.b16 %v1046, %v982
    %v1303 = vpack.c.b16 %v1047, %v983
    %v1304 = vpack.c.b16 %v1048, %v984
    %v1305 = vpack.c.b16 %v1049, %v985
    %v1306 = vpack.c.b16 %v1050, %v986
    %v1307 = vpack.c.b16 %v1051, %v987
    %v1308 = vpack.c.b16 %v1052, %v988
    %v1309 = vpack.c.b16 %v1053, %v989
    %v1310 = vpack.c.b16 %v1054, %v990
    %v1311 = vpack.c.b16 %v1055, %v991
    %v1312 = vpack.c.b16 %v1056, %v992
    %v1313 = vpack.c.b16 %v1057, %v993
    %v1314 = vpack.c.b16 %v1058, %v994
    %v1315 = vpack.c.b16 %v1059, %v995
    %v1316 = vpack.c.b16 %v1060, %v996
    %v1317 = vpack.c.b16 %v1061, %v997
    %v1318 = vpack.c.b16 %v1062, %v998
    %v1319 = vpack.c.b16 %v1063, %v999
    %v1320 = vpack.c.b16 %v1064, %v1000
    %v1321 = vpack.c.b16 %v1065, %v1001
    %v1322 = vpack.c.b16 %v1066, %v1002
    %v1323 = vpack.c.b16 %v1067, %v1003
    %v1324 = vpack.c.b16 %v1068, %v1004
    %v1325 = vpack.c.b16 %v1069, %v1005
    %v1326 = vpack.c.b16 %v1070, %v1006
    %v1327 = vpack.c.b16 %v1071, %v1007
    %v1328 = vpack.c.b16 %v1072, %v1008
    %v1329 = vpack.c.b16 %v1073, %v1009
    %v1330 = vpack.c.b16 %v1074, %v1010
    %v1331 = vpack.c.b16 %v1075, %v1011
    %v1332 = vpack.c.b16 %v1076, %v1012
    %v1333 = vpack.c.b16 %v1077, %v1013
    %v1334 = vpack.c.b16 %v1078, %v1014
    %v1335 = vpack.c.b16 %v1079, %v1015
    %v1336 = vpack.c.b16 %v1080, %v1016
    %v1337 = vpack.c.b16 %v1081, %v1017
    %v1338 = vpack.c.b16 %v1082, %v1018
    %v1339 = vpack.c.b16 %v1083, %v1019
    %v1340 = vpack.c.b16 %v1084, %v1020
    %v1341 = vpack.c.b16 %v1085, %v1021
    %v1342 = vpack.c.b16 %v1086, %v1022
    %v1343 = vpack.c.b16 %v1087, %v1023
    %v1344 = vpack.c.b16 %v1088, %v1024
    %v1345 = vpack.c.b16 %v1089, %v1025
    %v1346 = vpack.c.b16 %v1090, %v1026
    %v1347 = vpack.c.b16 %v1091, %v1027
    %v1348 = vpack.c.b16 %v1092, %v1028
    %v1349 = vpack.c.b16 %v1093, %v1029
    %v1350 = vpack.c.b16 %v1094, %v1030
    %v1351 = vpack.c.b16 %v1095, %v1031
    %v1352 = vpack.c.b16 %v1096, %v1032
    %v1353 = vpack.c.b16 %v1097, %v1033
    %vm1610 = vcmask 523264
    %v1612 = vsel %vm1610, %v73, 0
    %1614 = vmatprep.subr.bf16.mxu0 0
    %1615 = vmatpush1.bf16.msra.mxu0 0
    %1616 = vmatprep.subr.bf16.mxu0 0
    %1617 = vmatpush1.bf16.msra.mxu0 0
    %1618 = vmatprep.subr.bf16.mxu0 0
    %1619 = vmatpush1.bf16.msra.mxu0 0
    %1620 = vmatprep.subr.bf16.mxu0 0
    %1621 = vmatpush1.bf16.msra.mxu0 0
    %1622 = vmatprep.subr.bf16.mxu0 %v1291
    %1623 = vmatpush1.bf16.msra.mxu0 %v1290
    %1624 = vmatprep.subr.bf16.mxu0 %v1227
    %1625 = vmatpush1.bf16.msra.mxu0 %v1226
    %1626 = vmatprep.subr.bf16.mxu0 %v1163
    %1627 = vmatpush1.bf16.msra.mxu0 %v1162
    %1628 = vmatprep.subr.bf16.mxu0 %v1099
    %1629 = vmatpush1.bf16.msra.mxu0 %v1098
    %1630 = vmatprep.subr.bf16.mxu0 0
    %1631 = vmatpush2.bf16.msra.mxu0 0
    %1632 = vmatprep.subr.bf16.mxu0 0
    %1633 = vmatpush2.bf16.msra.mxu0 0
    %1634 = vmatprep.subr.bf16.mxu0 0
    %1635 = vmatpush2.bf16.msra.mxu0 0
    %1636 = vmatprep.subr.bf16.mxu0 0
    %1637 = vmatpush2.bf16.msra.mxu0 0
    %1638 = vmatprep.subr.bf16.mxu0 0
    %1639 = vmatpush2.bf16.msra.mxu0 0
    %1640 = vmatprep.subr.bf16.mxu0 0
    %1641 = vmatpush2.bf16.msra.mxu0 0
    %1642 = vmatprep.subr.bf16.mxu0 0
    %1643 = vmatpush2.bf16.msra.mxu0 0
    %1644 = vmatprep.subr.bf16.mxu0 0
    %1645 = vmatpush2.bf16.msra.mxu0 0
    %1646 = vmatprep.mubr.bf16.mxu0 0
    %1647 = vmatmul.mubr.bf16.gmra.mxu0 %v1612
    %v1648 = vpop.f32.mrf.mxu0
    %v1649 = vadd.f32 0.0, %v1648
    %v1650 = vpop.f32.mrf.mxu0
    %v1651 = vadd.f32 0.0, %v1650
    %v1652 = vpop.f32.mrf.mxu0
    %v1653 = vpop.f32.mrf.mxu0
    %1654 = vdwg.mxu0
    %1655 = vmatprep.subr.bf16.mxu0 0
    %1656 = vmatpush1.bf16.msra.mxu0 0
    %1657 = vmatprep.subr.bf16.mxu0 0
    %1658 = vmatpush1.bf16.msra.mxu0 0
    %1659 = vmatprep.subr.bf16.mxu0 0
    %1660 = vmatpush1.bf16.msra.mxu0 0
    %1661 = vmatprep.subr.bf16.mxu0 0
    %1662 = vmatpush1.bf16.msra.mxu0 0
    %1663 = vmatprep.subr.bf16.mxu0 %v1293
    %1664 = vmatpush1.bf16.msra.mxu0 %v1292
    %1665 = vmatprep.subr.bf16.mxu0 %v1229
    %1666 = vmatpush1.bf16.msra.mxu0 %v1228
    %1667 = vmatprep.subr.bf16.mxu0 %v1165
    %1668 = vmatpush1.bf16.msra.mxu0 %v1164
    %1669 = vmatprep.subr.bf16.mxu0 %v1101
    %1670 = vmatpush1.bf16.msra.mxu0 %v1100
    %1671 = vmatprep.subr.bf16.mxu0 0
    %1672 = vmatpush2.bf16.msra.mxu0 0
    %1673 = vmatprep.subr.bf16.mxu0 0
    %1674 = vmatpush2.bf16.msra.mxu0 0
    %1675 = vmatprep.subr.bf16.mxu0 0
    %1676 = vmatpush2.bf16.msra.mxu0 0
    %1677 = vmatprep.subr.bf16.mxu0 0
    %1678 = vmatpush2.bf16.msra.mxu0 0
    %1679 = vmatprep.subr.bf16.mxu0 0
    %1680 = vmatpush2.bf16.msra.mxu0 0
    %1681 = vmatprep.subr.bf16.mxu0 0
    %1682 = vmatpush2.bf16.msra.mxu0 0
    %1683 = vmatprep.subr.bf16.mxu0 0
    %1684 = vmatpush2.bf16.msra.mxu0 0
    %1685 = vmatprep.subr.bf16.mxu0 0
    %1686 = vmatpush2.bf16.msra.mxu0 0
    %1687 = vmatprep.mubr.bf16.mxu0 0
    %1688 = vmatmul.mubr.bf16.gmra.mxu0 %v1612
    %v1689 = vpop.f32.mrf.mxu0
    %v1690 = vadd.f32 0.0, %v1689
    %v1691 = vpop.f32.mrf.mxu0
    %v1692 = vadd.f32 0.0, %v1691
    %v1693 = vpop.f32.mrf.mxu0
    %v1694 = vpop.f32.mrf.mxu0
    %1695 = vdwg.mxu0
    %1696 = vmatprep.subr.bf16.mxu0 0
    %1697 = vmatpush1.bf16.msra.mxu0 0
    %1698 = vmatprep.subr.bf16.mxu0 0
    %1699 = vmatpush1.bf16.msra.mxu0 0
    %1700 = vmatprep.subr.bf16.mxu0 0
    %1701 = vmatpush1.bf16.msra.mxu0 0
    %1702 = vmatprep.subr.bf16.mxu0 0
    %1703 = vmatpush1.bf16.msra.mxu0 0
    %1704 = vmatprep.subr.bf16.mxu0 %v1295
    %1705 = vmatpush1.bf16.msra.mxu0 %v1294
    %1706 = vmatprep.subr.bf16.mxu0 %v1231
    %1707 = vmatpush1.bf16.msra.mxu0 %v1230
    %1708 = vmatprep.subr.bf16.mxu0 %v1167
    %1709 = vmatpush1.bf16.msra.mxu0 %v1166
    %1710 = vmatprep.subr.bf16.mxu0 %v1103
    %1711 = vmatpush1.bf16.msra.mxu0 %v1102
    %1712 = vmatprep.subr.bf16.mxu0 0
    %1713 = vmatpush2.bf16.msra.mxu0 0
    %1714 = vmatprep.subr.bf16.mxu0 0
    %1715 = vmatpush2.bf16.msra.mxu0 0
    %1716 = vmatprep.subr.bf16.mxu0 0
    %1717 = vmatpush2.bf16.msra.mxu0 0
    %1718 = vmatprep.subr.bf16.mxu0 0
    %1719 = vmatpush2.bf16.msra.mxu0 0
    %1720 = vmatprep.subr.bf16.mxu0 0
    %1721 = vmatpush2.bf16.msra.mxu0 0
    %1722 = vmatprep.subr.bf16.mxu0 0
    %1723 = vmatpush2.bf16.msra.mxu0 0
    %1724 = vmatprep.subr.bf16.mxu0 0
    %1725 = vmatpush2.bf16.msra.mxu0 0
    %1726 = vmatprep.subr.bf16.mxu0 0
    %1727 = vmatpush2.bf16.msra.mxu0 0
    %1728 = vmatprep.mubr.bf16.mxu0 0
    %1729 = vmatmul.mubr.bf16.gmra.mxu0 %v1612
    %v1730 = vpop.f32.mrf.mxu0
    %v1731 = vadd.f32 0.0, %v1730
    %v1732 = vpop.f32.mrf.mxu0
    %v1733 = vadd.f32 0.0, %v1732
    %v1734 = vpop.f32.mrf.mxu0
    %v1735 = vpop.f32.mrf.mxu0
    %1736 = vdwg.mxu0
    %1737 = vmatprep.subr.bf16.mxu0 0
    %1738 = vmatpush1.bf16.msra.mxu0 0
    %1739 = vmatprep.subr.bf16.mxu0 0
    %1740 = vmatpush1.bf16.msra.mxu0 0
    %1741 = vmatprep.subr.bf16.mxu0 0
    %1742 = vmatpush1.bf16.msra.mxu0 0
    %1743 = vmatprep.subr.bf16.mxu0 0
    %1744 = vmatpush1.bf16.msra.mxu0 0
    %1745 = vmatprep.subr.bf16.mxu0 %v1297
    %1746 = vmatpush1.bf16.msra.mxu0 %v1296
    %1747 = vmatprep.subr.bf16.mxu0 %v1233
    %1748 = vmatpush1.bf16.msra.mxu0 %v1232
    %1749 = vmatprep.subr.bf16.mxu0 %v1169
    %1750 = vmatpush1.bf16.msra.mxu0 %v1168
    %1751 = vmatprep.subr.bf16.mxu0 %v1105
    %1752 = vmatpush1.bf16.msra.mxu0 %v1104
    %1753 = vmatprep.subr.bf16.mxu0 0
    %1754 = vmatpush2.bf16.msra.mxu0 0
    %1755 = vmatprep.subr.bf16.mxu0 0
    %1756 = vmatpush2.bf16.msra.mxu0 0
    %1757 = vmatprep.subr.bf16.mxu0 0
    %1758 = vmatpush2.bf16.msra.mxu0 0
    %1759 = vmatprep.subr.bf16.mxu0 0
    %1760 = vmatpush2.bf16.msra.mxu0 0
    %1761 = vmatprep.subr.bf16.mxu0 0
    %1762 = vmatpush2.bf16.msra.mxu0 0
    %1763 = vmatprep.subr.bf16.mxu0 0
    %1764 = vmatpush2.bf16.msra.mxu0 0
    %1765 = vmatprep.subr.bf16.mxu0 0
    %1766 = vmatpush2.bf16.msra.mxu0 0
    %1767 = vmatprep.subr.bf16.mxu0 0
    %1768 = vmatpush2.bf16.msra.mxu0 0
    %1769 = vmatprep.mubr.bf16.mxu0 0
    %1770 = vmatmul.mubr.bf16.gmra.mxu0 %v1612
    %v1771 = vpop.f32.mrf.mxu0
    %v1772 = vadd.f32 0.0, %v1771
    %v1773 = vpop.f32.mrf.mxu0
    %v1774 = vadd.f32 0.0, %v1773
    %v1775 = vpop.f32.mrf.mxu0
    %v1776 = vpop.f32.mrf.mxu0
    %1777 = vdwg.mxu0
    %1778 = vmatprep.subr.bf16.mxu0 0
    %1779 = vmatpush1.bf16.msra.mxu0 0
    %1780 = vmatprep.subr.bf16.mxu0 0
    %1781 = vmatpush1.bf16.msra.mxu0 0
    %1782 = vmatprep.subr.bf16.mxu0 0
    %1783 = vmatpush1.bf16.msra.mxu0 0
    %1784 = vmatprep.subr.bf16.mxu0 0
    %1785 = vmatpush1.bf16.msra.mxu0 0
    %1786 = vmatprep.subr.bf16.mxu0 %v1299
    %1787 = vmatpush1.bf16.msra.mxu0 %v1298
    %1788 = vmatprep.subr.bf16.mxu0 %v1235
    %1789 = vmatpush1.bf16.msra.mxu0 %v1234
    %1790 = vmatprep.subr.bf16.mxu0 %v1171
    %1791 = vmatpush1.bf16.msra.mxu0 %v1170
    %1792 = vmatprep.subr.bf16.mxu0 %v1107
    %1793 = vmatpush1.bf16.msra.mxu0 %v1106
    %1794 = vmatprep.subr.bf16.mxu0 0
    %1795 = vmatpush2.bf16.msra.mxu0 0
    %1796 = vmatprep.subr.bf16.mxu0 0
    %1797 = vmatpush2.bf16.msra.mxu0 0
    %1798 = vmatprep.subr.bf16.mxu0 0
    %1799 = vmatpush2.bf16.msra.mxu0 0
    %1800 = vmatprep.subr.bf16.mxu0 0
    %1801 = vmatpush2.bf16.msra.mxu0 0
    %1802 = vmatprep.subr.bf16.mxu0 0
    %1803 = vmatpush2.bf16.msra.mxu0 0
    %1804 = vmatprep.subr.bf16.mxu0 0
    %1805 = vmatpush2.bf16.msra.mxu0 0
    %1806 = vmatprep.subr.bf16.mxu0 0
    %1807 = vmatpush2.bf16.msra.mxu0 0
    %1808 = vmatprep.subr.bf16.mxu0 0
    %1809 = vmatpush2.bf16.msra.mxu0 0
    %1810 = vmatprep.mubr.bf16.mxu0 0
    %1811 = vmatmul.mubr.bf16.gmra.mxu0 %v1612
    %v1812 = vpop.f32.mrf.mxu0
    %v1813 = vadd.f32 0.0, %v1812
    %v1814 = vpop.f32.mrf.mxu0
    %v1815 = vadd.f32 0.0, %v1814
    %v1816 = vpop.f32.mrf.mxu0
    %v1817 = vpop.f32.mrf.mxu0
    %1818 = vdwg.mxu0
    %1819 = vmatprep.subr.bf16.mxu0 0
    %1820 = vmatpush1.bf16.msra.mxu0 0
    %1821 = vmatprep.subr.bf16.mxu0 0
    %1822 = vmatpush1.bf16.msra.mxu0 0
    %1823 = vmatprep.subr.bf16.mxu0 0
    %1824 = vmatpush1.bf16.msra.mxu0 0
    %1825 = vmatprep.subr.bf16.mxu0 0
    %1826 = vmatpush1.bf16.msra.mxu0 0
    %1827 = vmatprep.subr.bf16.mxu0 %v1301
    %1828 = vmatpush1.bf16.msra.mxu0 %v1300
    %1829 = vmatprep.subr.bf16.mxu0 %v1237
    %1830 = vmatpush1.bf16.msra.mxu0 %v1236
    %1831 = vmatprep.subr.bf16.mxu0 %v1173
    %1832 = vmatpush1.bf16.msra.mxu0 %v1172
    %1833 = vmatprep.subr.bf16.mxu0 %v1109
    %1834 = vmatpush1.bf16.msra.mxu0 %v1108
    %1835 = vmatprep.subr.bf16.mxu0 0
    %1836 = vmatpush2.bf16.msra.mxu0 0
    %1837 = vmatprep.subr.bf16.mxu0 0
    %1838 = vmatpush2.bf16.msra.mxu0 0
    %1839 = vmatprep.subr.bf16.mxu0 0
    %1840 = vmatpush2.bf16.msra.mxu0 0
    %1841 = vmatprep.subr.bf16.mxu0 0
    %1842 = vmatpush2.bf16.msra.mxu0 0
    %1843 = vmatprep.subr.bf16.mxu0 0
    %1844 = vmatpush2.bf16.msra.mxu0 0
    %1845 = vmatprep.subr.bf16.mxu0 0
    %1846 = vmatpush2.bf16.msra.mxu0 0
    %1847 = vmatprep.subr.bf16.mxu0 0
    %1848 = vmatpush2.bf16.msra.mxu0 0
    %1849 = vmatprep.subr.bf16.mxu0 0
    %1850 = vmatpush2.bf16.msra.mxu0 0
    %1851 = vmatprep.mubr.bf16.mxu0 0
    %1852 = vmatmul.mubr.bf16.gmra.mxu0 %v1612
    %v1853 = vpop.f32.mrf.mxu0
    %v1854 = vadd.f32 0.0, %v1853
    %v1855 = vpop.f32.mrf.mxu0
    %v1856 = vadd.f32 0.0, %v1855
    %v1857 = vpop.f32.mrf.mxu0
    %v1858 = vpop.f32.mrf.mxu0
    %1859 = vdwg.mxu0
    %1860 = vmatprep.subr.bf16.mxu0 0
    %1861 = vmatpush1.bf16.msra.mxu0 0
    %1862 = vmatprep.subr.bf16.mxu0 0
    %1863 = vmatpush1.bf16.msra.mxu0 0
    %1864 = vmatprep.subr.bf16.mxu0 0
    %1865 = vmatpush1.bf16.msra.mxu0 0
    %1866 = vmatprep.subr.bf16.mxu0 0
    %1867 = vmatpush1.bf16.msra.mxu0 0
    %1868 = vmatprep.subr.bf16.mxu0 %v1303
    %1869 = vmatpush1.bf16.msra.mxu0 %v1302
    %1870 = vmatprep.subr.bf16.mxu0 %v1239
    %1871 = vmatpush1.bf16.msra.mxu0 %v1238
    %1872 = vmatprep.subr.bf16.mxu0 %v1175
    %1873 = vmatpush1.bf16.msra.mxu0 %v1174
    %1874 = vmatprep.subr.bf16.mxu0 %v1111
    %1875 = vmatpush1.bf16.msra.mxu0 %v1110
    %1876 = vmatprep.subr.bf16.mxu0 0
    %1877 = vmatpush2.bf16.msra.mxu0 0
    %1878 = vmatprep.subr.bf16.mxu0 0
    %1879 = vmatpush2.bf16.msra.mxu0 0
    %1880 = vmatprep.subr.bf16.mxu0 0
    %1881 = vmatpush2.bf16.msra.mxu0 0
    %1882 = vmatprep.subr.bf16.mxu0 0
    %1883 = vmatpush2.bf16.msra.mxu0 0
    %1884 = vmatprep.subr.bf16.mxu0 0
    %1885 = vmatpush2.bf16.msra.mxu0 0
    %1886 = vmatprep.subr.bf16.mxu0 0
    %1887 = vmatpush2.bf16.msra.mxu0 0
    %1888 = vmatprep.subr.bf16.mxu0 0
    %1889 = vmatpush2.bf16.msra.mxu0 0
    %1890 = vmatprep.subr.bf16.mxu0 0
    %1891 = vmatpush2.bf16.msra.mxu0 0
    %1892 = vmatprep.mubr.bf16.mxu0 0
    %1893 = vmatmul.mubr.bf16.gmra.mxu0 %v1612
    %v1894 = vpop.f32.mrf.mxu0
    %v1895 = vadd.f32 0.0, %v1894
    %v1896 = vpop.f32.mrf.mxu0
    %v1897 = vadd.f32 0.0, %v1896
    %v1898 = vpop.f32.mrf.mxu0
    %v1899 = vpop.f32.mrf.mxu0
    %1900 = vdwg.mxu0
    %1901 = vmatprep.subr.bf16.mxu0 0
    %1902 = vmatpush1.bf16.msra.mxu0 0
    %1903 = vmatprep.subr.bf16.mxu0 0
    %1904 = vmatpush1.bf16.msra.mxu0 0
    %1905 = vmatprep.subr.bf16.mxu0 0
    %1906 = vmatpush1.bf16.msra.mxu0 0
    %1907 = vmatprep.subr.bf16.mxu0 0
    %1908 = vmatpush1.bf16.msra.mxu0 0
    %1909 = vmatprep.subr.bf16.mxu0 %v1305
    %1910 = vmatpush1.bf16.msra.mxu0 %v1304
    %1911 = vmatprep.subr.bf16.mxu0 %v1241
    %1912 = vmatpush1.bf16.msra.mxu0 %v1240
    %1913 = vmatprep.subr.bf16.mxu0 %v1177
    %1914 = vmatpush1.bf16.msra.mxu0 %v1176
    %1915 = vmatprep.subr.bf16.mxu0 %v1113
    %1916 = vmatpush1.bf16.msra.mxu0 %v1112
    %1917 = vmatprep.subr.bf16.mxu0 0
    %1918 = vmatpush2.bf16.msra.mxu0 0
    %1919 = vmatprep.subr.bf16.mxu0 0
    %1920 = vmatpush2.bf16.msra.mxu0 0
    %1921 = vmatprep.subr.bf16.mxu0 0
    %1922 = vmatpush2.bf16.msra.mxu0 0
    %1923 = vmatprep.subr.bf16.mxu0 0
    %1924 = vmatpush2.bf16.msra.mxu0 0
    %1925 = vmatprep.subr.bf16.mxu0 0
    %1926 = vmatpush2.bf16.msra.mxu0 0
    %1927 = vmatprep.subr.bf16.mxu0 0
    %1928 = vmatpush2.bf16.msra.mxu0 0
    %1929 = vmatprep.subr.bf16.mxu0 0
    %1930 = vmatpush2.bf16.msra.mxu0 0
    %1931 = vmatprep.subr.bf16.mxu0 0
    %1932 = vmatpush2.bf16.msra.mxu0 0
    %1933 = vmatprep.mubr.bf16.mxu0 0
    %1934 = vmatmul.mubr.bf16.gmra.mxu0 %v1612
    %v1935 = vpop.f32.mrf.mxu0
    %v1936 = vadd.f32 0.0, %v1935
    %v1937 = vpop.f32.mrf.mxu0
    %v1938 = vadd.f32 0.0, %v1937
    %v1939 = vpop.f32.mrf.mxu0
    %v1940 = vpop.f32.mrf.mxu0
    %1941 = vdwg.mxu0
    %1942 = vmatprep.subr.bf16.mxu0 0
    %1943 = vmatpush1.bf16.msra.mxu0 0
    %1944 = vmatprep.subr.bf16.mxu0 0
    %1945 = vmatpush1.bf16.msra.mxu0 0
    %1946 = vmatprep.subr.bf16.mxu0 0
    %1947 = vmatpush1.bf16.msra.mxu0 0
    %1948 = vmatprep.subr.bf16.mxu0 0
    %1949 = vmatpush1.bf16.msra.mxu0 0
    %1950 = vmatprep.subr.bf16.mxu0 %v1307
    %1951 = vmatpush1.bf16.msra.mxu0 %v1306
    %1952 = vmatprep.subr.bf16.mxu0 %v1243
    %1953 = vmatpush1.bf16.msra.mxu0 %v1242
    %1954 = vmatprep.subr.bf16.mxu0 %v1179
    %1955 = vmatpush1.bf16.msra.mxu0 %v1178
    %1956 = vmatprep.subr.bf16.mxu0 %v1115
    %1957 = vmatpush1.bf16.msra.mxu0 %v1114
    %1958 = vmatprep.subr.bf16.mxu0 0
    %1959 = vmatpush2.bf16.msra.mxu0 0
    %1960 = vmatprep.subr.bf16.mxu0 0
    %1961 = vmatpush2.bf16.msra.mxu0 0
    %1962 = vmatprep.subr.bf16.mxu0 0
    %1963 = vmatpush2.bf16.msra.mxu0 0
    %1964 = vmatprep.subr.bf16.mxu0 0
    %1965 = vmatpush2.bf16.msra.mxu0 0
    %1966 = vmatprep.subr.bf16.mxu0 0
    %1967 = vmatpush2.bf16.msra.mxu0 0
    %1968 = vmatprep.subr.bf16.mxu0 0
    %1969 = vmatpush2.bf16.msra.mxu0 0
    %1970 = vmatprep.subr.bf16.mxu0 0
    %1971 = vmatpush2.bf16.msra.mxu0 0
    %1972 = vmatprep.subr.bf16.mxu0 0
    %1973 = vmatpush2.bf16.msra.mxu0 0
    %1974 = vmatprep.mubr.bf16.mxu0 0
    %1975 = vmatmul.mubr.bf16.gmra.mxu0 %v1612
    %v1976 = vpop.f32.mrf.mxu0
    %v1977 = vadd.f32 0.0, %v1976
    %v1978 = vpop.f32.mrf.mxu0
    %v1979 = vadd.f32 0.0, %v1978
    %v1980 = vpop.f32.mrf.mxu0
    %v1981 = vpop.f32.mrf.mxu0
    %1982 = vdwg.mxu0
    %1983 = vmatprep.subr.bf16.mxu0 0
    %1984 = vmatpush1.bf16.msra.mxu0 0
    %1985 = vmatprep.subr.bf16.mxu0 0
    %1986 = vmatpush1.bf16.msra.mxu0 0
    %1987 = vmatprep.subr.bf16.mxu0 0
    %1988 = vmatpush1.bf16.msra.mxu0 0
    %1989 = vmatprep.subr.bf16.mxu0 0
    %1990 = vmatpush1.bf16.msra.mxu0 0
    %1991 = vmatprep.subr.bf16.mxu0 %v1309
    %1992 = vmatpush1.bf16.msra.mxu0 %v1308
    %1993 = vmatprep.subr.bf16.mxu0 %v1245
    %1994 = vmatpush1.bf16.msra.mxu0 %v1244
    %1995 = vmatprep.subr.bf16.mxu0 %v1181
    %1996 = vmatpush1.bf16.msra.mxu0 %v1180
    %1997 = vmatprep.subr.bf16.mxu0 %v1117
    %1998 = vmatpush1.bf16.msra.mxu0 %v1116
    %1999 = vmatprep.subr.bf16.mxu0 0
    %2000 = vmatpush2.bf16.msra.mxu0 0
    %2001 = vmatprep.subr.bf16.mxu0 0
    %2002 = vmatpush2.bf16.msra.mxu0 0
    %2003 = vmatprep.subr.bf16.mxu0 0
    %2004 = vmatpush2.bf16.msra.mxu0 0
    %2005 = vmatprep.subr.bf16.mxu0 0
    %2006 = vmatpush2.bf16.msra.mxu0 0
    %2007 = vmatprep.subr.bf16.mxu0 0
    %2008 = vmatpush2.bf16.msra.mxu0 0
    %2009 = vmatprep.subr.bf16.mxu0 0
    %2010 = vmatpush2.bf16.msra.mxu0 0
    %2011 = vmatprep.subr.bf16.mxu0 0
    %2012 = vmatpush2.bf16.msra.mxu0 0
    %2013 = vmatprep.subr.bf16.mxu0 0
    %2014 = vmatpush2.bf16.msra.mxu0 0
    %2015 = vmatprep.mubr.bf16.mxu0 0
    %2016 = vmatmul.mubr.bf16.gmra.mxu0 %v1612
    %v2017 = vpop.f32.mrf.mxu0
    %v2018 = vadd.f32 0.0, %v2017
    %v2019 = vpop.f32.mrf.mxu0
    %v2020 = vadd.f32 0.0, %v2019
    %v2021 = vpop.f32.mrf.mxu0
    %v2022 = vpop.f32.mrf.mxu0
    %2023 = vdwg.mxu0
    %2024 = vmatprep.subr.bf16.mxu0 0
    %2025 = vmatpush1.bf16.msra.mxu0 0
    %2026 = vmatprep.subr.bf16.mxu0 0
    %2027 = vmatpush1.bf16.msra.mxu0 0
    %2028 = vmatprep.subr.bf16.mxu0 0
    %2029 = vmatpush1.bf16.msra.mxu0 0
    %2030 = vmatprep.subr.bf16.mxu0 0
    %2031 = vmatpush1.bf16.msra.mxu0 0
    %2032 = vmatprep.subr.bf16.mxu0 %v1311
    %2033 = vmatpush1.bf16.msra.mxu0 %v1310
    %2034 = vmatprep.subr.bf16.mxu0 %v1247
    %2035 = vmatpush1.bf16.msra.mxu0 %v1246
    %2036 = vmatprep.subr.bf16.mxu0 %v1183
    %2037 = vmatpush1.bf16.msra.mxu0 %v1182
    %2038 = vmatprep.subr.bf16.mxu0 %v1119
    %2039 = vmatpush1.bf16.msra.mxu0 %v1118
    %2040 = vmatprep.subr.bf16.mxu0 0
    %2041 = vmatpush2.bf16.msra.mxu0 0
    %2042 = vmatprep.subr.bf16.mxu0 0
    %2043 = vmatpush2.bf16.msra.mxu0 0
    %2044 = vmatprep.subr.bf16.mxu0 0
    %2045 = vmatpush2.bf16.msra.mxu0 0
    %2046 = vmatprep.subr.bf16.mxu0 0
    %2047 = vmatpush2.bf16.msra.mxu0 0
    %2048 = vmatprep.subr.bf16.mxu0 0
    %2049 = vmatpush2.bf16.msra.mxu0 0
    %2050 = vmatprep.subr.bf16.mxu0 0
    %2051 = vmatpush2.bf16.msra.mxu0 0
    %2052 = vmatprep.subr.bf16.mxu0 0
    %2053 = vmatpush2.bf16.msra.mxu0 0
    %2054 = vmatprep.subr.bf16.mxu0 0
    %2055 = vmatpush2.bf16.msra.mxu0 0
    %2056 = vmatprep.mubr.bf16.mxu0 0
    %2057 = vmatmul.mubr.bf16.gmra.mxu0 %v1612
    %v2058 = vpop.f32.mrf.mxu0
    %v2059 = vadd.f32 0.0, %v2058
    %v2060 = vpop.f32.mrf.mxu0
    %v2061 = vadd.f32 0.0, %v2060
    %v2062 = vpop.f32.mrf.mxu0
    %v2063 = vpop.f32.mrf.mxu0
    %2064 = vdwg.mxu0
    %2065 = vmatprep.subr.bf16.mxu0 0
    %2066 = vmatpush1.bf16.msra.mxu0 0
    %2067 = vmatprep.subr.bf16.mxu0 0
    %2068 = vmatpush1.bf16.msra.mxu0 0
    %2069 = vmatprep.subr.bf16.mxu0 0
    %2070 = vmatpush1.bf16.msra.mxu0 0
    %2071 = vmatprep.subr.bf16.mxu0 0
    %2072 = vmatpush1.bf16.msra.mxu0 0
    %2073 = vmatprep.subr.bf16.mxu0 %v1313
    %2074 = vmatpush1.bf16.msra.mxu0 %v1312
    %2075 = vmatprep.subr.bf16.mxu0 %v1249
    %2076 = vmatpush1.bf16.msra.mxu0 %v1248
    %2077 = vmatprep.subr.bf16.mxu0 %v1185
    %2078 = vmatpush1.bf16.msra.mxu0 %v1184
    %2079 = vmatprep.subr.bf16.mxu0 %v1121
    %2080 = vmatpush1.bf16.msra.mxu0 %v1120
    %2081 = vmatprep.subr.bf16.mxu0 0
    %2082 = vmatpush2.bf16.msra.mxu0 0
    %2083 = vmatprep.subr.bf16.mxu0 0
    %2084 = vmatpush2.bf16.msra.mxu0 0
    %2085 = vmatprep.subr.bf16.mxu0 0
    %2086 = vmatpush2.bf16.msra.mxu0 0
    %2087 = vmatprep.subr.bf16.mxu0 0
    %2088 = vmatpush2.bf16.msra.mxu0 0
    %2089 = vmatprep.subr.bf16.mxu0 0
    %2090 = vmatpush2.bf16.msra.mxu0 0
    %2091 = vmatprep.subr.bf16.mxu0 0
    %2092 = vmatpush2.bf16.msra.mxu0 0
    %2093 = vmatprep.subr.bf16.mxu0 0
    %2094 = vmatpush2.bf16.msra.mxu0 0
    %2095 = vmatprep.subr.bf16.mxu0 0
    %2096 = vmatpush2.bf16.msra.mxu0 0
    %2097 = vmatprep.mubr.bf16.mxu0 0
    %2098 = vmatmul.mubr.bf16.gmra.mxu0 %v1612
    %v2099 = vpop.f32.mrf.mxu0
    %v2100 = vadd.f32 0.0, %v2099
    %v2101 = vpop.f32.mrf.mxu0
    %v2102 = vadd.f32 0.0, %v2101
    %v2103 = vpop.f32.mrf.mxu0
    %v2104 = vpop.f32.mrf.mxu0
    %2105 = vdwg.mxu0
    %2106 = vmatprep.subr.bf16.mxu0 0
    %2107 = vmatpush1.bf16.msra.mxu0 0
    %2108 = vmatprep.subr.bf16.mxu0 0
    %2109 = vmatpush1.bf16.msra.mxu0 0
    %2110 = vmatprep.subr.bf16.mxu0 0
    %2111 = vmatpush1.bf16.msra.mxu0 0
    %2112 = vmatprep.subr.bf16.mxu0 0
    %2113 = vmatpush1.bf16.msra.mxu0 0
    %2114 = vmatprep.subr.bf16.mxu0 %v1315
    %2115 = vmatpush1.bf16.msra.mxu0 %v1314
    %2116 = vmatprep.subr.bf16.mxu0 %v1251
    %2117 = vmatpush1.bf16.msra.mxu0 %v1250
    %2118 = vmatprep.subr.bf16.mxu0 %v1187
    %2119 = vmatpush1.bf16.msra.mxu0 %v1186
    %2120 = vmatprep.subr.bf16.mxu0 %v1123
    %2121 = vmatpush1.bf16.msra.mxu0 %v1122
    %2122 = vmatprep.subr.bf16.mxu0 0
    %2123 = vmatpush2.bf16.msra.mxu0 0
    %2124 = vmatprep.subr.bf16.mxu0 0
    %2125 = vmatpush2.bf16.msra.mxu0 0
    %2126 = vmatprep.subr.bf16.mxu0 0
    %2127 = vmatpush2.bf16.msra.mxu0 0
    %2128 = vmatprep.subr.bf16.mxu0 0
    %2129 = vmatpush2.bf16.msra.mxu0 0
    %2130 = vmatprep.subr.bf16.mxu0 0
    %2131 = vmatpush2.bf16.msra.mxu0 0
    %2132 = vmatprep.subr.bf16.mxu0 0
    %2133 = vmatpush2.bf16.msra.mxu0 0
    %2134 = vmatprep.subr.bf16.mxu0 0
    %2135 = vmatpush2.bf16.msra.mxu0 0
    %2136 = vmatprep.subr.bf16.mxu0 0
    %2137 = vmatpush2.bf16.msra.mxu0 0
    %2138 = vmatprep.mubr.bf16.mxu0 0
    %2139 = vmatmul.mubr.bf16.gmra.mxu0 %v1612
    %v2140 = vpop.f32.mrf.mxu0
    %v2141 = vadd.f32 0.0, %v2140
    %v2142 = vpop.f32.mrf.mxu0
    %v2143 = vadd.f32 0.0, %v2142
    %v2144 = vpop.f32.mrf.mxu0
    %v2145 = vpop.f32.mrf.mxu0
    %2146 = vdwg.mxu0
    %2147 = vmatprep.subr.bf16.mxu0 0
    %2148 = vmatpush1.bf16.msra.mxu0 0
    %2149 = vmatprep.subr.bf16.mxu0 0
    %2150 = vmatpush1.bf16.msra.mxu0 0
    %2151 = vmatprep.subr.bf16.mxu0 0
    %2152 = vmatpush1.bf16.msra.mxu0 0
    %2153 = vmatprep.subr.bf16.mxu0 0
    %2154 = vmatpush1.bf16.msra.mxu0 0
    %2155 = vmatprep.subr.bf16.mxu0 %v1317
    %2156 = vmatpush1.bf16.msra.mxu0 %v1316
    %2157 = vmatprep.subr.bf16.mxu0 %v1253
    %2158 = vmatpush1.bf16.msra.mxu0 %v1252
    %2159 = vmatprep.subr.bf16.mxu0 %v1189
    %2160 = vmatpush1.bf16.msra.mxu0 %v1188
    %2161 = vmatprep.subr.bf16.mxu0 %v1125
    %2162 = vmatpush1.bf16.msra.mxu0 %v1124
    %2163 = vmatprep.subr.bf16.mxu0 0
    %2164 = vmatpush2.bf16.msra.mxu0 0
    %2165 = vmatprep.subr.bf16.mxu0 0
    %2166 = vmatpush2.bf16.msra.mxu0 0
    %2167 = vmatprep.subr.bf16.mxu0 0
    %2168 = vmatpush2.bf16.msra.mxu0 0
    %2169 = vmatprep.subr.bf16.mxu0 0
    %2170 = vmatpush2.bf16.msra.mxu0 0
    %2171 = vmatprep.subr.bf16.mxu0 0
    %2172 = vmatpush2.bf16.msra.mxu0 0
    %2173 = vmatprep.subr.bf16.mxu0 0
    %2174 = vmatpush2.bf16.msra.mxu0 0
    %2175 = vmatprep.subr.bf16.mxu0 0
    %2176 = vmatpush2.bf16.msra.mxu0 0
    %2177 = vmatprep.subr.bf16.mxu0 0
    %2178 = vmatpush2.bf16.msra.mxu0 0
    %2179 = vmatprep.mubr.bf16.mxu0 0
    %2180 = vmatmul.mubr.bf16.gmra.mxu0 %v1612
    %v2181 = vpop.f32.mrf.mxu0
    %v2182 = vadd.f32 0.0, %v2181
    %v2183 = vpop.f32.mrf.mxu0
    %v2184 = vadd.f32 0.0, %v2183
    %v2185 = vpop.f32.mrf.mxu0
    %v2186 = vpop.f32.mrf.mxu0
    %2187 = vdwg.mxu0
    %2188 = vmatprep.subr.bf16.mxu0 0
    %2189 = vmatpush1.bf16.msra.mxu0 0
    %2190 = vmatprep.subr.bf16.mxu0 0
    %2191 = vmatpush1.bf16.msra.mxu0 0
    %2192 = vmatprep.subr.bf16.mxu0 0
    %2193 = vmatpush1.bf16.msra.mxu0 0
    %2194 = vmatprep.subr.bf16.mxu0 0
    %2195 = vmatpush1.bf16.msra.mxu0 0
    %2196 = vmatprep.subr.bf16.mxu0 %v1319
    %2197 = vmatpush1.bf16.msra.mxu0 %v1318
    %2198 = vmatprep.subr.bf16.mxu0 %v1255
    %2199 = vmatpush1.bf16.msra.mxu0 %v1254
    %2200 = vmatprep.subr.bf16.mxu0 %v1191
    %2201 = vmatpush1.bf16.msra.mxu0 %v1190
    %2202 = vmatprep.subr.bf16.mxu0 %v1127
    %2203 = vmatpush1.bf16.msra.mxu0 %v1126
    %2204 = vmatprep.subr.bf16.mxu0 0
    %2205 = vmatpush2.bf16.msra.mxu0 0
    %2206 = vmatprep.subr.bf16.mxu0 0
    %2207 = vmatpush2.bf16.msra.mxu0 0
    %2208 = vmatprep.subr.bf16.mxu0 0
    %2209 = vmatpush2.bf16.msra.mxu0 0
    %2210 = vmatprep.subr.bf16.mxu0 0
    %2211 = vmatpush2.bf16.msra.mxu0 0
    %2212 = vmatprep.subr.bf16.mxu0 0
    %2213 = vmatpush2.bf16.msra.mxu0 0
    %2214 = vmatprep.subr.bf16.mxu0 0
    %2215 = vmatpush2.bf16.msra.mxu0 0
    %2216 = vmatprep.subr.bf16.mxu0 0
    %2217 = vmatpush2.bf16.msra.mxu0 0
    %2218 = vmatprep.subr.bf16.mxu0 0
    %2219 = vmatpush2.bf16.msra.mxu0 0
    %2220 = vmatprep.mubr.bf16.mxu0 0
    %2221 = vmatmul.mubr.bf16.gmra.mxu0 %v1612
    %v2222 = vpop.f32.mrf.mxu0
    %v2223 = vadd.f32 0.0, %v2222
    %v2224 = vpop.f32.mrf.mxu0
    %v2225 = vadd.f32 0.0, %v2224
    %v2226 = vpop.f32.mrf.mxu0
    %v2227 = vpop.f32.mrf.mxu0
    %2228 = vdwg.mxu0
    %2229 = vmatprep.subr.bf16.mxu0 0
    %2230 = vmatpush1.bf16.msra.mxu0 0
    %2231 = vmatprep.subr.bf16.mxu0 0
    %2232 = vmatpush1.bf16.msra.mxu0 0
    %2233 = vmatprep.subr.bf16.mxu0 0
    %2234 = vmatpush1.bf16.msra.mxu0 0
    %2235 = vmatprep.subr.bf16.mxu0 0
    %2236 = vmatpush1.bf16.msra.mxu0 0
    %2237 = vmatprep.subr.bf16.mxu0 %v1321
    %2238 = vmatpush1.bf16.msra.mxu0 %v1320
    %2239 = vmatprep.subr.bf16.mxu0 %v1257
    %2240 = vmatpush1.bf16.msra.mxu0 %v1256
    %2241 = vmatprep.subr.bf16.mxu0 %v1193
    %2242 = vmatpush1.bf16.msra.mxu0 %v1192
    %2243 = vmatprep.subr.bf16.mxu0 %v1129
    %2244 = vmatpush1.bf16.msra.mxu0 %v1128
    %2245 = vmatprep.subr.bf16.mxu0 0
    %2246 = vmatpush2.bf16.msra.mxu0 0
    %2247 = vmatprep.subr.bf16.mxu0 0
    %2248 = vmatpush2.bf16.msra.mxu0 0
    %2249 = vmatprep.subr.bf16.mxu0 0
    %2250 = vmatpush2.bf16.msra.mxu0 0
    %2251 = vmatprep.subr.bf16.mxu0 0
    %2252 = vmatpush2.bf16.msra.mxu0 0
    %2253 = vmatprep.subr.bf16.mxu0 0
    %2254 = vmatpush2.bf16.msra.mxu0 0
    %2255 = vmatprep.subr.bf16.mxu0 0
    %2256 = vmatpush2.bf16.msra.mxu0 0
    %2257 = vmatprep.subr.bf16.mxu0 0
    %2258 = vmatpush2.bf16.msra.mxu0 0
    %2259 = vmatprep.subr.bf16.mxu0 0
    %2260 = vmatpush2.bf16.msra.mxu0 0
    %2261 = vmatprep.mubr.bf16.mxu0 0
    %2262 = vmatmul.mubr.bf16.gmra.mxu0 %v1612
    %v2263 = vpop.f32.mrf.mxu0
    %v2264 = vadd.f32 0.0, %v2263
    %v2265 = vpop.f32.mrf.mxu0
    %v2266 = vadd.f32 0.0, %v2265
    %v2267 = vpop.f32.mrf.mxu0
    %v2268 = vpop.f32.mrf.mxu0
    %2269 = vdwg.mxu0
    %2270 = vmatprep.subr.bf16.mxu0 0
    %2271 = vmatpush1.bf16.msra.mxu0 0
    %2272 = vmatprep.subr.bf16.mxu0 0
    %2273 = vmatpush1.bf16.msra.mxu0 0
    %2274 = vmatprep.subr.bf16.mxu0 0
    %2275 = vmatpush1.bf16.msra.mxu0 0
    %2276 = vmatprep.subr.bf16.mxu0 0
    %2277 = vmatpush1.bf16.msra.mxu0 0
    %2278 = vmatprep.subr.bf16.mxu0 %v1323
    %2279 = vmatpush1.bf16.msra.mxu0 %v1322
    %2280 = vmatprep.subr.bf16.mxu0 %v1259
    %2281 = vmatpush1.bf16.msra.mxu0 %v1258
    %2282 = vmatprep.subr.bf16.mxu0 %v1195
    %2283 = vmatpush1.bf16.msra.mxu0 %v1194
    %2284 = vmatprep.subr.bf16.mxu0 %v1131
    %2285 = vmatpush1.bf16.msra.mxu0 %v1130
    %2286 = vmatprep.subr.bf16.mxu0 0
    %2287 = vmatpush2.bf16.msra.mxu0 0
    %2288 = vmatprep.subr.bf16.mxu0 0
    %2289 = vmatpush2.bf16.msra.mxu0 0
    %2290 = vmatprep.subr.bf16.mxu0 0
    %2291 = vmatpush2.bf16.msra.mxu0 0
    %2292 = vmatprep.subr.bf16.mxu0 0
    %2293 = vmatpush2.bf16.msra.mxu0 0
    %2294 = vmatprep.subr.bf16.mxu0 0
    %2295 = vmatpush2.bf16.msra.mxu0 0
    %2296 = vmatprep.subr.bf16.mxu0 0
    %2297 = vmatpush2.bf16.msra.mxu0 0
    %2298 = vmatprep.subr.bf16.mxu0 0
    %2299 = vmatpush2.bf16.msra.mxu0 0
    %2300 = vmatprep.subr.bf16.mxu0 0
    %2301 = vmatpush2.bf16.msra.mxu0 0
    %2302 = vmatprep.mubr.bf16.mxu0 0
    %2303 = vmatmul.mubr.bf16.gmra.mxu0 %v1612
    %v2304 = vpop.f32.mrf.mxu0
    %v2305 = vadd.f32 0.0, %v2304
    %v2306 = vpop.f32.mrf.mxu0
    %v2307 = vadd.f32 0.0, %v2306
    %v2308 = vpop.f32.mrf.mxu0
    %v2309 = vpop.f32.mrf.mxu0
    %2310 = vdwg.mxu0
    %2311 = vmatprep.subr.bf16.mxu0 0
    %2312 = vmatpush1.bf16.msra.mxu0 0
    %2313 = vmatprep.subr.bf16.mxu0 0
    %2314 = vmatpush1.bf16.msra.mxu0 0
    %2315 = vmatprep.subr.bf16.mxu0 0
    %2316 = vmatpush1.bf16.msra.mxu0 0
    %2317 = vmatprep.subr.bf16.mxu0 0
    %2318 = vmatpush1.bf16.msra.mxu0 0
    %2319 = vmatprep.subr.bf16.mxu0 %v1325
    %2320 = vmatpush1.bf16.msra.mxu0 %v1324
    %2321 = vmatprep.subr.bf16.mxu0 %v1261
    %2322 = vmatpush1.bf16.msra.mxu0 %v1260
    %2323 = vmatprep.subr.bf16.mxu0 %v1197
    %2324 = vmatpush1.bf16.msra.mxu0 %v1196
    %2325 = vmatprep.subr.bf16.mxu0 %v1133
    %2326 = vmatpush1.bf16.msra.mxu0 %v1132
    %2327 = vmatprep.subr.bf16.mxu0 0
    %2328 = vmatpush2.bf16.msra.mxu0 0
    %2329 = vmatprep.subr.bf16.mxu0 0
    %2330 = vmatpush2.bf16.msra.mxu0 0
    %2331 = vmatprep.subr.bf16.mxu0 0
    %2332 = vmatpush2.bf16.msra.mxu0 0
    %2333 = vmatprep.subr.bf16.mxu0 0
    %2334 = vmatpush2.bf16.msra.mxu0 0
    %2335 = vmatprep.subr.bf16.mxu0 0
    %2336 = vmatpush2.bf16.msra.mxu0 0
    %2337 = vmatprep.subr.bf16.mxu0 0
    %2338 = vmatpush2.bf16.msra.mxu0 0
    %2339 = vmatprep.subr.bf16.mxu0 0
    %2340 = vmatpush2.bf16.msra.mxu0 0
    %2341 = vmatprep.subr.bf16.mxu0 0
    %2342 = vmatpush2.bf16.msra.mxu0 0
    %2343 = vmatprep.mubr.bf16.mxu0 0
    %2344 = vmatmul.mubr.bf16.gmra.mxu0 %v1612
    %v2345 = vpop.f32.mrf.mxu0
    %v2346 = vadd.f32 0.0, %v2345
    %v2347 = vpop.f32.mrf.mxu0
    %v2348 = vadd.f32 0.0, %v2347
    %v2349 = vpop.f32.mrf.mxu0
    %v2350 = vpop.f32.mrf.mxu0
    %2351 = vdwg.mxu0
    %2352 = vmatprep.subr.bf16.mxu0 0
    %2353 = vmatpush1.bf16.msra.mxu0 0
    %2354 = vmatprep.subr.bf16.mxu0 0
    %2355 = vmatpush1.bf16.msra.mxu0 0
    %2356 = vmatprep.subr.bf16.mxu0 0
    %2357 = vmatpush1.bf16.msra.mxu0 0
    %2358 = vmatprep.subr.bf16.mxu0 0
    %2359 = vmatpush1.bf16.msra.mxu0 0
    %2360 = vmatprep.subr.bf16.mxu0 %v1327
    %2361 = vmatpush1.bf16.msra.mxu0 %v1326
    %2362 = vmatprep.subr.bf16.mxu0 %v1263
    %2363 = vmatpush1.bf16.msra.mxu0 %v1262
    %2364 = vmatprep.subr.bf16.mxu0 %v1199
    %2365 = vmatpush1.bf16.msra.mxu0 %v1198
    %2366 = vmatprep.subr.bf16.mxu0 %v1135
    %2367 = vmatpush1.bf16.msra.mxu0 %v1134
    %2368 = vmatprep.subr.bf16.mxu0 0
    %2369 = vmatpush2.bf16.msra.mxu0 0
    %2370 = vmatprep.subr.bf16.mxu0 0
    %2371 = vmatpush2.bf16.msra.mxu0 0
    %2372 = vmatprep.subr.bf16.mxu0 0
    %2373 = vmatpush2.bf16.msra.mxu0 0
    %2374 = vmatprep.subr.bf16.mxu0 0
    %2375 = vmatpush2.bf16.msra.mxu0 0
    %2376 = vmatprep.subr.bf16.mxu0 0
    %2377 = vmatpush2.bf16.msra.mxu0 0
    %2378 = vmatprep.subr.bf16.mxu0 0
    %2379 = vmatpush2.bf16.msra.mxu0 0
    %2380 = vmatprep.subr.bf16.mxu0 0
    %2381 = vmatpush2.bf16.msra.mxu0 0
    %2382 = vmatprep.subr.bf16.mxu0 0
    %2383 = vmatpush2.bf16.msra.mxu0 0
    %2384 = vmatprep.mubr.bf16.mxu0 0
    %2385 = vmatmul.mubr.bf16.gmra.mxu0 %v1612
    %v2386 = vpop.f32.mrf.mxu0
    %v2387 = vadd.f32 0.0, %v2386
    %v2388 = vpop.f32.mrf.mxu0
    %v2389 = vadd.f32 0.0, %v2388
    %v2390 = vpop.f32.mrf.mxu0
    %v2391 = vpop.f32.mrf.mxu0
    %2392 = vdwg.mxu0
    %2393 = vmatprep.subr.bf16.mxu0 0
    %2394 = vmatpush1.bf16.msra.mxu0 0
    %2395 = vmatprep.subr.bf16.mxu0 0
    %2396 = vmatpush1.bf16.msra.mxu0 0
    %2397 = vmatprep.subr.bf16.mxu0 0
    %2398 = vmatpush1.bf16.msra.mxu0 0
    %2399 = vmatprep.subr.bf16.mxu0 0
    %2400 = vmatpush1.bf16.msra.mxu0 0
    %2401 = vmatprep.subr.bf16.mxu0 %v1329
    %2402 = vmatpush1.bf16.msra.mxu0 %v1328
    %2403 = vmatprep.subr.bf16.mxu0 %v1265
    %2404 = vmatpush1.bf16.msra.mxu0 %v1264
    %2405 = vmatprep.subr.bf16.mxu0 %v1201
    %2406 = vmatpush1.bf16.msra.mxu0 %v1200
    %2407 = vmatprep.subr.bf16.mxu0 %v1137
    %2408 = vmatpush1.bf16.msra.mxu0 %v1136
    %2409 = vmatprep.subr.bf16.mxu0 0
    %2410 = vmatpush2.bf16.msra.mxu0 0
    %2411 = vmatprep.subr.bf16.mxu0 0
    %2412 = vmatpush2.bf16.msra.mxu0 0
    %2413 = vmatprep.subr.bf16.mxu0 0
    %2414 = vmatpush2.bf16.msra.mxu0 0
    %2415 = vmatprep.subr.bf16.mxu0 0
    %2416 = vmatpush2.bf16.msra.mxu0 0
    %2417 = vmatprep.subr.bf16.mxu0 0
    %2418 = vmatpush2.bf16.msra.mxu0 0
    %2419 = vmatprep.subr.bf16.mxu0 0
    %2420 = vmatpush2.bf16.msra.mxu0 0
    %2421 = vmatprep.subr.bf16.mxu0 0
    %2422 = vmatpush2.bf16.msra.mxu0 0
    %2423 = vmatprep.subr.bf16.mxu0 0
    %2424 = vmatpush2.bf16.msra.mxu0 0
    %2425 = vmatprep.mubr.bf16.mxu0 0
    %2426 = vmatmul.mubr.bf16.gmra.mxu0 %v1612
    %v2427 = vpop.f32.mrf.mxu0
    %v2428 = vadd.f32 0.0, %v2427
    %v2429 = vpop.f32.mrf.mxu0
    %v2430 = vadd.f32 0.0, %v2429
    %v2431 = vpop.f32.mrf.mxu0
    %v2432 = vpop.f32.mrf.mxu0
    %2433 = vdwg.mxu0
    %2434 = vmatprep.subr.bf16.mxu0 0
    %2435 = vmatpush1.bf16.msra.mxu0 0
    %2436 = vmatprep.subr.bf16.mxu0 0
    %2437 = vmatpush1.bf16.msra.mxu0 0
    %2438 = vmatprep.subr.bf16.mxu0 0
    %2439 = vmatpush1.bf16.msra.mxu0 0
    %2440 = vmatprep.subr.bf16.mxu0 0
    %2441 = vmatpush1.bf16.msra.mxu0 0
    %2442 = vmatprep.subr.bf16.mxu0 %v1331
    %2443 = vmatpush1.bf16.msra.mxu0 %v1330
    %2444 = vmatprep.subr.bf16.mxu0 %v1267
    %2445 = vmatpush1.bf16.msra.mxu0 %v1266
    %2446 = vmatprep.subr.bf16.mxu0 %v1203
    %2447 = vmatpush1.bf16.msra.mxu0 %v1202
    %2448 = vmatprep.subr.bf16.mxu0 %v1139
    %2449 = vmatpush1.bf16.msra.mxu0 %v1138
    %2450 = vmatprep.subr.bf16.mxu0 0
    %2451 = vmatpush2.bf16.msra.mxu0 0
    %2452 = vmatprep.subr.bf16.mxu0 0
    %2453 = vmatpush2.bf16.msra.mxu0 0
    %2454 = vmatprep.subr.bf16.mxu0 0
    %2455 = vmatpush2.bf16.msra.mxu0 0
    %2456 = vmatprep.subr.bf16.mxu0 0
    %2457 = vmatpush2.bf16.msra.mxu0 0
    %2458 = vmatprep.subr.bf16.mxu0 0
    %2459 = vmatpush2.bf16.msra.mxu0 0
    %2460 = vmatprep.subr.bf16.mxu0 0
    %2461 = vmatpush2.bf16.msra.mxu0 0
    %2462 = vmatprep.subr.bf16.mxu0 0
    %2463 = vmatpush2.bf16.msra.mxu0 0
    %2464 = vmatprep.subr.bf16.mxu0 0
    %2465 = vmatpush2.bf16.msra.mxu0 0
    %2466 = vmatprep.mubr.bf16.mxu0 0
    %2467 = vmatmul.mubr.bf16.gmra.mxu0 %v1612
    %v2468 = vpop.f32.mrf.mxu0
    %v2469 = vadd.f32 0.0, %v2468
    %v2470 = vpop.f32.mrf.mxu0
    %v2471 = vadd.f32 0.0, %v2470
    %v2472 = vpop.f32.mrf.mxu0
    %v2473 = vpop.f32.mrf.mxu0
    %2474 = vdwg.mxu0
    %2475 = vmatprep.subr.bf16.mxu0 0
    %2476 = vmatpush1.bf16.msra.mxu0 0
    %2477 = vmatprep.subr.bf16.mxu0 0
    %2478 = vmatpush1.bf16.msra.mxu0 0
    %2479 = vmatprep.subr.bf16.mxu0 0
    %2480 = vmatpush1.bf16.msra.mxu0 0
    %2481 = vmatprep.subr.bf16.mxu0 0
    %2482 = vmatpush1.bf16.msra.mxu0 0
    %2483 = vmatprep.subr.bf16.mxu0 %v1333
    %2484 = vmatpush1.bf16.msra.mxu0 %v1332
    %2485 = vmatprep.subr.bf16.mxu0 %v1269
    %2486 = vmatpush1.bf16.msra.mxu0 %v1268
    %2487 = vmatprep.subr.bf16.mxu0 %v1205
    %2488 = vmatpush1.bf16.msra.mxu0 %v1204
    %2489 = vmatprep.subr.bf16.mxu0 %v1141
    %2490 = vmatpush1.bf16.msra.mxu0 %v1140
    %2491 = vmatprep.subr.bf16.mxu0 0
    %2492 = vmatpush2.bf16.msra.mxu0 0
    %2493 = vmatprep.subr.bf16.mxu0 0
    %2494 = vmatpush2.bf16.msra.mxu0 0
    %2495 = vmatprep.subr.bf16.mxu0 0
    %2496 = vmatpush2.bf16.msra.mxu0 0
    %2497 = vmatprep.subr.bf16.mxu0 0
    %2498 = vmatpush2.bf16.msra.mxu0 0
    %2499 = vmatprep.subr.bf16.mxu0 0
    %2500 = vmatpush2.bf16.msra.mxu0 0
    %2501 = vmatprep.subr.bf16.mxu0 0
    %2502 = vmatpush2.bf16.msra.mxu0 0
    %2503 = vmatprep.subr.bf16.mxu0 0
    %2504 = vmatpush2.bf16.msra.mxu0 0
    %2505 = vmatprep.subr.bf16.mxu0 0
    %2506 = vmatpush2.bf16.msra.mxu0 0
    %2507 = vmatprep.mubr.bf16.mxu0 0
    %2508 = vmatmul.mubr.bf16.gmra.mxu0 %v1612
    %v2509 = vpop.f32.mrf.mxu0
    %v2510 = vadd.f32 0.0, %v2509
    %v2511 = vpop.f32.mrf.mxu0
    %v2512 = vadd.f32 0.0, %v2511
    %v2513 = vpop.f32.mrf.mxu0
    %v2514 = vpop.f32.mrf.mxu0
    %2515 = vdwg.mxu0
    %2516 = vmatprep.subr.bf16.mxu0 0
    %2517 = vmatpush1.bf16.msra.mxu0 0
    %2518 = vmatprep.subr.bf16.mxu0 0
    %2519 = vmatpush1.bf16.msra.mxu0 0
    %2520 = vmatprep.subr.bf16.mxu0 0
    %2521 = vmatpush1.bf16.msra.mxu0 0
    %2522 = vmatprep.subr.bf16.mxu0 0
    %2523 = vmatpush1.bf16.msra.mxu0 0
    %2524 = vmatprep.subr.bf16.mxu0 %v1335
    %2525 = vmatpush1.bf16.msra.mxu0 %v1334
    %2526 = vmatprep.subr.bf16.mxu0 %v1271
    %2527 = vmatpush1.bf16.msra.mxu0 %v1270
    %2528 = vmatprep.subr.bf16.mxu0 %v1207
    %2529 = vmatpush1.bf16.msra.mxu0 %v1206
    %2530 = vmatprep.subr.bf16.mxu0 %v1143
    %2531 = vmatpush1.bf16.msra.mxu0 %v1142
    %2532 = vmatprep.subr.bf16.mxu0 0
    %2533 = vmatpush2.bf16.msra.mxu0 0
    %2534 = vmatprep.subr.bf16.mxu0 0
    %2535 = vmatpush2.bf16.msra.mxu0 0
    %2536 = vmatprep.subr.bf16.mxu0 0
    %2537 = vmatpush2.bf16.msra.mxu0 0
    %2538 = vmatprep.subr.bf16.mxu0 0
    %2539 = vmatpush2.bf16.msra.mxu0 0
    %2540 = vmatprep.subr.bf16.mxu0 0
    %2541 = vmatpush2.bf16.msra.mxu0 0
    %2542 = vmatprep.subr.bf16.mxu0 0
    %2543 = vmatpush2.bf16.msra.mxu0 0
    %2544 = vmatprep.subr.bf16.mxu0 0
    %2545 = vmatpush2.bf16.msra.mxu0 0
    %2546 = vmatprep.subr.bf16.mxu0 0
    %2547 = vmatpush2.bf16.msra.mxu0 0
    %2548 = vmatprep.mubr.bf16.mxu0 0
    %2549 = vmatmul.mubr.bf16.gmra.mxu0 %v1612
    %v2550 = vpop.f32.mrf.mxu0
    %v2551 = vadd.f32 0.0, %v2550
    %v2552 = vpop.f32.mrf.mxu0
    %v2553 = vadd.f32 0.0, %v2552
    %v2554 = vpop.f32.mrf.mxu0
    %v2555 = vpop.f32.mrf.mxu0
    %2556 = vdwg.mxu0
    %2557 = vmatprep.subr.bf16.mxu0 0
    %2558 = vmatpush1.bf16.msra.mxu0 0
    %2559 = vmatprep.subr.bf16.mxu0 0
    %2560 = vmatpush1.bf16.msra.mxu0 0
    %2561 = vmatprep.subr.bf16.mxu0 0
    %2562 = vmatpush1.bf16.msra.mxu0 0
    %2563 = vmatprep.subr.bf16.mxu0 0
    %2564 = vmatpush1.bf16.msra.mxu0 0
    %2565 = vmatprep.subr.bf16.mxu0 %v1337
    %2566 = vmatpush1.bf16.msra.mxu0 %v1336
    %2567 = vmatprep.subr.bf16.mxu0 %v1273
    %2568 = vmatpush1.bf16.msra.mxu0 %v1272
    %2569 = vmatprep.subr.bf16.mxu0 %v1209
    %2570 = vmatpush1.bf16.msra.mxu0 %v1208
    %2571 = vmatprep.subr.bf16.mxu0 %v1145
    %2572 = vmatpush1.bf16.msra.mxu0 %v1144
    %2573 = vmatprep.subr.bf16.mxu0 0
    %2574 = vmatpush2.bf16.msra.mxu0 0
    %2575 = vmatprep.subr.bf16.mxu0 0
    %2576 = vmatpush2.bf16.msra.mxu0 0
    %2577 = vmatprep.subr.bf16.mxu0 0
    %2578 = vmatpush2.bf16.msra.mxu0 0
    %2579 = vmatprep.subr.bf16.mxu0 0
    %2580 = vmatpush2.bf16.msra.mxu0 0
    %2581 = vmatprep.subr.bf16.mxu0 0
    %2582 = vmatpush2.bf16.msra.mxu0 0
    %2583 = vmatprep.subr.bf16.mxu0 0
    %2584 = vmatpush2.bf16.msra.mxu0 0
    %2585 = vmatprep.subr.bf16.mxu0 0
    %2586 = vmatpush2.bf16.msra.mxu0 0
    %2587 = vmatprep.subr.bf16.mxu0 0
    %2588 = vmatpush2.bf16.msra.mxu0 0
    %2589 = vmatprep.mubr.bf16.mxu0 0
    %2590 = vmatmul.mubr.bf16.gmra.mxu0 %v1612
    %v2591 = vpop.f32.mrf.mxu0
    %v2592 = vadd.f32 0.0, %v2591
    %v2593 = vpop.f32.mrf.mxu0
    %v2594 = vadd.f32 0.0, %v2593
    %v2595 = vpop.f32.mrf.mxu0
    %v2596 = vpop.f32.mrf.mxu0
    %2597 = vdwg.mxu0
    %2598 = vmatprep.subr.bf16.mxu0 0
    %2599 = vmatpush1.bf16.msra.mxu0 0
    %2600 = vmatprep.subr.bf16.mxu0 0
    %2601 = vmatpush1.bf16.msra.mxu0 0
    %2602 = vmatprep.subr.bf16.mxu0 0
    %2603 = vmatpush1.bf16.msra.mxu0 0
    %2604 = vmatprep.subr.bf16.mxu0 0
    %2605 = vmatpush1.bf16.msra.mxu0 0
    %2606 = vmatprep.subr.bf16.mxu0 %v1339
    %2607 = vmatpush1.bf16.msra.mxu0 %v1338
    %2608 = vmatprep.subr.bf16.mxu0 %v1275
    %2609 = vmatpush1.bf16.msra.mxu0 %v1274
    %2610 = vmatprep.subr.bf16.mxu0 %v1211
    %2611 = vmatpush1.bf16.msra.mxu0 %v1210
    %2612 = vmatprep.subr.bf16.mxu0 %v1147
    %2613 = vmatpush1.bf16.msra.mxu0 %v1146
    %2614 = vmatprep.subr.bf16.mxu0 0
    %2615 = vmatpush2.bf16.msra.mxu0 0
    %2616 = vmatprep.subr.bf16.mxu0 0
    %2617 = vmatpush2.bf16.msra.mxu0 0
    %2618 = vmatprep.subr.bf16.mxu0 0
    %2619 = vmatpush2.bf16.msra.mxu0 0
    %2620 = vmatprep.subr.bf16.mxu0 0
    %2621 = vmatpush2.bf16.msra.mxu0 0
    %2622 = vmatprep.subr.bf16.mxu0 0
    %2623 = vmatpush2.bf16.msra.mxu0 0
    %2624 = vmatprep.subr.bf16.mxu0 0
    %2625 = vmatpush2.bf16.msra.mxu0 0
    %2626 = vmatprep.subr.bf16.mxu0 0
    %2627 = vmatpush2.bf16.msra.mxu0 0
    %2628 = vmatprep.subr.bf16.mxu0 0
    %2629 = vmatpush2.bf16.msra.mxu0 0
    %2630 = vmatprep.mubr.bf16.mxu0 0
    %2631 = vmatmul.mubr.bf16.gmra.mxu0 %v1612
    %v2632 = vpop.f32.mrf.mxu0
    %v2633 = vadd.f32 0.0, %v2632
    %v2634 = vpop.f32.mrf.mxu0
    %v2635 = vadd.f32 0.0, %v2634
    %v2636 = vpop.f32.mrf.mxu0
    %v2637 = vpop.f32.mrf.mxu0
    %2638 = vdwg.mxu0
    %2639 = vmatprep.subr.bf16.mxu0 0
    %2640 = vmatpush1.bf16.msra.mxu0 0
    %2641 = vmatprep.subr.bf16.mxu0 0
    %2642 = vmatpush1.bf16.msra.mxu0 0
    %2643 = vmatprep.subr.bf16.mxu0 0
    %2644 = vmatpush1.bf16.msra.mxu0 0
    %2645 = vmatprep.subr.bf16.mxu0 0
    %2646 = vmatpush1.bf16.msra.mxu0 0
    %2647 = vmatprep.subr.bf16.mxu0 %v1341
    %2648 = vmatpush1.bf16.msra.mxu0 %v1340
    %2649 = vmatprep.subr.bf16.mxu0 %v1277
    %2650 = vmatpush1.bf16.msra.mxu0 %v1276
    %2651 = vmatprep.subr.bf16.mxu0 %v1213
    %2652 = vmatpush1.bf16.msra.mxu0 %v1212
    %2653 = vmatprep.subr.bf16.mxu0 %v1149
    %2654 = vmatpush1.bf16.msra.mxu0 %v1148
    %2655 = vmatprep.subr.bf16.mxu0 0
    %2656 = vmatpush2.bf16.msra.mxu0 0
    %2657 = vmatprep.subr.bf16.mxu0 0
    %2658 = vmatpush2.bf16.msra.mxu0 0
    %2659 = vmatprep.subr.bf16.mxu0 0
    %2660 = vmatpush2.bf16.msra.mxu0 0
    %2661 = vmatprep.subr.bf16.mxu0 0
    %2662 = vmatpush2.bf16.msra.mxu0 0
    %2663 = vmatprep.subr.bf16.mxu0 0
    %2664 = vmatpush2.bf16.msra.mxu0 0
    %2665 = vmatprep.subr.bf16.mxu0 0
    %2666 = vmatpush2.bf16.msra.mxu0 0
    %2667 = vmatprep.subr.bf16.mxu0 0
    %2668 = vmatpush2.bf16.msra.mxu0 0
    %2669 = vmatprep.subr.bf16.mxu0 0
    %2670 = vmatpush2.bf16.msra.mxu0 0
    %2671 = vmatprep.mubr.bf16.mxu0 0
    %2672 = vmatmul.mubr.bf16.gmra.mxu0 %v1612
    %v2673 = vpop.f32.mrf.mxu0
    %v2674 = vadd.f32 0.0, %v2673
    %v2675 = vpop.f32.mrf.mxu0
    %v2676 = vadd.f32 0.0, %v2675
    %v2677 = vpop.f32.mrf.mxu0
    %v2678 = vpop.f32.mrf.mxu0
    %2679 = vdwg.mxu0
    %2680 = vmatprep.subr.bf16.mxu0 0
    %2681 = vmatpush1.bf16.msra.mxu0 0
    %2682 = vmatprep.subr.bf16.mxu0 0
    %2683 = vmatpush1.bf16.msra.mxu0 0
    %2684 = vmatprep.subr.bf16.mxu0 0
    %2685 = vmatpush1.bf16.msra.mxu0 0
    %2686 = vmatprep.subr.bf16.mxu0 0
    %2687 = vmatpush1.bf16.msra.mxu0 0
    %2688 = vmatprep.subr.bf16.mxu0 %v1343
    %2689 = vmatpush1.bf16.msra.mxu0 %v1342
    %2690 = vmatprep.subr.bf16.mxu0 %v1279
    %2691 = vmatpush1.bf16.msra.mxu0 %v1278
    %2692 = vmatprep.subr.bf16.mxu0 %v1215
    %2693 = vmatpush1.bf16.msra.mxu0 %v1214
    %2694 = vmatprep.subr.bf16.mxu0 %v1151
    %2695 = vmatpush1.bf16.msra.mxu0 %v1150
    %2696 = vmatprep.subr.bf16.mxu0 0
    %2697 = vmatpush2.bf16.msra.mxu0 0
    %2698 = vmatprep.subr.bf16.mxu0 0
    %2699 = vmatpush2.bf16.msra.mxu0 0
    %2700 = vmatprep.subr.bf16.mxu0 0
    %2701 = vmatpush2.bf16.msra.mxu0 0
    %2702 = vmatprep.subr.bf16.mxu0 0
    %2703 = vmatpush2.bf16.msra.mxu0 0
    %2704 = vmatprep.subr.bf16.mxu0 0
    %2705 = vmatpush2.bf16.msra.mxu0 0
    %2706 = vmatprep.subr.bf16.mxu0 0
    %2707 = vmatpush2.bf16.msra.mxu0 0
    %2708 = vmatprep.subr.bf16.mxu0 0
    %2709 = vmatpush2.bf16.msra.mxu0 0
    %2710 = vmatprep.subr.bf16.mxu0 0
    %2711 = vmatpush2.bf16.msra.mxu0 0
    %2712 = vmatprep.mubr.bf16.mxu0 0
    %2713 = vmatmul.mubr.bf16.gmra.mxu0 %v1612
    %v2714 = vpop.f32.mrf.mxu0
    %v2715 = vadd.f32 0.0, %v2714
    %v2716 = vpop.f32.mrf.mxu0
    %v2717 = vadd.f32 0.0, %v2716
    %v2718 = vpop.f32.mrf.mxu0
    %v2719 = vpop.f32.mrf.mxu0
    %2720 = vdwg.mxu0
    %2721 = vmatprep.subr.bf16.mxu0 0
    %2722 = vmatpush1.bf16.msra.mxu0 0
    %2723 = vmatprep.subr.bf16.mxu0 0
    %2724 = vmatpush1.bf16.msra.mxu0 0
    %2725 = vmatprep.subr.bf16.mxu0 0
    %2726 = vmatpush1.bf16.msra.mxu0 0
    %2727 = vmatprep.subr.bf16.mxu0 0
    %2728 = vmatpush1.bf16.msra.mxu0 0
    %2729 = vmatprep.subr.bf16.mxu0 %v1345
    %2730 = vmatpush1.bf16.msra.mxu0 %v1344
    %2731 = vmatprep.subr.bf16.mxu0 %v1281
    %2732 = vmatpush1.bf16.msra.mxu0 %v1280
    %2733 = vmatprep.subr.bf16.mxu0 %v1217
    %2734 = vmatpush1.bf16.msra.mxu0 %v1216
    %2735 = vmatprep.subr.bf16.mxu0 %v1153
    %2736 = vmatpush1.bf16.msra.mxu0 %v1152
    %2737 = vmatprep.subr.bf16.mxu0 0
    %2738 = vmatpush2.bf16.msra.mxu0 0
    %2739 = vmatprep.subr.bf16.mxu0 0
    %2740 = vmatpush2.bf16.msra.mxu0 0
    %2741 = vmatprep.subr.bf16.mxu0 0
    %2742 = vmatpush2.bf16.msra.mxu0 0
    %2743 = vmatprep.subr.bf16.mxu0 0
    %2744 = vmatpush2.bf16.msra.mxu0 0
    %2745 = vmatprep.subr.bf16.mxu0 0
    %2746 = vmatpush2.bf16.msra.mxu0 0
    %2747 = vmatprep.subr.bf16.mxu0 0
    %2748 = vmatpush2.bf16.msra.mxu0 0
    %2749 = vmatprep.subr.bf16.mxu0 0
    %2750 = vmatpush2.bf16.msra.mxu0 0
    %2751 = vmatprep.subr.bf16.mxu0 0
    %2752 = vmatpush2.bf16.msra.mxu0 0
    %2753 = vmatprep.mubr.bf16.mxu0 0
    %2754 = vmatmul.mubr.bf16.gmra.mxu0 %v1612
    %v2755 = vpop.f32.mrf.mxu0
    %v2756 = vadd.f32 0.0, %v2755
    %v2757 = vpop.f32.mrf.mxu0
    %v2758 = vadd.f32 0.0, %v2757
    %v2759 = vpop.f32.mrf.mxu0
    %v2760 = vpop.f32.mrf.mxu0
    %2761 = vdwg.mxu0
    %2762 = vmatprep.subr.bf16.mxu0 0
    %2763 = vmatpush1.bf16.msra.mxu0 0
    %2764 = vmatprep.subr.bf16.mxu0 0
    %2765 = vmatpush1.bf16.msra.mxu0 0
    %2766 = vmatprep.subr.bf16.mxu0 0
    %2767 = vmatpush1.bf16.msra.mxu0 0
    %2768 = vmatprep.subr.bf16.mxu0 0
    %2769 = vmatpush1.bf16.msra.mxu0 0
    %2770 = vmatprep.subr.bf16.mxu0 %v1347
    %2771 = vmatpush1.bf16.msra.mxu0 %v1346
    %2772 = vmatprep.subr.bf16.mxu0 %v1283
    %2773 = vmatpush1.bf16.msra.mxu0 %v1282
    %2774 = vmatprep.subr.bf16.mxu0 %v1219
    %2775 = vmatpush1.bf16.msra.mxu0 %v1218
    %2776 = vmatprep.subr.bf16.mxu0 %v1155
    %2777 = vmatpush1.bf16.msra.mxu0 %v1154
    %2778 = vmatprep.subr.bf16.mxu0 0
    %2779 = vmatpush2.bf16.msra.mxu0 0
    %2780 = vmatprep.subr.bf16.mxu0 0
    %2781 = vmatpush2.bf16.msra.mxu0 0
    %2782 = vmatprep.subr.bf16.mxu0 0
    %2783 = vmatpush2.bf16.msra.mxu0 0
    %2784 = vmatprep.subr.bf16.mxu0 0
    %2785 = vmatpush2.bf16.msra.mxu0 0
    %2786 = vmatprep.subr.bf16.mxu0 0
    %2787 = vmatpush2.bf16.msra.mxu0 0
    %2788 = vmatprep.subr.bf16.mxu0 0
    %2789 = vmatpush2.bf16.msra.mxu0 0
    %2790 = vmatprep.subr.bf16.mxu0 0
    %2791 = vmatpush2.bf16.msra.mxu0 0
    %2792 = vmatprep.subr.bf16.mxu0 0
    %2793 = vmatpush2.bf16.msra.mxu0 0
    %2794 = vmatprep.mubr.bf16.mxu0 0
    %2795 = vmatmul.mubr.bf16.gmra.mxu0 %v1612
    %v2796 = vpop.f32.mrf.mxu0
    %v2797 = vadd.f32 0.0, %v2796
    %v2798 = vpop.f32.mrf.mxu0
    %v2799 = vadd.f32 0.0, %v2798
    %v2800 = vpop.f32.mrf.mxu0
    %v2801 = vpop.f32.mrf.mxu0
    %2802 = vdwg.mxu0
    %2803 = vmatprep.subr.bf16.mxu0 0
    %2804 = vmatpush1.bf16.msra.mxu0 0
    %2805 = vmatprep.subr.bf16.mxu0 0
    %2806 = vmatpush1.bf16.msra.mxu0 0
    %2807 = vmatprep.subr.bf16.mxu0 0
    %2808 = vmatpush1.bf16.msra.mxu0 0
    %2809 = vmatprep.subr.bf16.mxu0 0
    %2810 = vmatpush1.bf16.msra.mxu0 0
    %2811 = vmatprep.subr.bf16.mxu0 %v1349
    %2812 = vmatpush1.bf16.msra.mxu0 %v1348
    %2813 = vmatprep.subr.bf16.mxu0 %v1285
    %2814 = vmatpush1.bf16.msra.mxu0 %v1284
    %2815 = vmatprep.subr.bf16.mxu0 %v1221
    %2816 = vmatpush1.bf16.msra.mxu0 %v1220
    %2817 = vmatprep.subr.bf16.mxu0 %v1157
    %2818 = vmatpush1.bf16.msra.mxu0 %v1156
    %2819 = vmatprep.subr.bf16.mxu0 0
    %2820 = vmatpush2.bf16.msra.mxu0 0
    %2821 = vmatprep.subr.bf16.mxu0 0
    %2822 = vmatpush2.bf16.msra.mxu0 0
    %2823 = vmatprep.subr.bf16.mxu0 0
    %2824 = vmatpush2.bf16.msra.mxu0 0
    %2825 = vmatprep.subr.bf16.mxu0 0
    %2826 = vmatpush2.bf16.msra.mxu0 0
    %2827 = vmatprep.subr.bf16.mxu0 0
    %2828 = vmatpush2.bf16.msra.mxu0 0
    %2829 = vmatprep.subr.bf16.mxu0 0
    %2830 = vmatpush2.bf16.msra.mxu0 0
    %2831 = vmatprep.subr.bf16.mxu0 0
    %2832 = vmatpush2.bf16.msra.mxu0 0
    %2833 = vmatprep.subr.bf16.mxu0 0
    %2834 = vmatpush2.bf16.msra.mxu0 0
    %2835 = vmatprep.mubr.bf16.mxu0 0
    %2836 = vmatmul.mubr.bf16.gmra.mxu0 %v1612
    %v2837 = vpop.f32.mrf.mxu0
    %v2838 = vadd.f32 0.0, %v2837
    %v2839 = vpop.f32.mrf.mxu0
    %v2840 = vadd.f32 0.0, %v2839
    %v2841 = vpop.f32.mrf.mxu0
    %v2842 = vpop.f32.mrf.mxu0
    %2843 = vdwg.mxu0
    %2844 = vmatprep.subr.bf16.mxu0 0
    %2845 = vmatpush1.bf16.msra.mxu0 0
    %2846 = vmatprep.subr.bf16.mxu0 0
    %2847 = vmatpush1.bf16.msra.mxu0 0
    %2848 = vmatprep.subr.bf16.mxu0 0
    %2849 = vmatpush1.bf16.msra.mxu0 0
    %2850 = vmatprep.subr.bf16.mxu0 0
    %2851 = vmatpush1.bf16.msra.mxu0 0
    %2852 = vmatprep.subr.bf16.mxu0 %v1351
    %2853 = vmatpush1.bf16.msra.mxu0 %v1350
    %2854 = vmatprep.subr.bf16.mxu0 %v1287
    %2855 = vmatpush1.bf16.msra.mxu0 %v1286
    %2856 = vmatprep.subr.bf16.mxu0 %v1223
    %2857 = vmatpush1.bf16.msra.mxu0 %v1222
    %2858 = vmatprep.subr.bf16.mxu0 %v1159
    %2859 = vmatpush1.bf16.msra.mxu0 %v1158
    %2860 = vmatprep.subr.bf16.mxu0 0
    %2861 = vmatpush2.bf16.msra.mxu0 0
    %2862 = vmatprep.subr.bf16.mxu0 0
    %2863 = vmatpush2.bf16.msra.mxu0 0
    %2864 = vmatprep.subr.bf16.mxu0 0
    %2865 = vmatpush2.bf16.msra.mxu0 0
    %2866 = vmatprep.subr.bf16.mxu0 0
    %2867 = vmatpush2.bf16.msra.mxu0 0
    %2868 = vmatprep.subr.bf16.mxu0 0
    %2869 = vmatpush2.bf16.msra.mxu0 0
    %2870 = vmatprep.subr.bf16.mxu0 0
    %2871 = vmatpush2.bf16.msra.mxu0 0
    %2872 = vmatprep.subr.bf16.mxu0 0
    %2873 = vmatpush2.bf16.msra.mxu0 0
    %2874 = vmatprep.subr.bf16.mxu0 0
    %2875 = vmatpush2.bf16.msra.mxu0 0
    %2876 = vmatprep.mubr.bf16.mxu0 0
    %2877 = vmatmul.mubr.bf16.gmra.mxu0 %v1612
    %v2878 = vpop.f32.mrf.mxu0
    %v2879 = vadd.f32 0.0, %v2878
    %v2880 = vpop.f32.mrf.mxu0
    %v2881 = vadd.f32 0.0, %v2880
    %v2882 = vpop.f32.mrf.mxu0
    %v2883 = vpop.f32.mrf.mxu0
    %2884 = vdwg.mxu0
    %2885 = vmatprep.subr.bf16.mxu0 0
    %2886 = vmatpush1.bf16.msra.mxu0 0
    %2887 = vmatprep.subr.bf16.mxu0 0
    %2888 = vmatpush1.bf16.msra.mxu0 0
    %2889 = vmatprep.subr.bf16.mxu0 0
    %2890 = vmatpush1.bf16.msra.mxu0 0
    %2891 = vmatprep.subr.bf16.mxu0 0
    %2892 = vmatpush1.bf16.msra.mxu0 0
    %2893 = vmatprep.subr.bf16.mxu0 %v1353
    %2894 = vmatpush1.bf16.msra.mxu0 %v1352
    %2895 = vmatprep.subr.bf16.mxu0 %v1289
    %2896 = vmatpush1.bf16.msra.mxu0 %v1288
    %2897 = vmatprep.subr.bf16.mxu0 %v1225
    %2898 = vmatpush1.bf16.msra.mxu0 %v1224
    %2899 = vmatprep.subr.bf16.mxu0 %v1161
    %2900 = vmatpush1.bf16.msra.mxu0 %v1160
    %2901 = vmatprep.subr.bf16.mxu0 0
    %2902 = vmatpush2.bf16.msra.mxu0 0
    %2903 = vmatprep.subr.bf16.mxu0 0
    %2904 = vmatpush2.bf16.msra.mxu0 0
    %2905 = vmatprep.subr.bf16.mxu0 0
    %2906 = vmatpush2.bf16.msra.mxu0 0
    %2907 = vmatprep.subr.bf16.mxu0 0
    %2908 = vmatpush2.bf16.msra.mxu0 0
    %2909 = vmatprep.subr.bf16.mxu0 0
    %2910 = vmatpush2.bf16.msra.mxu0 0
    %2911 = vmatprep.subr.bf16.mxu0 0
    %2912 = vmatpush2.bf16.msra.mxu0 0
    %2913 = vmatprep.subr.bf16.mxu0 0
    %2914 = vmatpush2.bf16.msra.mxu0 0
    %2915 = vmatprep.subr.bf16.mxu0 0
    %2916 = vmatpush2.bf16.msra.mxu0 0
    %2917 = vmatprep.mubr.bf16.mxu0 0
    %2918 = vmatmul.mubr.bf16.gmra.mxu0 %v1612
    %v2919 = vpop.f32.mrf.mxu0
    %v2920 = vadd.f32 0.0, %v2919
    %v2921 = vpop.f32.mrf.mxu0
    %v2922 = vadd.f32 0.0, %v2921
    %v2923 = vpop.f32.mrf.mxu0
    %v2924 = vpop.f32.mrf.mxu0
    %2925 = vdwg.mxu0
    %v2990 = vcombine.low %v1649, %v1651
    %v2991 = vcombine.low %v1690, %v1692
    %v2992 = vcombine.low %v1731, %v1733
    %v2993 = vcombine.low %v1772, %v1774
    %v2995 = vunpack.c.l.s4 1966171168
    %v2996 = vunpack.c.0.s8 %v2995
    %v2997 = vlaneseq
    %v2998 = vshrl.u32 %v2997, 7
    %v2999 = vsub.s32 %v2996, %v2998
    %v3000 = vrot.slane %v2990, %v2999
    %v3002 = vunpack.c.l.s4 1966171168
    %v3003 = vunpack.c.0.s8 %v3002
    %v3004 = vlaneseq
    %v3005 = vshrl.u32 %v3004, 7
    %v3006 = vsub.s32 %v3003, %v3005
    %v3007 = vrot.slane %v2991, %v3006
    %v3009 = vunpack.c.l.s4 1966171168
    %v3010 = vunpack.c.0.s8 %v3009
    %v3011 = vlaneseq
    %v3012 = vshrl.u32 %v3011, 7
    %v3013 = vsub.s32 %v3010, %v3012
    %v3014 = vrot.slane %v2992, %v3013
    %v3016 = vunpack.c.l.s4 1966171168
    %v3017 = vunpack.c.0.s8 %v3016
    %v3018 = vlaneseq
    %v3019 = vshrl.u32 %v3018, 7
    %v3020 = vsub.s32 %v3017, %v3019
    %v3021 = vrot.slane %v2993, %v3020
    %v3022 = vcombine.low %v3000, %v3007
    %v3023 = vcombine.high %v3000, %v3007
    %v3024 = vcombine.low %v3014, %v3021
    %v3025 = vcombine.high %v3014, %v3021
    %v3027 = vunpack.c.l.s4 1966171168
    %v3028 = vunpack.c.0.s8 %v3027
    %v3029 = vlaneseq
    %v3030 = vshrl.u32 %v3029, 7
    %v3031 = vsub.s32 %v3028, %v3030
    %v3032 = vrot.slane %v3022, %v3031
    %v3034 = vunpack.c.l.s4 1966171168
    %v3035 = vunpack.c.0.s8 %v3034
    %v3036 = vlaneseq
    %v3037 = vshrl.u32 %v3036, 7
    %v3038 = vsub.s32 %v3035, %v3037
    %v3039 = vrot.slane %v3023, %v3038
    %v3041 = vunpack.c.l.s4 1966171168
    %v3042 = vunpack.c.0.s8 %v3041
    %v3043 = vlaneseq
    %v3044 = vshrl.u32 %v3043, 7
    %v3045 = vsub.s32 %v3042, %v3044
    %v3046 = vrot.slane %v3024, %v3045
    %v3048 = vunpack.c.l.s4 1966171168
    %v3049 = vunpack.c.0.s8 %v3048
    %v3050 = vlaneseq
    %v3051 = vshrl.u32 %v3050, 7
    %v3052 = vsub.s32 %v3049, %v3051
    %v3053 = vrot.slane %v3025, %v3052
    %v3054 = vcombine.low %v3032, %v3046
    %v3055 = vcombine.low %v3039, %v3053
    %v3056 = vcombine.low %v1813, %v1815
    %v3057 = vcombine.low %v1854, %v1856
    %v3058 = vcombine.low %v1895, %v1897
    %v3059 = vcombine.low %v1936, %v1938
    %v3061 = vunpack.c.l.s4 1966171168
    %v3062 = vunpack.c.0.s8 %v3061
    %v3063 = vlaneseq
    %v3064 = vshrl.u32 %v3063, 7
    %v3065 = vsub.s32 %v3062, %v3064
    %v3066 = vrot.slane %v3056, %v3065
    %v3068 = vunpack.c.l.s4 1966171168
    %v3069 = vunpack.c.0.s8 %v3068
    %v3070 = vlaneseq
    %v3071 = vshrl.u32 %v3070, 7
    %v3072 = vsub.s32 %v3069, %v3071
    %v3073 = vrot.slane %v3057, %v3072
    %v3075 = vunpack.c.l.s4 1966171168
    %v3076 = vunpack.c.0.s8 %v3075
    %v3077 = vlaneseq
    %v3078 = vshrl.u32 %v3077, 7
    %v3079 = vsub.s32 %v3076, %v3078
    %v3080 = vrot.slane %v3058, %v3079
    %v3082 = vunpack.c.l.s4 1966171168
    %v3083 = vunpack.c.0.s8 %v3082
    %v3084 = vlaneseq
    %v3085 = vshrl.u32 %v3084, 7
    %v3086 = vsub.s32 %v3083, %v3085
    %v3087 = vrot.slane %v3059, %v3086
    %v3088 = vcombine.low %v3066, %v3073
    %v3089 = vcombine.high %v3066, %v3073
    %v3090 = vcombine.low %v3080, %v3087
    %v3091 = vcombine.high %v3080, %v3087
    %v3093 = vunpack.c.l.s4 1966171168
    %v3094 = vunpack.c.0.s8 %v3093
    %v3095 = vlaneseq
    %v3096 = vshrl.u32 %v3095, 7
    %v3097 = vsub.s32 %v3094, %v3096
    %v3098 = vrot.slane %v3088, %v3097
    %v3100 = vunpack.c.l.s4 1966171168
    %v3101 = vunpack.c.0.s8 %v3100
    %v3102 = vlaneseq
    %v3103 = vshrl.u32 %v3102, 7
    %v3104 = vsub.s32 %v3101, %v3103
    %v3105 = vrot.slane %v3089, %v3104
    %v3107 = vunpack.c.l.s4 1966171168
    %v3108 = vunpack.c.0.s8 %v3107
    %v3109 = vlaneseq
    %v3110 = vshrl.u32 %v3109, 7
    %v3111 = vsub.s32 %v3108, %v3110
    %v3112 = vrot.slane %v3090, %v3111
    %v3114 = vunpack.c.l.s4 1966171168
    %v3115 = vunpack.c.0.s8 %v3114
    %v3116 = vlaneseq
    %v3117 = vshrl.u32 %v3116, 7
    %v3118 = vsub.s32 %v3115, %v3117
    %v3119 = vrot.slane %v3091, %v3118
    %v3120 = vcombine.low %v3098, %v3112
    %v3121 = vcombine.low %v3105, %v3119
    %v3122 = vcombine.low %v1977, %v1979
    %v3123 = vcombine.low %v2018, %v2020
    %v3124 = vcombine.low %v2059, %v2061
    %v3125 = vcombine.low %v2100, %v2102
    %v3127 = vunpack.c.l.s4 1966171168
    %v3128 = vunpack.c.0.s8 %v3127
    %v3129 = vlaneseq
    %v3130 = vshrl.u32 %v3129, 7
    %v3131 = vsub.s32 %v3128, %v3130
    %v3132 = vrot.slane %v3122, %v3131
    %v3134 = vunpack.c.l.s4 1966171168
    %v3135 = vunpack.c.0.s8 %v3134
    %v3136 = vlaneseq
    %v3137 = vshrl.u32 %v3136, 7
    %v3138 = vsub.s32 %v3135, %v3137
    %v3139 = vrot.slane %v3123, %v3138
    %v3141 = vunpack.c.l.s4 1966171168
    %v3142 = vunpack.c.0.s8 %v3141
    %v3143 = vlaneseq
    %v3144 = vshrl.u32 %v3143, 7
    %v3145 = vsub.s32 %v3142, %v3144
    %v3146 = vrot.slane %v3124, %v3145
    %v3148 = vunpack.c.l.s4 1966171168
    %v3149 = vunpack.c.0.s8 %v3148
    %v3150 = vlaneseq
    %v3151 = vshrl.u32 %v3150, 7
    %v3152 = vsub.s32 %v3149, %v3151
    %v3153 = vrot.slane %v3125, %v3152
    %v3154 = vcombine.low %v3132, %v3139
    %v3155 = vcombine.high %v3132, %v3139
    %v3156 = vcombine.low %v3146, %v3153
    %v3157 = vcombine.high %v3146, %v3153
    %v3159 = vunpack.c.l.s4 1966171168
    %v3160 = vunpack.c.0.s8 %v3159
    %v3161 = vlaneseq
    %v3162 = vshrl.u32 %v3161, 7
    %v3163 = vsub.s32 %v3160, %v3162
    %v3164 = vrot.slane %v3154, %v3163
    %v3166 = vunpack.c.l.s4 1966171168
    %v3167 = vunpack.c.0.s8 %v3166
    %v3168 = vlaneseq
    %v3169 = vshrl.u32 %v3168, 7
    %v3170 = vsub.s32 %v3167, %v3169
    %v3171 = vrot.slane %v3155, %v3170
    %v3173 = vunpack.c.l.s4 1966171168
    %v3174 = vunpack.c.0.s8 %v3173
    %v3175 = vlaneseq
    %v3176 = vshrl.u32 %v3175, 7
    %v3177 = vsub.s32 %v3174, %v3176
    %v3178 = vrot.slane %v3156, %v3177
    %v3180 = vunpack.c.l.s4 1966171168
    %v3181 = vunpack.c.0.s8 %v3180
    %v3182 = vlaneseq
    %v3183 = vshrl.u32 %v3182, 7
    %v3184 = vsub.s32 %v3181, %v3183
    %v3185 = vrot.slane %v3157, %v3184
    %v3186 = vcombine.low %v3164, %v3178
    %v3187 = vcombine.low %v3171, %v3185
    %v3188 = vcombine.low %v2141, %v2143
    %v3189 = vcombine.low %v2182, %v2184
    %v3190 = vcombine.low %v2223, %v2225
    %v3191 = vcombine.low %v2264, %v2266
    %v3193 = vunpack.c.l.s4 1966171168
    %v3194 = vunpack.c.0.s8 %v3193
    %v3195 = vlaneseq
    %v3196 = vshrl.u32 %v3195, 7
    %v3197 = vsub.s32 %v3194, %v3196
    %v3198 = vrot.slane %v3188, %v3197
    %v3200 = vunpack.c.l.s4 1966171168
    %v3201 = vunpack.c.0.s8 %v3200
    %v3202 = vlaneseq
    %v3203 = vshrl.u32 %v3202, 7
    %v3204 = vsub.s32 %v3201, %v3203
    %v3205 = vrot.slane %v3189, %v3204
    %v3207 = vunpack.c.l.s4 1966171168
    %v3208 = vunpack.c.0.s8 %v3207
    %v3209 = vlaneseq
    %v3210 = vshrl.u32 %v3209, 7
    %v3211 = vsub.s32 %v3208, %v3210
    %v3212 = vrot.slane %v3190, %v3211
    %v3214 = vunpack.c.l.s4 1966171168
    %v3215 = vunpack.c.0.s8 %v3214
    %v3216 = vlaneseq
    %v3217 = vshrl.u32 %v3216, 7
    %v3218 = vsub.s32 %v3215, %v3217
    %v3219 = vrot.slane %v3191, %v3218
    %v3220 = vcombine.low %v3198, %v3205
    %v3221 = vcombine.high %v3198, %v3205
    %v3222 = vcombine.low %v3212, %v3219
    %v3223 = vcombine.high %v3212, %v3219
    %v3225 = vunpack.c.l.s4 1966171168
    %v3226 = vunpack.c.0.s8 %v3225
    %v3227 = vlaneseq
    %v3228 = vshrl.u32 %v3227, 7
    %v3229 = vsub.s32 %v3226, %v3228
    %v3230 = vrot.slane %v3220, %v3229
    %v3232 = vunpack.c.l.s4 1966171168
    %v3233 = vunpack.c.0.s8 %v3232
    %v3234 = vlaneseq
    %v3235 = vshrl.u32 %v3234, 7
    %v3236 = vsub.s32 %v3233, %v3235
    %v3237 = vrot.slane %v3221, %v3236
    %v3239 = vunpack.c.l.s4 1966171168
    %v3240 = vunpack.c.0.s8 %v3239
    %v3241 = vlaneseq
    %v3242 = vshrl.u32 %v3241, 7
    %v3243 = vsub.s32 %v3240, %v3242
    %v3244 = vrot.slane %v3222, %v3243
    %v3246 = vunpack.c.l.s4 1966171168
    %v3247 = vunpack.c.0.s8 %v3246
    %v3248 = vlaneseq
    %v3249 = vshrl.u32 %v3248, 7
    %v3250 = vsub.s32 %v3247, %v3249
    %v3251 = vrot.slane %v3223, %v3250
    %v3252 = vcombine.low %v3230, %v3244
    %v3253 = vcombine.low %v3237, %v3251
    %v3254 = vcombine.low %v2305, %v2307
    %v3255 = vcombine.low %v2346, %v2348
    %v3256 = vcombine.low %v2387, %v2389
    %v3257 = vcombine.low %v2428, %v2430
    %v3259 = vunpack.c.l.s4 1966171168
    %v3260 = vunpack.c.0.s8 %v3259
    %v3261 = vlaneseq
    %v3262 = vshrl.u32 %v3261, 7
    %v3263 = vsub.s32 %v3260, %v3262
    %v3264 = vrot.slane %v3254, %v3263
    %v3266 = vunpack.c.l.s4 1966171168
    %v3267 = vunpack.c.0.s8 %v3266
    %v3268 = vlaneseq
    %v3269 = vshrl.u32 %v3268, 7
    %v3270 = vsub.s32 %v3267, %v3269
    %v3271 = vrot.slane %v3255, %v3270
    %v3273 = vunpack.c.l.s4 1966171168
    %v3274 = vunpack.c.0.s8 %v3273
    %v3275 = vlaneseq
    %v3276 = vshrl.u32 %v3275, 7
    %v3277 = vsub.s32 %v3274, %v3276
    %v3278 = vrot.slane %v3256, %v3277
    %v3280 = vunpack.c.l.s4 1966171168
    %v3281 = vunpack.c.0.s8 %v3280
    %v3282 = vlaneseq
    %v3283 = vshrl.u32 %v3282, 7
    %v3284 = vsub.s32 %v3281, %v3283
    %v3285 = vrot.slane %v3257, %v3284
    %v3286 = vcombine.low %v3264, %v3271
    %v3287 = vcombine.high %v3264, %v3271
    %v3288 = vcombine.low %v3278, %v3285
    %v3289 = vcombine.high %v3278, %v3285
    %v3291 = vunpack.c.l.s4 1966171168
    %v3292 = vunpack.c.0.s8 %v3291
    %v3293 = vlaneseq
    %v3294 = vshrl.u32 %v3293, 7
    %v3295 = vsub.s32 %v3292, %v3294
    %v3296 = vrot.slane %v3286, %v3295
    %v3298 = vunpack.c.l.s4 1966171168
    %v3299 = vunpack.c.0.s8 %v3298
    %v3300 = vlaneseq
    %v3301 = vshrl.u32 %v3300, 7
    %v3302 = vsub.s32 %v3299, %v3301
    %v3303 = vrot.slane %v3287, %v3302
    %v3305 = vunpack.c.l.s4 1966171168
    %v3306 = vunpack.c.0.s8 %v3305
    %v3307 = vlaneseq
    %v3308 = vshrl.u32 %v3307, 7
    %v3309 = vsub.s32 %v3306, %v3308
    %v3310 = vrot.slane %v3288, %v3309
    %v3312 = vunpack.c.l.s4 1966171168
    %v3313 = vunpack.c.0.s8 %v3312
    %v3314 = vlaneseq
    %v3315 = vshrl.u32 %v3314, 7
    %v3316 = vsub.s32 %v3313, %v3315
    %v3317 = vrot.slane %v3289, %v3316
    %v3318 = vcombine.low %v3296, %v3310
    %v3319 = vcombine.low %v3303, %v3317
    %v3320 = vcombine.low %v2469, %v2471
    %v3321 = vcombine.low %v2510, %v2512
    %v3322 = vcombine.low %v2551, %v2553
    %v3323 = vcombine.low %v2592, %v2594
    %v3325 = vunpack.c.l.s4 1966171168
    %v3326 = vunpack.c.0.s8 %v3325
    %v3327 = vlaneseq
    %v3328 = vshrl.u32 %v3327, 7
    %v3329 = vsub.s32 %v3326, %v3328
    %v3330 = vrot.slane %v3320, %v3329
    %v3332 = vunpack.c.l.s4 1966171168
    %v3333 = vunpack.c.0.s8 %v3332
    %v3334 = vlaneseq
    %v3335 = vshrl.u32 %v3334, 7
    %v3336 = vsub.s32 %v3333, %v3335
    %v3337 = vrot.slane %v3321, %v3336
    %v3339 = vunpack.c.l.s4 1966171168
    %v3340 = vunpack.c.0.s8 %v3339
    %v3341 = vlaneseq
    %v3342 = vshrl.u32 %v3341, 7
    %v3343 = vsub.s32 %v3340, %v3342
    %v3344 = vrot.slane %v3322, %v3343
    %v3346 = vunpack.c.l.s4 1966171168
    %v3347 = vunpack.c.0.s8 %v3346
    %v3348 = vlaneseq
    %v3349 = vshrl.u32 %v3348, 7
    %v3350 = vsub.s32 %v3347, %v3349
    %v3351 = vrot.slane %v3323, %v3350
    %v3352 = vcombine.low %v3330, %v3337
    %v3353 = vcombine.high %v3330, %v3337
    %v3354 = vcombine.low %v3344, %v3351
    %v3355 = vcombine.high %v3344, %v3351
    %v3357 = vunpack.c.l.s4 1966171168
    %v3358 = vunpack.c.0.s8 %v3357
    %v3359 = vlaneseq
    %v3360 = vshrl.u32 %v3359, 7
    %v3361 = vsub.s32 %v3358, %v3360
    %v3362 = vrot.slane %v3352, %v3361
    %v3364 = vunpack.c.l.s4 1966171168
    %v3365 = vunpack.c.0.s8 %v3364
    %v3366 = vlaneseq
    %v3367 = vshrl.u32 %v3366, 7
    %v3368 = vsub.s32 %v3365, %v3367
    %v3369 = vrot.slane %v3353, %v3368
    %v3371 = vunpack.c.l.s4 1966171168
    %v3372 = vunpack.c.0.s8 %v3371
    %v3373 = vlaneseq
    %v3374 = vshrl.u32 %v3373, 7
    %v3375 = vsub.s32 %v3372, %v3374
    %v3376 = vrot.slane %v3354, %v3375
    %v3378 = vunpack.c.l.s4 1966171168
    %v3379 = vunpack.c.0.s8 %v3378
    %v3380 = vlaneseq
    %v3381 = vshrl.u32 %v3380, 7
    %v3382 = vsub.s32 %v3379, %v3381
    %v3383 = vrot.slane %v3355, %v3382
    %v3384 = vcombine.low %v3362, %v3376
    %v3385 = vcombine.low %v3369, %v3383
    %v3386 = vcombine.low %v2633, %v2635
    %v3387 = vcombine.low %v2674, %v2676
    %v3388 = vcombine.low %v2715, %v2717
    %v3389 = vcombine.low %v2756, %v2758
    %v3391 = vunpack.c.l.s4 1966171168
    %v3392 = vunpack.c.0.s8 %v3391
    %v3393 = vlaneseq
    %v3394 = vshrl.u32 %v3393, 7
    %v3395 = vsub.s32 %v3392, %v3394
    %v3396 = vrot.slane %v3386, %v3395
    %v3398 = vunpack.c.l.s4 1966171168
    %v3399 = vunpack.c.0.s8 %v3398
    %v3400 = vlaneseq
    %v3401 = vshrl.u32 %v3400, 7
    %v3402 = vsub.s32 %v3399, %v3401
    %v3403 = vrot.slane %v3387, %v3402
    %v3405 = vunpack.c.l.s4 1966171168
    %v3406 = vunpack.c.0.s8 %v3405
    %v3407 = vlaneseq
    %v3408 = vshrl.u32 %v3407, 7
    %v3409 = vsub.s32 %v3406, %v3408
    %v3410 = vrot.slane %v3388, %v3409
    %v3412 = vunpack.c.l.s4 1966171168
    %v3413 = vunpack.c.0.s8 %v3412
    %v3414 = vlaneseq
    %v3415 = vshrl.u32 %v3414, 7
    %v3416 = vsub.s32 %v3413, %v3415
    %v3417 = vrot.slane %v3389, %v3416
    %v3418 = vcombine.low %v3396, %v3403
    %v3419 = vcombine.high %v3396, %v3403
    %v3420 = vcombine.low %v3410, %v3417
    %v3421 = vcombine.high %v3410, %v3417
    %v3423 = vunpack.c.l.s4 1966171168
    %v3424 = vunpack.c.0.s8 %v3423
    %v3425 = vlaneseq
    %v3426 = vshrl.u32 %v3425, 7
    %v3427 = vsub.s32 %v3424, %v3426
    %v3428 = vrot.slane %v3418, %v3427
    %v3430 = vunpack.c.l.s4 1966171168
    %v3431 = vunpack.c.0.s8 %v3430
    %v3432 = vlaneseq
    %v3433 = vshrl.u32 %v3432, 7
    %v3434 = vsub.s32 %v3431, %v3433
    %v3435 = vrot.slane %v3419, %v3434
    %v3437 = vunpack.c.l.s4 1966171168
    %v3438 = vunpack.c.0.s8 %v3437
    %v3439 = vlaneseq
    %v3440 = vshrl.u32 %v3439, 7
    %v3441 = vsub.s32 %v3438, %v3440
    %v3442 = vrot.slane %v3420, %v3441
    %v3444 = vunpack.c.l.s4 1966171168
    %v3445 = vunpack.c.0.s8 %v3444
    %v3446 = vlaneseq
    %v3447 = vshrl.u32 %v3446, 7
    %v3448 = vsub.s32 %v3445, %v3447
    %v3449 = vrot.slane %v3421, %v3448
    %v3450 = vcombine.low %v3428, %v3442
    %v3451 = vcombine.low %v3435, %v3449
    %v3452 = vcombine.low %v2797, %v2799
    %v3453 = vcombine.low %v2838, %v2840
    %v3454 = vcombine.low %v2879, %v2881
    %v3455 = vcombine.low %v2920, %v2922
    %v3457 = vunpack.c.l.s4 1966171168
    %v3458 = vunpack.c.0.s8 %v3457
    %v3459 = vlaneseq
    %v3460 = vshrl.u32 %v3459, 7
    %v3461 = vsub.s32 %v3458, %v3460
    %v3462 = vrot.slane %v3452, %v3461
    %v3464 = vunpack.c.l.s4 1966171168
    %v3465 = vunpack.c.0.s8 %v3464
    %v3466 = vlaneseq
    %v3467 = vshrl.u32 %v3466, 7
    %v3468 = vsub.s32 %v3465, %v3467
    %v3469 = vrot.slane %v3453, %v3468
    %v3471 = vunpack.c.l.s4 1966171168
    %v3472 = vunpack.c.0.s8 %v3471
    %v3473 = vlaneseq
    %v3474 = vshrl.u32 %v3473, 7
    %v3475 = vsub.s32 %v3472, %v3474
    %v3476 = vrot.slane %v3454, %v3475
    %v3478 = vunpack.c.l.s4 1966171168
    %v3479 = vunpack.c.0.s8 %v3478
    %v3480 = vlaneseq
    %v3481 = vshrl.u32 %v3480, 7
    %v3482 = vsub.s32 %v3479, %v3481
    %v3483 = vrot.slane %v3455, %v3482
    %v3484 = vcombine.low %v3462, %v3469
    %v3485 = vcombine.high %v3462, %v3469
    %v3486 = vcombine.low %v3476, %v3483
    %v3487 = vcombine.high %v3476, %v3483
    %v3489 = vunpack.c.l.s4 1966171168
    %v3490 = vunpack.c.0.s8 %v3489
    %v3491 = vlaneseq
    %v3492 = vshrl.u32 %v3491, 7
    %v3493 = vsub.s32 %v3490, %v3492
    %v3494 = vrot.slane %v3484, %v3493
    %v3496 = vunpack.c.l.s4 1966171168
    %v3497 = vunpack.c.0.s8 %v3496
    %v3498 = vlaneseq
    %v3499 = vshrl.u32 %v3498, 7
    %v3500 = vsub.s32 %v3497, %v3499
    %v3501 = vrot.slane %v3485, %v3500
    %v3503 = vunpack.c.l.s4 1966171168
    %v3504 = vunpack.c.0.s8 %v3503
    %v3505 = vlaneseq
    %v3506 = vshrl.u32 %v3505, 7
    %v3507 = vsub.s32 %v3504, %v3506
    %v3508 = vrot.slane %v3486, %v3507
    %v3510 = vunpack.c.l.s4 1966171168
    %v3511 = vunpack.c.0.s8 %v3510
    %v3512 = vlaneseq
    %v3513 = vshrl.u32 %v3512, 7
    %v3514 = vsub.s32 %v3511, %v3513
    %v3515 = vrot.slane %v3487, %v3514
    %v3516 = vcombine.low %v3494, %v3508
    %v3517 = vcombine.low %v3501, %v3515
    %v3535 = vunpack.c.l.s4 1935823168
    %v3536 = vunpack.c.0.s8 %v3535
    %v3537 = vlaneseq
    %v3538 = vshrl.u32 %v3537, 7
    %v3539 = vsub.s32 %v3536, %v3538
    %v3540 = vrot.slane %v3054, %v3539
    %v3542 = vunpack.c.l.s4 1935823168
    %v3543 = vunpack.c.0.s8 %v3542
    %v3544 = vlaneseq
    %v3545 = vshrl.u32 %v3544, 7
    %v3546 = vsub.s32 %v3543, %v3545
    %v3547 = vrot.slane %v3120, %v3546
    %v3549 = vunpack.c.l.s4 1935823168
    %v3550 = vunpack.c.0.s8 %v3549
    %v3551 = vlaneseq
    %v3552 = vshrl.u32 %v3551, 7
    %v3553 = vsub.s32 %v3550, %v3552
    %v3554 = vrot.slane %v3186, %v3553
    %v3556 = vunpack.c.l.s4 1935823168
    %v3557 = vunpack.c.0.s8 %v3556
    %v3558 = vlaneseq
    %v3559 = vshrl.u32 %v3558, 7
    %v3560 = vsub.s32 %v3557, %v3559
    %v3561 = vrot.slane %v3252, %v3560
    %v3563 = vunpack.c.l.s4 1935823168
    %v3564 = vunpack.c.0.s8 %v3563
    %v3565 = vlaneseq
    %v3566 = vshrl.u32 %v3565, 7
    %v3567 = vsub.s32 %v3564, %v3566
    %v3568 = vrot.slane %v3318, %v3567
    %v3570 = vunpack.c.l.s4 1935823168
    %v3571 = vunpack.c.0.s8 %v3570
    %v3572 = vlaneseq
    %v3573 = vshrl.u32 %v3572, 7
    %v3574 = vsub.s32 %v3571, %v3573
    %v3575 = vrot.slane %v3384, %v3574
    %v3577 = vunpack.c.l.s4 1935823168
    %v3578 = vunpack.c.0.s8 %v3577
    %v3579 = vlaneseq
    %v3580 = vshrl.u32 %v3579, 7
    %v3581 = vsub.s32 %v3578, %v3580
    %v3582 = vrot.slane %v3450, %v3581
    %v3584 = vunpack.c.l.s4 1935823168
    %v3585 = vunpack.c.0.s8 %v3584
    %v3586 = vlaneseq
    %v3587 = vshrl.u32 %v3586, 7
    %v3588 = vsub.s32 %v3585, %v3587
    %v3589 = vrot.slane %v3516, %v3588
    %v3591 = vunpack.c.l.s4 1935823168
    %v3592 = vunpack.c.0.s8 %v3591
    %v3593 = vlaneseq
    %v3594 = vshrl.u32 %v3593, 7
    %v3595 = vsub.s32 %v3592, %v3594
    %v3596 = vrot.slane %v3055, %v3595
    %v3598 = vunpack.c.l.s4 1935823168
    %v3599 = vunpack.c.0.s8 %v3598
    %v3600 = vlaneseq
    %v3601 = vshrl.u32 %v3600, 7
    %v3602 = vsub.s32 %v3599, %v3601
    %v3603 = vrot.slane %v3121, %v3602
    %v3605 = vunpack.c.l.s4 1935823168
    %v3606 = vunpack.c.0.s8 %v3605
    %v3607 = vlaneseq
    %v3608 = vshrl.u32 %v3607, 7
    %v3609 = vsub.s32 %v3606, %v3608
    %v3610 = vrot.slane %v3187, %v3609
    %v3612 = vunpack.c.l.s4 1935823168
    %v3613 = vunpack.c.0.s8 %v3612
    %v3614 = vlaneseq
    %v3615 = vshrl.u32 %v3614, 7
    %v3616 = vsub.s32 %v3613, %v3615
    %v3617 = vrot.slane %v3253, %v3616
    %v3619 = vunpack.c.l.s4 1935823168
    %v3620 = vunpack.c.0.s8 %v3619
    %v3621 = vlaneseq
    %v3622 = vshrl.u32 %v3621, 7
    %v3623 = vsub.s32 %v3620, %v3622
    %v3624 = vrot.slane %v3319, %v3623
    %v3626 = vunpack.c.l.s4 1935823168
    %v3627 = vunpack.c.0.s8 %v3626
    %v3628 = vlaneseq
    %v3629 = vshrl.u32 %v3628, 7
    %v3630 = vsub.s32 %v3627, %v3629
    %v3631 = vrot.slane %v3385, %v3630
    %v3633 = vunpack.c.l.s4 1935823168
    %v3634 = vunpack.c.0.s8 %v3633
    %v3635 = vlaneseq
    %v3636 = vshrl.u32 %v3635, 7
    %v3637 = vsub.s32 %v3634, %v3636
    %v3638 = vrot.slane %v3451, %v3637
    %v3640 = vunpack.c.l.s4 1935823168
    %v3641 = vunpack.c.0.s8 %v3640
    %v3642 = vlaneseq
    %v3643 = vshrl.u32 %v3642, 7
    %v3644 = vsub.s32 %v3641, %v3643
    %v3645 = vrot.slane %v3517, %v3644
    %v3646 = vld [vmem:[#allocation6] sm:$0xf]
    %v3648 = vlaneseq
    %v3649 = vshrl.u32 %v3648, 7
    %v3650 = vsub.s32 0, %v3649
    %v3651 = vrot.slane %v3646, %v3650
    %v3652 = vlaneseq
    %v3653 = vshrl.u32 %v3652, 7
    %v3654 = vsub.s32 1, %v3653
    %v3655 = vrot.slane %v3646, %v3654
    %v3656 = vlaneseq
    %v3657 = vshrl.u32 %v3656, 7
    %v3658 = vsub.s32 2, %v3657
    %v3659 = vrot.slane %v3646, %v3658
    %v3660 = vlaneseq
    %v3661 = vshrl.u32 %v3660, 7
    %v3662 = vsub.s32 3, %v3661
    %v3663 = vrot.slane %v3646, %v3662
    %v3664 = vcombine.low %v3651, %v3655
    %v3665 = vcombine.low %v3659, %v3663
    %v3667 = vunpack.c.l.s4 1983009808
    %v3668 = vunpack.c.0.s8 %v3667
    %v3669 = vlaneseq
    %v3670 = vshrl.u32 %v3669, 7
    %v3671 = vsub.s32 %v3668, %v3670
    %v3672 = vrot.slane %v3664, %v3671
    %v3674 = vunpack.c.l.s4 1983009808
    %v3675 = vunpack.c.0.s8 %v3674
    %v3676 = vlaneseq
    %v3677 = vshrl.u32 %v3676, 7
    %v3678 = vsub.s32 %v3675, %v3677
    %v3679 = vrot.slane %v3665, %v3678
    %v3680 = vcombine.low %v3672, %v3679
    %v3681 = vcombine.high %v3672, %v3679
    %v3684 = vadd.f32 %v3540, %v3680
    %v3685 = vadd.f32 %v3547, %v3681
    %v3686 = vadd.f32 %v3554, %v3680
    %v3687 = vadd.f32 %v3561, %v3681
    %v3688 = vadd.f32 %v3568, %v3680
    %v3689 = vadd.f32 %v3575, %v3681
    %v3690 = vadd.f32 %v3582, %v3680
    %v3691 = vadd.f32 %v3589, %v3681
    %v3692 = vadd.f32 %v3596, %v3680
    %v3693 = vadd.f32 %v3603, %v3681
    %v3694 = vadd.f32 %v3610, %v3680
    %v3695 = vadd.f32 %v3617, %v3681
    %v3696 = vadd.f32 %v3624, %v3680
    %v3697 = vadd.f32 %v3631, %v3681
    %v3698 = vadd.f32 %v3638, %v3680
    %v3699 = vadd.f32 %v3645, %v3681
    %v3700 = vmul.f32 %v3684, 0.2
    %v3701 = vmul.f32 %v3685, 0.2
    %v3702 = vmul.f32 %v3686, 0.2
    %v3703 = vmul.f32 %v3687, 0.2
    %v3704 = vmul.f32 %v3688, 0.2
    %v3705 = vmul.f32 %v3689, 0.2
    %v3706 = vmul.f32 %v3690, 0.2
    %v3707 = vmul.f32 %v3691, 0.2
    %v3708 = vmul.f32 %v3692, 0.2
    %v3709 = vmul.f32 %v3693, 0.2
    %v3710 = vmul.f32 %v3694, 0.2
    %v3711 = vmul.f32 %v3695, 0.2
    %v3712 = vmul.f32 %v3696, 0.2
    %v3713 = vmul.f32 %v3697, 0.2
    %v3714 = vmul.f32 %v3698, 0.2
    %v3715 = vmul.f32 %v3699, 0.2
    %v3716 = vmax.f32 %v3684, %v3700
    %v3717 = vmax.f32 %v3685, %v3701
    %v3718 = vmax.f32 %v3686, %v3702
    %v3719 = vmax.f32 %v3687, %v3703
    %v3720 = vmax.f32 %v3688, %v3704
    %v3721 = vmax.f32 %v3689, %v3705
    %v3722 = vmax.f32 %v3690, %v3706
    %v3723 = vmax.f32 %v3691, %v3707
    %v3724 = vmax.f32 %v3692, %v3708
    %v3725 = vmax.f32 %v3693, %v3709
    %v3726 = vmax.f32 %v3694, %v3710
    %v3727 = vmax.f32 %v3695, %v3711
    %v3728 = vmax.f32 %v3696, %v3712
    %v3729 = vmax.f32 %v3697, %v3713
    %v3730 = vmax.f32 %v3698, %v3714
    %v3731 = vmax.f32 %v3699, %v3715
    %3732 = vst [vmem:[#allocation2] sm:$0x77] 0
    %3733 = vst [vmem:[#allocation2 + $0x8] sm:$0x77] 0
    %3734 = vst [vmem:[#allocation2 + $0x10] sm:$0x77] 0
    %3735 = vst [vmem:[#allocation2 + $0x18] sm:$0x77] 0
    %3736 = vst [vmem:[#allocation2 + $0x20] sm:$0x77] 0
    %3737 = vst [vmem:[#allocation2 + $0x28] sm:$0x77] 0
    %3738 = vst [vmem:[#allocation2 + $0x30] sm:$0x77] 0
    %3739 = vst [vmem:[#allocation2 + $0x38] sm:$0x77] 0
    %3740 = vst [vmem:[#allocation2 + $0x40] sm:$0x77] 0
    %3741 = vst [vmem:[#allocation2 + $0x48] sm:$0x77] 0
    %3742 = vst [vmem:[#allocation2 + $0x50] sm:$0x77] 0
    %3743 = vst [vmem:[#allocation2 + $0x58] sm:$0x77] 0
    %3744 = vst [vmem:[#allocation2 + $0x60] sm:$0x77] 0
    %3745 = vst [vmem:[#allocation2 + $0x68] sm:$0x77] 0
    %3746 = vst [vmem:[#allocation2 + $0x70] sm:$0x77] 0
    %3747 = vst [vmem:[#allocation2 + $0x78] sm:$0x77] 0
    %3748 = vst [vmem:[#allocation2 + $0x80] sm:$0x77] 0
    %3749 = vst [vmem:[#allocation2 + $0x88] sm:$0x77] 0
    %3750 = vst [vmem:[#allocation2 + $0x90] sm:$0x77] 0
    %3751 = vst [vmem:[#allocation2 + $0x98] sm:$0x77] 0
    %3752 = vst [vmem:[#allocation2 + $0xa0] sm:$0x77] 0
    %3753 = vst [vmem:[#allocation2 + $0xa8] sm:$0x77] 0
    %3754 = vst [vmem:[#allocation2 + $0xb0] sm:$0x77] 0
    %3755 = vst [vmem:[#allocation2 + $0xb8] sm:$0x77] 0
    %v3772 = vcombine.low %v3716, %v3717
    %v3773 = vcombine.high %v3716, %v3717
    %v3775 = vunpack.c.l.s4 1983009808
    %v3776 = vunpack.c.0.s8 %v3775
    %v3777 = vlaneseq
    %v3778 = vshrl.u32 %v3777, 7
    %v3779 = vsub.s32 %v3776, %v3778
    %v3780 = vrot.slane %v3772, %v3779
    %v3782 = vunpack.c.l.s4 1983009808
    %v3783 = vunpack.c.0.s8 %v3782
    %v3784 = vlaneseq
    %v3785 = vshrl.u32 %v3784, 7
    %v3786 = vsub.s32 %v3783, %v3785
    %v3787 = vrot.slane %v3773, %v3786
    %v3788 = vcombine.high %v3780, %v3780
    %v3789 = vcombine.high %v3787, %v3787
    %v3790 = vcombine.low %v3718, %v3719
    %v3791 = vcombine.high %v3718, %v3719
    %v3793 = vunpack.c.l.s4 1983009808
    %v3794 = vunpack.c.0.s8 %v3793
    %v3795 = vlaneseq
    %v3796 = vshrl.u32 %v3795, 7
    %v3797 = vsub.s32 %v3794, %v3796
    %v3798 = vrot.slane %v3790, %v3797
    %v3800 = vunpack.c.l.s4 1983009808
    %v3801 = vunpack.c.0.s8 %v3800
    %v3802 = vlaneseq
    %v3803 = vshrl.u32 %v3802, 7
    %v3804 = vsub.s32 %v3801, %v3803
    %v3805 = vrot.slane %v3791, %v3804
    %v3806 = vcombine.high %v3798, %v3798
    %v3807 = vcombine.high %v3805, %v3805
    %v3808 = vcombine.low %v3720, %v3721
    %v3809 = vcombine.high %v3720, %v3721
    %v3811 = vunpack.c.l.s4 1983009808
    %v3812 = vunpack.c.0.s8 %v3811
    %v3813 = vlaneseq
    %v3814 = vshrl.u32 %v3813, 7
    %v3815 = vsub.s32 %v3812, %v3814
    %v3816 = vrot.slane %v3808, %v3815
    %v3818 = vunpack.c.l.s4 1983009808
    %v3819 = vunpack.c.0.s8 %v3818
    %v3820 = vlaneseq
    %v3821 = vshrl.u32 %v3820, 7
    %v3822 = vsub.s32 %v3819, %v3821
    %v3823 = vrot.slane %v3809, %v3822
    %v3824 = vcombine.high %v3816, %v3816
    %v3825 = vcombine.high %v3823, %v3823
    %v3826 = vcombine.low %v3722, %v3723
    %v3827 = vcombine.high %v3722, %v3723
    %v3829 = vunpack.c.l.s4 1983009808
    %v3830 = vunpack.c.0.s8 %v3829
    %v3831 = vlaneseq
    %v3832 = vshrl.u32 %v3831, 7
    %v3833 = vsub.s32 %v3830, %v3832
    %v3834 = vrot.slane %v3826, %v3833
    %v3836 = vunpack.c.l.s4 1983009808
    %v3837 = vunpack.c.0.s8 %v3836
    %v3838 = vlaneseq
    %v3839 = vshrl.u32 %v3838, 7
    %v3840 = vsub.s32 %v3837, %v3839
    %v3841 = vrot.slane %v3827, %v3840
    %v3842 = vcombine.high %v3834, %v3834
    %v3843 = vcombine.high %v3841, %v3841
    %v3844 = vcombine.low %v3724, %v3725
    %v3845 = vcombine.high %v3724, %v3725
    %v3847 = vunpack.c.l.s4 1983009808
    %v3848 = vunpack.c.0.s8 %v3847
    %v3849 = vlaneseq
    %v3850 = vshrl.u32 %v3849, 7
    %v3851 = vsub.s32 %v3848, %v3850
    %v3852 = vrot.slane %v3844, %v3851
    %v3854 = vunpack.c.l.s4 1983009808
    %v3855 = vunpack.c.0.s8 %v3854
    %v3856 = vlaneseq
    %v3857 = vshrl.u32 %v3856, 7
    %v3858 = vsub.s32 %v3855, %v3857
    %v3859 = vrot.slane %v3845, %v3858
    %v3860 = vcombine.high %v3852, %v3852
    %v3861 = vcombine.high %v3859, %v3859
    %v3862 = vcombine.low %v3726, %v3727
    %v3863 = vcombine.high %v3726, %v3727
    %v3865 = vunpack.c.l.s4 1983009808
    %v3866 = vunpack.c.0.s8 %v3865
    %v3867 = vlaneseq
    %v3868 = vshrl.u32 %v3867, 7
    %v3869 = vsub.s32 %v3866, %v3868
    %v3870 = vrot.slane %v3862, %v3869
    %v3872 = vunpack.c.l.s4 1983009808
    %v3873 = vunpack.c.0.s8 %v3872
    %v3874 = vlaneseq
    %v3875 = vshrl.u32 %v3874, 7
    %v3876 = vsub.s32 %v3873, %v3875
    %v3877 = vrot.slane %v3863, %v3876
    %v3878 = vcombine.high %v3870, %v3870
    %v3879 = vcombine.high %v3877, %v3877
    %v3880 = vcombine.low %v3728, %v3729
    %v3881 = vcombine.high %v3728, %v3729
    %v3883 = vunpack.c.l.s4 1983009808
    %v3884 = vunpack.c.0.s8 %v3883
    %v3885 = vlaneseq
    %v3886 = vshrl.u32 %v3885, 7
    %v3887 = vsub.s32 %v3884, %v3886
    %v3888 = vrot.slane %v3880, %v3887
    %v3890 = vunpack.c.l.s4 1983009808
    %v3891 = vunpack.c.0.s8 %v3890
    %v3892 = vlaneseq
    %v3893 = vshrl.u32 %v3892, 7
    %v3894 = vsub.s32 %v3891, %v3893
    %v3895 = vrot.slane %v3881, %v3894
    %v3896 = vcombine.high %v3888, %v3888
    %v3897 = vcombine.high %v3895, %v3895
    %v3898 = vcombine.low %v3730, %v3731
    %v3899 = vcombine.high %v3730, %v3731
    %v3901 = vunpack.c.l.s4 1983009808
    %v3902 = vunpack.c.0.s8 %v3901
    %v3903 = vlaneseq
    %v3904 = vshrl.u32 %v3903, 7
    %v3905 = vsub.s32 %v3902, %v3904
    %v3906 = vrot.slane %v3898, %v3905
    %v3908 = vunpack.c.l.s4 1983009808
    %v3909 = vunpack.c.0.s8 %v3908
    %v3910 = vlaneseq
    %v3911 = vshrl.u32 %v3910, 7
    %v3912 = vsub.s32 %v3909, %v3911
    %v3913 = vrot.slane %v3899, %v3912
    %v3914 = vcombine.high %v3906, %v3906
    %v3915 = vcombine.high %v3913, %v3913
    %v3948 = vpack.c.bf16 %v3780, %v3780
    %v3949 = vpack.c.bf16 %v3788, %v3788
    %v3950 = vpack.c.bf16 %v3787, %v3787
    %v3951 = vpack.c.bf16 %v3789, %v3789
    %v3952 = vpack.c.bf16 %v3798, %v3798
    %v3953 = vpack.c.bf16 %v3806, %v3806
    %v3954 = vpack.c.bf16 %v3805, %v3805
    %v3955 = vpack.c.bf16 %v3807, %v3807
    %v3956 = vpack.c.bf16 %v3816, %v3816
    %v3957 = vpack.c.bf16 %v3824, %v3824
    %v3958 = vpack.c.bf16 %v3823, %v3823
    %v3959 = vpack.c.bf16 %v3825, %v3825
    %v3960 = vpack.c.bf16 %v3834, %v3834
    %v3961 = vpack.c.bf16 %v3842, %v3842
    %v3962 = vpack.c.bf16 %v3841, %v3841
    %v3963 = vpack.c.bf16 %v3843, %v3843
    %v3964 = vpack.c.bf16 %v3852, %v3852
    %v3965 = vpack.c.bf16 %v3860, %v3860
    %v3966 = vpack.c.bf16 %v3859, %v3859
    %v3967 = vpack.c.bf16 %v3861, %v3861
    %v3968 = vpack.c.bf16 %v3870, %v3870
    %v3969 = vpack.c.bf16 %v3878, %v3878
    %v3970 = vpack.c.bf16 %v3877, %v3877
    %v3971 = vpack.c.bf16 %v3879, %v3879
    %v3972 = vpack.c.bf16 %v3888, %v3888
    %v3973 = vpack.c.bf16 %v3896, %v3896
    %v3974 = vpack.c.bf16 %v3895, %v3895
    %v3975 = vpack.c.bf16 %v3897, %v3897
    %v3976 = vpack.c.bf16 %v3906, %v3906
    %v3977 = vpack.c.bf16 %v3914, %v3914
    %v3978 = vpack.c.bf16 %v3913, %v3913
    %v3979 = vpack.c.bf16 %v3915, %v3915
    %v4012 = vunpack.c.l.b16 %v3948
    %v4013 = vunpack.c.l.b16 %v3949
    %v4014 = vunpack.c.l.b16 %v3950
    %v4015 = vunpack.c.l.b16 %v3951
    %v4016 = vunpack.c.l.b16 %v3952
    %v4017 = vunpack.c.l.b16 %v3953
    %v4018 = vunpack.c.l.b16 %v3954
    %v4019 = vunpack.c.l.b16 %v3955
    %v4020 = vunpack.c.l.b16 %v3956
    %v4021 = vunpack.c.l.b16 %v3957
    %v4022 = vunpack.c.l.b16 %v3958
    %v4023 = vunpack.c.l.b16 %v3959
    %v4024 = vunpack.c.l.b16 %v3960
    %v4025 = vunpack.c.l.b16 %v3961
    %v4026 = vunpack.c.l.b16 %v3962
    %v4027 = vunpack.c.l.b16 %v3963
    %v4028 = vunpack.c.l.b16 %v3964
    %v4029 = vunpack.c.l.b16 %v3965
    %v4030 = vunpack.c.l.b16 %v3966
    %v4031 = vunpack.c.l.b16 %v3967
    %v4032 = vunpack.c.l.b16 %v3968
    %v4033 = vunpack.c.l.b16 %v3969
    %v4034 = vunpack.c.l.b16 %v3970
    %v4035 = vunpack.c.l.b16 %v3971
    %v4036 = vunpack.c.l.b16 %v3972
    %v4037 = vunpack.c.l.b16 %v3973
    %v4038 = vunpack.c.l.b16 %v3974
    %v4039 = vunpack.c.l.b16 %v3975
    %v4040 = vunpack.c.l.b16 %v3976
    %v4041 = vunpack.c.l.b16 %v3977
    %v4042 = vunpack.c.l.b16 %v3978
    %v4043 = vunpack.c.l.b16 %v3979
    %v4044 = vpack.c.b16 %v4013, %v4012
    %v4045 = vpack.c.b16 %v4015, %v4014
    %v4046 = vpack.c.b16 %v4017, %v4016
    %v4047 = vpack.c.b16 %v4019, %v4018
    %v4048 = vpack.c.b16 %v4021, %v4020
    %v4049 = vpack.c.b16 %v4023, %v4022
    %v4050 = vpack.c.b16 %v4025, %v4024
    %v4051 = vpack.c.b16 %v4027, %v4026
    %v4052 = vpack.c.b16 %v4029, %v4028
    %v4053 = vpack.c.b16 %v4031, %v4030
    %v4054 = vpack.c.b16 %v4033, %v4032
    %v4055 = vpack.c.b16 %v4035, %v4034
    %v4056 = vpack.c.b16 %v4037, %v4036
    %v4057 = vpack.c.b16 %v4039, %v4038
    %v4058 = vpack.c.b16 %v4041, %v4040
    %v4059 = vpack.c.b16 %v4043, %v4042
    %v4061 = vshrl.u32 %v4044, 16
    %v4063 = vrot.slane %v4061, 7
    %v4064 = vshll.u32 %v4044, 16
    %v4066 = vor.u32 %v4063, %v4064
    %v4068 = vshrl.u32 %v4045, 16
    %v4070 = vrot.slane %v4068, 7
    %v4071 = vshll.u32 %v4045, 16
    %v4073 = vor.u32 %v4070, %v4071
    %v4075 = vshrl.u32 %v4046, 16
    %v4077 = vrot.slane %v4075, 7
    %v4078 = vshll.u32 %v4046, 16
    %v4080 = vor.u32 %v4077, %v4078
    %v4082 = vshrl.u32 %v4047, 16
    %v4084 = vrot.slane %v4082, 7
    %v4085 = vshll.u32 %v4047, 16
    %v4087 = vor.u32 %v4084, %v4085
    %v4089 = vshrl.u32 %v4048, 16
    %v4091 = vrot.slane %v4089, 7
    %v4092 = vshll.u32 %v4048, 16
    %v4094 = vor.u32 %v4091, %v4092
    %v4096 = vshrl.u32 %v4049, 16
    %v4098 = vrot.slane %v4096, 7
    %v4099 = vshll.u32 %v4049, 16
    %v4101 = vor.u32 %v4098, %v4099
    %v4103 = vshrl.u32 %v4050, 16
    %v4105 = vrot.slane %v4103, 7
    %v4106 = vshll.u32 %v4050, 16
    %v4108 = vor.u32 %v4105, %v4106
    %v4110 = vshrl.u32 %v4051, 16
    %v4112 = vrot.slane %v4110, 7
    %v4113 = vshll.u32 %v4051, 16
    %v4115 = vor.u32 %v4112, %v4113
    %v4117 = vshrl.u32 %v4052, 16
    %v4119 = vrot.slane %v4117, 7
    %v4120 = vshll.u32 %v4052, 16
    %v4122 = vor.u32 %v4119, %v4120
    %v4124 = vshrl.u32 %v4053, 16
    %v4126 = vrot.slane %v4124, 7
    %v4127 = vshll.u32 %v4053, 16
    %v4129 = vor.u32 %v4126, %v4127
    %v4131 = vshrl.u32 %v4054, 16
    %v4133 = vrot.slane %v4131, 7
    %v4134 = vshll.u32 %v4054, 16
    %v4136 = vor.u32 %v4133, %v4134
    %v4138 = vshrl.u32 %v4055, 16
    %v4140 = vrot.slane %v4138, 7
    %v4141 = vshll.u32 %v4055, 16
    %v4143 = vor.u32 %v4140, %v4141
    %v4145 = vshrl.u32 %v4056, 16
    %v4147 = vrot.slane %v4145, 7
    %v4148 = vshll.u32 %v4056, 16
    %v4150 = vor.u32 %v4147, %v4148
    %v4152 = vshrl.u32 %v4057, 16
    %v4154 = vrot.slane %v4152, 7
    %v4155 = vshll.u32 %v4057, 16
    %v4157 = vor.u32 %v4154, %v4155
    %v4159 = vshrl.u32 %v4058, 16
    %v4161 = vrot.slane %v4159, 7
    %v4162 = vshll.u32 %v4058, 16
    %v4164 = vor.u32 %v4161, %v4162
    %v4166 = vshrl.u32 %v4059, 16
    %v4168 = vrot.slane %v4166, 7
    %v4169 = vshll.u32 %v4059, 16
    %v4171 = vor.u32 %v4168, %v4169
    %s4188 = scalar_lea.vmem [#allocation2], 16
    %vm4189 = vcmask 1042432
    %vm4190 = vsmask.f32 2306
    %vm4191 = vmand %vm4189, %vm4190
    %vm4192 = vcmask 1046532
    %vm4193 = vsmask.f32 6418
    %vm4194 = vmand %vm4192, %vm4193
    %vm4195 = vmor %vm4194, %vm4191
    %v4196 = vld [vmem:[%s4188] sm:$0x77]
    %v4197 = vsel %vm4195, %v4066, %v4196
    %4198 = vst [vmem:[%s4188] sm:$0x77] %v4197
    %v4199 = vld [vmem:[%s4188 + $0x8] sm:$0x77]
    %v4200 = vsel %vm4195, %v4073, %v4199
    %4201 = vst [vmem:[%s4188 + $0x8] sm:$0x77] %v4200
    %v4202 = vld [vmem:[%s4188 + $0x10] sm:$0x77]
    %v4203 = vsel %vm4195, %v4080, %v4202
    %4204 = vst [vmem:[%s4188 + $0x10] sm:$0x77] %v4203
    %v4205 = vld [vmem:[%s4188 + $0x18] sm:$0x77]
    %v4206 = vsel %vm4195, %v4087, %v4205
    %4207 = vst [vmem:[%s4188 + $0x18] sm:$0x77] %v4206
    %v4208 = vld [vmem:[%s4188 + $0x20] sm:$0x77]
    %v4209 = vsel %vm4195, %v4094, %v4208
    %4210 = vst [vmem:[%s4188 + $0x20] sm:$0x77] %v4209
    %v4211 = vld [vmem:[%s4188 + $0x28] sm:$0x77]
    %v4212 = vsel %vm4195, %v4101, %v4211
    %4213 = vst [vmem:[%s4188 + $0x28] sm:$0x77] %v4212
    %v4214 = vld [vmem:[%s4188 + $0x30] sm:$0x77]
    %v4215 = vsel %vm4195, %v4108, %v4214
    %4216 = vst [vmem:[%s4188 + $0x30] sm:$0x77] %v4215
    %v4217 = vld [vmem:[%s4188 + $0x38] sm:$0x77]
    %v4218 = vsel %vm4195, %v4115, %v4217
    %4219 = vst [vmem:[%s4188 + $0x38] sm:$0x77] %v4218
    %v4220 = vld [vmem:[%s4188 + $0x60] sm:$0x77]
    %v4221 = vsel %vm4195, %v4122, %v4220
    %4222 = vst [vmem:[%s4188 + $0x60] sm:$0x77] %v4221
    %v4223 = vld [vmem:[%s4188 + $0x68] sm:$0x77]
    %v4224 = vsel %vm4195, %v4129, %v4223
    %4225 = vst [vmem:[%s4188 + $0x68] sm:$0x77] %v4224
    %v4226 = vld [vmem:[%s4188 + $0x70] sm:$0x77]
    %v4227 = vsel %vm4195, %v4136, %v4226
    %4228 = vst [vmem:[%s4188 + $0x70] sm:$0x77] %v4227
    %v4229 = vld [vmem:[%s4188 + $0x78] sm:$0x77]
    %v4230 = vsel %vm4195, %v4143, %v4229
    %4231 = vst [vmem:[%s4188 + $0x78] sm:$0x77] %v4230
    %v4232 = vld [vmem:[%s4188 + $0x80] sm:$0x77]
    %v4233 = vsel %vm4195, %v4150, %v4232
    %4234 = vst [vmem:[%s4188 + $0x80] sm:$0x77] %v4233
    %v4235 = vld [vmem:[%s4188 + $0x88] sm:$0x77]
    %v4236 = vsel %vm4195, %v4157, %v4235
    %4237 = vst [vmem:[%s4188 + $0x88] sm:$0x77] %v4236
    %v4238 = vld [vmem:[%s4188 + $0x90] sm:$0x77]
    %v4239 = vsel %vm4195, %v4164, %v4238
    %4240 = vst [vmem:[%s4188 + $0x90] sm:$0x77] %v4239
    %v4241 = vld [vmem:[%s4188 + $0x98] sm:$0x77]
    %v4242 = vsel %vm4195, %v4171, %v4241
    %4243 = vst [vmem:[%s4188 + $0x98] sm:$0x77] %v4242
    %v4244 = vld [vmem:[#allocation2] sm:$0x77]
    %v4245 = vld [vmem:[#allocation2 + $0x8] sm:$0x77]
    %v4246 = vld [vmem:[#allocation2 + $0x10] sm:$0x77]
    %v4247 = vld [vmem:[#allocation2 + $0x18] sm:$0x77]
    %v4248 = vld [vmem:[#allocation2 + $0x20] sm:$0x77]
    %v4249 = vld [vmem:[#allocation2 + $0x28] sm:$0x77]
    %v4250 = vld [vmem:[#allocation2 + $0x30] sm:$0x77]
    %v4251 = vld [vmem:[#allocation2 + $0x38] sm:$0x77]
    %v4252 = vld [vmem:[#allocation2 + $0x40] sm:$0x77]
    %v4253 = vld [vmem:[#allocation2 + $0x48] sm:$0x77]
    %v4254 = vld [vmem:[#allocation2 + $0x50] sm:$0x77]
    %v4255 = vld [vmem:[#allocation2 + $0x58] sm:$0x77]
    %v4256 = vld [vmem:[#allocation2 + $0x60] sm:$0x77]
    %v4257 = vld [vmem:[#allocation2 + $0x68] sm:$0x77]
    %v4258 = vld [vmem:[#allocation2 + $0x70] sm:$0x77]
    %v4259 = vld [vmem:[#allocation2 + $0x78] sm:$0x77]
    %v4260 = vld [vmem:[#allocation2 + $0x80] sm:$0x77]
    %v4261 = vld [vmem:[#allocation2 + $0x88] sm:$0x77]
    %v4262 = vld [vmem:[#allocation2 + $0x90] sm:$0x77]
    %v4263 = vld [vmem:[#allocation2 + $0x98] sm:$0x77]
    %v4264 = vld [vmem:[#allocation2 + $0xa0] sm:$0x77]
    %v4265 = vld [vmem:[#allocation2 + $0xa8] sm:$0x77]
    %v4266 = vld [vmem:[#allocation2 + $0xb0] sm:$0x77]
    %v4267 = vld [vmem:[#allocation2 + $0xb8] sm:$0x77]
    %v4285 = vunpack.c.l.s4 1983009808
    %v4286 = vunpack.c.0.s8 %v4285
    %v4287 = vlaneseq
    %v4288 = vshrl.u32 %v4287, 7
    %v4289 = vsub.s32 %v4286, %v4288
    %v4290 = vrot.slane %v4244, %v4289
    %v4292 = vunpack.c.l.s4 1983009808
    %v4293 = vunpack.c.0.s8 %v4292
    %v4294 = vlaneseq
    %v4295 = vshrl.u32 %v4294, 7
    %v4296 = vsub.s32 %v4293, %v4295
    %v4297 = vrot.slane %v4245, %v4296
    %v4298 = vcombine.low %v4290, %v4297
    %v4300 = vunpack.c.l.s4 1983009808
    %v4301 = vunpack.c.0.s8 %v4300
    %v4302 = vlaneseq
    %v4303 = vshrl.u32 %v4302, 7
    %v4304 = vsub.s32 %v4301, %v4303
    %v4305 = vrot.slane %v4246, %v4304
    %v4307 = vunpack.c.l.s4 1983009808
    %v4308 = vunpack.c.0.s8 %v4307
    %v4309 = vlaneseq
    %v4310 = vshrl.u32 %v4309, 7
    %v4311 = vsub.s32 %v4308, %v4310
    %v4312 = vrot.slane %v4247, %v4311
    %v4313 = vcombine.low %v4305, %v4312
    %v4315 = vunpack.c.l.s4 1983009808
    %v4316 = vunpack.c.0.s8 %v4315
    %v4317 = vlaneseq
    %v4318 = vshrl.u32 %v4317, 7
    %v4319 = vsub.s32 %v4316, %v4318
    %v4320 = vrot.slane %v4248, %v4319
    %v4322 = vunpack.c.l.s4 1983009808
    %v4323 = vunpack.c.0.s8 %v4322
    %v4324 = vlaneseq
    %v4325 = vshrl.u32 %v4324, 7
    %v4326 = vsub.s32 %v4323, %v4325
    %v4327 = vrot.slane %v4249, %v4326
    %v4328 = vcombine.low %v4320, %v4327
    %v4330 = vunpack.c.l.s4 1983009808
    %v4331 = vunpack.c.0.s8 %v4330
    %v4332 = vlaneseq
    %v4333 = vshrl.u32 %v4332, 7
    %v4334 = vsub.s32 %v4331, %v4333
    %v4335 = vrot.slane %v4250, %v4334
    %v4337 = vunpack.c.l.s4 1983009808
    %v4338 = vunpack.c.0.s8 %v4337
    %v4339 = vlaneseq
    %v4340 = vshrl.u32 %v4339, 7
    %v4341 = vsub.s32 %v4338, %v4340
    %v4342 = vrot.slane %v4251, %v4341
    %v4343 = vcombine.low %v4335, %v4342
    %v4345 = vunpack.c.l.s4 1983009808
    %v4346 = vunpack.c.0.s8 %v4345
    %v4347 = vlaneseq
    %v4348 = vshrl.u32 %v4347, 7
    %v4349 = vsub.s32 %v4346, %v4348
    %v4350 = vrot.slane %v4256, %v4349
    %v4352 = vunpack.c.l.s4 1983009808
    %v4353 = vunpack.c.0.s8 %v4352
    %v4354 = vlaneseq
    %v4355 = vshrl.u32 %v4354, 7
    %v4356 = vsub.s32 %v4353, %v4355
    %v4357 = vrot.slane %v4257, %v4356
    %v4358 = vcombine.low %v4350, %v4357
    %v4360 = vunpack.c.l.s4 1983009808
    %v4361 = vunpack.c.0.s8 %v4360
    %v4362 = vlaneseq
    %v4363 = vshrl.u32 %v4362, 7
    %v4364 = vsub.s32 %v4361, %v4363
    %v4365 = vrot.slane %v4258, %v4364
    %v4367 = vunpack.c.l.s4 1983009808
    %v4368 = vunpack.c.0.s8 %v4367
    %v4369 = vlaneseq
    %v4370 = vshrl.u32 %v4369, 7
    %v4371 = vsub.s32 %v4368, %v4370
    %v4372 = vrot.slane %v4259, %v4371
    %v4373 = vcombine.low %v4365, %v4372
    %v4375 = vunpack.c.l.s4 1983009808
    %v4376 = vunpack.c.0.s8 %v4375
    %v4377 = vlaneseq
    %v4378 = vshrl.u32 %v4377, 7
    %v4379 = vsub.s32 %v4376, %v4378
    %v4380 = vrot.slane %v4260, %v4379
    %v4382 = vunpack.c.l.s4 1983009808
    %v4383 = vunpack.c.0.s8 %v4382
    %v4384 = vlaneseq
    %v4385 = vshrl.u32 %v4384, 7
    %v4386 = vsub.s32 %v4383, %v4385
    %v4387 = vrot.slane %v4261, %v4386
    %v4388 = vcombine.low %v4380, %v4387
    %v4390 = vunpack.c.l.s4 1983009808
    %v4391 = vunpack.c.0.s8 %v4390
    %v4392 = vlaneseq
    %v4393 = vshrl.u32 %v4392, 7
    %v4394 = vsub.s32 %v4391, %v4393
    %v4395 = vrot.slane %v4262, %v4394
    %v4397 = vunpack.c.l.s4 1983009808
    %v4398 = vunpack.c.0.s8 %v4397
    %v4399 = vlaneseq
    %v4400 = vshrl.u32 %v4399, 7
    %v4401 = vsub.s32 %v4398, %v4400
    %v4402 = vrot.slane %v4263, %v4401
    %v4403 = vcombine.low %v4395, %v4402
    %v4404 = vld [vmem:[#allocation8] sm:$0xff]
    %v4405 = vld [vmem:[#allocation8 + $0x8] sm:$0xff]
    %v4406 = vld [vmem:[#allocation8 + $0x10] sm:$0xff]
    %v4407 = vld [vmem:[#allocation8 + $0x18] sm:$0xff]
    %v4408 = vld [vmem:[#allocation8 + $0x20] sm:$0xff]
    %v4409 = vld [vmem:[#allocation8 + $0x28] sm:$0xff]
    %v4410 = vld [vmem:[#allocation8 + $0x30] sm:$0xff]
    %v4411 = vld [vmem:[#allocation8 + $0x38] sm:$0xff]
    %v4412 = vld [vmem:[#allocation8 + $0x40] sm:$0xff]
    %v4413 = vld [vmem:[#allocation8 + $0x48] sm:$0xff]
    %v4414 = vld [vmem:[#allocation8 + $0x50] sm:$0xff]
    %v4415 = vld [vmem:[#allocation8 + $0x58] sm:$0xff]
    %v4416 = vld [vmem:[#allocation8 + $0x60] sm:$0xff]
    %v4417 = vld [vmem:[#allocation8 + $0x68] sm:$0xff]
    %v4418 = vld [vmem:[#allocation8 + $0x70] sm:$0xff]
    %v4419 = vld [vmem:[#allocation8 + $0x78] sm:$0xff]
    %v4420 = vld [vmem:[#allocation8 + $0x80] sm:$0xff]
    %v4421 = vld [vmem:[#allocation8 + $0x88] sm:$0xff]
    %v4422 = vld [vmem:[#allocation8 + $0x90] sm:$0xff]
    %v4423 = vld [vmem:[#allocation8 + $0x98] sm:$0xff]
    %v4424 = vld [vmem:[#allocation8 + $0xa0] sm:$0xff]
    %v4425 = vld [vmem:[#allocation8 + $0xa8] sm:$0xff]
    %v4426 = vld [vmem:[#allocation8 + $0xb0] sm:$0xff]
    %v4427 = vld [vmem:[#allocation8 + $0xb8] sm:$0xff]
    %v4428 = vld [vmem:[#allocation8 + $0xc0] sm:$0xff]
    %v4429 = vld [vmem:[#allocation8 + $0xc8] sm:$0xff]
    %v4430 = vld [vmem:[#allocation8 + $0xd0] sm:$0xff]
    %v4431 = vld [vmem:[#allocation8 + $0xd8] sm:$0xff]
    %v4432 = vld [vmem:[#allocation8 + $0xe0] sm:$0xff]
    %v4433 = vld [vmem:[#allocation8 + $0xe8] sm:$0xff]
    %v4434 = vld [vmem:[#allocation8 + $0xf0] sm:$0xff]
    %v4435 = vld [vmem:[#allocation8 + $0xf8] sm:$0xff]
    %v4436 = vld [vmem:[#allocation8 + $0x100] sm:$0xff]
    %v4437 = vld [vmem:[#allocation8 + $0x108] sm:$0xff]
    %v4438 = vld [vmem:[#allocation8 + $0x110] sm:$0xff]
    %v4439 = vld [vmem:[#allocation8 + $0x118] sm:$0xff]
    %v4440 = vld [vmem:[#allocation8 + $0x120] sm:$0xff]
    %v4441 = vld [vmem:[#allocation8 + $0x128] sm:$0xff]
    %v4442 = vld [vmem:[#allocation8 + $0x130] sm:$0xff]
    %v4443 = vld [vmem:[#allocation8 + $0x138] sm:$0xff]
    %v4444 = vld [vmem:[#allocation8 + $0x140] sm:$0xff]
    %v4445 = vld [vmem:[#allocation8 + $0x148] sm:$0xff]
    %v4446 = vld [vmem:[#allocation8 + $0x150] sm:$0xff]
    %v4447 = vld [vmem:[#allocation8 + $0x158] sm:$0xff]
    %v4448 = vld [vmem:[#allocation8 + $0x160] sm:$0xff]
    %v4449 = vld [vmem:[#allocation8 + $0x168] sm:$0xff]
    %v4450 = vld [vmem:[#allocation8 + $0x170] sm:$0xff]
    %v4451 = vld [vmem:[#allocation8 + $0x178] sm:$0xff]
    %v4452 = vld [vmem:[#allocation8 + $0x180] sm:$0xff]
    %v4453 = vld [vmem:[#allocation8 + $0x188] sm:$0xff]
    %v4454 = vld [vmem:[#allocation8 + $0x190] sm:$0xff]
    %v4455 = vld [vmem:[#allocation8 + $0x198] sm:$0xff]
    %v4456 = vld [vmem:[#allocation8 + $0x1a0] sm:$0xff]
    %v4457 = vld [vmem:[#allocation8 + $0x1a8] sm:$0xff]
    %v4458 = vld [vmem:[#allocation8 + $0x1b0] sm:$0xff]
    %v4459 = vld [vmem:[#allocation8 + $0x1b8] sm:$0xff]
    %v4460 = vld [vmem:[#allocation8 + $0x1c0] sm:$0xff]
    %v4461 = vld [vmem:[#allocation8 + $0x1c8] sm:$0xff]
    %v4462 = vld [vmem:[#allocation8 + $0x1d0] sm:$0xff]
    %v4463 = vld [vmem:[#allocation8 + $0x1d8] sm:$0xff]
    %v4464 = vld [vmem:[#allocation8 + $0x1e0] sm:$0xff]
    %v4465 = vld [vmem:[#allocation8 + $0x1e8] sm:$0xff]
    %v4466 = vld [vmem:[#allocation8 + $0x1f0] sm:$0xff]
    %v4467 = vld [vmem:[#allocation8 + $0x1f8] sm:$0xff]
    %v4468 = vld [vmem:[#allocation8 + $0x200] sm:$0xff]
    %v4469 = vld [vmem:[#allocation8 + $0x208] sm:$0xff]
    %v4470 = vld [vmem:[#allocation8 + $0x210] sm:$0xff]
    %v4471 = vld [vmem:[#allocation8 + $0x218] sm:$0xff]
    %v4472 = vld [vmem:[#allocation8 + $0x220] sm:$0xff]
    %v4473 = vld [vmem:[#allocation8 + $0x228] sm:$0xff]
    %v4474 = vld [vmem:[#allocation8 + $0x230] sm:$0xff]
    %v4475 = vld [vmem:[#allocation8 + $0x238] sm:$0xff]
    %v4476 = vld [vmem:[#allocation8 + $0x240] sm:$0xff]
    %v4477 = vld [vmem:[#allocation8 + $0x248] sm:$0xff]
    %v4478 = vld [vmem:[#allocation8 + $0x250] sm:$0xff]
    %v4479 = vld [vmem:[#allocation8 + $0x258] sm:$0xff]
    %v4480 = vld [vmem:[#allocation8 + $0x260] sm:$0xff]
    %v4481 = vld [vmem:[#allocation8 + $0x268] sm:$0xff]
    %v4482 = vld [vmem:[#allocation8 + $0x270] sm:$0xff]
    %v4483 = vld [vmem:[#allocation8 + $0x278] sm:$0xff]
    %v4484 = vld [vmem:[#allocation8 + $0x280] sm:$0xff]
    %v4485 = vld [vmem:[#allocation8 + $0x288] sm:$0xff]
    %v4486 = vld [vmem:[#allocation8 + $0x290] sm:$0xff]
    %v4487 = vld [vmem:[#allocation8 + $0x298] sm:$0xff]
    %v4488 = vld [vmem:[#allocation8 + $0x2a0] sm:$0xff]
    %v4489 = vld [vmem:[#allocation8 + $0x2a8] sm:$0xff]
    %v4490 = vld [vmem:[#allocation8 + $0x2b0] sm:$0xff]
    %v4491 = vld [vmem:[#allocation8 + $0x2b8] sm:$0xff]
    %v4492 = vld [vmem:[#allocation8 + $0x2c0] sm:$0xff]
    %v4493 = vld [vmem:[#allocation8 + $0x2c8] sm:$0xff]
    %v4494 = vld [vmem:[#allocation8 + $0x2d0] sm:$0xff]
    %v4495 = vld [vmem:[#allocation8 + $0x2d8] sm:$0xff]
    %v4496 = vld [vmem:[#allocation8 + $0x2e0] sm:$0xff]
    %v4497 = vld [vmem:[#allocation8 + $0x2e8] sm:$0xff]
    %v4498 = vld [vmem:[#allocation8 + $0x2f0] sm:$0xff]
    %v4499 = vld [vmem:[#allocation8 + $0x2f8] sm:$0xff]
    %v4500 = vld [vmem:[#allocation8 + $0x300] sm:$0xff]
    %v4501 = vld [vmem:[#allocation8 + $0x308] sm:$0xff]
    %v4502 = vld [vmem:[#allocation8 + $0x310] sm:$0xff]
    %v4503 = vld [vmem:[#allocation8 + $0x318] sm:$0xff]
    %v4504 = vld [vmem:[#allocation8 + $0x320] sm:$0xff]
    %v4505 = vld [vmem:[#allocation8 + $0x328] sm:$0xff]
    %v4506 = vld [vmem:[#allocation8 + $0x330] sm:$0xff]
    %v4507 = vld [vmem:[#allocation8 + $0x338] sm:$0xff]
    %v4508 = vld [vmem:[#allocation8 + $0x340] sm:$0xff]
    %v4509 = vld [vmem:[#allocation8 + $0x348] sm:$0xff]
    %v4510 = vld [vmem:[#allocation8 + $0x350] sm:$0xff]
    %v4511 = vld [vmem:[#allocation8 + $0x358] sm:$0xff]
    %v4512 = vld [vmem:[#allocation8 + $0x360] sm:$0xff]
    %v4513 = vld [vmem:[#allocation8 + $0x368] sm:$0xff]
    %v4514 = vld [vmem:[#allocation8 + $0x370] sm:$0xff]
    %v4515 = vld [vmem:[#allocation8 + $0x378] sm:$0xff]
    %v4516 = vld [vmem:[#allocation8 + $0x380] sm:$0xff]
    %v4517 = vld [vmem:[#allocation8 + $0x388] sm:$0xff]
    %v4518 = vld [vmem:[#allocation8 + $0x390] sm:$0xff]
    %v4519 = vld [vmem:[#allocation8 + $0x398] sm:$0xff]
    %v4520 = vld [vmem:[#allocation8 + $0x3a0] sm:$0xff]
    %v4521 = vld [vmem:[#allocation8 + $0x3a8] sm:$0xff]
    %v4522 = vld [vmem:[#allocation8 + $0x3b0] sm:$0xff]
    %v4523 = vld [vmem:[#allocation8 + $0x3b8] sm:$0xff]
    %v4524 = vld [vmem:[#allocation8 + $0x3c0] sm:$0xff]
    %v4525 = vld [vmem:[#allocation8 + $0x3c8] sm:$0xff]
    %v4526 = vld [vmem:[#allocation8 + $0x3d0] sm:$0xff]
    %v4527 = vld [vmem:[#allocation8 + $0x3d8] sm:$0xff]
    %v4528 = vld [vmem:[#allocation8 + $0x3e0] sm:$0xff]
    %v4529 = vld [vmem:[#allocation8 + $0x3e8] sm:$0xff]
    %v4530 = vld [vmem:[#allocation8 + $0x3f0] sm:$0xff]
    %v4531 = vld [vmem:[#allocation8 + $0x3f8] sm:$0xff]
    %v4532 = vcombine.high %v4290, %v4297
    %v4533 = vcombine.high %v4305, %v4312
    %v4534 = vcombine.high %v4320, %v4327
    %v4535 = vcombine.high %v4335, %v4342
    %v4536 = vcombine.high %v4350, %v4357
    %v4537 = vcombine.high %v4365, %v4372
    %v4538 = vcombine.high %v4380, %v4387
    %v4539 = vcombine.high %v4395, %v4402
    %vm4540 = vsmask.f32 1280
    %vm4541 = vsmask.f32 3336
    %vm4542 = vmor %vm4540, %vm4541
    %vm4543 = vsmask.f32 5392
    %vm4544 = vmor %vm4542, %vm4543
    %vm4545 = vsmask.f32 7448
    %vm4546 = vmor %vm4544, %vm4545
    %v4548 = vshrl.u32 %v4298, 16
    %v4550 = vrot.slane %v4548, 6
    %v4551 = vshll.u32 %v4298, 16
    %v4553 = vrot.slane %v4551, 7
    %v4554 = vor.u32 %v4550, %v4553
    %v4555 = vrot.slane %v4554, 2
    %v4557 = vshll.u32 %v4532, 16
    %v4559 = vrot.slane %v4557, 7
    %v4560 = vsel %vm4546, %v4555, %v4559
    %v4562 = vshrl.u32 %v4313, 16
    %v4564 = vrot.slane %v4562, 6
    %v4565 = vshll.u32 %v4313, 16
    %v4567 = vrot.slane %v4565, 7
    %v4568 = vor.u32 %v4564, %v4567
    %v4569 = vrot.slane %v4568, 2
    %v4571 = vshll.u32 %v4533, 16
    %v4573 = vrot.slane %v4571, 7
    %v4574 = vsel %vm4546, %v4569, %v4573
    %v4576 = vshrl.u32 %v4328, 16
    %v4578 = vrot.slane %v4576, 6
    %v4579 = vshll.u32 %v4328, 16
    %v4581 = vrot.slane %v4579, 7
    %v4582 = vor.u32 %v4578, %v4581
    %v4583 = vrot.slane %v4582, 2
    %v4585 = vshll.u32 %v4534, 16
    %v4587 = vrot.slane %v4585, 7
    %v4588 = vsel %vm4546, %v4583, %v4587
    %v4590 = vshrl.u32 %v4343, 16
    %v4592 = vrot.slane %v4590, 6
    %v4593 = vshll.u32 %v4343, 16
    %v4595 = vrot.slane %v4593, 7
    %v4596 = vor.u32 %v4592, %v4595
    %v4597 = vrot.slane %v4596, 2
    %v4599 = vshll.u32 %v4535, 16
    %v4601 = vrot.slane %v4599, 7
    %v4602 = vsel %vm4546, %v4597, %v4601
    %v4604 = vshrl.u32 %v4358, 16
    %v4606 = vrot.slane %v4604, 6
    %v4607 = vshll.u32 %v4358, 16
    %v4609 = vrot.slane %v4607, 7
    %v4610 = vor.u32 %v4606, %v4609
    %v4611 = vrot.slane %v4610, 2
    %v4613 = vshll.u32 %v4536, 16
    %v4615 = vrot.slane %v4613, 7
    %v4616 = vsel %vm4546, %v4611, %v4615
    %v4618 = vshrl.u32 %v4373, 16
    %v4620 = vrot.slane %v4618, 6
    %v4621 = vshll.u32 %v4373, 16
    %v4623 = vrot.slane %v4621, 7
    %v4624 = vor.u32 %v4620, %v4623
    %v4625 = vrot.slane %v4624, 2
    %v4627 = vshll.u32 %v4537, 16
    %v4629 = vrot.slane %v4627, 7
    %v4630 = vsel %vm4546, %v4625, %v4629
    %v4632 = vshrl.u32 %v4388, 16
    %v4634 = vrot.slane %v4632, 6
    %v4635 = vshll.u32 %v4388, 16
    %v4637 = vrot.slane %v4635, 7
    %v4638 = vor.u32 %v4634, %v4637
    %v4639 = vrot.slane %v4638, 2
    %v4641 = vshll.u32 %v4538, 16
    %v4643 = vrot.slane %v4641, 7
    %v4644 = vsel %vm4546, %v4639, %v4643
    %v4646 = vshrl.u32 %v4403, 16
    %v4648 = vrot.slane %v4646, 6
    %v4649 = vshll.u32 %v4403, 16
    %v4651 = vrot.slane %v4649, 7
    %v4652 = vor.u32 %v4648, %v4651
    %v4653 = vrot.slane %v4652, 2
    %v4655 = vshll.u32 %v4539, 16
    %v4657 = vrot.slane %v4655, 7
    %v4658 = vsel %vm4546, %v4653, %v4657
    %s4659 = scalar_lea.vmem [#allocation8], 1024
    %v4660 = vld [vmem:[%s4659] sm:$0xff]
    %v4661 = vld [vmem:[%s4659 + $0x8] sm:$0xff]
    %v4662 = vld [vmem:[%s4659 + $0x10] sm:$0xff]
    %v4663 = vld [vmem:[%s4659 + $0x18] sm:$0xff]
    %v4664 = vld [vmem:[%s4659 + $0x20] sm:$0xff]
    %v4665 = vld [vmem:[%s4659 + $0x28] sm:$0xff]
    %v4666 = vld [vmem:[%s4659 + $0x30] sm:$0xff]
    %v4667 = vld [vmem:[%s4659 + $0x38] sm:$0xff]
    %v4668 = vld [vmem:[%s4659 + $0x40] sm:$0xff]
    %v4669 = vld [vmem:[%s4659 + $0x48] sm:$0xff]
    %v4670 = vld [vmem:[%s4659 + $0x50] sm:$0xff]
    %v4671 = vld [vmem:[%s4659 + $0x58] sm:$0xff]
    %v4672 = vld [vmem:[%s4659 + $0x60] sm:$0xff]
    %v4673 = vld [vmem:[%s4659 + $0x68] sm:$0xff]
    %v4674 = vld [vmem:[%s4659 + $0x70] sm:$0xff]
    %v4675 = vld [vmem:[%s4659 + $0x78] sm:$0xff]
    %v4676 = vld [vmem:[%s4659 + $0x80] sm:$0xff]
    %v4677 = vld [vmem:[%s4659 + $0x88] sm:$0xff]
    %v4678 = vld [vmem:[%s4659 + $0x90] sm:$0xff]
    %v4679 = vld [vmem:[%s4659 + $0x98] sm:$0xff]
    %v4680 = vld [vmem:[%s4659 + $0xa0] sm:$0xff]
    %v4681 = vld [vmem:[%s4659 + $0xa8] sm:$0xff]
    %v4682 = vld [vmem:[%s4659 + $0xb0] sm:$0xff]
    %v4683 = vld [vmem:[%s4659 + $0xb8] sm:$0xff]
    %v4684 = vld [vmem:[%s4659 + $0xc0] sm:$0xff]
    %v4685 = vld [vmem:[%s4659 + $0xc8] sm:$0xff]
    %v4686 = vld [vmem:[%s4659 + $0xd0] sm:$0xff]
    %v4687 = vld [vmem:[%s4659 + $0xd8] sm:$0xff]
    %v4688 = vld [vmem:[%s4659 + $0xe0] sm:$0xff]
    %v4689 = vld [vmem:[%s4659 + $0xe8] sm:$0xff]
    %v4690 = vld [vmem:[%s4659 + $0xf0] sm:$0xff]
    %v4691 = vld [vmem:[%s4659 + $0xf8] sm:$0xff]
    %v4692 = vld [vmem:[%s4659 + $0x100] sm:$0xff]
    %v4693 = vld [vmem:[%s4659 + $0x108] sm:$0xff]
    %v4694 = vld [vmem:[%s4659 + $0x110] sm:$0xff]
    %v4695 = vld [vmem:[%s4659 + $0x118] sm:$0xff]
    %v4696 = vld [vmem:[%s4659 + $0x120] sm:$0xff]
    %v4697 = vld [vmem:[%s4659 + $0x128] sm:$0xff]
    %v4698 = vld [vmem:[%s4659 + $0x130] sm:$0xff]
    %v4699 = vld [vmem:[%s4659 + $0x138] sm:$0xff]
    %v4700 = vld [vmem:[%s4659 + $0x140] sm:$0xff]
    %v4701 = vld [vmem:[%s4659 + $0x148] sm:$0xff]
    %v4702 = vld [vmem:[%s4659 + $0x150] sm:$0xff]
    %v4703 = vld [vmem:[%s4659 + $0x158] sm:$0xff]
    %v4704 = vld [vmem:[%s4659 + $0x160] sm:$0xff]
    %v4705 = vld [vmem:[%s4659 + $0x168] sm:$0xff]
    %v4706 = vld [vmem:[%s4659 + $0x170] sm:$0xff]
    %v4707 = vld [vmem:[%s4659 + $0x178] sm:$0xff]
    %v4708 = vld [vmem:[%s4659 + $0x180] sm:$0xff]
    %v4709 = vld [vmem:[%s4659 + $0x188] sm:$0xff]
    %v4710 = vld [vmem:[%s4659 + $0x190] sm:$0xff]
    %v4711 = vld [vmem:[%s4659 + $0x198] sm:$0xff]
    %v4712 = vld [vmem:[%s4659 + $0x1a0] sm:$0xff]
    %v4713 = vld [vmem:[%s4659 + $0x1a8] sm:$0xff]
    %v4714 = vld [vmem:[%s4659 + $0x1b0] sm:$0xff]
    %v4715 = vld [vmem:[%s4659 + $0x1b8] sm:$0xff]
    %v4716 = vld [vmem:[%s4659 + $0x1c0] sm:$0xff]
    %v4717 = vld [vmem:[%s4659 + $0x1c8] sm:$0xff]
    %v4718 = vld [vmem:[%s4659 + $0x1d0] sm:$0xff]
    %v4719 = vld [vmem:[%s4659 + $0x1d8] sm:$0xff]
    %v4720 = vld [vmem:[%s4659 + $0x1e0] sm:$0xff]
    %v4721 = vld [vmem:[%s4659 + $0x1e8] sm:$0xff]
    %v4722 = vld [vmem:[%s4659 + $0x1f0] sm:$0xff]
    %v4723 = vld [vmem:[%s4659 + $0x1f8] sm:$0xff]
    %v4724 = vld [vmem:[%s4659 + $0x200] sm:$0xff]
    %v4725 = vld [vmem:[%s4659 + $0x208] sm:$0xff]
    %v4726 = vld [vmem:[%s4659 + $0x210] sm:$0xff]
    %v4727 = vld [vmem:[%s4659 + $0x218] sm:$0xff]
    %v4728 = vld [vmem:[%s4659 + $0x220] sm:$0xff]
    %v4729 = vld [vmem:[%s4659 + $0x228] sm:$0xff]
    %v4730 = vld [vmem:[%s4659 + $0x230] sm:$0xff]
    %v4731 = vld [vmem:[%s4659 + $0x238] sm:$0xff]
    %v4732 = vld [vmem:[%s4659 + $0x240] sm:$0xff]
    %v4733 = vld [vmem:[%s4659 + $0x248] sm:$0xff]
    %v4734 = vld [vmem:[%s4659 + $0x250] sm:$0xff]
    %v4735 = vld [vmem:[%s4659 + $0x258] sm:$0xff]
    %v4736 = vld [vmem:[%s4659 + $0x260] sm:$0xff]
    %v4737 = vld [vmem:[%s4659 + $0x268] sm:$0xff]
    %v4738 = vld [vmem:[%s4659 + $0x270] sm:$0xff]
    %v4739 = vld [vmem:[%s4659 + $0x278] sm:$0xff]
    %v4740 = vld [vmem:[%s4659 + $0x280] sm:$0xff]
    %v4741 = vld [vmem:[%s4659 + $0x288] sm:$0xff]
    %v4742 = vld [vmem:[%s4659 + $0x290] sm:$0xff]
    %v4743 = vld [vmem:[%s4659 + $0x298] sm:$0xff]
    %v4744 = vld [vmem:[%s4659 + $0x2a0] sm:$0xff]
    %v4745 = vld [vmem:[%s4659 + $0x2a8] sm:$0xff]
    %v4746 = vld [vmem:[%s4659 + $0x2b0] sm:$0xff]
    %v4747 = vld [vmem:[%s4659 + $0x2b8] sm:$0xff]
    %v4748 = vld [vmem:[%s4659 + $0x2c0] sm:$0xff]
    %v4749 = vld [vmem:[%s4659 + $0x2c8] sm:$0xff]
    %v4750 = vld [vmem:[%s4659 + $0x2d0] sm:$0xff]
    %v4751 = vld [vmem:[%s4659 + $0x2d8] sm:$0xff]
    %v4752 = vld [vmem:[%s4659 + $0x2e0] sm:$0xff]
    %v4753 = vld [vmem:[%s4659 + $0x2e8] sm:$0xff]
    %v4754 = vld [vmem:[%s4659 + $0x2f0] sm:$0xff]
    %v4755 = vld [vmem:[%s4659 + $0x2f8] sm:$0xff]
    %v4756 = vld [vmem:[%s4659 + $0x300] sm:$0xff]
    %v4757 = vld [vmem:[%s4659 + $0x308] sm:$0xff]
    %v4758 = vld [vmem:[%s4659 + $0x310] sm:$0xff]
    %v4759 = vld [vmem:[%s4659 + $0x318] sm:$0xff]
    %v4760 = vld [vmem:[%s4659 + $0x320] sm:$0xff]
    %v4761 = vld [vmem:[%s4659 + $0x328] sm:$0xff]
    %v4762 = vld [vmem:[%s4659 + $0x330] sm:$0xff]
    %v4763 = vld [vmem:[%s4659 + $0x338] sm:$0xff]
    %v4764 = vld [vmem:[%s4659 + $0x340] sm:$0xff]
    %v4765 = vld [vmem:[%s4659 + $0x348] sm:$0xff]
    %v4766 = vld [vmem:[%s4659 + $0x350] sm:$0xff]
    %v4767 = vld [vmem:[%s4659 + $0x358] sm:$0xff]
    %v4768 = vld [vmem:[%s4659 + $0x360] sm:$0xff]
    %v4769 = vld [vmem:[%s4659 + $0x368] sm:$0xff]
    %v4770 = vld [vmem:[%s4659 + $0x370] sm:$0xff]
    %v4771 = vld [vmem:[%s4659 + $0x378] sm:$0xff]
    %v4772 = vld [vmem:[%s4659 + $0x380] sm:$0xff]
    %v4773 = vld [vmem:[%s4659 + $0x388] sm:$0xff]
    %v4774 = vld [vmem:[%s4659 + $0x390] sm:$0xff]
    %v4775 = vld [vmem:[%s4659 + $0x398] sm:$0xff]
    %v4776 = vld [vmem:[%s4659 + $0x3a0] sm:$0xff]
    %v4777 = vld [vmem:[%s4659 + $0x3a8] sm:$0xff]
    %v4778 = vld [vmem:[%s4659 + $0x3b0] sm:$0xff]
    %v4779 = vld [vmem:[%s4659 + $0x3b8] sm:$0xff]
    %v4780 = vld [vmem:[%s4659 + $0x3c0] sm:$0xff]
    %v4781 = vld [vmem:[%s4659 + $0x3c8] sm:$0xff]
    %v4782 = vld [vmem:[%s4659 + $0x3d0] sm:$0xff]
    %v4783 = vld [vmem:[%s4659 + $0x3d8] sm:$0xff]
    %v4784 = vld [vmem:[%s4659 + $0x3e0] sm:$0xff]
    %v4785 = vld [vmem:[%s4659 + $0x3e8] sm:$0xff]
    %v4786 = vld [vmem:[%s4659 + $0x3f0] sm:$0xff]
    %v4787 = vld [vmem:[%s4659 + $0x3f8] sm:$0xff]
    %v4788 = vcombine.low %v4560, %v4574
    %v4789 = vcombine.high %v4560, %v4574
    %v4790 = vcombine.low %v4588, %v4602
    %v4791 = vcombine.high %v4588, %v4602
    %v4793 = vunpack.c.l.s4 1983009808
    %v4794 = vunpack.c.0.s8 %v4793
    %v4795 = vlaneseq
    %v4796 = vshrl.u32 %v4795, 7
    %v4797 = vsub.s32 %v4794, %v4796
    %v4798 = vrot.slane %v4788, %v4797
    %v4800 = vunpack.c.l.s4 1983009808
    %v4801 = vunpack.c.0.s8 %v4800
    %v4802 = vlaneseq
    %v4803 = vshrl.u32 %v4802, 7
    %v4804 = vsub.s32 %v4801, %v4803
    %v4805 = vrot.slane %v4789, %v4804
    %v4807 = vunpack.c.l.s4 1983009808
    %v4808 = vunpack.c.0.s8 %v4807
    %v4809 = vlaneseq
    %v4810 = vshrl.u32 %v4809, 7
    %v4811 = vsub.s32 %v4808, %v4810
    %v4812 = vrot.slane %v4790, %v4811
    %v4814 = vunpack.c.l.s4 1983009808
    %v4815 = vunpack.c.0.s8 %v4814
    %v4816 = vlaneseq
    %v4817 = vshrl.u32 %v4816, 7
    %v4818 = vsub.s32 %v4815, %v4817
    %v4819 = vrot.slane %v4791, %v4818
    %v4820 = vcombine.low %v4798, %v4812
    %v4821 = vcombine.high %v4798, %v4812
    %v4822 = vcombine.low %v4805, %v4819
    %v4823 = vcombine.high %v4805, %v4819
    %v4824 = vcombine.low %v4616, %v4630
    %v4825 = vcombine.high %v4616, %v4630
    %v4826 = vcombine.low %v4644, %v4658
    %v4827 = vcombine.high %v4644, %v4658
    %v4829 = vunpack.c.l.s4 1983009808
    %v4830 = vunpack.c.0.s8 %v4829
    %v4831 = vlaneseq
    %v4832 = vshrl.u32 %v4831, 7
    %v4833 = vsub.s32 %v4830, %v4832
    %v4834 = vrot.slane %v4824, %v4833
    %v4836 = vunpack.c.l.s4 1983009808
    %v4837 = vunpack.c.0.s8 %v4836
    %v4838 = vlaneseq
    %v4839 = vshrl.u32 %v4838, 7
    %v4840 = vsub.s32 %v4837, %v4839
    %v4841 = vrot.slane %v4825, %v4840
    %v4843 = vunpack.c.l.s4 1983009808
    %v4844 = vunpack.c.0.s8 %v4843
    %v4845 = vlaneseq
    %v4846 = vshrl.u32 %v4845, 7
    %v4847 = vsub.s32 %v4844, %v4846
    %v4848 = vrot.slane %v4826, %v4847
    %v4850 = vunpack.c.l.s4 1983009808
    %v4851 = vunpack.c.0.s8 %v4850
    %v4852 = vlaneseq
    %v4853 = vshrl.u32 %v4852, 7
    %v4854 = vsub.s32 %v4851, %v4853
    %v4855 = vrot.slane %v4827, %v4854
    %v4856 = vcombine.low %v4834, %v4848
    %v4857 = vcombine.high %v4834, %v4848
    %v4858 = vcombine.low %v4841, %v4855
    %v4859 = vcombine.high %v4841, %v4855
    %v4996 = vunpack.c.l.b16 %v4660
    %v4997 = vunpack.c.h.b16 %v4660
    %v4998 = vunpack.c.l.b16 %v4661
    %v4999 = vunpack.c.h.b16 %v4661
    %v5000 = vunpack.c.l.b16 %v4662
    %v5001 = vunpack.c.h.b16 %v4662
    %v5002 = vunpack.c.l.b16 %v4663
    %v5003 = vunpack.c.h.b16 %v4663
    %v5004 = vunpack.c.l.b16 %v4664
    %v5005 = vunpack.c.h.b16 %v4664
    %v5006 = vunpack.c.l.b16 %v4665
    %v5007 = vunpack.c.h.b16 %v4665
    %v5008 = vunpack.c.l.b16 %v4666
    %v5009 = vunpack.c.h.b16 %v4666
    %v5010 = vunpack.c.l.b16 %v4667
    %v5011 = vunpack.c.h.b16 %v4667
    %v5012 = vunpack.c.l.b16 %v4668
    %v5013 = vunpack.c.h.b16 %v4668
    %v5014 = vunpack.c.l.b16 %v4669
    %v5015 = vunpack.c.h.b16 %v4669
    %v5016 = vunpack.c.l.b16 %v4670
    %v5017 = vunpack.c.h.b16 %v4670
    %v5018 = vunpack.c.l.b16 %v4671
    %v5019 = vunpack.c.h.b16 %v4671
    %v5020 = vunpack.c.l.b16 %v4672
    %v5021 = vunpack.c.h.b16 %v4672
    %v5022 = vunpack.c.l.b16 %v4673
    %v5023 = vunpack.c.h.b16 %v4673
    %v5024 = vunpack.c.l.b16 %v4674
    %v5025 = vunpack.c.h.b16 %v4674
    %v5026 = vunpack.c.l.b16 %v4675
    %v5027 = vunpack.c.h.b16 %v4675
    %v5028 = vunpack.c.l.b16 %v4676
    %v5029 = vunpack.c.h.b16 %v4676
    %v5030 = vunpack.c.l.b16 %v4677
    %v5031 = vunpack.c.h.b16 %v4677
    %v5032 = vunpack.c.l.b16 %v4678
    %v5033 = vunpack.c.h.b16 %v4678
    %v5034 = vunpack.c.l.b16 %v4679
    %v5035 = vunpack.c.h.b16 %v4679
    %v5036 = vunpack.c.l.b16 %v4680
    %v5037 = vunpack.c.h.b16 %v4680
    %v5038 = vunpack.c.l.b16 %v4681
    %v5039 = vunpack.c.h.b16 %v4681
    %v5040 = vunpack.c.l.b16 %v4682
    %v5041 = vunpack.c.h.b16 %v4682
    %v5042 = vunpack.c.l.b16 %v4683
    %v5043 = vunpack.c.h.b16 %v4683
    %v5044 = vunpack.c.l.b16 %v4684
    %v5045 = vunpack.c.h.b16 %v4684
    %v5046 = vunpack.c.l.b16 %v4685
    %v5047 = vunpack.c.h.b16 %v4685
    %v5048 = vunpack.c.l.b16 %v4686
    %v5049 = vunpack.c.h.b16 %v4686
    %v5050 = vunpack.c.l.b16 %v4687
    %v5051 = vunpack.c.h.b16 %v4687
    %v5052 = vunpack.c.l.b16 %v4688
    %v5053 = vunpack.c.h.b16 %v4688
    %v5054 = vunpack.c.l.b16 %v4689
    %v5055 = vunpack.c.h.b16 %v4689
    %v5056 = vunpack.c.l.b16 %v4690
    %v5057 = vunpack.c.h.b16 %v4690
    %v5058 = vunpack.c.l.b16 %v4691
    %v5059 = vunpack.c.h.b16 %v4691
    %v5060 = vunpack.c.l.b16 %v4692
    %v5061 = vunpack.c.h.b16 %v4692
    %v5062 = vunpack.c.l.b16 %v4693
    %v5063 = vunpack.c.h.b16 %v4693
    %v5064 = vunpack.c.l.b16 %v4694
    %v5065 = vunpack.c.h.b16 %v4694
    %v5066 = vunpack.c.l.b16 %v4695
    %v5067 = vunpack.c.h.b16 %v4695
    %v5068 = vunpack.c.l.b16 %v4696
    %v5069 = vunpack.c.h.b16 %v4696
    %v5070 = vunpack.c.l.b16 %v4697
    %v5071 = vunpack.c.h.b16 %v4697
    %v5072 = vunpack.c.l.b16 %v4698
    %v5073 = vunpack.c.h.b16 %v4698
    %v5074 = vunpack.c.l.b16 %v4699
    %v5075 = vunpack.c.h.b16 %v4699
    %v5076 = vunpack.c.l.b16 %v4700
    %v5077 = vunpack.c.h.b16 %v4700
    %v5078 = vunpack.c.l.b16 %v4701
    %v5079 = vunpack.c.h.b16 %v4701
    %v5080 = vunpack.c.l.b16 %v4702
    %v5081 = vunpack.c.h.b16 %v4702
    %v5082 = vunpack.c.l.b16 %v4703
    %v5083 = vunpack.c.h.b16 %v4703
    %v5084 = vunpack.c.l.b16 %v4704
    %v5085 = vunpack.c.h.b16 %v4704
    %v5086 = vunpack.c.l.b16 %v4705
    %v5087 = vunpack.c.h.b16 %v4705
    %v5088 = vunpack.c.l.b16 %v4706
    %v5089 = vunpack.c.h.b16 %v4706
    %v5090 = vunpack.c.l.b16 %v4707
    %v5091 = vunpack.c.h.b16 %v4707
    %v5092 = vunpack.c.l.b16 %v4708
    %v5093 = vunpack.c.h.b16 %v4708
    %v5094 = vunpack.c.l.b16 %v4709
    %v5095 = vunpack.c.h.b16 %v4709
    %v5096 = vunpack.c.l.b16 %v4710
    %v5097 = vunpack.c.h.b16 %v4710
    %v5098 = vunpack.c.l.b16 %v4711
    %v5099 = vunpack.c.h.b16 %v4711
    %v5100 = vunpack.c.l.b16 %v4712
    %v5101 = vunpack.c.h.b16 %v4712
    %v5102 = vunpack.c.l.b16 %v4713
    %v5103 = vunpack.c.h.b16 %v4713
    %v5104 = vunpack.c.l.b16 %v4714
    %v5105 = vunpack.c.h.b16 %v4714
    %v5106 = vunpack.c.l.b16 %v4715
    %v5107 = vunpack.c.h.b16 %v4715
    %v5108 = vunpack.c.l.b16 %v4716
    %v5109 = vunpack.c.h.b16 %v4716
    %v5110 = vunpack.c.l.b16 %v4717
    %v5111 = vunpack.c.h.b16 %v4717
    %v5112 = vunpack.c.l.b16 %v4718
    %v5113 = vunpack.c.h.b16 %v4718
    %v5114 = vunpack.c.l.b16 %v4719
    %v5115 = vunpack.c.h.b16 %v4719
    %v5116 = vunpack.c.l.b16 %v4720
    %v5117 = vunpack.c.h.b16 %v4720
    %v5118 = vunpack.c.l.b16 %v4721
    %v5119 = vunpack.c.h.b16 %v4721
    %v5120 = vunpack.c.l.b16 %v4722
    %v5121 = vunpack.c.h.b16 %v4722
    %v5122 = vunpack.c.l.b16 %v4723
    %v5123 = vunpack.c.h.b16 %v4723
    %v5124 = vunpack.c.l.b16 %v4724
    %v5125 = vunpack.c.h.b16 %v4724
    %v5126 = vunpack.c.l.b16 %v4725
    %v5127 = vunpack.c.h.b16 %v4725
    %v5128 = vunpack.c.l.b16 %v4726
    %v5129 = vunpack.c.h.b16 %v4726
    %v5130 = vunpack.c.l.b16 %v4727
    %v5131 = vunpack.c.h.b16 %v4727
    %v5132 = vunpack.c.l.b16 %v4728
    %v5133 = vunpack.c.h.b16 %v4728
    %v5134 = vunpack.c.l.b16 %v4729
    %v5135 = vunpack.c.h.b16 %v4729
    %v5136 = vunpack.c.l.b16 %v4730
    %v5137 = vunpack.c.h.b16 %v4730
    %v5138 = vunpack.c.l.b16 %v4731
    %v5139 = vunpack.c.h.b16 %v4731
    %v5140 = vunpack.c.l.b16 %v4732
    %v5141 = vunpack.c.h.b16 %v4732
    %v5142 = vunpack.c.l.b16 %v4733
    %v5143 = vunpack.c.h.b16 %v4733
    %v5144 = vunpack.c.l.b16 %v4734
    %v5145 = vunpack.c.h.b16 %v4734
    %v5146 = vunpack.c.l.b16 %v4735
    %v5147 = vunpack.c.h.b16 %v4735
    %v5148 = vunpack.c.l.b16 %v4736
    %v5149 = vunpack.c.h.b16 %v4736
    %v5150 = vunpack.c.l.b16 %v4737
    %v5151 = vunpack.c.h.b16 %v4737
    %v5152 = vunpack.c.l.b16 %v4738
    %v5153 = vunpack.c.h.b16 %v4738
    %v5154 = vunpack.c.l.b16 %v4739
    %v5155 = vunpack.c.h.b16 %v4739
    %v5156 = vunpack.c.l.b16 %v4740
    %v5157 = vunpack.c.h.b16 %v4740
    %v5158 = vunpack.c.l.b16 %v4741
    %v5159 = vunpack.c.h.b16 %v4741
    %v5160 = vunpack.c.l.b16 %v4742
    %v5161 = vunpack.c.h.b16 %v4742
    %v5162 = vunpack.c.l.b16 %v4743
    %v5163 = vunpack.c.h.b16 %v4743
    %v5164 = vunpack.c.l.b16 %v4744
    %v5165 = vunpack.c.h.b16 %v4744
    %v5166 = vunpack.c.l.b16 %v4745
    %v5167 = vunpack.c.h.b16 %v4745
    %v5168 = vunpack.c.l.b16 %v4746
    %v5169 = vunpack.c.h.b16 %v4746
    %v5170 = vunpack.c.l.b16 %v4747
    %v5171 = vunpack.c.h.b16 %v4747
    %v5172 = vunpack.c.l.b16 %v4748
    %v5173 = vunpack.c.h.b16 %v4748
    %v5174 = vunpack.c.l.b16 %v4749
    %v5175 = vunpack.c.h.b16 %v4749
    %v5176 = vunpack.c.l.b16 %v4750
    %v5177 = vunpack.c.h.b16 %v4750
    %v5178 = vunpack.c.l.b16 %v4751
    %v5179 = vunpack.c.h.b16 %v4751
    %v5180 = vunpack.c.l.b16 %v4752
    %v5181 = vunpack.c.h.b16 %v4752
    %v5182 = vunpack.c.l.b16 %v4753
    %v5183 = vunpack.c.h.b16 %v4753
    %v5184 = vunpack.c.l.b16 %v4754
    %v5185 = vunpack.c.h.b16 %v4754
    %v5186 = vunpack.c.l.b16 %v4755
    %v5187 = vunpack.c.h.b16 %v4755
    %v5188 = vunpack.c.l.b16 %v4756
    %v5189 = vunpack.c.h.b16 %v4756
    %v5190 = vunpack.c.l.b16 %v4757
    %v5191 = vunpack.c.h.b16 %v4757
    %v5192 = vunpack.c.l.b16 %v4758
    %v5193 = vunpack.c.h.b16 %v4758
    %v5194 = vunpack.c.l.b16 %v4759
    %v5195 = vunpack.c.h.b16 %v4759
    %v5196 = vunpack.c.l.b16 %v4760
    %v5197 = vunpack.c.h.b16 %v4760
    %v5198 = vunpack.c.l.b16 %v4761
    %v5199 = vunpack.c.h.b16 %v4761
    %v5200 = vunpack.c.l.b16 %v4762
    %v5201 = vunpack.c.h.b16 %v4762
    %v5202 = vunpack.c.l.b16 %v4763
    %v5203 = vunpack.c.h.b16 %v4763
    %v5204 = vunpack.c.l.b16 %v4764
    %v5205 = vunpack.c.h.b16 %v4764
    %v5206 = vunpack.c.l.b16 %v4765
    %v5207 = vunpack.c.h.b16 %v4765
    %v5208 = vunpack.c.l.b16 %v4766
    %v5209 = vunpack.c.h.b16 %v4766
    %v5210 = vunpack.c.l.b16 %v4767
    %v5211 = vunpack.c.h.b16 %v4767
    %v5212 = vunpack.c.l.b16 %v4768
    %v5213 = vunpack.c.h.b16 %v4768
    %v5214 = vunpack.c.l.b16 %v4769
    %v5215 = vunpack.c.h.b16 %v4769
    %v5216 = vunpack.c.l.b16 %v4770
    %v5217 = vunpack.c.h.b16 %v4770
    %v5218 = vunpack.c.l.b16 %v4771
    %v5219 = vunpack.c.h.b16 %v4771
    %v5220 = vunpack.c.l.b16 %v4772
    %v5221 = vunpack.c.h.b16 %v4772
    %v5222 = vunpack.c.l.b16 %v4773
    %v5223 = vunpack.c.h.b16 %v4773
    %v5224 = vunpack.c.l.b16 %v4774
    %v5225 = vunpack.c.h.b16 %v4774
    %v5226 = vunpack.c.l.b16 %v4775
    %v5227 = vunpack.c.h.b16 %v4775
    %v5228 = vunpack.c.l.b16 %v4776
    %v5229 = vunpack.c.h.b16 %v4776
    %v5230 = vunpack.c.l.b16 %v4777
    %v5231 = vunpack.c.h.b16 %v4777
    %v5232 = vunpack.c.l.b16 %v4778
    %v5233 = vunpack.c.h.b16 %v4778
    %v5234 = vunpack.c.l.b16 %v4779
    %v5235 = vunpack.c.h.b16 %v4779
    %v5236 = vunpack.c.l.b16 %v4780
    %v5237 = vunpack.c.h.b16 %v4780
    %v5238 = vunpack.c.l.b16 %v4781
    %v5239 = vunpack.c.h.b16 %v4781
    %v5240 = vunpack.c.l.b16 %v4782
    %v5241 = vunpack.c.h.b16 %v4782
    %v5242 = vunpack.c.l.b16 %v4783
    %v5243 = vunpack.c.h.b16 %v4783
    %v5244 = vunpack.c.l.b16 %v4784
    %v5245 = vunpack.c.h.b16 %v4784
    %v5246 = vunpack.c.l.b16 %v4785
    %v5247 = vunpack.c.h.b16 %v4785
    %v5248 = vunpack.c.l.b16 %v4786
    %v5249 = vunpack.c.h.b16 %v4786
    %v5250 = vunpack.c.l.b16 %v4787
    %v5251 = vunpack.c.h.b16 %v4787
    %v5252 = vpack.c.b16 %v5000, %v4996
    %v5253 = vpack.c.b16 %v5001, %v4997
    %v5254 = vpack.c.b16 %v5002, %v4998
    %v5255 = vpack.c.b16 %v5003, %v4999
    %v5256 = vpack.c.b16 %v5008, %v5004
    %v5257 = vpack.c.b16 %v5009, %v5005
    %v5258 = vpack.c.b16 %v5010, %v5006
    %v5259 = vpack.c.b16 %v5011, %v5007
    %v5260 = vpack.c.b16 %v5016, %v5012
    %v5261 = vpack.c.b16 %v5017, %v5013
    %v5262 = vpack.c.b16 %v5018, %v5014
    %v5263 = vpack.c.b16 %v5019, %v5015
    %v5264 = vpack.c.b16 %v5024, %v5020
    %v5265 = vpack.c.b16 %v5025, %v5021
    %v5266 = vpack.c.b16 %v5026, %v5022
    %v5267 = vpack.c.b16 %v5027, %v5023
    %v5268 = vpack.c.b16 %v5032, %v5028
    %v5269 = vpack.c.b16 %v5033, %v5029
    %v5270 = vpack.c.b16 %v5034, %v5030
    %v5271 = vpack.c.b16 %v5035, %v5031
    %v5272 = vpack.c.b16 %v5040, %v5036
    %v5273 = vpack.c.b16 %v5041, %v5037
    %v5274 = vpack.c.b16 %v5042, %v5038
    %v5275 = vpack.c.b16 %v5043, %v5039
    %v5276 = vpack.c.b16 %v5048, %v5044
    %v5277 = vpack.c.b16 %v5049, %v5045
    %v5278 = vpack.c.b16 %v5050, %v5046
    %v5279 = vpack.c.b16 %v5051, %v5047
    %v5280 = vpack.c.b16 %v5056, %v5052
    %v5281 = vpack.c.b16 %v5057, %v5053
    %v5282 = vpack.c.b16 %v5058, %v5054
    %v5283 = vpack.c.b16 %v5059, %v5055
    %v5284 = vpack.c.b16 %v5064, %v5060
    %v5285 = vpack.c.b16 %v5065, %v5061
    %v5286 = vpack.c.b16 %v5066, %v5062
    %v5287 = vpack.c.b16 %v5067, %v5063
    %v5288 = vpack.c.b16 %v5072, %v5068
    %v5289 = vpack.c.b16 %v5073, %v5069
    %v5290 = vpack.c.b16 %v5074, %v5070
    %v5291 = vpack.c.b16 %v5075, %v5071
    %v5292 = vpack.c.b16 %v5080, %v5076
    %v5293 = vpack.c.b16 %v5081, %v5077
    %v5294 = vpack.c.b16 %v5082, %v5078
    %v5295 = vpack.c.b16 %v5083, %v5079
    %v5296 = vpack.c.b16 %v5088, %v5084
    %v5297 = vpack.c.b16 %v5089, %v5085
    %v5298 = vpack.c.b16 %v5090, %v5086
    %v5299 = vpack.c.b16 %v5091, %v5087
    %v5300 = vpack.c.b16 %v5096, %v5092
    %v5301 = vpack.c.b16 %v5097, %v5093
    %v5302 = vpack.c.b16 %v5098, %v5094
    %v5303 = vpack.c.b16 %v5099, %v5095
    %v5304 = vpack.c.b16 %v5104, %v5100
    %v5305 = vpack.c.b16 %v5105, %v5101
    %v5306 = vpack.c.b16 %v5106, %v5102
    %v5307 = vpack.c.b16 %v5107, %v5103
    %v5308 = vpack.c.b16 %v5112, %v5108
    %v5309 = vpack.c.b16 %v5113, %v5109
    %v5310 = vpack.c.b16 %v5114, %v5110
    %v5311 = vpack.c.b16 %v5115, %v5111
    %v5312 = vpack.c.b16 %v5120, %v5116
    %v5313 = vpack.c.b16 %v5121, %v5117
    %v5314 = vpack.c.b16 %v5122, %v5118
    %v5315 = vpack.c.b16 %v5123, %v5119
    %v5316 = vpack.c.b16 %v5128, %v5124
    %v5317 = vpack.c.b16 %v5129, %v5125
    %v5318 = vpack.c.b16 %v5130, %v5126
    %v5319 = vpack.c.b16 %v5131, %v5127
    %v5320 = vpack.c.b16 %v5136, %v5132
    %v5321 = vpack.c.b16 %v5137, %v5133
    %v5322 = vpack.c.b16 %v5138, %v5134
    %v5323 = vpack.c.b16 %v5139, %v5135
    %v5324 = vpack.c.b16 %v5144, %v5140
    %v5325 = vpack.c.b16 %v5145, %v5141
    %v5326 = vpack.c.b16 %v5146, %v5142
    %v5327 = vpack.c.b16 %v5147, %v5143
    %v5328 = vpack.c.b16 %v5152, %v5148
    %v5329 = vpack.c.b16 %v5153, %v5149
    %v5330 = vpack.c.b16 %v5154, %v5150
    %v5331 = vpack.c.b16 %v5155, %v5151
    %v5332 = vpack.c.b16 %v5160, %v5156
    %v5333 = vpack.c.b16 %v5161, %v5157
    %v5334 = vpack.c.b16 %v5162, %v5158
    %v5335 = vpack.c.b16 %v5163, %v5159
    %v5336 = vpack.c.b16 %v5168, %v5164
    %v5337 = vpack.c.b16 %v5169, %v5165
    %v5338 = vpack.c.b16 %v5170, %v5166
    %v5339 = vpack.c.b16 %v5171, %v5167
    %v5340 = vpack.c.b16 %v5176, %v5172
    %v5341 = vpack.c.b16 %v5177, %v5173
    %v5342 = vpack.c.b16 %v5178, %v5174
    %v5343 = vpack.c.b16 %v5179, %v5175
    %v5344 = vpack.c.b16 %v5184, %v5180
    %v5345 = vpack.c.b16 %v5185, %v5181
    %v5346 = vpack.c.b16 %v5186, %v5182
    %v5347 = vpack.c.b16 %v5187, %v5183
    %v5348 = vpack.c.b16 %v5192, %v5188
    %v5349 = vpack.c.b16 %v5193, %v5189
    %v5350 = vpack.c.b16 %v5194, %v5190
    %v5351 = vpack.c.b16 %v5195, %v5191
    %v5352 = vpack.c.b16 %v5200, %v5196
    %v5353 = vpack.c.b16 %v5201, %v5197
    %v5354 = vpack.c.b16 %v5202, %v5198
    %v5355 = vpack.c.b16 %v5203, %v5199
    %v5356 = vpack.c.b16 %v5208, %v5204
    %v5357 = vpack.c.b16 %v5209, %v5205
    %v5358 = vpack.c.b16 %v5210, %v5206
    %v5359 = vpack.c.b16 %v5211, %v5207
    %v5360 = vpack.c.b16 %v5216, %v5212
    %v5361 = vpack.c.b16 %v5217, %v5213
    %v5362 = vpack.c.b16 %v5218, %v5214
    %v5363 = vpack.c.b16 %v5219, %v5215
    %v5364 = vpack.c.b16 %v5224, %v5220
    %v5365 = vpack.c.b16 %v5225, %v5221
    %v5366 = vpack.c.b16 %v5226, %v5222
    %v5367 = vpack.c.b16 %v5227, %v5223
    %v5368 = vpack.c.b16 %v5232, %v5228
    %v5369 = vpack.c.b16 %v5233, %v5229
    %v5370 = vpack.c.b16 %v5234, %v5230
    %v5371 = vpack.c.b16 %v5235, %v5231
    %v5372 = vpack.c.b16 %v5240, %v5236
    %v5373 = vpack.c.b16 %v5241, %v5237
    %v5374 = vpack.c.b16 %v5242, %v5238
    %v5375 = vpack.c.b16 %v5243, %v5239
    %v5376 = vpack.c.b16 %v5248, %v5244
    %v5377 = vpack.c.b16 %v5249, %v5245
    %v5378 = vpack.c.b16 %v5250, %v5246
    %v5379 = vpack.c.b16 %v5251, %v5247
    %5508 = vmatprep.subr.bf16.mxu0 %v5281
    %5509 = vmatpush1.bf16.msra.mxu0 %v5280
    %5510 = vmatprep.subr.bf16.mxu0 %v5277
    %5511 = vmatpush1.bf16.msra.mxu0 %v5276
    %5512 = vmatprep.subr.bf16.mxu0 %v5273
    %5513 = vmatpush1.bf16.msra.mxu0 %v5272
    %5514 = vmatprep.subr.bf16.mxu0 %v5269
    %5515 = vmatpush1.bf16.msra.mxu0 %v5268
    %5516 = vmatprep.subr.bf16.mxu0 %v5265
    %5517 = vmatpush1.bf16.msra.mxu0 %v5264
    %5518 = vmatprep.subr.bf16.mxu0 %v5261
    %5519 = vmatpush1.bf16.msra.mxu0 %v5260
    %5520 = vmatprep.subr.bf16.mxu0 %v5257
    %5521 = vmatpush1.bf16.msra.mxu0 %v5256
    %5522 = vmatprep.subr.bf16.mxu0 %v5253
    %5523 = vmatpush1.bf16.msra.mxu0 %v5252
    %5524 = vmatprep.subr.bf16.mxu0 %v5313
    %5525 = vmatpush2.bf16.msra.mxu0 %v5312
    %5526 = vmatprep.subr.bf16.mxu0 %v5309
    %5527 = vmatpush2.bf16.msra.mxu0 %v5308
    %5528 = vmatprep.subr.bf16.mxu0 %v5305
    %5529 = vmatpush2.bf16.msra.mxu0 %v5304
    %5530 = vmatprep.subr.bf16.mxu0 %v5301
    %5531 = vmatpush2.bf16.msra.mxu0 %v5300
    %5532 = vmatprep.subr.bf16.mxu0 %v5297
    %5533 = vmatpush2.bf16.msra.mxu0 %v5296
    %5534 = vmatprep.subr.bf16.mxu0 %v5293
    %5535 = vmatpush2.bf16.msra.mxu0 %v5292
    %5536 = vmatprep.subr.bf16.mxu0 %v5289
    %5537 = vmatpush2.bf16.msra.mxu0 %v5288
    %5538 = vmatprep.subr.bf16.mxu0 %v5285
    %5539 = vmatpush2.bf16.msra.mxu0 %v5284
    %5540 = vmatprep.mubr.bf16.mxu0 %v4821
    %5541 = vmatmul.mubr.bf16.gmra.mxu0 %v4820
    %v5542 = vpop.f32.mrf.mxu0
    %v5543 = vadd.f32 0.0, %v5542
    %v5544 = vpop.f32.mrf.mxu0
    %v5545 = vadd.f32 0.0, %v5544
    %v5546 = vpop.f32.mrf.mxu0
    %v5547 = vadd.f32 0.0, %v5546
    %v5548 = vpop.f32.mrf.mxu0
    %v5549 = vadd.f32 0.0, %v5548
    %5550 = vmatprep.mubr.bf16.mxu0 %v4857
    %5551 = vmatmul.mubr.bf16.gmra.mxu0 %v4856
    %v5552 = vpop.f32.mrf.mxu0
    %v5553 = vadd.f32 0.0, %v5552
    %v5554 = vpop.f32.mrf.mxu0
    %v5555 = vadd.f32 0.0, %v5554
    %v5556 = vpop.f32.mrf.mxu0
    %v5557 = vadd.f32 0.0, %v5556
    %v5558 = vpop.f32.mrf.mxu0
    %v5559 = vadd.f32 0.0, %v5558
    %5560 = vdwg.mxu0
    %5561 = vmatprep.subr.bf16.mxu0 %v5345
    %5562 = vmatpush1.bf16.msra.mxu0 %v5344
    %5563 = vmatprep.subr.bf16.mxu0 %v5341
    %5564 = vmatpush1.bf16.msra.mxu0 %v5340
    %5565 = vmatprep.subr.bf16.mxu0 %v5337
    %5566 = vmatpush1.bf16.msra.mxu0 %v5336
    %5567 = vmatprep.subr.bf16.mxu0 %v5333
    %5568 = vmatpush1.bf16.msra.mxu0 %v5332
    %5569 = vmatprep.subr.bf16.mxu0 %v5329
    %5570 = vmatpush1.bf16.msra.mxu0 %v5328
    %5571 = vmatprep.subr.bf16.mxu0 %v5325
    %5572 = vmatpush1.bf16.msra.mxu0 %v5324
    %5573 = vmatprep.subr.bf16.mxu0 %v5321
    %5574 = vmatpush1.bf16.msra.mxu0 %v5320
    %5575 = vmatprep.subr.bf16.mxu0 %v5317
    %5576 = vmatpush1.bf16.msra.mxu0 %v5316
    %5577 = vmatprep.subr.bf16.mxu0 %v5377
    %5578 = vmatpush2.bf16.msra.mxu0 %v5376
    %5579 = vmatprep.subr.bf16.mxu0 %v5373
    %5580 = vmatpush2.bf16.msra.mxu0 %v5372
    %5581 = vmatprep.subr.bf16.mxu0 %v5369
    %5582 = vmatpush2.bf16.msra.mxu0 %v5368
    %5583 = vmatprep.subr.bf16.mxu0 %v5365
    %5584 = vmatpush2.bf16.msra.mxu0 %v5364
    %5585 = vmatprep.subr.bf16.mxu0 %v5361
    %5586 = vmatpush2.bf16.msra.mxu0 %v5360
    %5587 = vmatprep.subr.bf16.mxu0 %v5357
    %5588 = vmatpush2.bf16.msra.mxu0 %v5356
    %5589 = vmatprep.subr.bf16.mxu0 %v5353
    %5590 = vmatpush2.bf16.msra.mxu0 %v5352
    %5591 = vmatprep.subr.bf16.mxu0 %v5349
    %5592 = vmatpush2.bf16.msra.mxu0 %v5348
    %5593 = vmatprep.mubr.bf16.mxu0 %v4823
    %5594 = vmatmul.mubr.bf16.gmra.mxu0 %v4822
    %v5595 = vpop.f32.mrf.mxu0
    %v5596 = vadd.f32 %v5543, %v5595
    %v5597 = vpop.f32.mrf.mxu0
    %v5598 = vadd.f32 %v5545, %v5597
    %v5599 = vpop.f32.mrf.mxu0
    %v5600 = vadd.f32 %v5547, %v5599
    %v5601 = vpop.f32.mrf.mxu0
    %v5602 = vadd.f32 %v5549, %v5601
    %5603 = vmatprep.mubr.bf16.mxu0 %v4859
    %5604 = vmatmul.mubr.bf16.gmra.mxu0 %v4858
    %v5605 = vpop.f32.mrf.mxu0
    %v5606 = vadd.f32 %v5553, %v5605
    %v5607 = vpop.f32.mrf.mxu0
    %v5608 = vadd.f32 %v5555, %v5607
    %v5609 = vpop.f32.mrf.mxu0
    %v5610 = vadd.f32 %v5557, %v5609
    %v5611 = vpop.f32.mrf.mxu0
    %v5612 = vadd.f32 %v5559, %v5611
    %5613 = vdwg.mxu0
    %5614 = vmatprep.subr.bf16.mxu0 %v5283
    %5615 = vmatpush1.bf16.msra.mxu0 %v5282
    %5616 = vmatprep.subr.bf16.mxu0 %v5279
    %5617 = vmatpush1.bf16.msra.mxu0 %v5278
    %5618 = vmatprep.subr.bf16.mxu0 %v5275
    %5619 = vmatpush1.bf16.msra.mxu0 %v5274
    %5620 = vmatprep.subr.bf16.mxu0 %v5271
    %5621 = vmatpush1.bf16.msra.mxu0 %v5270
    %5622 = vmatprep.subr.bf16.mxu0 %v5267
    %5623 = vmatpush1.bf16.msra.mxu0 %v5266
    %5624 = vmatprep.subr.bf16.mxu0 %v5263
    %5625 = vmatpush1.bf16.msra.mxu0 %v5262
    %5626 = vmatprep.subr.bf16.mxu0 %v5259
    %5627 = vmatpush1.bf16.msra.mxu0 %v5258
    %5628 = vmatprep.subr.bf16.mxu0 %v5255
    %5629 = vmatpush1.bf16.msra.mxu0 %v5254
    %5630 = vmatprep.subr.bf16.mxu0 %v5315
    %5631 = vmatpush2.bf16.msra.mxu0 %v5314
    %5632 = vmatprep.subr.bf16.mxu0 %v5311
    %5633 = vmatpush2.bf16.msra.mxu0 %v5310
    %5634 = vmatprep.subr.bf16.mxu0 %v5307
    %5635 = vmatpush2.bf16.msra.mxu0 %v5306
    %5636 = vmatprep.subr.bf16.mxu0 %v5303
    %5637 = vmatpush2.bf16.msra.mxu0 %v5302
    %5638 = vmatprep.subr.bf16.mxu0 %v5299
    %5639 = vmatpush2.bf16.msra.mxu0 %v5298
    %5640 = vmatprep.subr.bf16.mxu0 %v5295
    %5641 = vmatpush2.bf16.msra.mxu0 %v5294
    %5642 = vmatprep.subr.bf16.mxu0 %v5291
    %5643 = vmatpush2.bf16.msra.mxu0 %v5290
    %5644 = vmatprep.subr.bf16.mxu0 %v5287
    %5645 = vmatpush2.bf16.msra.mxu0 %v5286
    %5646 = vmatprep.mubr.bf16.mxu0 %v4821
    %5647 = vmatmul.mubr.bf16.gmra.mxu0 %v4820
    %v5648 = vpop.f32.mrf.mxu0
    %v5649 = vadd.f32 0.0, %v5648
    %v5650 = vpop.f32.mrf.mxu0
    %v5651 = vadd.f32 0.0, %v5650
    %v5652 = vpop.f32.mrf.mxu0
    %v5653 = vadd.f32 0.0, %v5652
    %v5654 = vpop.f32.mrf.mxu0
    %v5655 = vadd.f32 0.0, %v5654
    %5656 = vmatprep.mubr.bf16.mxu0 %v4857
    %5657 = vmatmul.mubr.bf16.gmra.mxu0 %v4856
    %v5658 = vpop.f32.mrf.mxu0
    %v5659 = vadd.f32 0.0, %v5658
    %v5660 = vpop.f32.mrf.mxu0
    %v5661 = vadd.f32 0.0, %v5660
    %v5662 = vpop.f32.mrf.mxu0
    %v5663 = vadd.f32 0.0, %v5662
    %v5664 = vpop.f32.mrf.mxu0
    %v5665 = vadd.f32 0.0, %v5664
    %5666 = vdwg.mxu0
    %5667 = vmatprep.subr.bf16.mxu0 %v5347
    %5668 = vmatpush1.bf16.msra.mxu0 %v5346
    %5669 = vmatprep.subr.bf16.mxu0 %v5343
    %5670 = vmatpush1.bf16.msra.mxu0 %v5342
    %5671 = vmatprep.subr.bf16.mxu0 %v5339
    %5672 = vmatpush1.bf16.msra.mxu0 %v5338
    %5673 = vmatprep.subr.bf16.mxu0 %v5335
    %5674 = vmatpush1.bf16.msra.mxu0 %v5334
    %5675 = vmatprep.subr.bf16.mxu0 %v5331
    %5676 = vmatpush1.bf16.msra.mxu0 %v5330
    %5677 = vmatprep.subr.bf16.mxu0 %v5327
    %5678 = vmatpush1.bf16.msra.mxu0 %v5326
    %5679 = vmatprep.subr.bf16.mxu0 %v5323
    %5680 = vmatpush1.bf16.msra.mxu0 %v5322
    %5681 = vmatprep.subr.bf16.mxu0 %v5319
    %5682 = vmatpush1.bf16.msra.mxu0 %v5318
    %5683 = vmatprep.subr.bf16.mxu0 %v5379
    %5684 = vmatpush2.bf16.msra.mxu0 %v5378
    %5685 = vmatprep.subr.bf16.mxu0 %v5375
    %5686 = vmatpush2.bf16.msra.mxu0 %v5374
    %5687 = vmatprep.subr.bf16.mxu0 %v5371
    %5688 = vmatpush2.bf16.msra.mxu0 %v5370
    %5689 = vmatprep.subr.bf16.mxu0 %v5367
    %5690 = vmatpush2.bf16.msra.mxu0 %v5366
    %5691 = vmatprep.subr.bf16.mxu0 %v5363
    %5692 = vmatpush2.bf16.msra.mxu0 %v5362
    %5693 = vmatprep.subr.bf16.mxu0 %v5359
    %5694 = vmatpush2.bf16.msra.mxu0 %v5358
    %5695 = vmatprep.subr.bf16.mxu0 %v5355
    %5696 = vmatpush2.bf16.msra.mxu0 %v5354
    %5697 = vmatprep.subr.bf16.mxu0 %v5351
    %5698 = vmatpush2.bf16.msra.mxu0 %v5350
    %5699 = vmatprep.mubr.bf16.mxu0 %v4823
    %5700 = vmatmul.mubr.bf16.gmra.mxu0 %v4822
    %v5701 = vpop.f32.mrf.mxu0
    %v5702 = vadd.f32 %v5649, %v5701
    %v5703 = vpop.f32.mrf.mxu0
    %v5704 = vadd.f32 %v5651, %v5703
    %v5705 = vpop.f32.mrf.mxu0
    %v5706 = vadd.f32 %v5653, %v5705
    %v5707 = vpop.f32.mrf.mxu0
    %v5708 = vadd.f32 %v5655, %v5707
    %5709 = vmatprep.mubr.bf16.mxu0 %v4859
    %5710 = vmatmul.mubr.bf16.gmra.mxu0 %v4858
    %v5711 = vpop.f32.mrf.mxu0
    %v5712 = vadd.f32 %v5659, %v5711
    %v5713 = vpop.f32.mrf.mxu0
    %v5714 = vadd.f32 %v5661, %v5713
    %v5715 = vpop.f32.mrf.mxu0
    %v5716 = vadd.f32 %v5663, %v5715
    %v5717 = vpop.f32.mrf.mxu0
    %v5718 = vadd.f32 %v5665, %v5717
    %5719 = vdwg.mxu0
    %v5720 = vcombine.low %v4298, %v4313
    %v5721 = vcombine.high %v4298, %v4313
    %v5722 = vcombine.low %v4328, %v4343
    %v5723 = vcombine.high %v4328, %v4343
    %v5725 = vunpack.c.l.s4 1983009808
    %v5726 = vunpack.c.0.s8 %v5725
    %v5727 = vlaneseq
    %v5728 = vshrl.u32 %v5727, 7
    %v5729 = vsub.s32 %v5726, %v5728
    %v5730 = vrot.slane %v5720, %v5729
    %v5732 = vunpack.c.l.s4 1983009808
    %v5733 = vunpack.c.0.s8 %v5732
    %v5734 = vlaneseq
    %v5735 = vshrl.u32 %v5734, 7
    %v5736 = vsub.s32 %v5733, %v5735
    %v5737 = vrot.slane %v5721, %v5736
    %v5739 = vunpack.c.l.s4 1983009808
    %v5740 = vunpack.c.0.s8 %v5739
    %v5741 = vlaneseq
    %v5742 = vshrl.u32 %v5741, 7
    %v5743 = vsub.s32 %v5740, %v5742
    %v5744 = vrot.slane %v5722, %v5743
    %v5746 = vunpack.c.l.s4 1983009808
    %v5747 = vunpack.c.0.s8 %v5746
    %v5748 = vlaneseq
    %v5749 = vshrl.u32 %v5748, 7
    %v5750 = vsub.s32 %v5747, %v5749
    %v5751 = vrot.slane %v5723, %v5750
    %v5752 = vcombine.low %v5730, %v5744
    %v5753 = vcombine.high %v5730, %v5744
    %v5754 = vcombine.low %v5737, %v5751
    %v5755 = vcombine.high %v5737, %v5751
    %v5756 = vcombine.low %v4358, %v4373
    %v5757 = vcombine.high %v4358, %v4373
    %v5758 = vcombine.low %v4388, %v4403
    %v5759 = vcombine.high %v4388, %v4403
    %v5761 = vunpack.c.l.s4 1983009808
    %v5762 = vunpack.c.0.s8 %v5761
    %v5763 = vlaneseq
    %v5764 = vshrl.u32 %v5763, 7
    %v5765 = vsub.s32 %v5762, %v5764
    %v5766 = vrot.slane %v5756, %v5765
    %v5768 = vunpack.c.l.s4 1983009808
    %v5769 = vunpack.c.0.s8 %v5768
    %v5770 = vlaneseq
    %v5771 = vshrl.u32 %v5770, 7
    %v5772 = vsub.s32 %v5769, %v5771
    %v5773 = vrot.slane %v5757, %v5772
    %v5775 = vunpack.c.l.s4 1983009808
    %v5776 = vunpack.c.0.s8 %v5775
    %v5777 = vlaneseq
    %v5778 = vshrl.u32 %v5777, 7
    %v5779 = vsub.s32 %v5776, %v5778
    %v5780 = vrot.slane %v5758, %v5779
    %v5782 = vunpack.c.l.s4 1983009808
    %v5783 = vunpack.c.0.s8 %v5782
    %v5784 = vlaneseq
    %v5785 = vshrl.u32 %v5784, 7
    %v5786 = vsub.s32 %v5783, %v5785
    %v5787 = vrot.slane %v5759, %v5786
    %v5788 = vcombine.low %v5766, %v5780
    %v5789 = vcombine.high %v5766, %v5780
    %v5790 = vcombine.low %v5773, %v5787
    %v5791 = vcombine.high %v5773, %v5787
    %v5928 = vunpack.c.l.b16 %v4404
    %v5929 = vunpack.c.h.b16 %v4404
    %v5930 = vunpack.c.l.b16 %v4405
    %v5931 = vunpack.c.h.b16 %v4405
    %v5932 = vunpack.c.l.b16 %v4406
    %v5933 = vunpack.c.h.b16 %v4406
    %v5934 = vunpack.c.l.b16 %v4407
    %v5935 = vunpack.c.h.b16 %v4407
    %v5936 = vunpack.c.l.b16 %v4408
    %v5937 = vunpack.c.h.b16 %v4408
    %v5938 = vunpack.c.l.b16 %v4409
    %v5939 = vunpack.c.h.b16 %v4409
    %v5940 = vunpack.c.l.b16 %v4410
    %v5941 = vunpack.c.h.b16 %v4410
    %v5942 = vunpack.c.l.b16 %v4411
    %v5943 = vunpack.c.h.b16 %v4411
    %v5944 = vunpack.c.l.b16 %v4412
    %v5945 = vunpack.c.h.b16 %v4412
    %v5946 = vunpack.c.l.b16 %v4413
    %v5947 = vunpack.c.h.b16 %v4413
    %v5948 = vunpack.c.l.b16 %v4414
    %v5949 = vunpack.c.h.b16 %v4414
    %v5950 = vunpack.c.l.b16 %v4415
    %v5951 = vunpack.c.h.b16 %v4415
    %v5952 = vunpack.c.l.b16 %v4416
    %v5953 = vunpack.c.h.b16 %v4416
    %v5954 = vunpack.c.l.b16 %v4417
    %v5955 = vunpack.c.h.b16 %v4417
    %v5956 = vunpack.c.l.b16 %v4418
    %v5957 = vunpack.c.h.b16 %v4418
    %v5958 = vunpack.c.l.b16 %v4419
    %v5959 = vunpack.c.h.b16 %v4419
    %v5960 = vunpack.c.l.b16 %v4420
    %v5961 = vunpack.c.h.b16 %v4420
    %v5962 = vunpack.c.l.b16 %v4421
    %v5963 = vunpack.c.h.b16 %v4421
    %v5964 = vunpack.c.l.b16 %v4422
    %v5965 = vunpack.c.h.b16 %v4422
    %v5966 = vunpack.c.l.b16 %v4423
    %v5967 = vunpack.c.h.b16 %v4423
    %v5968 = vunpack.c.l.b16 %v4424
    %v5969 = vunpack.c.h.b16 %v4424
    %v5970 = vunpack.c.l.b16 %v4425
    %v5971 = vunpack.c.h.b16 %v4425
    %v5972 = vunpack.c.l.b16 %v4426
    %v5973 = vunpack.c.h.b16 %v4426
    %v5974 = vunpack.c.l.b16 %v4427
    %v5975 = vunpack.c.h.b16 %v4427
    %v5976 = vunpack.c.l.b16 %v4428
    %v5977 = vunpack.c.h.b16 %v4428
    %v5978 = vunpack.c.l.b16 %v4429
    %v5979 = vunpack.c.h.b16 %v4429
    %v5980 = vunpack.c.l.b16 %v4430
    %v5981 = vunpack.c.h.b16 %v4430
    %v5982 = vunpack.c.l.b16 %v4431
    %v5983 = vunpack.c.h.b16 %v4431
    %v5984 = vunpack.c.l.b16 %v4432
    %v5985 = vunpack.c.h.b16 %v4432
    %v5986 = vunpack.c.l.b16 %v4433
    %v5987 = vunpack.c.h.b16 %v4433
    %v5988 = vunpack.c.l.b16 %v4434
    %v5989 = vunpack.c.h.b16 %v4434
    %v5990 = vunpack.c.l.b16 %v4435
    %v5991 = vunpack.c.h.b16 %v4435
    %v5992 = vunpack.c.l.b16 %v4436
    %v5993 = vunpack.c.h.b16 %v4436
    %v5994 = vunpack.c.l.b16 %v4437
    %v5995 = vunpack.c.h.b16 %v4437
    %v5996 = vunpack.c.l.b16 %v4438
    %v5997 = vunpack.c.h.b16 %v4438
    %v5998 = vunpack.c.l.b16 %v4439
    %v5999 = vunpack.c.h.b16 %v4439
    %v6000 = vunpack.c.l.b16 %v4440
    %v6001 = vunpack.c.h.b16 %v4440
    %v6002 = vunpack.c.l.b16 %v4441
    %v6003 = vunpack.c.h.b16 %v4441
    %v6004 = vunpack.c.l.b16 %v4442
    %v6005 = vunpack.c.h.b16 %v4442
    %v6006 = vunpack.c.l.b16 %v4443
    %v6007 = vunpack.c.h.b16 %v4443
    %v6008 = vunpack.c.l.b16 %v4444
    %v6009 = vunpack.c.h.b16 %v4444
    %v6010 = vunpack.c.l.b16 %v4445
    %v6011 = vunpack.c.h.b16 %v4445
    %v6012 = vunpack.c.l.b16 %v4446
    %v6013 = vunpack.c.h.b16 %v4446
    %v6014 = vunpack.c.l.b16 %v4447
    %v6015 = vunpack.c.h.b16 %v4447
    %v6016 = vunpack.c.l.b16 %v4448
    %v6017 = vunpack.c.h.b16 %v4448
    %v6018 = vunpack.c.l.b16 %v4449
    %v6019 = vunpack.c.h.b16 %v4449
    %v6020 = vunpack.c.l.b16 %v4450
    %v6021 = vunpack.c.h.b16 %v4450
    %v6022 = vunpack.c.l.b16 %v4451
    %v6023 = vunpack.c.h.b16 %v4451
    %v6024 = vunpack.c.l.b16 %v4452
    %v6025 = vunpack.c.h.b16 %v4452
    %v6026 = vunpack.c.l.b16 %v4453
    %v6027 = vunpack.c.h.b16 %v4453
    %v6028 = vunpack.c.l.b16 %v4454
    %v6029 = vunpack.c.h.b16 %v4454
    %v6030 = vunpack.c.l.b16 %v4455
    %v6031 = vunpack.c.h.b16 %v4455
    %v6032 = vunpack.c.l.b16 %v4456
    %v6033 = vunpack.c.h.b16 %v4456
    %v6034 = vunpack.c.l.b16 %v4457
    %v6035 = vunpack.c.h.b16 %v4457
    %v6036 = vunpack.c.l.b16 %v4458
    %v6037 = vunpack.c.h.b16 %v4458
    %v6038 = vunpack.c.l.b16 %v4459
    %v6039 = vunpack.c.h.b16 %v4459
    %v6040 = vunpack.c.l.b16 %v4460
    %v6041 = vunpack.c.h.b16 %v4460
    %v6042 = vunpack.c.l.b16 %v4461
    %v6043 = vunpack.c.h.b16 %v4461
    %v6044 = vunpack.c.l.b16 %v4462
    %v6045 = vunpack.c.h.b16 %v4462
    %v6046 = vunpack.c.l.b16 %v4463
    %v6047 = vunpack.c.h.b16 %v4463
    %v6048 = vunpack.c.l.b16 %v4464
    %v6049 = vunpack.c.h.b16 %v4464
    %v6050 = vunpack.c.l.b16 %v4465
    %v6051 = vunpack.c.h.b16 %v4465
    %v6052 = vunpack.c.l.b16 %v4466
    %v6053 = vunpack.c.h.b16 %v4466
    %v6054 = vunpack.c.l.b16 %v4467
    %v6055 = vunpack.c.h.b16 %v4467
    %v6056 = vunpack.c.l.b16 %v4468
    %v6057 = vunpack.c.h.b16 %v4468
    %v6058 = vunpack.c.l.b16 %v4469
    %v6059 = vunpack.c.h.b16 %v4469
    %v6060 = vunpack.c.l.b16 %v4470
    %v6061 = vunpack.c.h.b16 %v4470
    %v6062 = vunpack.c.l.b16 %v4471
    %v6063 = vunpack.c.h.b16 %v4471
    %v6064 = vunpack.c.l.b16 %v4472
    %v6065 = vunpack.c.h.b16 %v4472
    %v6066 = vunpack.c.l.b16 %v4473
    %v6067 = vunpack.c.h.b16 %v4473
    %v6068 = vunpack.c.l.b16 %v4474
    %v6069 = vunpack.c.h.b16 %v4474
    %v6070 = vunpack.c.l.b16 %v4475
    %v6071 = vunpack.c.h.b16 %v4475
    %v6072 = vunpack.c.l.b16 %v4476
    %v6073 = vunpack.c.h.b16 %v4476
    %v6074 = vunpack.c.l.b16 %v4477
    %v6075 = vunpack.c.h.b16 %v4477
    %v6076 = vunpack.c.l.b16 %v4478
    %v6077 = vunpack.c.h.b16 %v4478
    %v6078 = vunpack.c.l.b16 %v4479
    %v6079 = vunpack.c.h.b16 %v4479
    %v6080 = vunpack.c.l.b16 %v4480
    %v6081 = vunpack.c.h.b16 %v4480
    %v6082 = vunpack.c.l.b16 %v4481
    %v6083 = vunpack.c.h.b16 %v4481
    %v6084 = vunpack.c.l.b16 %v4482
    %v6085 = vunpack.c.h.b16 %v4482
    %v6086 = vunpack.c.l.b16 %v4483
    %v6087 = vunpack.c.h.b16 %v4483
    %v6088 = vunpack.c.l.b16 %v4484
    %v6089 = vunpack.c.h.b16 %v4484
    %v6090 = vunpack.c.l.b16 %v4485
    %v6091 = vunpack.c.h.b16 %v4485
    %v6092 = vunpack.c.l.b16 %v4486
    %v6093 = vunpack.c.h.b16 %v4486
    %v6094 = vunpack.c.l.b16 %v4487
    %v6095 = vunpack.c.h.b16 %v4487
    %v6096 = vunpack.c.l.b16 %v4488
    %v6097 = vunpack.c.h.b16 %v4488
    %v6098 = vunpack.c.l.b16 %v4489
    %v6099 = vunpack.c.h.b16 %v4489
    %v6100 = vunpack.c.l.b16 %v4490
    %v6101 = vunpack.c.h.b16 %v4490
    %v6102 = vunpack.c.l.b16 %v4491
    %v6103 = vunpack.c.h.b16 %v4491
    %v6104 = vunpack.c.l.b16 %v4492
    %v6105 = vunpack.c.h.b16 %v4492
    %v6106 = vunpack.c.l.b16 %v4493
    %v6107 = vunpack.c.h.b16 %v4493
    %v6108 = vunpack.c.l.b16 %v4494
    %v6109 = vunpack.c.h.b16 %v4494
    %v6110 = vunpack.c.l.b16 %v4495
    %v6111 = vunpack.c.h.b16 %v4495
    %v6112 = vunpack.c.l.b16 %v4496
    %v6113 = vunpack.c.h.b16 %v4496
    %v6114 = vunpack.c.l.b16 %v4497
    %v6115 = vunpack.c.h.b16 %v4497
    %v6116 = vunpack.c.l.b16 %v4498
    %v6117 = vunpack.c.h.b16 %v4498
    %v6118 = vunpack.c.l.b16 %v4499
    %v6119 = vunpack.c.h.b16 %v4499
    %v6120 = vunpack.c.l.b16 %v4500
    %v6121 = vunpack.c.h.b16 %v4500
    %v6122 = vunpack.c.l.b16 %v4501
    %v6123 = vunpack.c.h.b16 %v4501
    %v6124 = vunpack.c.l.b16 %v4502
    %v6125 = vunpack.c.h.b16 %v4502
    %v6126 = vunpack.c.l.b16 %v4503
    %v6127 = vunpack.c.h.b16 %v4503
    %v6128 = vunpack.c.l.b16 %v4504
    %v6129 = vunpack.c.h.b16 %v4504
    %v6130 = vunpack.c.l.b16 %v4505
    %v6131 = vunpack.c.h.b16 %v4505
    %v6132 = vunpack.c.l.b16 %v4506
    %v6133 = vunpack.c.h.b16 %v4506
    %v6134 = vunpack.c.l.b16 %v4507
    %v6135 = vunpack.c.h.b16 %v4507
    %v6136 = vunpack.c.l.b16 %v4508
    %v6137 = vunpack.c.h.b16 %v4508
    %v6138 = vunpack.c.l.b16 %v4509
    %v6139 = vunpack.c.h.b16 %v4509
    %v6140 = vunpack.c.l.b16 %v4510
    %v6141 = vunpack.c.h.b16 %v4510
    %v6142 = vunpack.c.l.b16 %v4511
    %v6143 = vunpack.c.h.b16 %v4511
    %v6144 = vunpack.c.l.b16 %v4512
    %v6145 = vunpack.c.h.b16 %v4512
    %v6146 = vunpack.c.l.b16 %v4513
    %v6147 = vunpack.c.h.b16 %v4513
    %v6148 = vunpack.c.l.b16 %v4514
    %v6149 = vunpack.c.h.b16 %v4514
    %v6150 = vunpack.c.l.b16 %v4515
    %v6151 = vunpack.c.h.b16 %v4515
    %v6152 = vunpack.c.l.b16 %v4516
    %v6153 = vunpack.c.h.b16 %v4516
    %v6154 = vunpack.c.l.b16 %v4517
    %v6155 = vunpack.c.h.b16 %v4517
    %v6156 = vunpack.c.l.b16 %v4518
    %v6157 = vunpack.c.h.b16 %v4518
    %v6158 = vunpack.c.l.b16 %v4519
    %v6159 = vunpack.c.h.b16 %v4519
    %v6160 = vunpack.c.l.b16 %v4520
    %v6161 = vunpack.c.h.b16 %v4520
    %v6162 = vunpack.c.l.b16 %v4521
    %v6163 = vunpack.c.h.b16 %v4521
    %v6164 = vunpack.c.l.b16 %v4522
    %v6165 = vunpack.c.h.b16 %v4522
    %v6166 = vunpack.c.l.b16 %v4523
    %v6167 = vunpack.c.h.b16 %v4523
    %v6168 = vunpack.c.l.b16 %v4524
    %v6169 = vunpack.c.h.b16 %v4524
    %v6170 = vunpack.c.l.b16 %v4525
    %v6171 = vunpack.c.h.b16 %v4525
    %v6172 = vunpack.c.l.b16 %v4526
    %v6173 = vunpack.c.h.b16 %v4526
    %v6174 = vunpack.c.l.b16 %v4527
    %v6175 = vunpack.c.h.b16 %v4527
    %v6176 = vunpack.c.l.b16 %v4528
    %v6177 = vunpack.c.h.b16 %v4528
    %v6178 = vunpack.c.l.b16 %v4529
    %v6179 = vunpack.c.h.b16 %v4529
    %v6180 = vunpack.c.l.b16 %v4530
    %v6181 = vunpack.c.h.b16 %v4530
    %v6182 = vunpack.c.l.b16 %v4531
    %v6183 = vunpack.c.h.b16 %v4531
    %v6184 = vpack.c.b16 %v5932, %v5928
    %v6185 = vpack.c.b16 %v5933, %v5929
    %v6186 = vpack.c.b16 %v5934, %v5930
    %v6187 = vpack.c.b16 %v5935, %v5931
    %v6188 = vpack.c.b16 %v5940, %v5936
    %v6189 = vpack.c.b16 %v5941, %v5937
    %v6190 = vpack.c.b16 %v5942, %v5938
    %v6191 = vpack.c.b16 %v5943, %v5939
    %v6192 = vpack.c.b16 %v5948, %v5944
    %v6193 = vpack.c.b16 %v5949, %v5945
    %v6194 = vpack.c.b16 %v5950, %v5946
    %v6195 = vpack.c.b16 %v5951, %v5947
    %v6196 = vpack.c.b16 %v5956, %v5952
    %v6197 = vpack.c.b16 %v5957, %v5953
    %v6198 = vpack.c.b16 %v5958, %v5954
    %v6199 = vpack.c.b16 %v5959, %v5955
    %v6200 = vpack.c.b16 %v5964, %v5960
    %v6201 = vpack.c.b16 %v5965, %v5961
    %v6202 = vpack.c.b16 %v5966, %v5962
    %v6203 = vpack.c.b16 %v5967, %v5963
    %v6204 = vpack.c.b16 %v5972, %v5968
    %v6205 = vpack.c.b16 %v5973, %v5969
    %v6206 = vpack.c.b16 %v5974, %v5970
    %v6207 = vpack.c.b16 %v5975, %v5971
    %v6208 = vpack.c.b16 %v5980, %v5976
    %v6209 = vpack.c.b16 %v5981, %v5977
    %v6210 = vpack.c.b16 %v5982, %v5978
    %v6211 = vpack.c.b16 %v5983, %v5979
    %v6212 = vpack.c.b16 %v5988, %v5984
    %v6213 = vpack.c.b16 %v5989, %v5985
    %v6214 = vpack.c.b16 %v5990, %v5986
    %v6215 = vpack.c.b16 %v5991, %v5987
    %v6216 = vpack.c.b16 %v5996, %v5992
    %v6217 = vpack.c.b16 %v5997, %v5993
    %v6218 = vpack.c.b16 %v5998, %v5994
    %v6219 = vpack.c.b16 %v5999, %v5995
    %v6220 = vpack.c.b16 %v6004, %v6000
    %v6221 = vpack.c.b16 %v6005, %v6001
    %v6222 = vpack.c.b16 %v6006, %v6002
    %v6223 = vpack.c.b16 %v6007, %v6003
    %v6224 = vpack.c.b16 %v6012, %v6008
    %v6225 = vpack.c.b16 %v6013, %v6009
    %v6226 = vpack.c.b16 %v6014, %v6010
    %v6227 = vpack.c.b16 %v6015, %v6011
    %v6228 = vpack.c.b16 %v6020, %v6016
    %v6229 = vpack.c.b16 %v6021, %v6017
    %v6230 = vpack.c.b16 %v6022, %v6018
    %v6231 = vpack.c.b16 %v6023, %v6019
    %v6232 = vpack.c.b16 %v6028, %v6024
    %v6233 = vpack.c.b16 %v6029, %v6025
    %v6234 = vpack.c.b16 %v6030, %v6026
    %v6235 = vpack.c.b16 %v6031, %v6027
    %v6236 = vpack.c.b16 %v6036, %v6032
    %v6237 = vpack.c.b16 %v6037, %v6033
    %v6238 = vpack.c.b16 %v6038, %v6034
    %v6239 = vpack.c.b16 %v6039, %v6035
    %v6240 = vpack.c.b16 %v6044, %v6040
    %v6241 = vpack.c.b16 %v6045, %v6041
    %v6242 = vpack.c.b16 %v6046, %v6042
    %v6243 = vpack.c.b16 %v6047, %v6043
    %v6244 = vpack.c.b16 %v6052, %v6048
    %v6245 = vpack.c.b16 %v6053, %v6049
    %v6246 = vpack.c.b16 %v6054, %v6050
    %v6247 = vpack.c.b16 %v6055, %v6051
    %v6248 = vpack.c.b16 %v6060, %v6056
    %v6249 = vpack.c.b16 %v6061, %v6057
    %v6250 = vpack.c.b16 %v6062, %v6058
    %v6251 = vpack.c.b16 %v6063, %v6059
    %v6252 = vpack.c.b16 %v6068, %v6064
    %v6253 = vpack.c.b16 %v6069, %v6065
    %v6254 = vpack.c.b16 %v6070, %v6066
    %v6255 = vpack.c.b16 %v6071, %v6067
    %v6256 = vpack.c.b16 %v6076, %v6072
    %v6257 = vpack.c.b16 %v6077, %v6073
    %v6258 = vpack.c.b16 %v6078, %v6074
    %v6259 = vpack.c.b16 %v6079, %v6075
    %v6260 = vpack.c.b16 %v6084, %v6080
    %v6261 = vpack.c.b16 %v6085, %v6081
    %v6262 = vpack.c.b16 %v6086, %v6082
    %v6263 = vpack.c.b16 %v6087, %v6083
    %v6264 = vpack.c.b16 %v6092, %v6088
    %v6265 = vpack.c.b16 %v6093, %v6089
    %v6266 = vpack.c.b16 %v6094, %v6090
    %v6267 = vpack.c.b16 %v6095, %v6091
    %v6268 = vpack.c.b16 %v6100, %v6096
    %v6269 = vpack.c.b16 %v6101, %v6097
    %v6270 = vpack.c.b16 %v6102, %v6098
    %v6271 = vpack.c.b16 %v6103, %v6099
    %v6272 = vpack.c.b16 %v6108, %v6104
    %v6273 = vpack.c.b16 %v6109, %v6105
    %v6274 = vpack.c.b16 %v6110, %v6106
    %v6275 = vpack.c.b16 %v6111, %v6107
    %v6276 = vpack.c.b16 %v6116, %v6112
    %v6277 = vpack.c.b16 %v6117, %v6113
    %v6278 = vpack.c.b16 %v6118, %v6114
    %v6279 = vpack.c.b16 %v6119, %v6115
    %v6280 = vpack.c.b16 %v6124, %v6120
    %v6281 = vpack.c.b16 %v6125, %v6121
    %v6282 = vpack.c.b16 %v6126, %v6122
    %v6283 = vpack.c.b16 %v6127, %v6123
    %v6284 = vpack.c.b16 %v6132, %v6128
    %v6285 = vpack.c.b16 %v6133, %v6129
    %v6286 = vpack.c.b16 %v6134, %v6130
    %v6287 = vpack.c.b16 %v6135, %v6131
    %v6288 = vpack.c.b16 %v6140, %v6136
    %v6289 = vpack.c.b16 %v6141, %v6137
    %v6290 = vpack.c.b16 %v6142, %v6138
    %v6291 = vpack.c.b16 %v6143, %v6139
    %v6292 = vpack.c.b16 %v6148, %v6144
    %v6293 = vpack.c.b16 %v6149, %v6145
    %v6294 = vpack.c.b16 %v6150, %v6146
    %v6295 = vpack.c.b16 %v6151, %v6147
    %v6296 = vpack.c.b16 %v6156, %v6152
    %v6297 = vpack.c.b16 %v6157, %v6153
    %v6298 = vpack.c.b16 %v6158, %v6154
    %v6299 = vpack.c.b16 %v6159, %v6155
    %v6300 = vpack.c.b16 %v6164, %v6160
    %v6301 = vpack.c.b16 %v6165, %v6161
    %v6302 = vpack.c.b16 %v6166, %v6162
    %v6303 = vpack.c.b16 %v6167, %v6163
    %v6304 = vpack.c.b16 %v6172, %v6168
    %v6305 = vpack.c.b16 %v6173, %v6169
    %v6306 = vpack.c.b16 %v6174, %v6170
    %v6307 = vpack.c.b16 %v6175, %v6171
    %v6308 = vpack.c.b16 %v6180, %v6176
    %v6309 = vpack.c.b16 %v6181, %v6177
    %v6310 = vpack.c.b16 %v6182, %v6178
    %v6311 = vpack.c.b16 %v6183, %v6179
    %6440 = vmatprep.subr.bf16.mxu0 %v6213
    %6441 = vmatpush1.bf16.msra.mxu0 %v6212
    %6442 = vmatprep.subr.bf16.mxu0 %v6209
    %6443 = vmatpush1.bf16.msra.mxu0 %v6208
    %6444 = vmatprep.subr.bf16.mxu0 %v6205
    %6445 = vmatpush1.bf16.msra.mxu0 %v6204
    %6446 = vmatprep.subr.bf16.mxu0 %v6201
    %6447 = vmatpush1.bf16.msra.mxu0 %v6200
    %6448 = vmatprep.subr.bf16.mxu0 %v6197
    %6449 = vmatpush1.bf16.msra.mxu0 %v6196
    %6450 = vmatprep.subr.bf16.mxu0 %v6193
    %6451 = vmatpush1.bf16.msra.mxu0 %v6192
    %6452 = vmatprep.subr.bf16.mxu0 %v6189
    %6453 = vmatpush1.bf16.msra.mxu0 %v6188
    %6454 = vmatprep.subr.bf16.mxu0 %v6185
    %6455 = vmatpush1.bf16.msra.mxu0 %v6184
    %6456 = vmatprep.subr.bf16.mxu0 %v6245
    %6457 = vmatpush2.bf16.msra.mxu0 %v6244
    %6458 = vmatprep.subr.bf16.mxu0 %v6241
    %6459 = vmatpush2.bf16.msra.mxu0 %v6240
    %6460 = vmatprep.subr.bf16.mxu0 %v6237
    %6461 = vmatpush2.bf16.msra.mxu0 %v6236
    %6462 = vmatprep.subr.bf16.mxu0 %v6233
    %6463 = vmatpush2.bf16.msra.mxu0 %v6232
    %6464 = vmatprep.subr.bf16.mxu0 %v6229
    %6465 = vmatpush2.bf16.msra.mxu0 %v6228
    %6466 = vmatprep.subr.bf16.mxu0 %v6225
    %6467 = vmatpush2.bf16.msra.mxu0 %v6224
    %6468 = vmatprep.subr.bf16.mxu0 %v6221
    %6469 = vmatpush2.bf16.msra.mxu0 %v6220
    %6470 = vmatprep.subr.bf16.mxu0 %v6217
    %6471 = vmatpush2.bf16.msra.mxu0 %v6216
    %6472 = vmatprep.mubr.bf16.mxu0 %v5753
    %6473 = vmatmul.mubr.bf16.gmra.mxu0 %v5752
    %v6474 = vpop.f32.mrf.mxu0
    %v6475 = vadd.f32 %v5596, %v6474
    %v6476 = vpop.f32.mrf.mxu0
    %v6477 = vadd.f32 %v5598, %v6476
    %v6478 = vpop.f32.mrf.mxu0
    %v6479 = vadd.f32 %v5600, %v6478
    %v6480 = vpop.f32.mrf.mxu0
    %v6481 = vadd.f32 %v5602, %v6480
    %6482 = vmatprep.mubr.bf16.mxu0 %v5789
    %6483 = vmatmul.mubr.bf16.gmra.mxu0 %v5788
    %v6484 = vpop.f32.mrf.mxu0
    %v6485 = vadd.f32 %v5606, %v6484
    %v6486 = vpop.f32.mrf.mxu0
    %v6487 = vadd.f32 %v5608, %v6486
    %v6488 = vpop.f32.mrf.mxu0
    %v6489 = vadd.f32 %v5610, %v6488
    %v6490 = vpop.f32.mrf.mxu0
    %v6491 = vadd.f32 %v5612, %v6490
    %6492 = vdwg.mxu0
    %6493 = vmatprep.subr.bf16.mxu0 %v6277
    %6494 = vmatpush1.bf16.msra.mxu0 %v6276
    %6495 = vmatprep.subr.bf16.mxu0 %v6273
    %6496 = vmatpush1.bf16.msra.mxu0 %v6272
    %6497 = vmatprep.subr.bf16.mxu0 %v6269
    %6498 = vmatpush1.bf16.msra.mxu0 %v6268
    %6499 = vmatprep.subr.bf16.mxu0 %v6265
    %6500 = vmatpush1.bf16.msra.mxu0 %v6264
    %6501 = vmatprep.subr.bf16.mxu0 %v6261
    %6502 = vmatpush1.bf16.msra.mxu0 %v6260
    %6503 = vmatprep.subr.bf16.mxu0 %v6257
    %6504 = vmatpush1.bf16.msra.mxu0 %v6256
    %6505 = vmatprep.subr.bf16.mxu0 %v6253
    %6506 = vmatpush1.bf16.msra.mxu0 %v6252
    %6507 = vmatprep.subr.bf16.mxu0 %v6249
    %6508 = vmatpush1.bf16.msra.mxu0 %v6248
    %6509 = vmatprep.subr.bf16.mxu0 %v6309
    %6510 = vmatpush2.bf16.msra.mxu0 %v6308
    %6511 = vmatprep.subr.bf16.mxu0 %v6305
    %6512 = vmatpush2.bf16.msra.mxu0 %v6304
    %6513 = vmatprep.subr.bf16.mxu0 %v6301
    %6514 = vmatpush2.bf16.msra.mxu0 %v6300
    %6515 = vmatprep.subr.bf16.mxu0 %v6297
    %6516 = vmatpush2.bf16.msra.mxu0 %v6296
    %6517 = vmatprep.subr.bf16.mxu0 %v6293
    %6518 = vmatpush2.bf16.msra.mxu0 %v6292
    %6519 = vmatprep.subr.bf16.mxu0 %v6289
    %6520 = vmatpush2.bf16.msra.mxu0 %v6288
    %6521 = vmatprep.subr.bf16.mxu0 %v6285
    %6522 = vmatpush2.bf16.msra.mxu0 %v6284
    %6523 = vmatprep.subr.bf16.mxu0 %v6281
    %6524 = vmatpush2.bf16.msra.mxu0 %v6280
    %6525 = vmatprep.mubr.bf16.mxu0 %v5755
    %6526 = vmatmul.mubr.bf16.gmra.mxu0 %v5754
    %v6527 = vpop.f32.mrf.mxu0
    %v6528 = vadd.f32 %v6475, %v6527
    %v6529 = vpop.f32.mrf.mxu0
    %v6530 = vadd.f32 %v6477, %v6529
    %v6531 = vpop.f32.mrf.mxu0
    %v6532 = vadd.f32 %v6479, %v6531
    %v6533 = vpop.f32.mrf.mxu0
    %v6534 = vadd.f32 %v6481, %v6533
    %6535 = vmatprep.mubr.bf16.mxu0 %v5791
    %6536 = vmatmul.mubr.bf16.gmra.mxu0 %v5790
    %v6537 = vpop.f32.mrf.mxu0
    %v6538 = vadd.f32 %v6485, %v6537
    %v6539 = vpop.f32.mrf.mxu0
    %v6540 = vadd.f32 %v6487, %v6539
    %v6541 = vpop.f32.mrf.mxu0
    %v6542 = vadd.f32 %v6489, %v6541
    %v6543 = vpop.f32.mrf.mxu0
    %v6544 = vadd.f32 %v6491, %v6543
    %6545 = vdwg.mxu0
    %6546 = vmatprep.subr.bf16.mxu0 %v6215
    %6547 = vmatpush1.bf16.msra.mxu0 %v6214
    %6548 = vmatprep.subr.bf16.mxu0 %v6211
    %6549 = vmatpush1.bf16.msra.mxu0 %v6210
    %6550 = vmatprep.subr.bf16.mxu0 %v6207
    %6551 = vmatpush1.bf16.msra.mxu0 %v6206
    %6552 = vmatprep.subr.bf16.mxu0 %v6203
    %6553 = vmatpush1.bf16.msra.mxu0 %v6202
    %6554 = vmatprep.subr.bf16.mxu0 %v6199
    %6555 = vmatpush1.bf16.msra.mxu0 %v6198
    %6556 = vmatprep.subr.bf16.mxu0 %v6195
    %6557 = vmatpush1.bf16.msra.mxu0 %v6194
    %6558 = vmatprep.subr.bf16.mxu0 %v6191
    %6559 = vmatpush1.bf16.msra.mxu0 %v6190
    %6560 = vmatprep.subr.bf16.mxu0 %v6187
    %6561 = vmatpush1.bf16.msra.mxu0 %v6186
    %6562 = vmatprep.subr.bf16.mxu0 %v6247
    %6563 = vmatpush2.bf16.msra.mxu0 %v6246
    %6564 = vmatprep.subr.bf16.mxu0 %v6243
    %6565 = vmatpush2.bf16.msra.mxu0 %v6242
    %6566 = vmatprep.subr.bf16.mxu0 %v6239
    %6567 = vmatpush2.bf16.msra.mxu0 %v6238
    %6568 = vmatprep.subr.bf16.mxu0 %v6235
    %6569 = vmatpush2.bf16.msra.mxu0 %v6234
    %6570 = vmatprep.subr.bf16.mxu0 %v6231
    %6571 = vmatpush2.bf16.msra.mxu0 %v6230
    %6572 = vmatprep.subr.bf16.mxu0 %v6227
    %6573 = vmatpush2.bf16.msra.mxu0 %v6226
    %6574 = vmatprep.subr.bf16.mxu0 %v6223
    %6575 = vmatpush2.bf16.msra.mxu0 %v6222
    %6576 = vmatprep.subr.bf16.mxu0 %v6219
    %6577 = vmatpush2.bf16.msra.mxu0 %v6218
    %6578 = vmatprep.mubr.bf16.mxu0 %v5753
    %6579 = vmatmul.mubr.bf16.gmra.mxu0 %v5752
    %v6580 = vpop.f32.mrf.mxu0
    %v6581 = vadd.f32 %v5702, %v6580
    %v6582 = vpop.f32.mrf.mxu0
    %v6583 = vadd.f32 %v5704, %v6582
    %v6584 = vpop.f32.mrf.mxu0
    %v6585 = vadd.f32 %v5706, %v6584
    %v6586 = vpop.f32.mrf.mxu0
    %v6587 = vadd.f32 %v5708, %v6586
    %6588 = vmatprep.mubr.bf16.mxu0 %v5789
    %6589 = vmatmul.mubr.bf16.gmra.mxu0 %v5788
    %v6590 = vpop.f32.mrf.mxu0
    %v6591 = vadd.f32 %v5712, %v6590
    %v6592 = vpop.f32.mrf.mxu0
    %v6593 = vadd.f32 %v5714, %v6592
    %v6594 = vpop.f32.mrf.mxu0
    %v6595 = vadd.f32 %v5716, %v6594
    %v6596 = vpop.f32.mrf.mxu0
    %v6597 = vadd.f32 %v5718, %v6596
    %6598 = vdwg.mxu0
    %6599 = vmatprep.subr.bf16.mxu0 %v6279
    %6600 = vmatpush1.bf16.msra.mxu0 %v6278
    %6601 = vmatprep.subr.bf16.mxu0 %v6275
    %6602 = vmatpush1.bf16.msra.mxu0 %v6274
    %6603 = vmatprep.subr.bf16.mxu0 %v6271
    %6604 = vmatpush1.bf16.msra.mxu0 %v6270
    %6605 = vmatprep.subr.bf16.mxu0 %v6267
    %6606 = vmatpush1.bf16.msra.mxu0 %v6266
    %6607 = vmatprep.subr.bf16.mxu0 %v6263
    %6608 = vmatpush1.bf16.msra.mxu0 %v6262
    %6609 = vmatprep.subr.bf16.mxu0 %v6259
    %6610 = vmatpush1.bf16.msra.mxu0 %v6258
    %6611 = vmatprep.subr.bf16.mxu0 %v6255
    %6612 = vmatpush1.bf16.msra.mxu0 %v6254
    %6613 = vmatprep.subr.bf16.mxu0 %v6251
    %6614 = vmatpush1.bf16.msra.mxu0 %v6250
    %6615 = vmatprep.subr.bf16.mxu0 %v6311
    %6616 = vmatpush2.bf16.msra.mxu0 %v6310
    %6617 = vmatprep.subr.bf16.mxu0 %v6307
    %6618 = vmatpush2.bf16.msra.mxu0 %v6306
    %6619 = vmatprep.subr.bf16.mxu0 %v6303
    %6620 = vmatpush2.bf16.msra.mxu0 %v6302
    %6621 = vmatprep.subr.bf16.mxu0 %v6299
    %6622 = vmatpush2.bf16.msra.mxu0 %v6298
    %6623 = vmatprep.subr.bf16.mxu0 %v6295
    %6624 = vmatpush2.bf16.msra.mxu0 %v6294
    %6625 = vmatprep.subr.bf16.mxu0 %v6291
    %6626 = vmatpush2.bf16.msra.mxu0 %v6290
    %6627 = vmatprep.subr.bf16.mxu0 %v6287
    %6628 = vmatpush2.bf16.msra.mxu0 %v6286
    %6629 = vmatprep.subr.bf16.mxu0 %v6283
    %6630 = vmatpush2.bf16.msra.mxu0 %v6282
    %6631 = vmatprep.mubr.bf16.mxu0 %v5755
    %6632 = vmatmul.mubr.bf16.gmra.mxu0 %v5754
    %v6633 = vpop.f32.mrf.mxu0
    %v6634 = vadd.f32 %v6581, %v6633
    %v6635 = vpop.f32.mrf.mxu0
    %v6636 = vadd.f32 %v6583, %v6635
    %v6637 = vpop.f32.mrf.mxu0
    %v6638 = vadd.f32 %v6585, %v6637
    %v6639 = vpop.f32.mrf.mxu0
    %v6640 = vadd.f32 %v6587, %v6639
    %6641 = vmatprep.mubr.bf16.mxu0 %v5791
    %6642 = vmatmul.mubr.bf16.gmra.mxu0 %v5790
    %v6643 = vpop.f32.mrf.mxu0
    %v6644 = vadd.f32 %v6591, %v6643
    %v6645 = vpop.f32.mrf.mxu0
    %v6646 = vadd.f32 %v6593, %v6645
    %v6647 = vpop.f32.mrf.mxu0
    %v6648 = vadd.f32 %v6595, %v6647
    %v6649 = vpop.f32.mrf.mxu0
    %v6650 = vadd.f32 %v6597, %v6649
    %6651 = vdwg.mxu0
    %vm6652 = vcmask 1040384
    %vm6653 = vcmask 1042434
    %vm6654 = vmor %vm6652, %vm6653
    %vm6655 = vcmask 1044484
    %vm6656 = vmor %vm6654, %vm6655
    %vm6657 = vcmask 1046534
    %vm6658 = vmor %vm6656, %vm6657
    %v6659 = vrot.slane %v4298, 7
    %v6660 = vrot.slane %v6659, 2
    %v6661 = vrot.slane %v4532, 7
    %v6662 = vsel %vm6658, %v6660, %v6661
    %v6663 = vrot.slane %v4313, 7
    %v6664 = vrot.slane %v6663, 2
    %v6665 = vrot.slane %v4533, 7
    %v6666 = vsel %vm6658, %v6664, %v6665
    %v6667 = vrot.slane %v4328, 7
    %v6668 = vrot.slane %v6667, 2
    %v6669 = vrot.slane %v4534, 7
    %v6670 = vsel %vm6658, %v6668, %v6669
    %v6671 = vrot.slane %v4343, 7
    %v6672 = vrot.slane %v6671, 2
    %v6673 = vrot.slane %v4535, 7
    %v6674 = vsel %vm6658, %v6672, %v6673
    %v6675 = vrot.slane %v4358, 7
    %v6676 = vrot.slane %v6675, 2
    %v6677 = vrot.slane %v4536, 7
    %v6678 = vsel %vm6658, %v6676, %v6677
    %v6679 = vrot.slane %v4373, 7
    %v6680 = vrot.slane %v6679, 2
    %v6681 = vrot.slane %v4537, 7
    %v6682 = vsel %vm6658, %v6680, %v6681
    %v6683 = vrot.slane %v4388, 7
    %v6684 = vrot.slane %v6683, 2
    %v6685 = vrot.slane %v4538, 7
    %v6686 = vsel %vm6658, %v6684, %v6685
    %v6687 = vrot.slane %v4403, 7
    %v6688 = vrot.slane %v6687, 2
    %v6689 = vrot.slane %v4539, 7
    %v6690 = vsel %vm6658, %v6688, %v6689
    %s6691 = scalar_lea.vmem [#allocation8], 2048
    %v6692 = vld [vmem:[%s6691] sm:$0xff]
    %v6693 = vld [vmem:[%s6691 + $0x8] sm:$0xff]
    %v6694 = vld [vmem:[%s6691 + $0x10] sm:$0xff]
    %v6695 = vld [vmem:[%s6691 + $0x18] sm:$0xff]
    %v6696 = vld [vmem:[%s6691 + $0x20] sm:$0xff]
    %v6697 = vld [vmem:[%s6691 + $0x28] sm:$0xff]
    %v6698 = vld [vmem:[%s6691 + $0x30] sm:$0xff]
    %v6699 = vld [vmem:[%s6691 + $0x38] sm:$0xff]
    %v6700 = vld [vmem:[%s6691 + $0x40] sm:$0xff]
    %v6701 = vld [vmem:[%s6691 + $0x48] sm:$0xff]
    %v6702 = vld [vmem:[%s6691 + $0x50] sm:$0xff]
    %v6703 = vld [vmem:[%s6691 + $0x58] sm:$0xff]
    %v6704 = vld [vmem:[%s6691 + $0x60] sm:$0xff]
    %v6705 = vld [vmem:[%s6691 + $0x68] sm:$0xff]
    %v6706 = vld [vmem:[%s6691 + $0x70] sm:$0xff]
    %v6707 = vld [vmem:[%s6691 + $0x78] sm:$0xff]
    %v6708 = vld [vmem:[%s6691 + $0x80] sm:$0xff]
    %v6709 = vld [vmem:[%s6691 + $0x88] sm:$0xff]
    %v6710 = vld [vmem:[%s6691 + $0x90] sm:$0xff]
    %v6711 = vld [vmem:[%s6691 + $0x98] sm:$0xff]
    %v6712 = vld [vmem:[%s6691 + $0xa0] sm:$0xff]
    %v6713 = vld [vmem:[%s6691 + $0xa8] sm:$0xff]
    %v6714 = vld [vmem:[%s6691 + $0xb0] sm:$0xff]
    %v6715 = vld [vmem:[%s6691 + $0xb8] sm:$0xff]
    %v6716 = vld [vmem:[%s6691 + $0xc0] sm:$0xff]
    %v6717 = vld [vmem:[%s6691 + $0xc8] sm:$0xff]
    %v6718 = vld [vmem:[%s6691 + $0xd0] sm:$0xff]
    %v6719 = vld [vmem:[%s6691 + $0xd8] sm:$0xff]
    %v6720 = vld [vmem:[%s6691 + $0xe0] sm:$0xff]
    %v6721 = vld [vmem:[%s6691 + $0xe8] sm:$0xff]
    %v6722 = vld [vmem:[%s6691 + $0xf0] sm:$0xff]
    %v6723 = vld [vmem:[%s6691 + $0xf8] sm:$0xff]
    %v6724 = vld [vmem:[%s6691 + $0x100] sm:$0xff]
    %v6725 = vld [vmem:[%s6691 + $0x108] sm:$0xff]
    %v6726 = vld [vmem:[%s6691 + $0x110] sm:$0xff]
    %v6727 = vld [vmem:[%s6691 + $0x118] sm:$0xff]
    %v6728 = vld [vmem:[%s6691 + $0x120] sm:$0xff]
    %v6729 = vld [vmem:[%s6691 + $0x128] sm:$0xff]
    %v6730 = vld [vmem:[%s6691 + $0x130] sm:$0xff]
    %v6731 = vld [vmem:[%s6691 + $0x138] sm:$0xff]
    %v6732 = vld [vmem:[%s6691 + $0x140] sm:$0xff]
    %v6733 = vld [vmem:[%s6691 + $0x148] sm:$0xff]
    %v6734 = vld [vmem:[%s6691 + $0x150] sm:$0xff]
    %v6735 = vld [vmem:[%s6691 + $0x158] sm:$0xff]
    %v6736 = vld [vmem:[%s6691 + $0x160] sm:$0xff]
    %v6737 = vld [vmem:[%s6691 + $0x168] sm:$0xff]
    %v6738 = vld [vmem:[%s6691 + $0x170] sm:$0xff]
    %v6739 = vld [vmem:[%s6691 + $0x178] sm:$0xff]
    %v6740 = vld [vmem:[%s6691 + $0x180] sm:$0xff]
    %v6741 = vld [vmem:[%s6691 + $0x188] sm:$0xff]
    %v6742 = vld [vmem:[%s6691 + $0x190] sm:$0xff]
    %v6743 = vld [vmem:[%s6691 + $0x198] sm:$0xff]
    %v6744 = vld [vmem:[%s6691 + $0x1a0] sm:$0xff]
    %v6745 = vld [vmem:[%s6691 + $0x1a8] sm:$0xff]
    %v6746 = vld [vmem:[%s6691 + $0x1b0] sm:$0xff]
    %v6747 = vld [vmem:[%s6691 + $0x1b8] sm:$0xff]
    %v6748 = vld [vmem:[%s6691 + $0x1c0] sm:$0xff]
    %v6749 = vld [vmem:[%s6691 + $0x1c8] sm:$0xff]
    %v6750 = vld [vmem:[%s6691 + $0x1d0] sm:$0xff]
    %v6751 = vld [vmem:[%s6691 + $0x1d8] sm:$0xff]
    %v6752 = vld [vmem:[%s6691 + $0x1e0] sm:$0xff]
    %v6753 = vld [vmem:[%s6691 + $0x1e8] sm:$0xff]
    %v6754 = vld [vmem:[%s6691 + $0x1f0] sm:$0xff]
    %v6755 = vld [vmem:[%s6691 + $0x1f8] sm:$0xff]
    %v6756 = vld [vmem:[%s6691 + $0x200] sm:$0xff]
    %v6757 = vld [vmem:[%s6691 + $0x208] sm:$0xff]
    %v6758 = vld [vmem:[%s6691 + $0x210] sm:$0xff]
    %v6759 = vld [vmem:[%s6691 + $0x218] sm:$0xff]
    %v6760 = vld [vmem:[%s6691 + $0x220] sm:$0xff]
    %v6761 = vld [vmem:[%s6691 + $0x228] sm:$0xff]
    %v6762 = vld [vmem:[%s6691 + $0x230] sm:$0xff]
    %v6763 = vld [vmem:[%s6691 + $0x238] sm:$0xff]
    %v6764 = vld [vmem:[%s6691 + $0x240] sm:$0xff]
    %v6765 = vld [vmem:[%s6691 + $0x248] sm:$0xff]
    %v6766 = vld [vmem:[%s6691 + $0x250] sm:$0xff]
    %v6767 = vld [vmem:[%s6691 + $0x258] sm:$0xff]
    %v6768 = vld [vmem:[%s6691 + $0x260] sm:$0xff]
    %v6769 = vld [vmem:[%s6691 + $0x268] sm:$0xff]
    %v6770 = vld [vmem:[%s6691 + $0x270] sm:$0xff]
    %v6771 = vld [vmem:[%s6691 + $0x278] sm:$0xff]
    %v6772 = vld [vmem:[%s6691 + $0x280] sm:$0xff]
    %v6773 = vld [vmem:[%s6691 + $0x288] sm:$0xff]
    %v6774 = vld [vmem:[%s6691 + $0x290] sm:$0xff]
    %v6775 = vld [vmem:[%s6691 + $0x298] sm:$0xff]
    %v6776 = vld [vmem:[%s6691 + $0x2a0] sm:$0xff]
    %v6777 = vld [vmem:[%s6691 + $0x2a8] sm:$0xff]
    %v6778 = vld [vmem:[%s6691 + $0x2b0] sm:$0xff]
    %v6779 = vld [vmem:[%s6691 + $0x2b8] sm:$0xff]
    %v6780 = vld [vmem:[%s6691 + $0x2c0] sm:$0xff]
    %v6781 = vld [vmem:[%s6691 + $0x2c8] sm:$0xff]
    %v6782 = vld [vmem:[%s6691 + $0x2d0] sm:$0xff]
    %v6783 = vld [vmem:[%s6691 + $0x2d8] sm:$0xff]
    %v6784 = vld [vmem:[%s6691 + $0x2e0] sm:$0xff]
    %v6785 = vld [vmem:[%s6691 + $0x2e8] sm:$0xff]
    %v6786 = vld [vmem:[%s6691 + $0x2f0] sm:$0xff]
    %v6787 = vld [vmem:[%s6691 + $0x2f8] sm:$0xff]
    %v6788 = vld [vmem:[%s6691 + $0x300] sm:$0xff]
    %v6789 = vld [vmem:[%s6691 + $0x308] sm:$0xff]
    %v6790 = vld [vmem:[%s6691 + $0x310] sm:$0xff]
    %v6791 = vld [vmem:[%s6691 + $0x318] sm:$0xff]
    %v6792 = vld [vmem:[%s6691 + $0x320] sm:$0xff]
    %v6793 = vld [vmem:[%s6691 + $0x328] sm:$0xff]
    %v6794 = vld [vmem:[%s6691 + $0x330] sm:$0xff]
    %v6795 = vld [vmem:[%s6691 + $0x338] sm:$0xff]
    %v6796 = vld [vmem:[%s6691 + $0x340] sm:$0xff]
    %v6797 = vld [vmem:[%s6691 + $0x348] sm:$0xff]
    %v6798 = vld [vmem:[%s6691 + $0x350] sm:$0xff]
    %v6799 = vld [vmem:[%s6691 + $0x358] sm:$0xff]
    %v6800 = vld [vmem:[%s6691 + $0x360] sm:$0xff]
    %v6801 = vld [vmem:[%s6691 + $0x368] sm:$0xff]
    %v6802 = vld [vmem:[%s6691 + $0x370] sm:$0xff]
    %v6803 = vld [vmem:[%s6691 + $0x378] sm:$0xff]
    %v6804 = vld [vmem:[%s6691 + $0x380] sm:$0xff]
    %v6805 = vld [vmem:[%s6691 + $0x388] sm:$0xff]
    %v6806 = vld [vmem:[%s6691 + $0x390] sm:$0xff]
    %v6807 = vld [vmem:[%s6691 + $0x398] sm:$0xff]
    %v6808 = vld [vmem:[%s6691 + $0x3a0] sm:$0xff]
    %v6809 = vld [vmem:[%s6691 + $0x3a8] sm:$0xff]
    %v6810 = vld [vmem:[%s6691 + $0x3b0] sm:$0xff]
    %v6811 = vld [vmem:[%s6691 + $0x3b8] sm:$0xff]
    %v6812 = vld [vmem:[%s6691 + $0x3c0] sm:$0xff]
    %v6813 = vld [vmem:[%s6691 + $0x3c8] sm:$0xff]
    %v6814 = vld [vmem:[%s6691 + $0x3d0] sm:$0xff]
    %v6815 = vld [vmem:[%s6691 + $0x3d8] sm:$0xff]
    %v6816 = vld [vmem:[%s6691 + $0x3e0] sm:$0xff]
    %v6817 = vld [vmem:[%s6691 + $0x3e8] sm:$0xff]
    %v6818 = vld [vmem:[%s6691 + $0x3f0] sm:$0xff]
    %v6819 = vld [vmem:[%s6691 + $0x3f8] sm:$0xff]
    %v6820 = vcombine.low %v6662, %v6666
    %v6821 = vcombine.high %v6662, %v6666
    %v6822 = vcombine.low %v6670, %v6674
    %v6823 = vcombine.high %v6670, %v6674
    %v6825 = vunpack.c.l.s4 1983009808
    %v6826 = vunpack.c.0.s8 %v6825
    %v6827 = vlaneseq
    %v6828 = vshrl.u32 %v6827, 7
    %v6829 = vsub.s32 %v6826, %v6828
    %v6830 = vrot.slane %v6820, %v6829
    %v6832 = vunpack.c.l.s4 1983009808
    %v6833 = vunpack.c.0.s8 %v6832
    %v6834 = vlaneseq
    %v6835 = vshrl.u32 %v6834, 7
    %v6836 = vsub.s32 %v6833, %v6835
    %v6837 = vrot.slane %v6821, %v6836
    %v6839 = vunpack.c.l.s4 1983009808
    %v6840 = vunpack.c.0.s8 %v6839
    %v6841 = vlaneseq
    %v6842 = vshrl.u32 %v6841, 7
    %v6843 = vsub.s32 %v6840, %v6842
    %v6844 = vrot.slane %v6822, %v6843
    %v6846 = vunpack.c.l.s4 1983009808
    %v6847 = vunpack.c.0.s8 %v6846
    %v6848 = vlaneseq
    %v6849 = vshrl.u32 %v6848, 7
    %v6850 = vsub.s32 %v6847, %v6849
    %v6851 = vrot.slane %v6823, %v6850
    %v6852 = vcombine.low %v6830, %v6844
    %v6853 = vcombine.high %v6830, %v6844
    %v6854 = vcombine.low %v6837, %v6851
    %v6855 = vcombine.high %v6837, %v6851
    %v6856 = vcombine.low %v6678, %v6682
    %v6857 = vcombine.high %v6678, %v6682
    %v6858 = vcombine.low %v6686, %v6690
    %v6859 = vcombine.high %v6686, %v6690
    %v6861 = vunpack.c.l.s4 1983009808
    %v6862 = vunpack.c.0.s8 %v6861
    %v6863 = vlaneseq
    %v6864 = vshrl.u32 %v6863, 7
    %v6865 = vsub.s32 %v6862, %v6864
    %v6866 = vrot.slane %v6856, %v6865
    %v6868 = vunpack.c.l.s4 1983009808
    %v6869 = vunpack.c.0.s8 %v6868
    %v6870 = vlaneseq
    %v6871 = vshrl.u32 %v6870, 7
    %v6872 = vsub.s32 %v6869, %v6871
    %v6873 = vrot.slane %v6857, %v6872
    %v6875 = vunpack.c.l.s4 1983009808
    %v6876 = vunpack.c.0.s8 %v6875
    %v6877 = vlaneseq
    %v6878 = vshrl.u32 %v6877, 7
    %v6879 = vsub.s32 %v6876, %v6878
    %v6880 = vrot.slane %v6858, %v6879
    %v6882 = vunpack.c.l.s4 1983009808
    %v6883 = vunpack.c.0.s8 %v6882
    %v6884 = vlaneseq
    %v6885 = vshrl.u32 %v6884, 7
    %v6886 = vsub.s32 %v6883, %v6885
    %v6887 = vrot.slane %v6859, %v6886
    %v6888 = vcombine.low %v6866, %v6880
    %v6889 = vcombine.high %v6866, %v6880
    %v6890 = vcombine.low %v6873, %v6887
    %v6891 = vcombine.high %v6873, %v6887
    %v7028 = vunpack.c.l.b16 %v6692
    %v7029 = vunpack.c.h.b16 %v6692
    %v7030 = vunpack.c.l.b16 %v6693
    %v7031 = vunpack.c.h.b16 %v6693
    %v7032 = vunpack.c.l.b16 %v6694
    %v7033 = vunpack.c.h.b16 %v6694
    %v7034 = vunpack.c.l.b16 %v6695
    %v7035 = vunpack.c.h.b16 %v6695
    %v7036 = vunpack.c.l.b16 %v6696
    %v7037 = vunpack.c.h.b16 %v6696
    %v7038 = vunpack.c.l.b16 %v6697
    %v7039 = vunpack.c.h.b16 %v6697
    %v7040 = vunpack.c.l.b16 %v6698
    %v7041 = vunpack.c.h.b16 %v6698
    %v7042 = vunpack.c.l.b16 %v6699
    %v7043 = vunpack.c.h.b16 %v6699
    %v7044 = vunpack.c.l.b16 %v6700
    %v7045 = vunpack.c.h.b16 %v6700
    %v7046 = vunpack.c.l.b16 %v6701
    %v7047 = vunpack.c.h.b16 %v6701
    %v7048 = vunpack.c.l.b16 %v6702
    %v7049 = vunpack.c.h.b16 %v6702
    %v7050 = vunpack.c.l.b16 %v6703
    %v7051 = vunpack.c.h.b16 %v6703
    %v7052 = vunpack.c.l.b16 %v6704
    %v7053 = vunpack.c.h.b16 %v6704
    %v7054 = vunpack.c.l.b16 %v6705
    %v7055 = vunpack.c.h.b16 %v6705
    %v7056 = vunpack.c.l.b16 %v6706
    %v7057 = vunpack.c.h.b16 %v6706
    %v7058 = vunpack.c.l.b16 %v6707
    %v7059 = vunpack.c.h.b16 %v6707
    %v7060 = vunpack.c.l.b16 %v6708
    %v7061 = vunpack.c.h.b16 %v6708
    %v7062 = vunpack.c.l.b16 %v6709
    %v7063 = vunpack.c.h.b16 %v6709
    %v7064 = vunpack.c.l.b16 %v6710
    %v7065 = vunpack.c.h.b16 %v6710
    %v7066 = vunpack.c.l.b16 %v6711
    %v7067 = vunpack.c.h.b16 %v6711
    %v7068 = vunpack.c.l.b16 %v6712
    %v7069 = vunpack.c.h.b16 %v6712
    %v7070 = vunpack.c.l.b16 %v6713
    %v7071 = vunpack.c.h.b16 %v6713
    %v7072 = vunpack.c.l.b16 %v6714
    %v7073 = vunpack.c.h.b16 %v6714
    %v7074 = vunpack.c.l.b16 %v6715
    %v7075 = vunpack.c.h.b16 %v6715
    %v7076 = vunpack.c.l.b16 %v6716
    %v7077 = vunpack.c.h.b16 %v6716
    %v7078 = vunpack.c.l.b16 %v6717
    %v7079 = vunpack.c.h.b16 %v6717
    %v7080 = vunpack.c.l.b16 %v6718
    %v7081 = vunpack.c.h.b16 %v6718
    %v7082 = vunpack.c.l.b16 %v6719
    %v7083 = vunpack.c.h.b16 %v6719
    %v7084 = vunpack.c.l.b16 %v6720
    %v7085 = vunpack.c.h.b16 %v6720
    %v7086 = vunpack.c.l.b16 %v6721
    %v7087 = vunpack.c.h.b16 %v6721
    %v7088 = vunpack.c.l.b16 %v6722
    %v7089 = vunpack.c.h.b16 %v6722
    %v7090 = vunpack.c.l.b16 %v6723
    %v7091 = vunpack.c.h.b16 %v6723
    %v7092 = vunpack.c.l.b16 %v6724
    %v7093 = vunpack.c.h.b16 %v6724
    %v7094 = vunpack.c.l.b16 %v6725
    %v7095 = vunpack.c.h.b16 %v6725
    %v7096 = vunpack.c.l.b16 %v6726
    %v7097 = vunpack.c.h.b16 %v6726
    %v7098 = vunpack.c.l.b16 %v6727
    %v7099 = vunpack.c.h.b16 %v6727
    %v7100 = vunpack.c.l.b16 %v6728
    %v7101 = vunpack.c.h.b16 %v6728
    %v7102 = vunpack.c.l.b16 %v6729
    %v7103 = vunpack.c.h.b16 %v6729
    %v7104 = vunpack.c.l.b16 %v6730
    %v7105 = vunpack.c.h.b16 %v6730
    %v7106 = vunpack.c.l.b16 %v6731
    %v7107 = vunpack.c.h.b16 %v6731
    %v7108 = vunpack.c.l.b16 %v6732
    %v7109 = vunpack.c.h.b16 %v6732
    %v7110 = vunpack.c.l.b16 %v6733
    %v7111 = vunpack.c.h.b16 %v6733
    %v7112 = vunpack.c.l.b16 %v6734
    %v7113 = vunpack.c.h.b16 %v6734
    %v7114 = vunpack.c.l.b16 %v6735
    %v7115 = vunpack.c.h.b16 %v6735
    %v7116 = vunpack.c.l.b16 %v6736
    %v7117 = vunpack.c.h.b16 %v6736
    %v7118 = vunpack.c.l.b16 %v6737
    %v7119 = vunpack.c.h.b16 %v6737
    %v7120 = vunpack.c.l.b16 %v6738
    %v7121 = vunpack.c.h.b16 %v6738
    %v7122 = vunpack.c.l.b16 %v6739
    %v7123 = vunpack.c.h.b16 %v6739
    %v7124 = vunpack.c.l.b16 %v6740
    %v7125 = vunpack.c.h.b16 %v6740
    %v7126 = vunpack.c.l.b16 %v6741
    %v7127 = vunpack.c.h.b16 %v6741
    %v7128 = vunpack.c.l.b16 %v6742
    %v7129 = vunpack.c.h.b16 %v6742
    %v7130 = vunpack.c.l.b16 %v6743
    %v7131 = vunpack.c.h.b16 %v6743
    %v7132 = vunpack.c.l.b16 %v6744
    %v7133 = vunpack.c.h.b16 %v6744
    %v7134 = vunpack.c.l.b16 %v6745
    %v7135 = vunpack.c.h.b16 %v6745
    %v7136 = vunpack.c.l.b16 %v6746
    %v7137 = vunpack.c.h.b16 %v6746
    %v7138 = vunpack.c.l.b16 %v6747
    %v7139 = vunpack.c.h.b16 %v6747
    %v7140 = vunpack.c.l.b16 %v6748
    %v7141 = vunpack.c.h.b16 %v6748
    %v7142 = vunpack.c.l.b16 %v6749
    %v7143 = vunpack.c.h.b16 %v6749
    %v7144 = vunpack.c.l.b16 %v6750
    %v7145 = vunpack.c.h.b16 %v6750
    %v7146 = vunpack.c.l.b16 %v6751
    %v7147 = vunpack.c.h.b16 %v6751
    %v7148 = vunpack.c.l.b16 %v6752
    %v7149 = vunpack.c.h.b16 %v6752
    %v7150 = vunpack.c.l.b16 %v6753
    %v7151 = vunpack.c.h.b16 %v6753
    %v7152 = vunpack.c.l.b16 %v6754
    %v7153 = vunpack.c.h.b16 %v6754
    %v7154 = vunpack.c.l.b16 %v6755
    %v7155 = vunpack.c.h.b16 %v6755
    %v7156 = vunpack.c.l.b16 %v6756
    %v7157 = vunpack.c.h.b16 %v6756
    %v7158 = vunpack.c.l.b16 %v6757
    %v7159 = vunpack.c.h.b16 %v6757
    %v7160 = vunpack.c.l.b16 %v6758
    %v7161 = vunpack.c.h.b16 %v6758
    %v7162 = vunpack.c.l.b16 %v6759
    %v7163 = vunpack.c.h.b16 %v6759
    %v7164 = vunpack.c.l.b16 %v6760
    %v7165 = vunpack.c.h.b16 %v6760
    %v7166 = vunpack.c.l.b16 %v6761
    %v7167 = vunpack.c.h.b16 %v6761
    %v7168 = vunpack.c.l.b16 %v6762
    %v7169 = vunpack.c.h.b16 %v6762
    %v7170 = vunpack.c.l.b16 %v6763
    %v7171 = vunpack.c.h.b16 %v6763
    %v7172 = vunpack.c.l.b16 %v6764
    %v7173 = vunpack.c.h.b16 %v6764
    %v7174 = vunpack.c.l.b16 %v6765
    %v7175 = vunpack.c.h.b16 %v6765
    %v7176 = vunpack.c.l.b16 %v6766
    %v7177 = vunpack.c.h.b16 %v6766
    %v7178 = vunpack.c.l.b16 %v6767
    %v7179 = vunpack.c.h.b16 %v6767
    %v7180 = vunpack.c.l.b16 %v6768
    %v7181 = vunpack.c.h.b16 %v6768
    %v7182 = vunpack.c.l.b16 %v6769
    %v7183 = vunpack.c.h.b16 %v6769
    %v7184 = vunpack.c.l.b16 %v6770
    %v7185 = vunpack.c.h.b16 %v6770
    %v7186 = vunpack.c.l.b16 %v6771
    %v7187 = vunpack.c.h.b16 %v6771
    %v7188 = vunpack.c.l.b16 %v6772
    %v7189 = vunpack.c.h.b16 %v6772
    %v7190 = vunpack.c.l.b16 %v6773
    %v7191 = vunpack.c.h.b16 %v6773
    %v7192 = vunpack.c.l.b16 %v6774
    %v7193 = vunpack.c.h.b16 %v6774
    %v7194 = vunpack.c.l.b16 %v6775
    %v7195 = vunpack.c.h.b16 %v6775
    %v7196 = vunpack.c.l.b16 %v6776
    %v7197 = vunpack.c.h.b16 %v6776
    %v7198 = vunpack.c.l.b16 %v6777
    %v7199 = vunpack.c.h.b16 %v6777
    %v7200 = vunpack.c.l.b16 %v6778
    %v7201 = vunpack.c.h.b16 %v6778
    %v7202 = vunpack.c.l.b16 %v6779
    %v7203 = vunpack.c.h.b16 %v6779
    %v7204 = vunpack.c.l.b16 %v6780
    %v7205 = vunpack.c.h.b16 %v6780
    %v7206 = vunpack.c.l.b16 %v6781
    %v7207 = vunpack.c.h.b16 %v6781
    %v7208 = vunpack.c.l.b16 %v6782
    %v7209 = vunpack.c.h.b16 %v6782
    %v7210 = vunpack.c.l.b16 %v6783
    %v7211 = vunpack.c.h.b16 %v6783
    %v7212 = vunpack.c.l.b16 %v6784
    %v7213 = vunpack.c.h.b16 %v6784
    %v7214 = vunpack.c.l.b16 %v6785
    %v7215 = vunpack.c.h.b16 %v6785
    %v7216 = vunpack.c.l.b16 %v6786
    %v7217 = vunpack.c.h.b16 %v6786
    %v7218 = vunpack.c.l.b16 %v6787
    %v7219 = vunpack.c.h.b16 %v6787
    %v7220 = vunpack.c.l.b16 %v6788
    %v7221 = vunpack.c.h.b16 %v6788
    %v7222 = vunpack.c.l.b16 %v6789
    %v7223 = vunpack.c.h.b16 %v6789
    %v7224 = vunpack.c.l.b16 %v6790
    %v7225 = vunpack.c.h.b16 %v6790
    %v7226 = vunpack.c.l.b16 %v6791
    %v7227 = vunpack.c.h.b16 %v6791
    %v7228 = vunpack.c.l.b16 %v6792
    %v7229 = vunpack.c.h.b16 %v6792
    %v7230 = vunpack.c.l.b16 %v6793
    %v7231 = vunpack.c.h.b16 %v6793
    %v7232 = vunpack.c.l.b16 %v6794
    %v7233 = vunpack.c.h.b16 %v6794
    %v7234 = vunpack.c.l.b16 %v6795
    %v7235 = vunpack.c.h.b16 %v6795
    %v7236 = vunpack.c.l.b16 %v6796
    %v7237 = vunpack.c.h.b16 %v6796
    %v7238 = vunpack.c.l.b16 %v6797
    %v7239 = vunpack.c.h.b16 %v6797
    %v7240 = vunpack.c.l.b16 %v6798
    %v7241 = vunpack.c.h.b16 %v6798
    %v7242 = vunpack.c.l.b16 %v6799
    %v7243 = vunpack.c.h.b16 %v6799
    %v7244 = vunpack.c.l.b16 %v6800
    %v7245 = vunpack.c.h.b16 %v6800
    %v7246 = vunpack.c.l.b16 %v6801
    %v7247 = vunpack.c.h.b16 %v6801
    %v7248 = vunpack.c.l.b16 %v6802
    %v7249 = vunpack.c.h.b16 %v6802
    %v7250 = vunpack.c.l.b16 %v6803
    %v7251 = vunpack.c.h.b16 %v6803
    %v7252 = vunpack.c.l.b16 %v6804
    %v7253 = vunpack.c.h.b16 %v6804
    %v7254 = vunpack.c.l.b16 %v6805
    %v7255 = vunpack.c.h.b16 %v6805
    %v7256 = vunpack.c.l.b16 %v6806
    %v7257 = vunpack.c.h.b16 %v6806
    %v7258 = vunpack.c.l.b16 %v6807
    %v7259 = vunpack.c.h.b16 %v6807
    %v7260 = vunpack.c.l.b16 %v6808
    %v7261 = vunpack.c.h.b16 %v6808
    %v7262 = vunpack.c.l.b16 %v6809
    %v7263 = vunpack.c.h.b16 %v6809
    %v7264 = vunpack.c.l.b16 %v6810
    %v7265 = vunpack.c.h.b16 %v6810
    %v7266 = vunpack.c.l.b16 %v6811
    %v7267 = vunpack.c.h.b16 %v6811
    %v7268 = vunpack.c.l.b16 %v6812
    %v7269 = vunpack.c.h.b16 %v6812
    %v7270 = vunpack.c.l.b16 %v6813
    %v7271 = vunpack.c.h.b16 %v6813
    %v7272 = vunpack.c.l.b16 %v6814
    %v7273 = vunpack.c.h.b16 %v6814
    %v7274 = vunpack.c.l.b16 %v6815
    %v7275 = vunpack.c.h.b16 %v6815
    %v7276 = vunpack.c.l.b16 %v6816
    %v7277 = vunpack.c.h.b16 %v6816
    %v7278 = vunpack.c.l.b16 %v6817
    %v7279 = vunpack.c.h.b16 %v6817
    %v7280 = vunpack.c.l.b16 %v6818
    %v7281 = vunpack.c.h.b16 %v6818
    %v7282 = vunpack.c.l.b16 %v6819
    %v7283 = vunpack.c.h.b16 %v6819
    %v7284 = vpack.c.b16 %v7032, %v7028
    %v7285 = vpack.c.b16 %v7033, %v7029
    %v7286 = vpack.c.b16 %v7034, %v7030
    %v7287 = vpack.c.b16 %v7035, %v7031
    %v7288 = vpack.c.b16 %v7040, %v7036
    %v7289 = vpack.c.b16 %v7041, %v7037
    %v7290 = vpack.c.b16 %v7042, %v7038
    %v7291 = vpack.c.b16 %v7043, %v7039
    %v7292 = vpack.c.b16 %v7048, %v7044
    %v7293 = vpack.c.b16 %v7049, %v7045
    %v7294 = vpack.c.b16 %v7050, %v7046
    %v7295 = vpack.c.b16 %v7051, %v7047
    %v7296 = vpack.c.b16 %v7056, %v7052
    %v7297 = vpack.c.b16 %v7057, %v7053
    %v7298 = vpack.c.b16 %v7058, %v7054
    %v7299 = vpack.c.b16 %v7059, %v7055
    %v7300 = vpack.c.b16 %v7064, %v7060
    %v7301 = vpack.c.b16 %v7065, %v7061
    %v7302 = vpack.c.b16 %v7066, %v7062
    %v7303 = vpack.c.b16 %v7067, %v7063
    %v7304 = vpack.c.b16 %v7072, %v7068
    %v7305 = vpack.c.b16 %v7073, %v7069
    %v7306 = vpack.c.b16 %v7074, %v7070
    %v7307 = vpack.c.b16 %v7075, %v7071
    %v7308 = vpack.c.b16 %v7080, %v7076
    %v7309 = vpack.c.b16 %v7081, %v7077
    %v7310 = vpack.c.b16 %v7082, %v7078
    %v7311 = vpack.c.b16 %v7083, %v7079
    %v7312 = vpack.c.b16 %v7088, %v7084
    %v7313 = vpack.c.b16 %v7089, %v7085
    %v7314 = vpack.c.b16 %v7090, %v7086
    %v7315 = vpack.c.b16 %v7091, %v7087
    %v7316 = vpack.c.b16 %v7096, %v7092
    %v7317 = vpack.c.b16 %v7097, %v7093
    %v7318 = vpack.c.b16 %v7098, %v7094
    %v7319 = vpack.c.b16 %v7099, %v7095
    %v7320 = vpack.c.b16 %v7104, %v7100
    %v7321 = vpack.c.b16 %v7105, %v7101
    %v7322 = vpack.c.b16 %v7106, %v7102
    %v7323 = vpack.c.b16 %v7107, %v7103
    %v7324 = vpack.c.b16 %v7112, %v7108
    %v7325 = vpack.c.b16 %v7113, %v7109
    %v7326 = vpack.c.b16 %v7114, %v7110
    %v7327 = vpack.c.b16 %v7115, %v7111
    %v7328 = vpack.c.b16 %v7120, %v7116
    %v7329 = vpack.c.b16 %v7121, %v7117
    %v7330 = vpack.c.b16 %v7122, %v7118
    %v7331 = vpack.c.b16 %v7123, %v7119
    %v7332 = vpack.c.b16 %v7128, %v7124
    %v7333 = vpack.c.b16 %v7129, %v7125
    %v7334 = vpack.c.b16 %v7130, %v7126
    %v7335 = vpack.c.b16 %v7131, %v7127
    %v7336 = vpack.c.b16 %v7136, %v7132
    %v7337 = vpack.c.b16 %v7137, %v7133
    %v7338 = vpack.c.b16 %v7138, %v7134
    %v7339 = vpack.c.b16 %v7139, %v7135
    %v7340 = vpack.c.b16 %v7144, %v7140
    %v7341 = vpack.c.b16 %v7145, %v7141
    %v7342 = vpack.c.b16 %v7146, %v7142
    %v7343 = vpack.c.b16 %v7147, %v7143
    %v7344 = vpack.c.b16 %v7152, %v7148
    %v7345 = vpack.c.b16 %v7153, %v7149
    %v7346 = vpack.c.b16 %v7154, %v7150
    %v7347 = vpack.c.b16 %v7155, %v7151
    %v7348 = vpack.c.b16 %v7160, %v7156
    %v7349 = vpack.c.b16 %v7161, %v7157
    %v7350 = vpack.c.b16 %v7162, %v7158
    %v7351 = vpack.c.b16 %v7163, %v7159
    %v7352 = vpack.c.b16 %v7168, %v7164
    %v7353 = vpack.c.b16 %v7169, %v7165
    %v7354 = vpack.c.b16 %v7170, %v7166
    %v7355 = vpack.c.b16 %v7171, %v7167
    %v7356 = vpack.c.b16 %v7176, %v7172
    %v7357 = vpack.c.b16 %v7177, %v7173
    %v7358 = vpack.c.b16 %v7178, %v7174
    %v7359 = vpack.c.b16 %v7179, %v7175
    %v7360 = vpack.c.b16 %v7184, %v7180
    %v7361 = vpack.c.b16 %v7185, %v7181
    %v7362 = vpack.c.b16 %v7186, %v7182
    %v7363 = vpack.c.b16 %v7187, %v7183
    %v7364 = vpack.c.b16 %v7192, %v7188
    %v7365 = vpack.c.b16 %v7193, %v7189
    %v7366 = vpack.c.b16 %v7194, %v7190
    %v7367 = vpack.c.b16 %v7195, %v7191
    %v7368 = vpack.c.b16 %v7200, %v7196
    %v7369 = vpack.c.b16 %v7201, %v7197
    %v7370 = vpack.c.b16 %v7202, %v7198
    %v7371 = vpack.c.b16 %v7203, %v7199
    %v7372 = vpack.c.b16 %v7208, %v7204
    %v7373 = vpack.c.b16 %v7209, %v7205
    %v7374 = vpack.c.b16 %v7210, %v7206
    %v7375 = vpack.c.b16 %v7211, %v7207
    %v7376 = vpack.c.b16 %v7216, %v7212
    %v7377 = vpack.c.b16 %v7217, %v7213
    %v7378 = vpack.c.b16 %v7218, %v7214
    %v7379 = vpack.c.b16 %v7219, %v7215
    %v7380 = vpack.c.b16 %v7224, %v7220
    %v7381 = vpack.c.b16 %v7225, %v7221
    %v7382 = vpack.c.b16 %v7226, %v7222
    %v7383 = vpack.c.b16 %v7227, %v7223
    %v7384 = vpack.c.b16 %v7232, %v7228
    %v7385 = vpack.c.b16 %v7233, %v7229
    %v7386 = vpack.c.b16 %v7234, %v7230
    %v7387 = vpack.c.b16 %v7235, %v7231
    %v7388 = vpack.c.b16 %v7240, %v7236
    %v7389 = vpack.c.b16 %v7241, %v7237
    %v7390 = vpack.c.b16 %v7242, %v7238
    %v7391 = vpack.c.b16 %v7243, %v7239
    %v7392 = vpack.c.b16 %v7248, %v7244
    %v7393 = vpack.c.b16 %v7249, %v7245
    %v7394 = vpack.c.b16 %v7250, %v7246
    %v7395 = vpack.c.b16 %v7251, %v7247
    %v7396 = vpack.c.b16 %v7256, %v7252
    %v7397 = vpack.c.b16 %v7257, %v7253
    %v7398 = vpack.c.b16 %v7258, %v7254
    %v7399 = vpack.c.b16 %v7259, %v7255
    %v7400 = vpack.c.b16 %v7264, %v7260
    %v7401 = vpack.c.b16 %v7265, %v7261
    %v7402 = vpack.c.b16 %v7266, %v7262
    %v7403 = vpack.c.b16 %v7267, %v7263
    %v7404 = vpack.c.b16 %v7272, %v7268
    %v7405 = vpack.c.b16 %v7273, %v7269
    %v7406 = vpack.c.b16 %v7274, %v7270
    %v7407 = vpack.c.b16 %v7275, %v7271
    %v7408 = vpack.c.b16 %v7280, %v7276
    %v7409 = vpack.c.b16 %v7281, %v7277
    %v7410 = vpack.c.b16 %v7282, %v7278
    %v7411 = vpack.c.b16 %v7283, %v7279
    %7540 = vmatprep.subr.bf16.mxu0 %v7313
    %7541 = vmatpush1.bf16.msra.mxu0 %v7312
    %7542 = vmatprep.subr.bf16.mxu0 %v7309
    %7543 = vmatpush1.bf16.msra.mxu0 %v7308
    %7544 = vmatprep.subr.bf16.mxu0 %v7305
    %7545 = vmatpush1.bf16.msra.mxu0 %v7304
    %7546 = vmatprep.subr.bf16.mxu0 %v7301
    %7547 = vmatpush1.bf16.msra.mxu0 %v7300
    %7548 = vmatprep.subr.bf16.mxu0 %v7297
    %7549 = vmatpush1.bf16.msra.mxu0 %v7296
    %7550 = vmatprep.subr.bf16.mxu0 %v7293
    %7551 = vmatpush1.bf16.msra.mxu0 %v7292
    %7552 = vmatprep.subr.bf16.mxu0 %v7289
    %7553 = vmatpush1.bf16.msra.mxu0 %v7288
    %7554 = vmatprep.subr.bf16.mxu0 %v7285
    %7555 = vmatpush1.bf16.msra.mxu0 %v7284
    %7556 = vmatprep.subr.bf16.mxu0 %v7345
    %7557 = vmatpush2.bf16.msra.mxu0 %v7344
    %7558 = vmatprep.subr.bf16.mxu0 %v7341
    %7559 = vmatpush2.bf16.msra.mxu0 %v7340
    %7560 = vmatprep.subr.bf16.mxu0 %v7337
    %7561 = vmatpush2.bf16.msra.mxu0 %v7336
    %7562 = vmatprep.subr.bf16.mxu0 %v7333
    %7563 = vmatpush2.bf16.msra.mxu0 %v7332
    %7564 = vmatprep.subr.bf16.mxu0 %v7329
    %7565 = vmatpush2.bf16.msra.mxu0 %v7328
    %7566 = vmatprep.subr.bf16.mxu0 %v7325
    %7567 = vmatpush2.bf16.msra.mxu0 %v7324
    %7568 = vmatprep.subr.bf16.mxu0 %v7321
    %7569 = vmatpush2.bf16.msra.mxu0 %v7320
    %7570 = vmatprep.subr.bf16.mxu0 %v7317
    %7571 = vmatpush2.bf16.msra.mxu0 %v7316
    %7572 = vmatprep.mubr.bf16.mxu0 %v6853
    %7573 = vmatmul.mubr.bf16.gmra.mxu0 %v6852
    %v7574 = vpop.f32.mrf.mxu0
    %v7575 = vadd.f32 0.0, %v7574
    %v7576 = vpop.f32.mrf.mxu0
    %v7577 = vadd.f32 0.0, %v7576
    %v7578 = vpop.f32.mrf.mxu0
    %v7579 = vadd.f32 0.0, %v7578
    %v7580 = vpop.f32.mrf.mxu0
    %v7581 = vadd.f32 0.0, %v7580
    %7582 = vmatprep.mubr.bf16.mxu0 %v6889
    %7583 = vmatmul.mubr.bf16.gmra.mxu0 %v6888
    %v7584 = vpop.f32.mrf.mxu0
    %v7585 = vadd.f32 0.0, %v7584
    %v7586 = vpop.f32.mrf.mxu0
    %v7587 = vadd.f32 0.0, %v7586
    %v7588 = vpop.f32.mrf.mxu0
    %v7589 = vadd.f32 0.0, %v7588
    %v7590 = vpop.f32.mrf.mxu0
    %v7591 = vadd.f32 0.0, %v7590
    %7592 = vdwg.mxu0
    %7593 = vmatprep.subr.bf16.mxu0 %v7377
    %7594 = vmatpush1.bf16.msra.mxu0 %v7376
    %7595 = vmatprep.subr.bf16.mxu0 %v7373
    %7596 = vmatpush1.bf16.msra.mxu0 %v7372
    %7597 = vmatprep.subr.bf16.mxu0 %v7369
    %7598 = vmatpush1.bf16.msra.mxu0 %v7368
    %7599 = vmatprep.subr.bf16.mxu0 %v7365
    %7600 = vmatpush1.bf16.msra.mxu0 %v7364
    %7601 = vmatprep.subr.bf16.mxu0 %v7361
    %7602 = vmatpush1.bf16.msra.mxu0 %v7360
    %7603 = vmatprep.subr.bf16.mxu0 %v7357
    %7604 = vmatpush1.bf16.msra.mxu0 %v7356
    %7605 = vmatprep.subr.bf16.mxu0 %v7353
    %7606 = vmatpush1.bf16.msra.mxu0 %v7352
    %7607 = vmatprep.subr.bf16.mxu0 %v7349
    %7608 = vmatpush1.bf16.msra.mxu0 %v7348
    %7609 = vmatprep.subr.bf16.mxu0 %v7409
    %7610 = vmatpush2.bf16.msra.mxu0 %v7408
    %7611 = vmatprep.subr.bf16.mxu0 %v7405
    %7612 = vmatpush2.bf16.msra.mxu0 %v7404
    %7613 = vmatprep.subr.bf16.mxu0 %v7401
    %7614 = vmatpush2.bf16.msra.mxu0 %v7400
    %7615 = vmatprep.subr.bf16.mxu0 %v7397
    %7616 = vmatpush2.bf16.msra.mxu0 %v7396
    %7617 = vmatprep.subr.bf16.mxu0 %v7393
    %7618 = vmatpush2.bf16.msra.mxu0 %v7392
    %7619 = vmatprep.subr.bf16.mxu0 %v7389
    %7620 = vmatpush2.bf16.msra.mxu0 %v7388
    %7621 = vmatprep.subr.bf16.mxu0 %v7385
    %7622 = vmatpush2.bf16.msra.mxu0 %v7384
    %7623 = vmatprep.subr.bf16.mxu0 %v7381
    %7624 = vmatpush2.bf16.msra.mxu0 %v7380
    %7625 = vmatprep.mubr.bf16.mxu0 %v6855
    %7626 = vmatmul.mubr.bf16.gmra.mxu0 %v6854
    %v7627 = vpop.f32.mrf.mxu0
    %v7628 = vadd.f32 %v7575, %v7627
    %v7629 = vpop.f32.mrf.mxu0
    %v7630 = vadd.f32 %v7577, %v7629
    %v7631 = vpop.f32.mrf.mxu0
    %v7632 = vadd.f32 %v7579, %v7631
    %v7633 = vpop.f32.mrf.mxu0
    %v7634 = vadd.f32 %v7581, %v7633
    %7635 = vmatprep.mubr.bf16.mxu0 %v6891
    %7636 = vmatmul.mubr.bf16.gmra.mxu0 %v6890
    %v7637 = vpop.f32.mrf.mxu0
    %v7638 = vadd.f32 %v7585, %v7637
    %v7639 = vpop.f32.mrf.mxu0
    %v7640 = vadd.f32 %v7587, %v7639
    %v7641 = vpop.f32.mrf.mxu0
    %v7642 = vadd.f32 %v7589, %v7641
    %v7643 = vpop.f32.mrf.mxu0
    %v7644 = vadd.f32 %v7591, %v7643
    %7645 = vdwg.mxu0
    %7646 = vmatprep.subr.bf16.mxu0 %v7315
    %7647 = vmatpush1.bf16.msra.mxu0 %v7314
    %7648 = vmatprep.subr.bf16.mxu0 %v7311
    %7649 = vmatpush1.bf16.msra.mxu0 %v7310
    %7650 = vmatprep.subr.bf16.mxu0 %v7307
    %7651 = vmatpush1.bf16.msra.mxu0 %v7306
    %7652 = vmatprep.subr.bf16.mxu0 %v7303
    %7653 = vmatpush1.bf16.msra.mxu0 %v7302
    %7654 = vmatprep.subr.bf16.mxu0 %v7299
    %7655 = vmatpush1.bf16.msra.mxu0 %v7298
    %7656 = vmatprep.subr.bf16.mxu0 %v7295
    %7657 = vmatpush1.bf16.msra.mxu0 %v7294
    %7658 = vmatprep.subr.bf16.mxu0 %v7291
    %7659 = vmatpush1.bf16.msra.mxu0 %v7290
    %7660 = vmatprep.subr.bf16.mxu0 %v7287
    %7661 = vmatpush1.bf16.msra.mxu0 %v7286
    %7662 = vmatprep.subr.bf16.mxu0 %v7347
    %7663 = vmatpush2.bf16.msra.mxu0 %v7346
    %7664 = vmatprep.subr.bf16.mxu0 %v7343
    %7665 = vmatpush2.bf16.msra.mxu0 %v7342
    %7666 = vmatprep.subr.bf16.mxu0 %v7339
    %7667 = vmatpush2.bf16.msra.mxu0 %v7338
    %7668 = vmatprep.subr.bf16.mxu0 %v7335
    %7669 = vmatpush2.bf16.msra.mxu0 %v7334
    %7670 = vmatprep.subr.bf16.mxu0 %v7331
    %7671 = vmatpush2.bf16.msra.mxu0 %v7330
    %7672 = vmatprep.subr.bf16.mxu0 %v7327
    %7673 = vmatpush2.bf16.msra.mxu0 %v7326
    %7674 = vmatprep.subr.bf16.mxu0 %v7323
    %7675 = vmatpush2.bf16.msra.mxu0 %v7322
    %7676 = vmatprep.subr.bf16.mxu0 %v7319
    %7677 = vmatpush2.bf16.msra.mxu0 %v7318
    %7678 = vmatprep.mubr.bf16.mxu0 %v6853
    %7679 = vmatmul.mubr.bf16.gmra.mxu0 %v6852
    %v7680 = vpop.f32.mrf.mxu0
    %v7681 = vadd.f32 0.0, %v7680
    %v7682 = vpop.f32.mrf.mxu0
    %v7683 = vadd.f32 0.0, %v7682
    %v7684 = vpop.f32.mrf.mxu0
    %v7685 = vadd.f32 0.0, %v7684
    %v7686 = vpop.f32.mrf.mxu0
    %v7687 = vadd.f32 0.0, %v7686
    %7688 = vmatprep.mubr.bf16.mxu0 %v6889
    %7689 = vmatmul.mubr.bf16.gmra.mxu0 %v6888
    %v7690 = vpop.f32.mrf.mxu0
    %v7691 = vadd.f32 0.0, %v7690
    %v7692 = vpop.f32.mrf.mxu0
    %v7693 = vadd.f32 0.0, %v7692
    %v7694 = vpop.f32.mrf.mxu0
    %v7695 = vadd.f32 0.0, %v7694
    %v7696 = vpop.f32.mrf.mxu0
    %v7697 = vadd.f32 0.0, %v7696
    %7698 = vdwg.mxu0
    %7699 = vmatprep.subr.bf16.mxu0 %v7379
    %7700 = vmatpush1.bf16.msra.mxu0 %v7378
    %7701 = vmatprep.subr.bf16.mxu0 %v7375
    %7702 = vmatpush1.bf16.msra.mxu0 %v7374
    %7703 = vmatprep.subr.bf16.mxu0 %v7371
    %7704 = vmatpush1.bf16.msra.mxu0 %v7370
    %7705 = vmatprep.subr.bf16.mxu0 %v7367
    %7706 = vmatpush1.bf16.msra.mxu0 %v7366
    %7707 = vmatprep.subr.bf16.mxu0 %v7363
    %7708 = vmatpush1.bf16.msra.mxu0 %v7362
    %7709 = vmatprep.subr.bf16.mxu0 %v7359
    %7710 = vmatpush1.bf16.msra.mxu0 %v7358
    %7711 = vmatprep.subr.bf16.mxu0 %v7355
    %7712 = vmatpush1.bf16.msra.mxu0 %v7354
    %7713 = vmatprep.subr.bf16.mxu0 %v7351
    %7714 = vmatpush1.bf16.msra.mxu0 %v7350
    %7715 = vmatprep.subr.bf16.mxu0 %v7411
    %7716 = vmatpush2.bf16.msra.mxu0 %v7410
    %7717 = vmatprep.subr.bf16.mxu0 %v7407
    %7718 = vmatpush2.bf16.msra.mxu0 %v7406
    %7719 = vmatprep.subr.bf16.mxu0 %v7403
    %7720 = vmatpush2.bf16.msra.mxu0 %v7402
    %7721 = vmatprep.subr.bf16.mxu0 %v7399
    %7722 = vmatpush2.bf16.msra.mxu0 %v7398
    %7723 = vmatprep.subr.bf16.mxu0 %v7395
    %7724 = vmatpush2.bf16.msra.mxu0 %v7394
    %7725 = vmatprep.subr.bf16.mxu0 %v7391
    %7726 = vmatpush2.bf16.msra.mxu0 %v7390
    %7727 = vmatprep.subr.bf16.mxu0 %v7387
    %7728 = vmatpush2.bf16.msra.mxu0 %v7386
    %7729 = vmatprep.subr.bf16.mxu0 %v7383
    %7730 = vmatpush2.bf16.msra.mxu0 %v7382
    %7731 = vmatprep.mubr.bf16.mxu0 %v6855
    %7732 = vmatmul.mubr.bf16.gmra.mxu0 %v6854
    %v7733 = vpop.f32.mrf.mxu0
    %v7734 = vadd.f32 %v7681, %v7733
    %v7735 = vpop.f32.mrf.mxu0
    %v7736 = vadd.f32 %v7683, %v7735
    %v7737 = vpop.f32.mrf.mxu0
    %v7738 = vadd.f32 %v7685, %v7737
    %v7739 = vpop.f32.mrf.mxu0
    %v7740 = vadd.f32 %v7687, %v7739
    %7741 = vmatprep.mubr.bf16.mxu0 %v6891
    %7742 = vmatmul.mubr.bf16.gmra.mxu0 %v6890
    %v7743 = vpop.f32.mrf.mxu0
    %v7744 = vadd.f32 %v7691, %v7743
    %v7745 = vpop.f32.mrf.mxu0
    %v7746 = vadd.f32 %v7693, %v7745
    %v7747 = vpop.f32.mrf.mxu0
    %v7748 = vadd.f32 %v7695, %v7747
    %v7749 = vpop.f32.mrf.mxu0
    %v7750 = vadd.f32 %v7697, %v7749
    %7751 = vdwg.mxu0
    %v7752 = vadd.f32 %v6528, %v7628
    %v7753 = vadd.f32 %v6530, %v7630
    %v7754 = vadd.f32 %v6634, %v7734
    %v7755 = vadd.f32 %v6636, %v7736
    %v7756 = vadd.f32 %v6532, %v7632
    %v7757 = vadd.f32 %v6534, %v7634
    %v7758 = vadd.f32 %v6638, %v7738
    %v7759 = vadd.f32 %v6640, %v7740
    %v7760 = vadd.f32 %v6538, %v7638
    %v7761 = vadd.f32 %v6540, %v7640
    %v7762 = vadd.f32 %v6644, %v7744
    %v7763 = vadd.f32 %v6646, %v7746
    %v7764 = vadd.f32 %v6542, %v7642
    %v7765 = vadd.f32 %v6544, %v7644
    %v7766 = vadd.f32 %v6648, %v7748
    %v7767 = vadd.f32 %v6650, %v7750
    %v7773 = vunpack.c.l.s4 1983009808
    %v7774 = vunpack.c.0.s8 %v7773
    %v7775 = vlaneseq
    %v7776 = vshrl.u32 %v7775, 7
    %v7777 = vsub.s32 %v7774, %v7776
    %v7778 = vrot.slane %v4252, %v7777
    %v7780 = vunpack.c.l.s4 1983009808
    %v7781 = vunpack.c.0.s8 %v7780
    %v7782 = vlaneseq
    %v7783 = vshrl.u32 %v7782, 7
    %v7784 = vsub.s32 %v7781, %v7783
    %v7785 = vrot.slane %v4253, %v7784
    %v7786 = vcombine.low %v7778, %v7785
    %v7788 = vunpack.c.l.s4 1983009808
    %v7789 = vunpack.c.0.s8 %v7788
    %v7790 = vlaneseq
    %v7791 = vshrl.u32 %v7790, 7
    %v7792 = vsub.s32 %v7789, %v7791
    %v7793 = vrot.slane %v4264, %v7792
    %v7795 = vunpack.c.l.s4 1983009808
    %v7796 = vunpack.c.0.s8 %v7795
    %v7797 = vlaneseq
    %v7798 = vshrl.u32 %v7797, 7
    %v7799 = vsub.s32 %v7796, %v7798
    %v7800 = vrot.slane %v4265, %v7799
    %v7801 = vcombine.low %v7793, %v7800
    %s7802 = scalar_lea.vmem [#allocation8], 3072
    %v7803 = vld [vmem:[%s7802] sm:$0xff]
    %v7804 = vld [vmem:[%s7802 + $0x8] sm:$0xff]
    %v7805 = vld [vmem:[%s7802 + $0x10] sm:$0xff]
    %v7806 = vld [vmem:[%s7802 + $0x18] sm:$0xff]
    %v7807 = vld [vmem:[%s7802 + $0x20] sm:$0xff]
    %v7808 = vld [vmem:[%s7802 + $0x28] sm:$0xff]
    %v7809 = vld [vmem:[%s7802 + $0x30] sm:$0xff]
    %v7810 = vld [vmem:[%s7802 + $0x38] sm:$0xff]
    %v7811 = vld [vmem:[%s7802 + $0x40] sm:$0xff]
    %v7812 = vld [vmem:[%s7802 + $0x48] sm:$0xff]
    %v7813 = vld [vmem:[%s7802 + $0x50] sm:$0xff]
    %v7814 = vld [vmem:[%s7802 + $0x58] sm:$0xff]
    %v7815 = vld [vmem:[%s7802 + $0x60] sm:$0xff]
    %v7816 = vld [vmem:[%s7802 + $0x68] sm:$0xff]
    %v7817 = vld [vmem:[%s7802 + $0x70] sm:$0xff]
    %v7818 = vld [vmem:[%s7802 + $0x78] sm:$0xff]
    %v7819 = vld [vmem:[%s7802 + $0x80] sm:$0xff]
    %v7820 = vld [vmem:[%s7802 + $0x88] sm:$0xff]
    %v7821 = vld [vmem:[%s7802 + $0x90] sm:$0xff]
    %v7822 = vld [vmem:[%s7802 + $0x98] sm:$0xff]
    %v7823 = vld [vmem:[%s7802 + $0xa0] sm:$0xff]
    %v7824 = vld [vmem:[%s7802 + $0xa8] sm:$0xff]
    %v7825 = vld [vmem:[%s7802 + $0xb0] sm:$0xff]
    %v7826 = vld [vmem:[%s7802 + $0xb8] sm:$0xff]
    %v7827 = vld [vmem:[%s7802 + $0xc0] sm:$0xff]
    %v7828 = vld [vmem:[%s7802 + $0xc8] sm:$0xff]
    %v7829 = vld [vmem:[%s7802 + $0xd0] sm:$0xff]
    %v7830 = vld [vmem:[%s7802 + $0xd8] sm:$0xff]
    %v7831 = vld [vmem:[%s7802 + $0xe0] sm:$0xff]
    %v7832 = vld [vmem:[%s7802 + $0xe8] sm:$0xff]
    %v7833 = vld [vmem:[%s7802 + $0xf0] sm:$0xff]
    %v7834 = vld [vmem:[%s7802 + $0xf8] sm:$0xff]
    %v7835 = vld [vmem:[%s7802 + $0x100] sm:$0xff]
    %v7836 = vld [vmem:[%s7802 + $0x108] sm:$0xff]
    %v7837 = vld [vmem:[%s7802 + $0x110] sm:$0xff]
    %v7838 = vld [vmem:[%s7802 + $0x118] sm:$0xff]
    %v7839 = vld [vmem:[%s7802 + $0x120] sm:$0xff]
    %v7840 = vld [vmem:[%s7802 + $0x128] sm:$0xff]
    %v7841 = vld [vmem:[%s7802 + $0x130] sm:$0xff]
    %v7842 = vld [vmem:[%s7802 + $0x138] sm:$0xff]
    %v7843 = vld [vmem:[%s7802 + $0x140] sm:$0xff]
    %v7844 = vld [vmem:[%s7802 + $0x148] sm:$0xff]
    %v7845 = vld [vmem:[%s7802 + $0x150] sm:$0xff]
    %v7846 = vld [vmem:[%s7802 + $0x158] sm:$0xff]
    %v7847 = vld [vmem:[%s7802 + $0x160] sm:$0xff]
    %v7848 = vld [vmem:[%s7802 + $0x168] sm:$0xff]
    %v7849 = vld [vmem:[%s7802 + $0x170] sm:$0xff]
    %v7850 = vld [vmem:[%s7802 + $0x178] sm:$0xff]
    %v7851 = vld [vmem:[%s7802 + $0x180] sm:$0xff]
    %v7852 = vld [vmem:[%s7802 + $0x188] sm:$0xff]
    %v7853 = vld [vmem:[%s7802 + $0x190] sm:$0xff]
    %v7854 = vld [vmem:[%s7802 + $0x198] sm:$0xff]
    %v7855 = vld [vmem:[%s7802 + $0x1a0] sm:$0xff]
    %v7856 = vld [vmem:[%s7802 + $0x1a8] sm:$0xff]
    %v7857 = vld [vmem:[%s7802 + $0x1b0] sm:$0xff]
    %v7858 = vld [vmem:[%s7802 + $0x1b8] sm:$0xff]
    %v7859 = vld [vmem:[%s7802 + $0x1c0] sm:$0xff]
    %v7860 = vld [vmem:[%s7802 + $0x1c8] sm:$0xff]
    %v7861 = vld [vmem:[%s7802 + $0x1d0] sm:$0xff]
    %v7862 = vld [vmem:[%s7802 + $0x1d8] sm:$0xff]
    %v7863 = vld [vmem:[%s7802 + $0x1e0] sm:$0xff]
    %v7864 = vld [vmem:[%s7802 + $0x1e8] sm:$0xff]
    %v7865 = vld [vmem:[%s7802 + $0x1f0] sm:$0xff]
    %v7866 = vld [vmem:[%s7802 + $0x1f8] sm:$0xff]
    %v7867 = vld [vmem:[%s7802 + $0x200] sm:$0xff]
    %v7868 = vld [vmem:[%s7802 + $0x208] sm:$0xff]
    %v7869 = vld [vmem:[%s7802 + $0x210] sm:$0xff]
    %v7870 = vld [vmem:[%s7802 + $0x218] sm:$0xff]
    %v7871 = vld [vmem:[%s7802 + $0x220] sm:$0xff]
    %v7872 = vld [vmem:[%s7802 + $0x228] sm:$0xff]
    %v7873 = vld [vmem:[%s7802 + $0x230] sm:$0xff]
    %v7874 = vld [vmem:[%s7802 + $0x238] sm:$0xff]
    %v7875 = vld [vmem:[%s7802 + $0x240] sm:$0xff]
    %v7876 = vld [vmem:[%s7802 + $0x248] sm:$0xff]
    %v7877 = vld [vmem:[%s7802 + $0x250] sm:$0xff]
    %v7878 = vld [vmem:[%s7802 + $0x258] sm:$0xff]
    %v7879 = vld [vmem:[%s7802 + $0x260] sm:$0xff]
    %v7880 = vld [vmem:[%s7802 + $0x268] sm:$0xff]
    %v7881 = vld [vmem:[%s7802 + $0x270] sm:$0xff]
    %v7882 = vld [vmem:[%s7802 + $0x278] sm:$0xff]
    %v7883 = vld [vmem:[%s7802 + $0x280] sm:$0xff]
    %v7884 = vld [vmem:[%s7802 + $0x288] sm:$0xff]
    %v7885 = vld [vmem:[%s7802 + $0x290] sm:$0xff]
    %v7886 = vld [vmem:[%s7802 + $0x298] sm:$0xff]
    %v7887 = vld [vmem:[%s7802 + $0x2a0] sm:$0xff]
    %v7888 = vld [vmem:[%s7802 + $0x2a8] sm:$0xff]
    %v7889 = vld [vmem:[%s7802 + $0x2b0] sm:$0xff]
    %v7890 = vld [vmem:[%s7802 + $0x2b8] sm:$0xff]
    %v7891 = vld [vmem:[%s7802 + $0x2c0] sm:$0xff]
    %v7892 = vld [vmem:[%s7802 + $0x2c8] sm:$0xff]
    %v7893 = vld [vmem:[%s7802 + $0x2d0] sm:$0xff]
    %v7894 = vld [vmem:[%s7802 + $0x2d8] sm:$0xff]
    %v7895 = vld [vmem:[%s7802 + $0x2e0] sm:$0xff]
    %v7896 = vld [vmem:[%s7802 + $0x2e8] sm:$0xff]
    %v7897 = vld [vmem:[%s7802 + $0x2f0] sm:$0xff]
    %v7898 = vld [vmem:[%s7802 + $0x2f8] sm:$0xff]
    %v7899 = vld [vmem:[%s7802 + $0x300] sm:$0xff]
    %v7900 = vld [vmem:[%s7802 + $0x308] sm:$0xff]
    %v7901 = vld [vmem:[%s7802 + $0x310] sm:$0xff]
    %v7902 = vld [vmem:[%s7802 + $0x318] sm:$0xff]
    %v7903 = vld [vmem:[%s7802 + $0x320] sm:$0xff]
    %v7904 = vld [vmem:[%s7802 + $0x328] sm:$0xff]
    %v7905 = vld [vmem:[%s7802 + $0x330] sm:$0xff]
    %v7906 = vld [vmem:[%s7802 + $0x338] sm:$0xff]
    %v7907 = vld [vmem:[%s7802 + $0x340] sm:$0xff]
    %v7908 = vld [vmem:[%s7802 + $0x348] sm:$0xff]
    %v7909 = vld [vmem:[%s7802 + $0x350] sm:$0xff]
    %v7910 = vld [vmem:[%s7802 + $0x358] sm:$0xff]
    %v7911 = vld [vmem:[%s7802 + $0x360] sm:$0xff]
    %v7912 = vld [vmem:[%s7802 + $0x368] sm:$0xff]
    %v7913 = vld [vmem:[%s7802 + $0x370] sm:$0xff]
    %v7914 = vld [vmem:[%s7802 + $0x378] sm:$0xff]
    %v7915 = vld [vmem:[%s7802 + $0x380] sm:$0xff]
    %v7916 = vld [vmem:[%s7802 + $0x388] sm:$0xff]
    %v7917 = vld [vmem:[%s7802 + $0x390] sm:$0xff]
    %v7918 = vld [vmem:[%s7802 + $0x398] sm:$0xff]
    %v7919 = vld [vmem:[%s7802 + $0x3a0] sm:$0xff]
    %v7920 = vld [vmem:[%s7802 + $0x3a8] sm:$0xff]
    %v7921 = vld [vmem:[%s7802 + $0x3b0] sm:$0xff]
    %v7922 = vld [vmem:[%s7802 + $0x3b8] sm:$0xff]
    %v7923 = vld [vmem:[%s7802 + $0x3c0] sm:$0xff]
    %v7924 = vld [vmem:[%s7802 + $0x3c8] sm:$0xff]
    %v7925 = vld [vmem:[%s7802 + $0x3d0] sm:$0xff]
    %v7926 = vld [vmem:[%s7802 + $0x3d8] sm:$0xff]
    %v7927 = vld [vmem:[%s7802 + $0x3e0] sm:$0xff]
    %v7928 = vld [vmem:[%s7802 + $0x3e8] sm:$0xff]
    %v7929 = vld [vmem:[%s7802 + $0x3f0] sm:$0xff]
    %v7930 = vld [vmem:[%s7802 + $0x3f8] sm:$0xff]
    %v7931 = vcombine.low %v4313, %v4328
    %v7932 = vcombine.high %v4313, %v4328
    %v7933 = vcombine.low %v4343, %v7786
    %v7934 = vcombine.high %v4343, %v7786
    %v7936 = vunpack.c.l.s4 1983009808
    %v7937 = vunpack.c.0.s8 %v7936
    %v7938 = vlaneseq
    %v7939 = vshrl.u32 %v7938, 7
    %v7940 = vsub.s32 %v7937, %v7939
    %v7941 = vrot.slane %v7931, %v7940
    %v7943 = vunpack.c.l.s4 1983009808
    %v7944 = vunpack.c.0.s8 %v7943
    %v7945 = vlaneseq
    %v7946 = vshrl.u32 %v7945, 7
    %v7947 = vsub.s32 %v7944, %v7946
    %v7948 = vrot.slane %v7932, %v7947
    %v7950 = vunpack.c.l.s4 1983009808
    %v7951 = vunpack.c.0.s8 %v7950
    %v7952 = vlaneseq
    %v7953 = vshrl.u32 %v7952, 7
    %v7954 = vsub.s32 %v7951, %v7953
    %v7955 = vrot.slane %v7933, %v7954
    %v7957 = vunpack.c.l.s4 1983009808
    %v7958 = vunpack.c.0.s8 %v7957
    %v7959 = vlaneseq
    %v7960 = vshrl.u32 %v7959, 7
    %v7961 = vsub.s32 %v7958, %v7960
    %v7962 = vrot.slane %v7934, %v7961
    %v7963 = vcombine.low %v7941, %v7955
    %v7964 = vcombine.high %v7941, %v7955
    %v7965 = vcombine.low %v7948, %v7962
    %v7966 = vcombine.high %v7948, %v7962
    %v7967 = vcombine.low %v4373, %v4388
    %v7968 = vcombine.high %v4373, %v4388
    %v7969 = vcombine.low %v4403, %v7801
    %v7970 = vcombine.high %v4403, %v7801
    %v7972 = vunpack.c.l.s4 1983009808
    %v7973 = vunpack.c.0.s8 %v7972
    %v7974 = vlaneseq
    %v7975 = vshrl.u32 %v7974, 7
    %v7976 = vsub.s32 %v7973, %v7975
    %v7977 = vrot.slane %v7967, %v7976
    %v7979 = vunpack.c.l.s4 1983009808
    %v7980 = vunpack.c.0.s8 %v7979
    %v7981 = vlaneseq
    %v7982 = vshrl.u32 %v7981, 7
    %v7983 = vsub.s32 %v7980, %v7982
    %v7984 = vrot.slane %v7968, %v7983
    %v7986 = vunpack.c.l.s4 1983009808
    %v7987 = vunpack.c.0.s8 %v7986
    %v7988 = vlaneseq
    %v7989 = vshrl.u32 %v7988, 7
    %v7990 = vsub.s32 %v7987, %v7989
    %v7991 = vrot.slane %v7969, %v7990
    %v7993 = vunpack.c.l.s4 1983009808
    %v7994 = vunpack.c.0.s8 %v7993
    %v7995 = vlaneseq
    %v7996 = vshrl.u32 %v7995, 7
    %v7997 = vsub.s32 %v7994, %v7996
    %v7998 = vrot.slane %v7970, %v7997
    %v7999 = vcombine.low %v7977, %v7991
    %v8000 = vcombine.high %v7977, %v7991
    %v8001 = vcombine.low %v7984, %v7998
    %v8002 = vcombine.high %v7984, %v7998
    %v8139 = vunpack.c.l.b16 %v7803
    %v8140 = vunpack.c.h.b16 %v7803
    %v8141 = vunpack.c.l.b16 %v7804
    %v8142 = vunpack.c.h.b16 %v7804
    %v8143 = vunpack.c.l.b16 %v7805
    %v8144 = vunpack.c.h.b16 %v7805
    %v8145 = vunpack.c.l.b16 %v7806
    %v8146 = vunpack.c.h.b16 %v7806
    %v8147 = vunpack.c.l.b16 %v7807
    %v8148 = vunpack.c.h.b16 %v7807
    %v8149 = vunpack.c.l.b16 %v7808
    %v8150 = vunpack.c.h.b16 %v7808
    %v8151 = vunpack.c.l.b16 %v7809
    %v8152 = vunpack.c.h.b16 %v7809
    %v8153 = vunpack.c.l.b16 %v7810
    %v8154 = vunpack.c.h.b16 %v7810
    %v8155 = vunpack.c.l.b16 %v7811
    %v8156 = vunpack.c.h.b16 %v7811
    %v8157 = vunpack.c.l.b16 %v7812
    %v8158 = vunpack.c.h.b16 %v7812
    %v8159 = vunpack.c.l.b16 %v7813
    %v8160 = vunpack.c.h.b16 %v7813
    %v8161 = vunpack.c.l.b16 %v7814
    %v8162 = vunpack.c.h.b16 %v7814
    %v8163 = vunpack.c.l.b16 %v7815
    %v8164 = vunpack.c.h.b16 %v7815
    %v8165 = vunpack.c.l.b16 %v7816
    %v8166 = vunpack.c.h.b16 %v7816
    %v8167 = vunpack.c.l.b16 %v7817
    %v8168 = vunpack.c.h.b16 %v7817
    %v8169 = vunpack.c.l.b16 %v7818
    %v8170 = vunpack.c.h.b16 %v7818
    %v8171 = vunpack.c.l.b16 %v7819
    %v8172 = vunpack.c.h.b16 %v7819
    %v8173 = vunpack.c.l.b16 %v7820
    %v8174 = vunpack.c.h.b16 %v7820
    %v8175 = vunpack.c.l.b16 %v7821
    %v8176 = vunpack.c.h.b16 %v7821
    %v8177 = vunpack.c.l.b16 %v7822
    %v8178 = vunpack.c.h.b16 %v7822
    %v8179 = vunpack.c.l.b16 %v7823
    %v8180 = vunpack.c.h.b16 %v7823
    %v8181 = vunpack.c.l.b16 %v7824
    %v8182 = vunpack.c.h.b16 %v7824
    %v8183 = vunpack.c.l.b16 %v7825
    %v8184 = vunpack.c.h.b16 %v7825
    %v8185 = vunpack.c.l.b16 %v7826
    %v8186 = vunpack.c.h.b16 %v7826
    %v8187 = vunpack.c.l.b16 %v7827
    %v8188 = vunpack.c.h.b16 %v7827
    %v8189 = vunpack.c.l.b16 %v7828
    %v8190 = vunpack.c.h.b16 %v7828
    %v8191 = vunpack.c.l.b16 %v7829
    %v8192 = vunpack.c.h.b16 %v7829
    %v8193 = vunpack.c.l.b16 %v7830
    %v8194 = vunpack.c.h.b16 %v7830
    %v8195 = vunpack.c.l.b16 %v7831
    %v8196 = vunpack.c.h.b16 %v7831
    %v8197 = vunpack.c.l.b16 %v7832
    %v8198 = vunpack.c.h.b16 %v7832
    %v8199 = vunpack.c.l.b16 %v7833
    %v8200 = vunpack.c.h.b16 %v7833
    %v8201 = vunpack.c.l.b16 %v7834
    %v8202 = vunpack.c.h.b16 %v7834
    %v8203 = vunpack.c.l.b16 %v7835
    %v8204 = vunpack.c.h.b16 %v7835
    %v8205 = vunpack.c.l.b16 %v7836
    %v8206 = vunpack.c.h.b16 %v7836
    %v8207 = vunpack.c.l.b16 %v7837
    %v8208 = vunpack.c.h.b16 %v7837
    %v8209 = vunpack.c.l.b16 %v7838
    %v8210 = vunpack.c.h.b16 %v7838
    %v8211 = vunpack.c.l.b16 %v7839
    %v8212 = vunpack.c.h.b16 %v7839
    %v8213 = vunpack.c.l.b16 %v7840
    %v8214 = vunpack.c.h.b16 %v7840
    %v8215 = vunpack.c.l.b16 %v7841
    %v8216 = vunpack.c.h.b16 %v7841
    %v8217 = vunpack.c.l.b16 %v7842
    %v8218 = vunpack.c.h.b16 %v7842
    %v8219 = vunpack.c.l.b16 %v7843
    %v8220 = vunpack.c.h.b16 %v7843
    %v8221 = vunpack.c.l.b16 %v7844
    %v8222 = vunpack.c.h.b16 %v7844
    %v8223 = vunpack.c.l.b16 %v7845
    %v8224 = vunpack.c.h.b16 %v7845
    %v8225 = vunpack.c.l.b16 %v7846
    %v8226 = vunpack.c.h.b16 %v7846
    %v8227 = vunpack.c.l.b16 %v7847
    %v8228 = vunpack.c.h.b16 %v7847
    %v8229 = vunpack.c.l.b16 %v7848
    %v8230 = vunpack.c.h.b16 %v7848
    %v8231 = vunpack.c.l.b16 %v7849
    %v8232 = vunpack.c.h.b16 %v7849
    %v8233 = vunpack.c.l.b16 %v7850
    %v8234 = vunpack.c.h.b16 %v7850
    %v8235 = vunpack.c.l.b16 %v7851
    %v8236 = vunpack.c.h.b16 %v7851
    %v8237 = vunpack.c.l.b16 %v7852
    %v8238 = vunpack.c.h.b16 %v7852
    %v8239 = vunpack.c.l.b16 %v7853
    %v8240 = vunpack.c.h.b16 %v7853
    %v8241 = vunpack.c.l.b16 %v7854
    %v8242 = vunpack.c.h.b16 %v7854
    %v8243 = vunpack.c.l.b16 %v7855
    %v8244 = vunpack.c.h.b16 %v7855
    %v8245 = vunpack.c.l.b16 %v7856
    %v8246 = vunpack.c.h.b16 %v7856
    %v8247 = vunpack.c.l.b16 %v7857
    %v8248 = vunpack.c.h.b16 %v7857
    %v8249 = vunpack.c.l.b16 %v7858
    %v8250 = vunpack.c.h.b16 %v7858
    %v8251 = vunpack.c.l.b16 %v7859
    %v8252 = vunpack.c.h.b16 %v7859
    %v8253 = vunpack.c.l.b16 %v7860
    %v8254 = vunpack.c.h.b16 %v7860
    %v8255 = vunpack.c.l.b16 %v7861
    %v8256 = vunpack.c.h.b16 %v7861
    %v8257 = vunpack.c.l.b16 %v7862
    %v8258 = vunpack.c.h.b16 %v7862
    %v8259 = vunpack.c.l.b16 %v7863
    %v8260 = vunpack.c.h.b16 %v7863
    %v8261 = vunpack.c.l.b16 %v7864
    %v8262 = vunpack.c.h.b16 %v7864
    %v8263 = vunpack.c.l.b16 %v7865
    %v8264 = vunpack.c.h.b16 %v7865
    %v8265 = vunpack.c.l.b16 %v7866
    %v8266 = vunpack.c.h.b16 %v7866
    %v8267 = vunpack.c.l.b16 %v7867
    %v8268 = vunpack.c.h.b16 %v7867
    %v8269 = vunpack.c.l.b16 %v7868
    %v8270 = vunpack.c.h.b16 %v7868
    %v8271 = vunpack.c.l.b16 %v7869
    %v8272 = vunpack.c.h.b16 %v7869
    %v8273 = vunpack.c.l.b16 %v7870
    %v8274 = vunpack.c.h.b16 %v7870
    %v8275 = vunpack.c.l.b16 %v7871
    %v8276 = vunpack.c.h.b16 %v7871
    %v8277 = vunpack.c.l.b16 %v7872
    %v8278 = vunpack.c.h.b16 %v7872
    %v8279 = vunpack.c.l.b16 %v7873
    %v8280 = vunpack.c.h.b16 %v7873
    %v8281 = vunpack.c.l.b16 %v7874
    %v8282 = vunpack.c.h.b16 %v7874
    %v8283 = vunpack.c.l.b16 %v7875
    %v8284 = vunpack.c.h.b16 %v7875
    %v8285 = vunpack.c.l.b16 %v7876
    %v8286 = vunpack.c.h.b16 %v7876
    %v8287 = vunpack.c.l.b16 %v7877
    %v8288 = vunpack.c.h.b16 %v7877
    %v8289 = vunpack.c.l.b16 %v7878
    %v8290 = vunpack.c.h.b16 %v7878
    %v8291 = vunpack.c.l.b16 %v7879
    %v8292 = vunpack.c.h.b16 %v7879
    %v8293 = vunpack.c.l.b16 %v7880
    %v8294 = vunpack.c.h.b16 %v7880
    %v8295 = vunpack.c.l.b16 %v7881
    %v8296 = vunpack.c.h.b16 %v7881
    %v8297 = vunpack.c.l.b16 %v7882
    %v8298 = vunpack.c.h.b16 %v7882
    %v8299 = vunpack.c.l.b16 %v7883
    %v8300 = vunpack.c.h.b16 %v7883
    %v8301 = vunpack.c.l.b16 %v7884
    %v8302 = vunpack.c.h.b16 %v7884
    %v8303 = vunpack.c.l.b16 %v7885
    %v8304 = vunpack.c.h.b16 %v7885
    %v8305 = vunpack.c.l.b16 %v7886
    %v8306 = vunpack.c.h.b16 %v7886
    %v8307 = vunpack.c.l.b16 %v7887
    %v8308 = vunpack.c.h.b16 %v7887
    %v8309 = vunpack.c.l.b16 %v7888
    %v8310 = vunpack.c.h.b16 %v7888
    %v8311 = vunpack.c.l.b16 %v7889
    %v8312 = vunpack.c.h.b16 %v7889
    %v8313 = vunpack.c.l.b16 %v7890
    %v8314 = vunpack.c.h.b16 %v7890
    %v8315 = vunpack.c.l.b16 %v7891
    %v8316 = vunpack.c.h.b16 %v7891
    %v8317 = vunpack.c.l.b16 %v7892
    %v8318 = vunpack.c.h.b16 %v7892
    %v8319 = vunpack.c.l.b16 %v7893
    %v8320 = vunpack.c.h.b16 %v7893
    %v8321 = vunpack.c.l.b16 %v7894
    %v8322 = vunpack.c.h.b16 %v7894
    %v8323 = vunpack.c.l.b16 %v7895
    %v8324 = vunpack.c.h.b16 %v7895
    %v8325 = vunpack.c.l.b16 %v7896
    %v8326 = vunpack.c.h.b16 %v7896
    %v8327 = vunpack.c.l.b16 %v7897
    %v8328 = vunpack.c.h.b16 %v7897
    %v8329 = vunpack.c.l.b16 %v7898
    %v8330 = vunpack.c.h.b16 %v7898
    %v8331 = vunpack.c.l.b16 %v7899
    %v8332 = vunpack.c.h.b16 %v7899
    %v8333 = vunpack.c.l.b16 %v7900
    %v8334 = vunpack.c.h.b16 %v7900
    %v8335 = vunpack.c.l.b16 %v7901
    %v8336 = vunpack.c.h.b16 %v7901
    %v8337 = vunpack.c.l.b16 %v7902
    %v8338 = vunpack.c.h.b16 %v7902
    %v8339 = vunpack.c.l.b16 %v7903
    %v8340 = vunpack.c.h.b16 %v7903
    %v8341 = vunpack.c.l.b16 %v7904
    %v8342 = vunpack.c.h.b16 %v7904
    %v8343 = vunpack.c.l.b16 %v7905
    %v8344 = vunpack.c.h.b16 %v7905
    %v8345 = vunpack.c.l.b16 %v7906
    %v8346 = vunpack.c.h.b16 %v7906
    %v8347 = vunpack.c.l.b16 %v7907
    %v8348 = vunpack.c.h.b16 %v7907
    %v8349 = vunpack.c.l.b16 %v7908
    %v8350 = vunpack.c.h.b16 %v7908
    %v8351 = vunpack.c.l.b16 %v7909
    %v8352 = vunpack.c.h.b16 %v7909
    %v8353 = vunpack.c.l.b16 %v7910
    %v8354 = vunpack.c.h.b16 %v7910
    %v8355 = vunpack.c.l.b16 %v7911
    %v8356 = vunpack.c.h.b16 %v7911
    %v8357 = vunpack.c.l.b16 %v7912
    %v8358 = vunpack.c.h.b16 %v7912
    %v8359 = vunpack.c.l.b16 %v7913
    %v8360 = vunpack.c.h.b16 %v7913
    %v8361 = vunpack.c.l.b16 %v7914
    %v8362 = vunpack.c.h.b16 %v7914
    %v8363 = vunpack.c.l.b16 %v7915
    %v8364 = vunpack.c.h.b16 %v7915
    %v8365 = vunpack.c.l.b16 %v7916
    %v8366 = vunpack.c.h.b16 %v7916
    %v8367 = vunpack.c.l.b16 %v7917
    %v8368 = vunpack.c.h.b16 %v7917
    %v8369 = vunpack.c.l.b16 %v7918
    %v8370 = vunpack.c.h.b16 %v7918
    %v8371 = vunpack.c.l.b16 %v7919
    %v8372 = vunpack.c.h.b16 %v7919
    %v8373 = vunpack.c.l.b16 %v7920
    %v8374 = vunpack.c.h.b16 %v7920
    %v8375 = vunpack.c.l.b16 %v7921
    %v8376 = vunpack.c.h.b16 %v7921
    %v8377 = vunpack.c.l.b16 %v7922
    %v8378 = vunpack.c.h.b16 %v7922
    %v8379 = vunpack.c.l.b16 %v7923
    %v8380 = vunpack.c.h.b16 %v7923
    %v8381 = vunpack.c.l.b16 %v7924
    %v8382 = vunpack.c.h.b16 %v7924
    %v8383 = vunpack.c.l.b16 %v7925
    %v8384 = vunpack.c.h.b16 %v7925
    %v8385 = vunpack.c.l.b16 %v7926
    %v8386 = vunpack.c.h.b16 %v7926
    %v8387 = vunpack.c.l.b16 %v7927
    %v8388 = vunpack.c.h.b16 %v7927
    %v8389 = vunpack.c.l.b16 %v7928
    %v8390 = vunpack.c.h.b16 %v7928
    %v8391 = vunpack.c.l.b16 %v7929
    %v8392 = vunpack.c.h.b16 %v7929
    %v8393 = vunpack.c.l.b16 %v7930
    %v8394 = vunpack.c.h.b16 %v7930
    %v8395 = vpack.c.b16 %v8143, %v8139
    %v8396 = vpack.c.b16 %v8144, %v8140
    %v8397 = vpack.c.b16 %v8145, %v8141
    %v8398 = vpack.c.b16 %v8146, %v8142
    %v8399 = vpack.c.b16 %v8151, %v8147
    %v8400 = vpack.c.b16 %v8152, %v8148
    %v8401 = vpack.c.b16 %v8153, %v8149
    %v8402 = vpack.c.b16 %v8154, %v8150
    %v8403 = vpack.c.b16 %v8159, %v8155
    %v8404 = vpack.c.b16 %v8160, %v8156
    %v8405 = vpack.c.b16 %v8161, %v8157
    %v8406 = vpack.c.b16 %v8162, %v8158
    %v8407 = vpack.c.b16 %v8167, %v8163
    %v8408 = vpack.c.b16 %v8168, %v8164
    %v8409 = vpack.c.b16 %v8169, %v8165
    %v8410 = vpack.c.b16 %v8170, %v8166
    %v8411 = vpack.c.b16 %v8175, %v8171
    %v8412 = vpack.c.b16 %v8176, %v8172
    %v8413 = vpack.c.b16 %v8177, %v8173
    %v8414 = vpack.c.b16 %v8178, %v8174
    %v8415 = vpack.c.b16 %v8183, %v8179
    %v8416 = vpack.c.b16 %v8184, %v8180
    %v8417 = vpack.c.b16 %v8185, %v8181
    %v8418 = vpack.c.b16 %v8186, %v8182
    %v8419 = vpack.c.b16 %v8191, %v8187
    %v8420 = vpack.c.b16 %v8192, %v8188
    %v8421 = vpack.c.b16 %v8193, %v8189
    %v8422 = vpack.c.b16 %v8194, %v8190
    %v8423 = vpack.c.b16 %v8199, %v8195
    %v8424 = vpack.c.b16 %v8200, %v8196
    %v8425 = vpack.c.b16 %v8201, %v8197
    %v8426 = vpack.c.b16 %v8202, %v8198
    %v8427 = vpack.c.b16 %v8207, %v8203
    %v8428 = vpack.c.b16 %v8208, %v8204
    %v8429 = vpack.c.b16 %v8209, %v8205
    %v8430 = vpack.c.b16 %v8210, %v8206
    %v8431 = vpack.c.b16 %v8215, %v8211
    %v8432 = vpack.c.b16 %v8216, %v8212
    %v8433 = vpack.c.b16 %v8217, %v8213
    %v8434 = vpack.c.b16 %v8218, %v8214
    %v8435 = vpack.c.b16 %v8223, %v8219
    %v8436 = vpack.c.b16 %v8224, %v8220
    %v8437 = vpack.c.b16 %v8225, %v8221
    %v8438 = vpack.c.b16 %v8226, %v8222
    %v8439 = vpack.c.b16 %v8231, %v8227
    %v8440 = vpack.c.b16 %v8232, %v8228
    %v8441 = vpack.c.b16 %v8233, %v8229
    %v8442 = vpack.c.b16 %v8234, %v8230
    %v8443 = vpack.c.b16 %v8239, %v8235
    %v8444 = vpack.c.b16 %v8240, %v8236
    %v8445 = vpack.c.b16 %v8241, %v8237
    %v8446 = vpack.c.b16 %v8242, %v8238
    %v8447 = vpack.c.b16 %v8247, %v8243
    %v8448 = vpack.c.b16 %v8248, %v8244
    %v8449 = vpack.c.b16 %v8249, %v8245
    %v8450 = vpack.c.b16 %v8250, %v8246
    %v8451 = vpack.c.b16 %v8255, %v8251
    %v8452 = vpack.c.b16 %v8256, %v8252
    %v8453 = vpack.c.b16 %v8257, %v8253
    %v8454 = vpack.c.b16 %v8258, %v8254
    %v8455 = vpack.c.b16 %v8263, %v8259
    %v8456 = vpack.c.b16 %v8264, %v8260
    %v8457 = vpack.c.b16 %v8265, %v8261
    %v8458 = vpack.c.b16 %v8266, %v8262
    %v8459 = vpack.c.b16 %v8271, %v8267
    %v8460 = vpack.c.b16 %v8272, %v8268
    %v8461 = vpack.c.b16 %v8273, %v8269
    %v8462 = vpack.c.b16 %v8274, %v8270
    %v8463 = vpack.c.b16 %v8279, %v8275
    %v8464 = vpack.c.b16 %v8280, %v8276
    %v8465 = vpack.c.b16 %v8281, %v8277
    %v8466 = vpack.c.b16 %v8282, %v8278
    %v8467 = vpack.c.b16 %v8287, %v8283
    %v8468 = vpack.c.b16 %v8288, %v8284
    %v8469 = vpack.c.b16 %v8289, %v8285
    %v8470 = vpack.c.b16 %v8290, %v8286
    %v8471 = vpack.c.b16 %v8295, %v8291
    %v8472 = vpack.c.b16 %v8296, %v8292
    %v8473 = vpack.c.b16 %v8297, %v8293
    %v8474 = vpack.c.b16 %v8298, %v8294
    %v8475 = vpack.c.b16 %v8303, %v8299
    %v8476 = vpack.c.b16 %v8304, %v8300
    %v8477 = vpack.c.b16 %v8305, %v8301
    %v8478 = vpack.c.b16 %v8306, %v8302
    %v8479 = vpack.c.b16 %v8311, %v8307
    %v8480 = vpack.c.b16 %v8312, %v8308
    %v8481 = vpack.c.b16 %v8313, %v8309
    %v8482 = vpack.c.b16 %v8314, %v8310
    %v8483 = vpack.c.b16 %v8319, %v8315
    %v8484 = vpack.c.b16 %v8320, %v8316
    %v8485 = vpack.c.b16 %v8321, %v8317
    %v8486 = vpack.c.b16 %v8322, %v8318
    %v8487 = vpack.c.b16 %v8327, %v8323
    %v8488 = vpack.c.b16 %v8328, %v8324
    %v8489 = vpack.c.b16 %v8329, %v8325
    %v8490 = vpack.c.b16 %v8330, %v8326
    %v8491 = vpack.c.b16 %v8335, %v8331
    %v8492 = vpack.c.b16 %v8336, %v8332
    %v8493 = vpack.c.b16 %v8337, %v8333
    %v8494 = vpack.c.b16 %v8338, %v8334
    %v8495 = vpack.c.b16 %v8343, %v8339
    %v8496 = vpack.c.b16 %v8344, %v8340
    %v8497 = vpack.c.b16 %v8345, %v8341
    %v8498 = vpack.c.b16 %v8346, %v8342
    %v8499 = vpack.c.b16 %v8351, %v8347
    %v8500 = vpack.c.b16 %v8352, %v8348
    %v8501 = vpack.c.b16 %v8353, %v8349
    %v8502 = vpack.c.b16 %v8354, %v8350
    %v8503 = vpack.c.b16 %v8359, %v8355
    %v8504 = vpack.c.b16 %v8360, %v8356
    %v8505 = vpack.c.b16 %v8361, %v8357
    %v8506 = vpack.c.b16 %v8362, %v8358
    %v8507 = vpack.c.b16 %v8367, %v8363
    %v8508 = vpack.c.b16 %v8368, %v8364
    %v8509 = vpack.c.b16 %v8369, %v8365
    %v8510 = vpack.c.b16 %v8370, %v8366
    %v8511 = vpack.c.b16 %v8375, %v8371
    %v8512 = vpack.c.b16 %v8376, %v8372
    %v8513 = vpack.c.b16 %v8377, %v8373
    %v8514 = vpack.c.b16 %v8378, %v8374
    %v8515 = vpack.c.b16 %v8383, %v8379
    %v8516 = vpack.c.b16 %v8384, %v8380
    %v8517 = vpack.c.b16 %v8385, %v8381
    %v8518 = vpack.c.b16 %v8386, %v8382
    %v8519 = vpack.c.b16 %v8391, %v8387
    %v8520 = vpack.c.b16 %v8392, %v8388
    %v8521 = vpack.c.b16 %v8393, %v8389
    %v8522 = vpack.c.b16 %v8394, %v8390
    %8651 = vmatprep.subr.bf16.mxu0 %v8424
    %8652 = vmatpush1.bf16.msra.mxu0 %v8423
    %8653 = vmatprep.subr.bf16.mxu0 %v8420
    %8654 = vmatpush1.bf16.msra.mxu0 %v8419
    %8655 = vmatprep.subr.bf16.mxu0 %v8416
    %8656 = vmatpush1.bf16.msra.mxu0 %v8415
    %8657 = vmatprep.subr.bf16.mxu0 %v8412
    %8658 = vmatpush1.bf16.msra.mxu0 %v8411
    %8659 = vmatprep.subr.bf16.mxu0 %v8408
    %8660 = vmatpush1.bf16.msra.mxu0 %v8407
    %8661 = vmatprep.subr.bf16.mxu0 %v8404
    %8662 = vmatpush1.bf16.msra.mxu0 %v8403
    %8663 = vmatprep.subr.bf16.mxu0 %v8400
    %8664 = vmatpush1.bf16.msra.mxu0 %v8399
    %8665 = vmatprep.subr.bf16.mxu0 %v8396
    %8666 = vmatpush1.bf16.msra.mxu0 %v8395
    %8667 = vmatprep.subr.bf16.mxu0 %v8456
    %8668 = vmatpush2.bf16.msra.mxu0 %v8455
    %8669 = vmatprep.subr.bf16.mxu0 %v8452
    %8670 = vmatpush2.bf16.msra.mxu0 %v8451
    %8671 = vmatprep.subr.bf16.mxu0 %v8448
    %8672 = vmatpush2.bf16.msra.mxu0 %v8447
    %8673 = vmatprep.subr.bf16.mxu0 %v8444
    %8674 = vmatpush2.bf16.msra.mxu0 %v8443
    %8675 = vmatprep.subr.bf16.mxu0 %v8440
    %8676 = vmatpush2.bf16.msra.mxu0 %v8439
    %8677 = vmatprep.subr.bf16.mxu0 %v8436
    %8678 = vmatpush2.bf16.msra.mxu0 %v8435
    %8679 = vmatprep.subr.bf16.mxu0 %v8432
    %8680 = vmatpush2.bf16.msra.mxu0 %v8431
    %8681 = vmatprep.subr.bf16.mxu0 %v8428
    %8682 = vmatpush2.bf16.msra.mxu0 %v8427
    %8683 = vmatprep.mubr.bf16.mxu0 %v7964
    %8684 = vmatmul.mubr.bf16.gmra.mxu0 %v7963
    %v8685 = vpop.f32.mrf.mxu0
    %v8686 = vadd.f32 0.0, %v8685
    %v8687 = vpop.f32.mrf.mxu0
    %v8688 = vadd.f32 0.0, %v8687
    %v8689 = vpop.f32.mrf.mxu0
    %v8690 = vadd.f32 0.0, %v8689
    %v8691 = vpop.f32.mrf.mxu0
    %v8692 = vadd.f32 0.0, %v8691
    %8693 = vmatprep.mubr.bf16.mxu0 %v8000
    %8694 = vmatmul.mubr.bf16.gmra.mxu0 %v7999
    %v8695 = vpop.f32.mrf.mxu0
    %v8696 = vadd.f32 0.0, %v8695
    %v8697 = vpop.f32.mrf.mxu0
    %v8698 = vadd.f32 0.0, %v8697
    %v8699 = vpop.f32.mrf.mxu0
    %v8700 = vadd.f32 0.0, %v8699
    %v8701 = vpop.f32.mrf.mxu0
    %v8702 = vadd.f32 0.0, %v8701
    %8703 = vdwg.mxu0
    %8704 = vmatprep.subr.bf16.mxu0 %v8488
    %8705 = vmatpush1.bf16.msra.mxu0 %v8487
    %8706 = vmatprep.subr.bf16.mxu0 %v8484
    %8707 = vmatpush1.bf16.msra.mxu0 %v8483
    %8708 = vmatprep.subr.bf16.mxu0 %v8480
    %8709 = vmatpush1.bf16.msra.mxu0 %v8479
    %8710 = vmatprep.subr.bf16.mxu0 %v8476
    %8711 = vmatpush1.bf16.msra.mxu0 %v8475
    %8712 = vmatprep.subr.bf16.mxu0 %v8472
    %8713 = vmatpush1.bf16.msra.mxu0 %v8471
    %8714 = vmatprep.subr.bf16.mxu0 %v8468
    %8715 = vmatpush1.bf16.msra.mxu0 %v8467
    %8716 = vmatprep.subr.bf16.mxu0 %v8464
    %8717 = vmatpush1.bf16.msra.mxu0 %v8463
    %8718 = vmatprep.subr.bf16.mxu0 %v8460
    %8719 = vmatpush1.bf16.msra.mxu0 %v8459
    %8720 = vmatprep.subr.bf16.mxu0 %v8520
    %8721 = vmatpush2.bf16.msra.mxu0 %v8519
    %8722 = vmatprep.subr.bf16.mxu0 %v8516
    %8723 = vmatpush2.bf16.msra.mxu0 %v8515
    %8724 = vmatprep.subr.bf16.mxu0 %v8512
    %8725 = vmatpush2.bf16.msra.mxu0 %v8511
    %8726 = vmatprep.subr.bf16.mxu0 %v8508
    %8727 = vmatpush2.bf16.msra.mxu0 %v8507
    %8728 = vmatprep.subr.bf16.mxu0 %v8504
    %8729 = vmatpush2.bf16.msra.mxu0 %v8503
    %8730 = vmatprep.subr.bf16.mxu0 %v8500
    %8731 = vmatpush2.bf16.msra.mxu0 %v8499
    %8732 = vmatprep.subr.bf16.mxu0 %v8496
    %8733 = vmatpush2.bf16.msra.mxu0 %v8495
    %8734 = vmatprep.subr.bf16.mxu0 %v8492
    %8735 = vmatpush2.bf16.msra.mxu0 %v8491
    %8736 = vmatprep.mubr.bf16.mxu0 %v7966
    %8737 = vmatmul.mubr.bf16.gmra.mxu0 %v7965
    %v8738 = vpop.f32.mrf.mxu0
    %v8739 = vadd.f32 %v8686, %v8738
    %v8740 = vpop.f32.mrf.mxu0
    %v8741 = vadd.f32 %v8688, %v8740
    %v8742 = vpop.f32.mrf.mxu0
    %v8743 = vadd.f32 %v8690, %v8742
    %v8744 = vpop.f32.mrf.mxu0
    %v8745 = vadd.f32 %v8692, %v8744
    %8746 = vmatprep.mubr.bf16.mxu0 %v8002
    %8747 = vmatmul.mubr.bf16.gmra.mxu0 %v8001
    %v8748 = vpop.f32.mrf.mxu0
    %v8749 = vadd.f32 %v8696, %v8748
    %v8750 = vpop.f32.mrf.mxu0
    %v8751 = vadd.f32 %v8698, %v8750
    %v8752 = vpop.f32.mrf.mxu0
    %v8753 = vadd.f32 %v8700, %v8752
    %v8754 = vpop.f32.mrf.mxu0
    %v8755 = vadd.f32 %v8702, %v8754
    %8756 = vdwg.mxu0
    %8757 = vmatprep.subr.bf16.mxu0 %v8426
    %8758 = vmatpush1.bf16.msra.mxu0 %v8425
    %8759 = vmatprep.subr.bf16.mxu0 %v8422
    %8760 = vmatpush1.bf16.msra.mxu0 %v8421
    %8761 = vmatprep.subr.bf16.mxu0 %v8418
    %8762 = vmatpush1.bf16.msra.mxu0 %v8417
    %8763 = vmatprep.subr.bf16.mxu0 %v8414
    %8764 = vmatpush1.bf16.msra.mxu0 %v8413
    %8765 = vmatprep.subr.bf16.mxu0 %v8410
    %8766 = vmatpush1.bf16.msra.mxu0 %v8409
    %8767 = vmatprep.subr.bf16.mxu0 %v8406
    %8768 = vmatpush1.bf16.msra.mxu0 %v8405
    %8769 = vmatprep.subr.bf16.mxu0 %v8402
    %8770 = vmatpush1.bf16.msra.mxu0 %v8401
    %8771 = vmatprep.subr.bf16.mxu0 %v8398
    %8772 = vmatpush1.bf16.msra.mxu0 %v8397
    %8773 = vmatprep.subr.bf16.mxu0 %v8458
    %8774 = vmatpush2.bf16.msra.mxu0 %v8457
    %8775 = vmatprep.subr.bf16.mxu0 %v8454
    %8776 = vmatpush2.bf16.msra.mxu0 %v8453
    %8777 = vmatprep.subr.bf16.mxu0 %v8450
    %8778 = vmatpush2.bf16.msra.mxu0 %v8449
    %8779 = vmatprep.subr.bf16.mxu0 %v8446
    %8780 = vmatpush2.bf16.msra.mxu0 %v8445
    %8781 = vmatprep.subr.bf16.mxu0 %v8442
    %8782 = vmatpush2.bf16.msra.mxu0 %v8441
    %8783 = vmatprep.subr.bf16.mxu0 %v8438
    %8784 = vmatpush2.bf16.msra.mxu0 %v8437
    %8785 = vmatprep.subr.bf16.mxu0 %v8434
    %8786 = vmatpush2.bf16.msra.mxu0 %v8433
    %8787 = vmatprep.subr.bf16.mxu0 %v8430
    %8788 = vmatpush2.bf16.msra.mxu0 %v8429
    %8789 = vmatprep.mubr.bf16.mxu0 %v7964
    %8790 = vmatmul.mubr.bf16.gmra.mxu0 %v7963
    %v8791 = vpop.f32.mrf.mxu0
    %v8792 = vadd.f32 0.0, %v8791
    %v8793 = vpop.f32.mrf.mxu0
    %v8794 = vadd.f32 0.0, %v8793
    %v8795 = vpop.f32.mrf.mxu0
    %v8796 = vadd.f32 0.0, %v8795
    %v8797 = vpop.f32.mrf.mxu0
    %v8798 = vadd.f32 0.0, %v8797
    %8799 = vmatprep.mubr.bf16.mxu0 %v8000
    %8800 = vmatmul.mubr.bf16.gmra.mxu0 %v7999
    %v8801 = vpop.f32.mrf.mxu0
    %v8802 = vadd.f32 0.0, %v8801
    %v8803 = vpop.f32.mrf.mxu0
    %v8804 = vadd.f32 0.0, %v8803
    %v8805 = vpop.f32.mrf.mxu0
    %v8806 = vadd.f32 0.0, %v8805
    %v8807 = vpop.f32.mrf.mxu0
    %v8808 = vadd.f32 0.0, %v8807
    %8809 = vdwg.mxu0
    %8810 = vmatprep.subr.bf16.mxu0 %v8490
    %8811 = vmatpush1.bf16.msra.mxu0 %v8489
    %8812 = vmatprep.subr.bf16.mxu0 %v8486
    %8813 = vmatpush1.bf16.msra.mxu0 %v8485
    %8814 = vmatprep.subr.bf16.mxu0 %v8482
    %8815 = vmatpush1.bf16.msra.mxu0 %v8481
    %8816 = vmatprep.subr.bf16.mxu0 %v8478
    %8817 = vmatpush1.bf16.msra.mxu0 %v8477
    %8818 = vmatprep.subr.bf16.mxu0 %v8474
    %8819 = vmatpush1.bf16.msra.mxu0 %v8473
    %8820 = vmatprep.subr.bf16.mxu0 %v8470
    %8821 = vmatpush1.bf16.msra.mxu0 %v8469
    %8822 = vmatprep.subr.bf16.mxu0 %v8466
    %8823 = vmatpush1.bf16.msra.mxu0 %v8465
    %8824 = vmatprep.subr.bf16.mxu0 %v8462
    %8825 = vmatpush1.bf16.msra.mxu0 %v8461
    %8826 = vmatprep.subr.bf16.mxu0 %v8522
    %8827 = vmatpush2.bf16.msra.mxu0 %v8521
    %8828 = vmatprep.subr.bf16.mxu0 %v8518
    %8829 = vmatpush2.bf16.msra.mxu0 %v8517
    %8830 = vmatprep.subr.bf16.mxu0 %v8514
    %8831 = vmatpush2.bf16.msra.mxu0 %v8513
    %8832 = vmatprep.subr.bf16.mxu0 %v8510
    %8833 = vmatpush2.bf16.msra.mxu0 %v8509
    %8834 = vmatprep.subr.bf16.mxu0 %v8506
    %8835 = vmatpush2.bf16.msra.mxu0 %v8505
    %8836 = vmatprep.subr.bf16.mxu0 %v8502
    %8837 = vmatpush2.bf16.msra.mxu0 %v8501
    %8838 = vmatprep.subr.bf16.mxu0 %v8498
    %8839 = vmatpush2.bf16.msra.mxu0 %v8497
    %8840 = vmatprep.subr.bf16.mxu0 %v8494
    %8841 = vmatpush2.bf16.msra.mxu0 %v8493
    %8842 = vmatprep.mubr.bf16.mxu0 %v7966
    %8843 = vmatmul.mubr.bf16.gmra.mxu0 %v7965
    %v8844 = vpop.f32.mrf.mxu0
    %v8845 = vadd.f32 %v8792, %v8844
    %v8846 = vpop.f32.mrf.mxu0
    %v8847 = vadd.f32 %v8794, %v8846
    %v8848 = vpop.f32.mrf.mxu0
    %v8849 = vadd.f32 %v8796, %v8848
    %v8850 = vpop.f32.mrf.mxu0
    %v8851 = vadd.f32 %v8798, %v8850
    %8852 = vmatprep.mubr.bf16.mxu0 %v8002
    %8853 = vmatmul.mubr.bf16.gmra.mxu0 %v8001
    %v8854 = vpop.f32.mrf.mxu0
    %v8855 = vadd.f32 %v8802, %v8854
    %v8856 = vpop.f32.mrf.mxu0
    %v8857 = vadd.f32 %v8804, %v8856
    %v8858 = vpop.f32.mrf.mxu0
    %v8859 = vadd.f32 %v8806, %v8858
    %v8860 = vpop.f32.mrf.mxu0
    %v8861 = vadd.f32 %v8808, %v8860
    %8862 = vdwg.mxu0
    %v8863 = vadd.f32 %v7752, %v8739
    %v8864 = vadd.f32 %v7753, %v8741
    %v8865 = vadd.f32 %v7754, %v8845
    %v8866 = vadd.f32 %v7755, %v8847
    %v8867 = vadd.f32 %v7756, %v8743
    %v8868 = vadd.f32 %v7757, %v8745
    %v8869 = vadd.f32 %v7758, %v8849
    %v8870 = vadd.f32 %v7759, %v8851
    %v8871 = vadd.f32 %v7760, %v8749
    %v8872 = vadd.f32 %v7761, %v8751
    %v8873 = vadd.f32 %v7762, %v8855
    %v8874 = vadd.f32 %v7763, %v8857
    %v8875 = vadd.f32 %v7764, %v8753
    %v8876 = vadd.f32 %v7765, %v8755
    %v8877 = vadd.f32 %v7766, %v8859
    %v8878 = vadd.f32 %v7767, %v8861
    %v8879 = vcombine.high %v7778, %v7785
    %v8880 = vcombine.high %v7793, %v7800
    %v8882 = vshrl.u32 %v7786, 16
    %v8884 = vrot.slane %v8882, 6
    %v8885 = vshll.u32 %v7786, 16
    %v8887 = vrot.slane %v8885, 7
    %v8888 = vor.u32 %v8884, %v8887
    %v8889 = vrot.slane %v8888, 2
    %v8891 = vshll.u32 %v8879, 16
    %v8893 = vrot.slane %v8891, 7
    %v8894 = vsel %vm4546, %v8889, %v8893
    %v8896 = vshrl.u32 %v7801, 16
    %v8898 = vrot.slane %v8896, 6
    %v8899 = vshll.u32 %v7801, 16
    %v8901 = vrot.slane %v8899, 7
    %v8902 = vor.u32 %v8898, %v8901
    %v8903 = vrot.slane %v8902, 2
    %v8905 = vshll.u32 %v8880, 16
    %v8907 = vrot.slane %v8905, 7
    %v8908 = vsel %vm4546, %v8903, %v8907
    %s8909 = scalar_lea.vmem [#allocation8], 4096
    %v8910 = vld [vmem:[%s8909] sm:$0xff]
    %v8911 = vld [vmem:[%s8909 + $0x8] sm:$0xff]
    %v8912 = vld [vmem:[%s8909 + $0x10] sm:$0xff]
    %v8913 = vld [vmem:[%s8909 + $0x18] sm:$0xff]
    %v8914 = vld [vmem:[%s8909 + $0x20] sm:$0xff]
    %v8915 = vld [vmem:[%s8909 + $0x28] sm:$0xff]
    %v8916 = vld [vmem:[%s8909 + $0x30] sm:$0xff]
    %v8917 = vld [vmem:[%s8909 + $0x38] sm:$0xff]
    %v8918 = vld [vmem:[%s8909 + $0x40] sm:$0xff]
    %v8919 = vld [vmem:[%s8909 + $0x48] sm:$0xff]
    %v8920 = vld [vmem:[%s8909 + $0x50] sm:$0xff]
    %v8921 = vld [vmem:[%s8909 + $0x58] sm:$0xff]
    %v8922 = vld [vmem:[%s8909 + $0x60] sm:$0xff]
    %v8923 = vld [vmem:[%s8909 + $0x68] sm:$0xff]
    %v8924 = vld [vmem:[%s8909 + $0x70] sm:$0xff]
    %v8925 = vld [vmem:[%s8909 + $0x78] sm:$0xff]
    %v8926 = vld [vmem:[%s8909 + $0x80] sm:$0xff]
    %v8927 = vld [vmem:[%s8909 + $0x88] sm:$0xff]
    %v8928 = vld [vmem:[%s8909 + $0x90] sm:$0xff]
    %v8929 = vld [vmem:[%s8909 + $0x98] sm:$0xff]
    %v8930 = vld [vmem:[%s8909 + $0xa0] sm:$0xff]
    %v8931 = vld [vmem:[%s8909 + $0xa8] sm:$0xff]
    %v8932 = vld [vmem:[%s8909 + $0xb0] sm:$0xff]
    %v8933 = vld [vmem:[%s8909 + $0xb8] sm:$0xff]
    %v8934 = vld [vmem:[%s8909 + $0xc0] sm:$0xff]
    %v8935 = vld [vmem:[%s8909 + $0xc8] sm:$0xff]
    %v8936 = vld [vmem:[%s8909 + $0xd0] sm:$0xff]
    %v8937 = vld [vmem:[%s8909 + $0xd8] sm:$0xff]
    %v8938 = vld [vmem:[%s8909 + $0xe0] sm:$0xff]
    %v8939 = vld [vmem:[%s8909 + $0xe8] sm:$0xff]
    %v8940 = vld [vmem:[%s8909 + $0xf0] sm:$0xff]
    %v8941 = vld [vmem:[%s8909 + $0xf8] sm:$0xff]
    %v8942 = vld [vmem:[%s8909 + $0x100] sm:$0xff]
    %v8943 = vld [vmem:[%s8909 + $0x108] sm:$0xff]
    %v8944 = vld [vmem:[%s8909 + $0x110] sm:$0xff]
    %v8945 = vld [vmem:[%s8909 + $0x118] sm:$0xff]
    %v8946 = vld [vmem:[%s8909 + $0x120] sm:$0xff]
    %v8947 = vld [vmem:[%s8909 + $0x128] sm:$0xff]
    %v8948 = vld [vmem:[%s8909 + $0x130] sm:$0xff]
    %v8949 = vld [vmem:[%s8909 + $0x138] sm:$0xff]
    %v8950 = vld [vmem:[%s8909 + $0x140] sm:$0xff]
    %v8951 = vld [vmem:[%s8909 + $0x148] sm:$0xff]
    %v8952 = vld [vmem:[%s8909 + $0x150] sm:$0xff]
    %v8953 = vld [vmem:[%s8909 + $0x158] sm:$0xff]
    %v8954 = vld [vmem:[%s8909 + $0x160] sm:$0xff]
    %v8955 = vld [vmem:[%s8909 + $0x168] sm:$0xff]
    %v8956 = vld [vmem:[%s8909 + $0x170] sm:$0xff]
    %v8957 = vld [vmem:[%s8909 + $0x178] sm:$0xff]
    %v8958 = vld [vmem:[%s8909 + $0x180] sm:$0xff]
    %v8959 = vld [vmem:[%s8909 + $0x188] sm:$0xff]
    %v8960 = vld [vmem:[%s8909 + $0x190] sm:$0xff]
    %v8961 = vld [vmem:[%s8909 + $0x198] sm:$0xff]
    %v8962 = vld [vmem:[%s8909 + $0x1a0] sm:$0xff]
    %v8963 = vld [vmem:[%s8909 + $0x1a8] sm:$0xff]
    %v8964 = vld [vmem:[%s8909 + $0x1b0] sm:$0xff]
    %v8965 = vld [vmem:[%s8909 + $0x1b8] sm:$0xff]
    %v8966 = vld [vmem:[%s8909 + $0x1c0] sm:$0xff]
    %v8967 = vld [vmem:[%s8909 + $0x1c8] sm:$0xff]
    %v8968 = vld [vmem:[%s8909 + $0x1d0] sm:$0xff]
    %v8969 = vld [vmem:[%s8909 + $0x1d8] sm:$0xff]
    %v8970 = vld [vmem:[%s8909 + $0x1e0] sm:$0xff]
    %v8971 = vld [vmem:[%s8909 + $0x1e8] sm:$0xff]
    %v8972 = vld [vmem:[%s8909 + $0x1f0] sm:$0xff]
    %v8973 = vld [vmem:[%s8909 + $0x1f8] sm:$0xff]
    %v8974 = vld [vmem:[%s8909 + $0x200] sm:$0xff]
    %v8975 = vld [vmem:[%s8909 + $0x208] sm:$0xff]
    %v8976 = vld [vmem:[%s8909 + $0x210] sm:$0xff]
    %v8977 = vld [vmem:[%s8909 + $0x218] sm:$0xff]
    %v8978 = vld [vmem:[%s8909 + $0x220] sm:$0xff]
    %v8979 = vld [vmem:[%s8909 + $0x228] sm:$0xff]
    %v8980 = vld [vmem:[%s8909 + $0x230] sm:$0xff]
    %v8981 = vld [vmem:[%s8909 + $0x238] sm:$0xff]
    %v8982 = vld [vmem:[%s8909 + $0x240] sm:$0xff]
    %v8983 = vld [vmem:[%s8909 + $0x248] sm:$0xff]
    %v8984 = vld [vmem:[%s8909 + $0x250] sm:$0xff]
    %v8985 = vld [vmem:[%s8909 + $0x258] sm:$0xff]
    %v8986 = vld [vmem:[%s8909 + $0x260] sm:$0xff]
    %v8987 = vld [vmem:[%s8909 + $0x268] sm:$0xff]
    %v8988 = vld [vmem:[%s8909 + $0x270] sm:$0xff]
    %v8989 = vld [vmem:[%s8909 + $0x278] sm:$0xff]
    %v8990 = vld [vmem:[%s8909 + $0x280] sm:$0xff]
    %v8991 = vld [vmem:[%s8909 + $0x288] sm:$0xff]
    %v8992 = vld [vmem:[%s8909 + $0x290] sm:$0xff]
    %v8993 = vld [vmem:[%s8909 + $0x298] sm:$0xff]
    %v8994 = vld [vmem:[%s8909 + $0x2a0] sm:$0xff]
    %v8995 = vld [vmem:[%s8909 + $0x2a8] sm:$0xff]
    %v8996 = vld [vmem:[%s8909 + $0x2b0] sm:$0xff]
    %v8997 = vld [vmem:[%s8909 + $0x2b8] sm:$0xff]
    %v8998 = vld [vmem:[%s8909 + $0x2c0] sm:$0xff]
    %v8999 = vld [vmem:[%s8909 + $0x2c8] sm:$0xff]
    %v9000 = vld [vmem:[%s8909 + $0x2d0] sm:$0xff]
    %v9001 = vld [vmem:[%s8909 + $0x2d8] sm:$0xff]
    %v9002 = vld [vmem:[%s8909 + $0x2e0] sm:$0xff]
    %v9003 = vld [vmem:[%s8909 + $0x2e8] sm:$0xff]
    %v9004 = vld [vmem:[%s8909 + $0x2f0] sm:$0xff]
    %v9005 = vld [vmem:[%s8909 + $0x2f8] sm:$0xff]
    %v9006 = vld [vmem:[%s8909 + $0x300] sm:$0xff]
    %v9007 = vld [vmem:[%s8909 + $0x308] sm:$0xff]
    %v9008 = vld [vmem:[%s8909 + $0x310] sm:$0xff]
    %v9009 = vld [vmem:[%s8909 + $0x318] sm:$0xff]
    %v9010 = vld [vmem:[%s8909 + $0x320] sm:$0xff]
    %v9011 = vld [vmem:[%s8909 + $0x328] sm:$0xff]
    %v9012 = vld [vmem:[%s8909 + $0x330] sm:$0xff]
    %v9013 = vld [vmem:[%s8909 + $0x338] sm:$0xff]
    %v9014 = vld [vmem:[%s8909 + $0x340] sm:$0xff]
    %v9015 = vld [vmem:[%s8909 + $0x348] sm:$0xff]
    %v9016 = vld [vmem:[%s8909 + $0x350] sm:$0xff]
    %v9017 = vld [vmem:[%s8909 + $0x358] sm:$0xff]
    %v9018 = vld [vmem:[%s8909 + $0x360] sm:$0xff]
    %v9019 = vld [vmem:[%s8909 + $0x368] sm:$0xff]
    %v9020 = vld [vmem:[%s8909 + $0x370] sm:$0xff]
    %v9021 = vld [vmem:[%s8909 + $0x378] sm:$0xff]
    %v9022 = vld [vmem:[%s8909 + $0x380] sm:$0xff]
    %v9023 = vld [vmem:[%s8909 + $0x388] sm:$0xff]
    %v9024 = vld [vmem:[%s8909 + $0x390] sm:$0xff]
    %v9025 = vld [vmem:[%s8909 + $0x398] sm:$0xff]
    %v9026 = vld [vmem:[%s8909 + $0x3a0] sm:$0xff]
    %v9027 = vld [vmem:[%s8909 + $0x3a8] sm:$0xff]
    %v9028 = vld [vmem:[%s8909 + $0x3b0] sm:$0xff]
    %v9029 = vld [vmem:[%s8909 + $0x3b8] sm:$0xff]
    %v9030 = vld [vmem:[%s8909 + $0x3c0] sm:$0xff]
    %v9031 = vld [vmem:[%s8909 + $0x3c8] sm:$0xff]
    %v9032 = vld [vmem:[%s8909 + $0x3d0] sm:$0xff]
    %v9033 = vld [vmem:[%s8909 + $0x3d8] sm:$0xff]
    %v9034 = vld [vmem:[%s8909 + $0x3e0] sm:$0xff]
    %v9035 = vld [vmem:[%s8909 + $0x3e8] sm:$0xff]
    %v9036 = vld [vmem:[%s8909 + $0x3f0] sm:$0xff]
    %v9037 = vld [vmem:[%s8909 + $0x3f8] sm:$0xff]
    %v9038 = vcombine.low %v4574, %v4588
    %v9039 = vcombine.high %v4574, %v4588
    %v9040 = vcombine.low %v4602, %v8894
    %v9041 = vcombine.high %v4602, %v8894
    %v9043 = vunpack.c.l.s4 1983009808
    %v9044 = vunpack.c.0.s8 %v9043
    %v9045 = vlaneseq
    %v9046 = vshrl.u32 %v9045, 7
    %v9047 = vsub.s32 %v9044, %v9046
    %v9048 = vrot.slane %v9038, %v9047
    %v9050 = vunpack.c.l.s4 1983009808
    %v9051 = vunpack.c.0.s8 %v9050
    %v9052 = vlaneseq
    %v9053 = vshrl.u32 %v9052, 7
    %v9054 = vsub.s32 %v9051, %v9053
    %v9055 = vrot.slane %v9039, %v9054
    %v9057 = vunpack.c.l.s4 1983009808
    %v9058 = vunpack.c.0.s8 %v9057
    %v9059 = vlaneseq
    %v9060 = vshrl.u32 %v9059, 7
    %v9061 = vsub.s32 %v9058, %v9060
    %v9062 = vrot.slane %v9040, %v9061
    %v9064 = vunpack.c.l.s4 1983009808
    %v9065 = vunpack.c.0.s8 %v9064
    %v9066 = vlaneseq
    %v9067 = vshrl.u32 %v9066, 7
    %v9068 = vsub.s32 %v9065, %v9067
    %v9069 = vrot.slane %v9041, %v9068
    %v9070 = vcombine.low %v9048, %v9062
    %v9071 = vcombine.high %v9048, %v9062
    %v9072 = vcombine.low %v9055, %v9069
    %v9073 = vcombine.high %v9055, %v9069
    %v9074 = vcombine.low %v4630, %v4644
    %v9075 = vcombine.high %v4630, %v4644
    %v9076 = vcombine.low %v4658, %v8908
    %v9077 = vcombine.high %v4658, %v8908
    %v9079 = vunpack.c.l.s4 1983009808
    %v9080 = vunpack.c.0.s8 %v9079
    %v9081 = vlaneseq
    %v9082 = vshrl.u32 %v9081, 7
    %v9083 = vsub.s32 %v9080, %v9082
    %v9084 = vrot.slane %v9074, %v9083
    %v9086 = vunpack.c.l.s4 1983009808
    %v9087 = vunpack.c.0.s8 %v9086
    %v9088 = vlaneseq
    %v9089 = vshrl.u32 %v9088, 7
    %v9090 = vsub.s32 %v9087, %v9089
    %v9091 = vrot.slane %v9075, %v9090
    %v9093 = vunpack.c.l.s4 1983009808
    %v9094 = vunpack.c.0.s8 %v9093
    %v9095 = vlaneseq
    %v9096 = vshrl.u32 %v9095, 7
    %v9097 = vsub.s32 %v9094, %v9096
    %v9098 = vrot.slane %v9076, %v9097
    %v9100 = vunpack.c.l.s4 1983009808
    %v9101 = vunpack.c.0.s8 %v9100
    %v9102 = vlaneseq
    %v9103 = vshrl.u32 %v9102, 7
    %v9104 = vsub.s32 %v9101, %v9103
    %v9105 = vrot.slane %v9077, %v9104
    %v9106 = vcombine.low %v9084, %v9098
    %v9107 = vcombine.high %v9084, %v9098
    %v9108 = vcombine.low %v9091, %v9105
    %v9109 = vcombine.high %v9091, %v9105
    %v9246 = vunpack.c.l.b16 %v8910
    %v9247 = vunpack.c.h.b16 %v8910
    %v9248 = vunpack.c.l.b16 %v8911
    %v9249 = vunpack.c.h.b16 %v8911
    %v9250 = vunpack.c.l.b16 %v8912
    %v9251 = vunpack.c.h.b16 %v8912
    %v9252 = vunpack.c.l.b16 %v8913
    %v9253 = vunpack.c.h.b16 %v8913
    %v9254 = vunpack.c.l.b16 %v8914
    %v9255 = vunpack.c.h.b16 %v8914
    %v9256 = vunpack.c.l.b16 %v8915
    %v9257 = vunpack.c.h.b16 %v8915
    %v9258 = vunpack.c.l.b16 %v8916
    %v9259 = vunpack.c.h.b16 %v8916
    %v9260 = vunpack.c.l.b16 %v8917
    %v9261 = vunpack.c.h.b16 %v8917
    %v9262 = vunpack.c.l.b16 %v8918
    %v9263 = vunpack.c.h.b16 %v8918
    %v9264 = vunpack.c.l.b16 %v8919
    %v9265 = vunpack.c.h.b16 %v8919
    %v9266 = vunpack.c.l.b16 %v8920
    %v9267 = vunpack.c.h.b16 %v8920
    %v9268 = vunpack.c.l.b16 %v8921
    %v9269 = vunpack.c.h.b16 %v8921
    %v9270 = vunpack.c.l.b16 %v8922
    %v9271 = vunpack.c.h.b16 %v8922
    %v9272 = vunpack.c.l.b16 %v8923
    %v9273 = vunpack.c.h.b16 %v8923
    %v9274 = vunpack.c.l.b16 %v8924
    %v9275 = vunpack.c.h.b16 %v8924
    %v9276 = vunpack.c.l.b16 %v8925
    %v9277 = vunpack.c.h.b16 %v8925
    %v9278 = vunpack.c.l.b16 %v8926
    %v9279 = vunpack.c.h.b16 %v8926
    %v9280 = vunpack.c.l.b16 %v8927
    %v9281 = vunpack.c.h.b16 %v8927
    %v9282 = vunpack.c.l.b16 %v8928
    %v9283 = vunpack.c.h.b16 %v8928
    %v9284 = vunpack.c.l.b16 %v8929
    %v9285 = vunpack.c.h.b16 %v8929
    %v9286 = vunpack.c.l.b16 %v8930
    %v9287 = vunpack.c.h.b16 %v8930
    %v9288 = vunpack.c.l.b16 %v8931
    %v9289 = vunpack.c.h.b16 %v8931
    %v9290 = vunpack.c.l.b16 %v8932
    %v9291 = vunpack.c.h.b16 %v8932
    %v9292 = vunpack.c.l.b16 %v8933
    %v9293 = vunpack.c.h.b16 %v8933
    %v9294 = vunpack.c.l.b16 %v8934
    %v9295 = vunpack.c.h.b16 %v8934
    %v9296 = vunpack.c.l.b16 %v8935
    %v9297 = vunpack.c.h.b16 %v8935
    %v9298 = vunpack.c.l.b16 %v8936
    %v9299 = vunpack.c.h.b16 %v8936
    %v9300 = vunpack.c.l.b16 %v8937
    %v9301 = vunpack.c.h.b16 %v8937
    %v9302 = vunpack.c.l.b16 %v8938
    %v9303 = vunpack.c.h.b16 %v8938
    %v9304 = vunpack.c.l.b16 %v8939
    %v9305 = vunpack.c.h.b16 %v8939
    %v9306 = vunpack.c.l.b16 %v8940
    %v9307 = vunpack.c.h.b16 %v8940
    %v9308 = vunpack.c.l.b16 %v8941
    %v9309 = vunpack.c.h.b16 %v8941
    %v9310 = vunpack.c.l.b16 %v8942
    %v9311 = vunpack.c.h.b16 %v8942
    %v9312 = vunpack.c.l.b16 %v8943
    %v9313 = vunpack.c.h.b16 %v8943
    %v9314 = vunpack.c.l.b16 %v8944
    %v9315 = vunpack.c.h.b16 %v8944
    %v9316 = vunpack.c.l.b16 %v8945
    %v9317 = vunpack.c.h.b16 %v8945
    %v9318 = vunpack.c.l.b16 %v8946
    %v9319 = vunpack.c.h.b16 %v8946
    %v9320 = vunpack.c.l.b16 %v8947
    %v9321 = vunpack.c.h.b16 %v8947
    %v9322 = vunpack.c.l.b16 %v8948
    %v9323 = vunpack.c.h.b16 %v8948
    %v9324 = vunpack.c.l.b16 %v8949
    %v9325 = vunpack.c.h.b16 %v8949
    %v9326 = vunpack.c.l.b16 %v8950
    %v9327 = vunpack.c.h.b16 %v8950
    %v9328 = vunpack.c.l.b16 %v8951
    %v9329 = vunpack.c.h.b16 %v8951
    %v9330 = vunpack.c.l.b16 %v8952
    %v9331 = vunpack.c.h.b16 %v8952
    %v9332 = vunpack.c.l.b16 %v8953
    %v9333 = vunpack.c.h.b16 %v8953
    %v9334 = vunpack.c.l.b16 %v8954
    %v9335 = vunpack.c.h.b16 %v8954
    %v9336 = vunpack.c.l.b16 %v8955
    %v9337 = vunpack.c.h.b16 %v8955
    %v9338 = vunpack.c.l.b16 %v8956
    %v9339 = vunpack.c.h.b16 %v8956
    %v9340 = vunpack.c.l.b16 %v8957
    %v9341 = vunpack.c.h.b16 %v8957
    %v9342 = vunpack.c.l.b16 %v8958
    %v9343 = vunpack.c.h.b16 %v8958
    %v9344 = vunpack.c.l.b16 %v8959
    %v9345 = vunpack.c.h.b16 %v8959
    %v9346 = vunpack.c.l.b16 %v8960
    %v9347 = vunpack.c.h.b16 %v8960
    %v9348 = vunpack.c.l.b16 %v8961
    %v9349 = vunpack.c.h.b16 %v8961
    %v9350 = vunpack.c.l.b16 %v8962
    %v9351 = vunpack.c.h.b16 %v8962
    %v9352 = vunpack.c.l.b16 %v8963
    %v9353 = vunpack.c.h.b16 %v8963
    %v9354 = vunpack.c.l.b16 %v8964
    %v9355 = vunpack.c.h.b16 %v8964
    %v9356 = vunpack.c.l.b16 %v8965
    %v9357 = vunpack.c.h.b16 %v8965
    %v9358 = vunpack.c.l.b16 %v8966
    %v9359 = vunpack.c.h.b16 %v8966
    %v9360 = vunpack.c.l.b16 %v8967
    %v9361 = vunpack.c.h.b16 %v8967
    %v9362 = vunpack.c.l.b16 %v8968
    %v9363 = vunpack.c.h.b16 %v8968
    %v9364 = vunpack.c.l.b16 %v8969
    %v9365 = vunpack.c.h.b16 %v8969
    %v9366 = vunpack.c.l.b16 %v8970
    %v9367 = vunpack.c.h.b16 %v8970
    %v9368 = vunpack.c.l.b16 %v8971
    %v9369 = vunpack.c.h.b16 %v8971
    %v9370 = vunpack.c.l.b16 %v8972
    %v9371 = vunpack.c.h.b16 %v8972
    %v9372 = vunpack.c.l.b16 %v8973
    %v9373 = vunpack.c.h.b16 %v8973
    %v9374 = vunpack.c.l.b16 %v8974
    %v9375 = vunpack.c.h.b16 %v8974
    %v9376 = vunpack.c.l.b16 %v8975
    %v9377 = vunpack.c.h.b16 %v8975
    %v9378 = vunpack.c.l.b16 %v8976
    %v9379 = vunpack.c.h.b16 %v8976
    %v9380 = vunpack.c.l.b16 %v8977
    %v9381 = vunpack.c.h.b16 %v8977
    %v9382 = vunpack.c.l.b16 %v8978
    %v9383 = vunpack.c.h.b16 %v8978
    %v9384 = vunpack.c.l.b16 %v8979
    %v9385 = vunpack.c.h.b16 %v8979
    %v9386 = vunpack.c.l.b16 %v8980
    %v9387 = vunpack.c.h.b16 %v8980
    %v9388 = vunpack.c.l.b16 %v8981
    %v9389 = vunpack.c.h.b16 %v8981
    %v9390 = vunpack.c.l.b16 %v8982
    %v9391 = vunpack.c.h.b16 %v8982
    %v9392 = vunpack.c.l.b16 %v8983
    %v9393 = vunpack.c.h.b16 %v8983
    %v9394 = vunpack.c.l.b16 %v8984
    %v9395 = vunpack.c.h.b16 %v8984
    %v9396 = vunpack.c.l.b16 %v8985
    %v9397 = vunpack.c.h.b16 %v8985
    %v9398 = vunpack.c.l.b16 %v8986
    %v9399 = vunpack.c.h.b16 %v8986
    %v9400 = vunpack.c.l.b16 %v8987
    %v9401 = vunpack.c.h.b16 %v8987
    %v9402 = vunpack.c.l.b16 %v8988
    %v9403 = vunpack.c.h.b16 %v8988
    %v9404 = vunpack.c.l.b16 %v8989
    %v9405 = vunpack.c.h.b16 %v8989
    %v9406 = vunpack.c.l.b16 %v8990
    %v9407 = vunpack.c.h.b16 %v8990
    %v9408 = vunpack.c.l.b16 %v8991
    %v9409 = vunpack.c.h.b16 %v8991
    %v9410 = vunpack.c.l.b16 %v8992
    %v9411 = vunpack.c.h.b16 %v8992
    %v9412 = vunpack.c.l.b16 %v8993
    %v9413 = vunpack.c.h.b16 %v8993
    %v9414 = vunpack.c.l.b16 %v8994
    %v9415 = vunpack.c.h.b16 %v8994
    %v9416 = vunpack.c.l.b16 %v8995
    %v9417 = vunpack.c.h.b16 %v8995
    %v9418 = vunpack.c.l.b16 %v8996
    %v9419 = vunpack.c.h.b16 %v8996
    %v9420 = vunpack.c.l.b16 %v8997
    %v9421 = vunpack.c.h.b16 %v8997
    %v9422 = vunpack.c.l.b16 %v8998
    %v9423 = vunpack.c.h.b16 %v8998
    %v9424 = vunpack.c.l.b16 %v8999
    %v9425 = vunpack.c.h.b16 %v8999
    %v9426 = vunpack.c.l.b16 %v9000
    %v9427 = vunpack.c.h.b16 %v9000
    %v9428 = vunpack.c.l.b16 %v9001
    %v9429 = vunpack.c.h.b16 %v9001
    %v9430 = vunpack.c.l.b16 %v9002
    %v9431 = vunpack.c.h.b16 %v9002
    %v9432 = vunpack.c.l.b16 %v9003
    %v9433 = vunpack.c.h.b16 %v9003
    %v9434 = vunpack.c.l.b16 %v9004
    %v9435 = vunpack.c.h.b16 %v9004
    %v9436 = vunpack.c.l.b16 %v9005
    %v9437 = vunpack.c.h.b16 %v9005
    %v9438 = vunpack.c.l.b16 %v9006
    %v9439 = vunpack.c.h.b16 %v9006
    %v9440 = vunpack.c.l.b16 %v9007
    %v9441 = vunpack.c.h.b16 %v9007
    %v9442 = vunpack.c.l.b16 %v9008
    %v9443 = vunpack.c.h.b16 %v9008
    %v9444 = vunpack.c.l.b16 %v9009
    %v9445 = vunpack.c.h.b16 %v9009
    %v9446 = vunpack.c.l.b16 %v9010
    %v9447 = vunpack.c.h.b16 %v9010
    %v9448 = vunpack.c.l.b16 %v9011
    %v9449 = vunpack.c.h.b16 %v9011
    %v9450 = vunpack.c.l.b16 %v9012
    %v9451 = vunpack.c.h.b16 %v9012
    %v9452 = vunpack.c.l.b16 %v9013
    %v9453 = vunpack.c.h.b16 %v9013
    %v9454 = vunpack.c.l.b16 %v9014
    %v9455 = vunpack.c.h.b16 %v9014
    %v9456 = vunpack.c.l.b16 %v9015
    %v9457 = vunpack.c.h.b16 %v9015
    %v9458 = vunpack.c.l.b16 %v9016
    %v9459 = vunpack.c.h.b16 %v9016
    %v9460 = vunpack.c.l.b16 %v9017
    %v9461 = vunpack.c.h.b16 %v9017
    %v9462 = vunpack.c.l.b16 %v9018
    %v9463 = vunpack.c.h.b16 %v9018
    %v9464 = vunpack.c.l.b16 %v9019
    %v9465 = vunpack.c.h.b16 %v9019
    %v9466 = vunpack.c.l.b16 %v9020
    %v9467 = vunpack.c.h.b16 %v9020
    %v9468 = vunpack.c.l.b16 %v9021
    %v9469 = vunpack.c.h.b16 %v9021
    %v9470 = vunpack.c.l.b16 %v9022
    %v9471 = vunpack.c.h.b16 %v9022
    %v9472 = vunpack.c.l.b16 %v9023
    %v9473 = vunpack.c.h.b16 %v9023
    %v9474 = vunpack.c.l.b16 %v9024
    %v9475 = vunpack.c.h.b16 %v9024
    %v9476 = vunpack.c.l.b16 %v9025
    %v9477 = vunpack.c.h.b16 %v9025
    %v9478 = vunpack.c.l.b16 %v9026
    %v9479 = vunpack.c.h.b16 %v9026
    %v9480 = vunpack.c.l.b16 %v9027
    %v9481 = vunpack.c.h.b16 %v9027
    %v9482 = vunpack.c.l.b16 %v9028
    %v9483 = vunpack.c.h.b16 %v9028
    %v9484 = vunpack.c.l.b16 %v9029
    %v9485 = vunpack.c.h.b16 %v9029
    %v9486 = vunpack.c.l.b16 %v9030
    %v9487 = vunpack.c.h.b16 %v9030
    %v9488 = vunpack.c.l.b16 %v9031
    %v9489 = vunpack.c.h.b16 %v9031
    %v9490 = vunpack.c.l.b16 %v9032
    %v9491 = vunpack.c.h.b16 %v9032
    %v9492 = vunpack.c.l.b16 %v9033
    %v9493 = vunpack.c.h.b16 %v9033
    %v9494 = vunpack.c.l.b16 %v9034
    %v9495 = vunpack.c.h.b16 %v9034
    %v9496 = vunpack.c.l.b16 %v9035
    %v9497 = vunpack.c.h.b16 %v9035
    %v9498 = vunpack.c.l.b16 %v9036
    %v9499 = vunpack.c.h.b16 %v9036
    %v9500 = vunpack.c.l.b16 %v9037
    %v9501 = vunpack.c.h.b16 %v9037
    %v9502 = vpack.c.b16 %v9250, %v9246
    %v9503 = vpack.c.b16 %v9251, %v9247
    %v9504 = vpack.c.b16 %v9252, %v9248
    %v9505 = vpack.c.b16 %v9253, %v9249
    %v9506 = vpack.c.b16 %v9258, %v9254
    %v9507 = vpack.c.b16 %v9259, %v9255
    %v9508 = vpack.c.b16 %v9260, %v9256
    %v9509 = vpack.c.b16 %v9261, %v9257
    %v9510 = vpack.c.b16 %v9266, %v9262
    %v9511 = vpack.c.b16 %v9267, %v9263
    %v9512 = vpack.c.b16 %v9268, %v9264
    %v9513 = vpack.c.b16 %v9269, %v9265
    %v9514 = vpack.c.b16 %v9274, %v9270
    %v9515 = vpack.c.b16 %v9275, %v9271
    %v9516 = vpack.c.b16 %v9276, %v9272
    %v9517 = vpack.c.b16 %v9277, %v9273
    %v9518 = vpack.c.b16 %v9282, %v9278
    %v9519 = vpack.c.b16 %v9283, %v9279
    %v9520 = vpack.c.b16 %v9284, %v9280
    %v9521 = vpack.c.b16 %v9285, %v9281
    %v9522 = vpack.c.b16 %v9290, %v9286
    %v9523 = vpack.c.b16 %v9291, %v9287
    %v9524 = vpack.c.b16 %v9292, %v9288
    %v9525 = vpack.c.b16 %v9293, %v9289
    %v9526 = vpack.c.b16 %v9298, %v9294
    %v9527 = vpack.c.b16 %v9299, %v9295
    %v9528 = vpack.c.b16 %v9300, %v9296
    %v9529 = vpack.c.b16 %v9301, %v9297
    %v9530 = vpack.c.b16 %v9306, %v9302
    %v9531 = vpack.c.b16 %v9307, %v9303
    %v9532 = vpack.c.b16 %v9308, %v9304
    %v9533 = vpack.c.b16 %v9309, %v9305
    %v9534 = vpack.c.b16 %v9314, %v9310
    %v9535 = vpack.c.b16 %v9315, %v9311
    %v9536 = vpack.c.b16 %v9316, %v9312
    %v9537 = vpack.c.b16 %v9317, %v9313
    %v9538 = vpack.c.b16 %v9322, %v9318
    %v9539 = vpack.c.b16 %v9323, %v9319
    %v9540 = vpack.c.b16 %v9324, %v9320
    %v9541 = vpack.c.b16 %v9325, %v9321
    %v9542 = vpack.c.b16 %v9330, %v9326
    %v9543 = vpack.c.b16 %v9331, %v9327
    %v9544 = vpack.c.b16 %v9332, %v9328
    %v9545 = vpack.c.b16 %v9333, %v9329
    %v9546 = vpack.c.b16 %v9338, %v9334
    %v9547 = vpack.c.b16 %v9339, %v9335
    %v9548 = vpack.c.b16 %v9340, %v9336
    %v9549 = vpack.c.b16 %v9341, %v9337
    %v9550 = vpack.c.b16 %v9346, %v9342
    %v9551 = vpack.c.b16 %v9347, %v9343
    %v9552 = vpack.c.b16 %v9348, %v9344
    %v9553 = vpack.c.b16 %v9349, %v9345
    %v9554 = vpack.c.b16 %v9354, %v9350
    %v9555 = vpack.c.b16 %v9355, %v9351
    %v9556 = vpack.c.b16 %v9356, %v9352
    %v9557 = vpack.c.b16 %v9357, %v9353
    %v9558 = vpack.c.b16 %v9362, %v9358
    %v9559 = vpack.c.b16 %v9363, %v9359
    %v9560 = vpack.c.b16 %v9364, %v9360
    %v9561 = vpack.c.b16 %v9365, %v9361
    %v9562 = vpack.c.b16 %v9370, %v9366
    %v9563 = vpack.c.b16 %v9371, %v9367
    %v9564 = vpack.c.b16 %v9372, %v9368
    %v9565 = vpack.c.b16 %v9373, %v9369
    %v9566 = vpack.c.b16 %v9378, %v9374
    %v9567 = vpack.c.b16 %v9379, %v9375
    %v9568 = vpack.c.b16 %v9380, %v9376
    %v9569 = vpack.c.b16 %v9381, %v9377
    %v9570 = vpack.c.b16 %v9386, %v9382
    %v9571 = vpack.c.b16 %v9387, %v9383
    %v9572 = vpack.c.b16 %v9388, %v9384
    %v9573 = vpack.c.b16 %v9389, %v9385
    %v9574 = vpack.c.b16 %v9394, %v9390
    %v9575 = vpack.c.b16 %v9395, %v9391
    %v9576 = vpack.c.b16 %v9396, %v9392
    %v9577 = vpack.c.b16 %v9397, %v9393
    %v9578 = vpack.c.b16 %v9402, %v9398
    %v9579 = vpack.c.b16 %v9403, %v9399
    %v9580 = vpack.c.b16 %v9404, %v9400
    %v9581 = vpack.c.b16 %v9405, %v9401
    %v9582 = vpack.c.b16 %v9410, %v9406
    %v9583 = vpack.c.b16 %v9411, %v9407
    %v9584 = vpack.c.b16 %v9412, %v9408
    %v9585 = vpack.c.b16 %v9413, %v9409
    %v9586 = vpack.c.b16 %v9418, %v9414
    %v9587 = vpack.c.b16 %v9419, %v9415
    %v9588 = vpack.c.b16 %v9420, %v9416
    %v9589 = vpack.c.b16 %v9421, %v9417
    %v9590 = vpack.c.b16 %v9426, %v9422
    %v9591 = vpack.c.b16 %v9427, %v9423
    %v9592 = vpack.c.b16 %v9428, %v9424
    %v9593 = vpack.c.b16 %v9429, %v9425
    %v9594 = vpack.c.b16 %v9434, %v9430
    %v9595 = vpack.c.b16 %v9435, %v9431
    %v9596 = vpack.c.b16 %v9436, %v9432
    %v9597 = vpack.c.b16 %v9437, %v9433
    %v9598 = vpack.c.b16 %v9442, %v9438
    %v9599 = vpack.c.b16 %v9443, %v9439
    %v9600 = vpack.c.b16 %v9444, %v9440
    %v9601 = vpack.c.b16 %v9445, %v9441
    %v9602 = vpack.c.b16 %v9450, %v9446
    %v9603 = vpack.c.b16 %v9451, %v9447
    %v9604 = vpack.c.b16 %v9452, %v9448
    %v9605 = vpack.c.b16 %v9453, %v9449
    %v9606 = vpack.c.b16 %v9458, %v9454
    %v9607 = vpack.c.b16 %v9459, %v9455
    %v9608 = vpack.c.b16 %v9460, %v9456
    %v9609 = vpack.c.b16 %v9461, %v9457
    %v9610 = vpack.c.b16 %v9466, %v9462
    %v9611 = vpack.c.b16 %v9467, %v9463
    %v9612 = vpack.c.b16 %v9468, %v9464
    %v9613 = vpack.c.b16 %v9469, %v9465
    %v9614 = vpack.c.b16 %v9474, %v9470
    %v9615 = vpack.c.b16 %v9475, %v9471
    %v9616 = vpack.c.b16 %v9476, %v9472
    %v9617 = vpack.c.b16 %v9477, %v9473
    %v9618 = vpack.c.b16 %v9482, %v9478
    %v9619 = vpack.c.b16 %v9483, %v9479
    %v9620 = vpack.c.b16 %v9484, %v9480
    %v9621 = vpack.c.b16 %v9485, %v9481
    %v9622 = vpack.c.b16 %v9490, %v9486
    %v9623 = vpack.c.b16 %v9491, %v9487
    %v9624 = vpack.c.b16 %v9492, %v9488
    %v9625 = vpack.c.b16 %v9493, %v9489
    %v9626 = vpack.c.b16 %v9498, %v9494
    %v9627 = vpack.c.b16 %v9499, %v9495
    %v9628 = vpack.c.b16 %v9500, %v9496
    %v9629 = vpack.c.b16 %v9501, %v9497
    %9758 = vmatprep.subr.bf16.mxu0 %v9531
    %9759 = vmatpush1.bf16.msra.mxu0 %v9530
    %9760 = vmatprep.subr.bf16.mxu0 %v9527
    %9761 = vmatpush1.bf16.msra.mxu0 %v9526
    %9762 = vmatprep.subr.bf16.mxu0 %v9523
    %9763 = vmatpush1.bf16.msra.mxu0 %v9522
    %9764 = vmatprep.subr.bf16.mxu0 %v9519
    %9765 = vmatpush1.bf16.msra.mxu0 %v9518
    %9766 = vmatprep.subr.bf16.mxu0 %v9515
    %9767 = vmatpush1.bf16.msra.mxu0 %v9514
    %9768 = vmatprep.subr.bf16.mxu0 %v9511
    %9769 = vmatpush1.bf16.msra.mxu0 %v9510
    %9770 = vmatprep.subr.bf16.mxu0 %v9507
    %9771 = vmatpush1.bf16.msra.mxu0 %v9506
    %9772 = vmatprep.subr.bf16.mxu0 %v9503
    %9773 = vmatpush1.bf16.msra.mxu0 %v9502
    %9774 = vmatprep.subr.bf16.mxu0 %v9563
    %9775 = vmatpush2.bf16.msra.mxu0 %v9562
    %9776 = vmatprep.subr.bf16.mxu0 %v9559
    %9777 = vmatpush2.bf16.msra.mxu0 %v9558
    %9778 = vmatprep.subr.bf16.mxu0 %v9555
    %9779 = vmatpush2.bf16.msra.mxu0 %v9554
    %9780 = vmatprep.subr.bf16.mxu0 %v9551
    %9781 = vmatpush2.bf16.msra.mxu0 %v9550
    %9782 = vmatprep.subr.bf16.mxu0 %v9547
    %9783 = vmatpush2.bf16.msra.mxu0 %v9546
    %9784 = vmatprep.subr.bf16.mxu0 %v9543
    %9785 = vmatpush2.bf16.msra.mxu0 %v9542
    %9786 = vmatprep.subr.bf16.mxu0 %v9539
    %9787 = vmatpush2.bf16.msra.mxu0 %v9538
    %9788 = vmatprep.subr.bf16.mxu0 %v9535
    %9789 = vmatpush2.bf16.msra.mxu0 %v9534
    %9790 = vmatprep.mubr.bf16.mxu0 %v9071
    %9791 = vmatmul.mubr.bf16.gmra.mxu0 %v9070
    %v9792 = vpop.f32.mrf.mxu0
    %v9793 = vadd.f32 0.0, %v9792
    %v9794 = vpop.f32.mrf.mxu0
    %v9795 = vadd.f32 0.0, %v9794
    %v9796 = vpop.f32.mrf.mxu0
    %v9797 = vadd.f32 0.0, %v9796
    %v9798 = vpop.f32.mrf.mxu0
    %v9799 = vadd.f32 0.0, %v9798
    %9800 = vmatprep.mubr.bf16.mxu0 %v9107
    %9801 = vmatmul.mubr.bf16.gmra.mxu0 %v9106
    %v9802 = vpop.f32.mrf.mxu0
    %v9803 = vadd.f32 0.0, %v9802
    %v9804 = vpop.f32.mrf.mxu0
    %v9805 = vadd.f32 0.0, %v9804
    %v9806 = vpop.f32.mrf.mxu0
    %v9807 = vadd.f32 0.0, %v9806
    %v9808 = vpop.f32.mrf.mxu0
    %v9809 = vadd.f32 0.0, %v9808
    %9810 = vdwg.mxu0
    %9811 = vmatprep.subr.bf16.mxu0 %v9595
    %9812 = vmatpush1.bf16.msra.mxu0 %v9594
    %9813 = vmatprep.subr.bf16.mxu0 %v9591
    %9814 = vmatpush1.bf16.msra.mxu0 %v9590
    %9815 = vmatprep.subr.bf16.mxu0 %v9587
    %9816 = vmatpush1.bf16.msra.mxu0 %v9586
    %9817 = vmatprep.subr.bf16.mxu0 %v9583
    %9818 = vmatpush1.bf16.msra.mxu0 %v9582
    %9819 = vmatprep.subr.bf16.mxu0 %v9579
    %9820 = vmatpush1.bf16.msra.mxu0 %v9578
    %9821 = vmatprep.subr.bf16.mxu0 %v9575
    %9822 = vmatpush1.bf16.msra.mxu0 %v9574
    %9823 = vmatprep.subr.bf16.mxu0 %v9571
    %9824 = vmatpush1.bf16.msra.mxu0 %v9570
    %9825 = vmatprep.subr.bf16.mxu0 %v9567
    %9826 = vmatpush1.bf16.msra.mxu0 %v9566
    %9827 = vmatprep.subr.bf16.mxu0 %v9627
    %9828 = vmatpush2.bf16.msra.mxu0 %v9626
    %9829 = vmatprep.subr.bf16.mxu0 %v9623
    %9830 = vmatpush2.bf16.msra.mxu0 %v9622
    %9831 = vmatprep.subr.bf16.mxu0 %v9619
    %9832 = vmatpush2.bf16.msra.mxu0 %v9618
    %9833 = vmatprep.subr.bf16.mxu0 %v9615
    %9834 = vmatpush2.bf16.msra.mxu0 %v9614
    %9835 = vmatprep.subr.bf16.mxu0 %v9611
    %9836 = vmatpush2.bf16.msra.mxu0 %v9610
    %9837 = vmatprep.subr.bf16.mxu0 %v9607
    %9838 = vmatpush2.bf16.msra.mxu0 %v9606
    %9839 = vmatprep.subr.bf16.mxu0 %v9603
    %9840 = vmatpush2.bf16.msra.mxu0 %v9602
    %9841 = vmatprep.subr.bf16.mxu0 %v9599
    %9842 = vmatpush2.bf16.msra.mxu0 %v9598
    %9843 = vmatprep.mubr.bf16.mxu0 %v9073
    %9844 = vmatmul.mubr.bf16.gmra.mxu0 %v9072
    %v9845 = vpop.f32.mrf.mxu0
    %v9846 = vadd.f32 %v9793, %v9845
    %v9847 = vpop.f32.mrf.mxu0
    %v9848 = vadd.f32 %v9795, %v9847
    %v9849 = vpop.f32.mrf.mxu0
    %v9850 = vadd.f32 %v9797, %v9849
    %v9851 = vpop.f32.mrf.mxu0
    %v9852 = vadd.f32 %v9799, %v9851
    %9853 = vmatprep.mubr.bf16.mxu0 %v9109
    %9854 = vmatmul.mubr.bf16.gmra.mxu0 %v9108
    %v9855 = vpop.f32.mrf.mxu0
    %v9856 = vadd.f32 %v9803, %v9855
    %v9857 = vpop.f32.mrf.mxu0
    %v9858 = vadd.f32 %v9805, %v9857
    %v9859 = vpop.f32.mrf.mxu0
    %v9860 = vadd.f32 %v9807, %v9859
    %v9861 = vpop.f32.mrf.mxu0
    %v9862 = vadd.f32 %v9809, %v9861
    %9863 = vdwg.mxu0
    %9864 = vmatprep.subr.bf16.mxu0 %v9533
    %9865 = vmatpush1.bf16.msra.mxu0 %v9532
    %9866 = vmatprep.subr.bf16.mxu0 %v9529
    %9867 = vmatpush1.bf16.msra.mxu0 %v9528
    %9868 = vmatprep.subr.bf16.mxu0 %v9525
    %9869 = vmatpush1.bf16.msra.mxu0 %v9524
    %9870 = vmatprep.subr.bf16.mxu0 %v9521
    %9871 = vmatpush1.bf16.msra.mxu0 %v9520
    %9872 = vmatprep.subr.bf16.mxu0 %v9517
    %9873 = vmatpush1.bf16.msra.mxu0 %v9516
    %9874 = vmatprep.subr.bf16.mxu0 %v9513
    %9875 = vmatpush1.bf16.msra.mxu0 %v9512
    %9876 = vmatprep.subr.bf16.mxu0 %v9509
    %9877 = vmatpush1.bf16.msra.mxu0 %v9508
    %9878 = vmatprep.subr.bf16.mxu0 %v9505
    %9879 = vmatpush1.bf16.msra.mxu0 %v9504
    %9880 = vmatprep.subr.bf16.mxu0 %v9565
    %9881 = vmatpush2.bf16.msra.mxu0 %v9564
    %9882 = vmatprep.subr.bf16.mxu0 %v9561
    %9883 = vmatpush2.bf16.msra.mxu0 %v9560
    %9884 = vmatprep.subr.bf16.mxu0 %v9557
    %9885 = vmatpush2.bf16.msra.mxu0 %v9556
    %9886 = vmatprep.subr.bf16.mxu0 %v9553
    %9887 = vmatpush2.bf16.msra.mxu0 %v9552
    %9888 = vmatprep.subr.bf16.mxu0 %v9549
    %9889 = vmatpush2.bf16.msra.mxu0 %v9548
    %9890 = vmatprep.subr.bf16.mxu0 %v9545
    %9891 = vmatpush2.bf16.msra.mxu0 %v9544
    %9892 = vmatprep.subr.bf16.mxu0 %v9541
    %9893 = vmatpush2.bf16.msra.mxu0 %v9540
    %9894 = vmatprep.subr.bf16.mxu0 %v9537
    %9895 = vmatpush2.bf16.msra.mxu0 %v9536
    %9896 = vmatprep.mubr.bf16.mxu0 %v9071
    %9897 = vmatmul.mubr.bf16.gmra.mxu0 %v9070
    %v9898 = vpop.f32.mrf.mxu0
    %v9899 = vadd.f32 0.0, %v9898
    %v9900 = vpop.f32.mrf.mxu0
    %v9901 = vadd.f32 0.0, %v9900
    %v9902 = vpop.f32.mrf.mxu0
    %v9903 = vadd.f32 0.0, %v9902
    %v9904 = vpop.f32.mrf.mxu0
    %v9905 = vadd.f32 0.0, %v9904
    %9906 = vmatprep.mubr.bf16.mxu0 %v9107
    %9907 = vmatmul.mubr.bf16.gmra.mxu0 %v9106
    %v9908 = vpop.f32.mrf.mxu0
    %v9909 = vadd.f32 0.0, %v9908
    %v9910 = vpop.f32.mrf.mxu0
    %v9911 = vadd.f32 0.0, %v9910
    %v9912 = vpop.f32.mrf.mxu0
    %v9913 = vadd.f32 0.0, %v9912
    %v9914 = vpop.f32.mrf.mxu0
    %v9915 = vadd.f32 0.0, %v9914
    %9916 = vdwg.mxu0
    %9917 = vmatprep.subr.bf16.mxu0 %v9597
    %9918 = vmatpush1.bf16.msra.mxu0 %v9596
    %9919 = vmatprep.subr.bf16.mxu0 %v9593
    %9920 = vmatpush1.bf16.msra.mxu0 %v9592
    %9921 = vmatprep.subr.bf16.mxu0 %v9589
    %9922 = vmatpush1.bf16.msra.mxu0 %v9588
    %9923 = vmatprep.subr.bf16.mxu0 %v9585
    %9924 = vmatpush1.bf16.msra.mxu0 %v9584
    %9925 = vmatprep.subr.bf16.mxu0 %v9581
    %9926 = vmatpush1.bf16.msra.mxu0 %v9580
    %9927 = vmatprep.subr.bf16.mxu0 %v9577
    %9928 = vmatpush1.bf16.msra.mxu0 %v9576
    %9929 = vmatprep.subr.bf16.mxu0 %v9573
    %9930 = vmatpush1.bf16.msra.mxu0 %v9572
    %9931 = vmatprep.subr.bf16.mxu0 %v9569
    %9932 = vmatpush1.bf16.msra.mxu0 %v9568
    %9933 = vmatprep.subr.bf16.mxu0 %v9629
    %9934 = vmatpush2.bf16.msra.mxu0 %v9628
    %9935 = vmatprep.subr.bf16.mxu0 %v9625
    %9936 = vmatpush2.bf16.msra.mxu0 %v9624
    %9937 = vmatprep.subr.bf16.mxu0 %v9621
    %9938 = vmatpush2.bf16.msra.mxu0 %v9620
    %9939 = vmatprep.subr.bf16.mxu0 %v9617
    %9940 = vmatpush2.bf16.msra.mxu0 %v9616
    %9941 = vmatprep.subr.bf16.mxu0 %v9613
    %9942 = vmatpush2.bf16.msra.mxu0 %v9612
    %9943 = vmatprep.subr.bf16.mxu0 %v9609
    %9944 = vmatpush2.bf16.msra.mxu0 %v9608
    %9945 = vmatprep.subr.bf16.mxu0 %v9605
    %9946 = vmatpush2.bf16.msra.mxu0 %v9604
    %9947 = vmatprep.subr.bf16.mxu0 %v9601
    %9948 = vmatpush2.bf16.msra.mxu0 %v9600
    %9949 = vmatprep.mubr.bf16.mxu0 %v9073
    %9950 = vmatmul.mubr.bf16.gmra.mxu0 %v9072
    %v9951 = vpop.f32.mrf.mxu0
    %v9952 = vadd.f32 %v9899, %v9951
    %v9953 = vpop.f32.mrf.mxu0
    %v9954 = vadd.f32 %v9901, %v9953
    %v9955 = vpop.f32.mrf.mxu0
    %v9956 = vadd.f32 %v9903, %v9955
    %v9957 = vpop.f32.mrf.mxu0
    %v9958 = vadd.f32 %v9905, %v9957
    %9959 = vmatprep.mubr.bf16.mxu0 %v9109
    %9960 = vmatmul.mubr.bf16.gmra.mxu0 %v9108
    %v9961 = vpop.f32.mrf.mxu0
    %v9962 = vadd.f32 %v9909, %v9961
    %v9963 = vpop.f32.mrf.mxu0
    %v9964 = vadd.f32 %v9911, %v9963
    %v9965 = vpop.f32.mrf.mxu0
    %v9966 = vadd.f32 %v9913, %v9965
    %v9967 = vpop.f32.mrf.mxu0
    %v9968 = vadd.f32 %v9915, %v9967
    %9969 = vdwg.mxu0
    %v9970 = vadd.f32 %v8863, %v9846
    %v9971 = vadd.f32 %v8864, %v9848
    %v9972 = vadd.f32 %v8865, %v9952
    %v9973 = vadd.f32 %v8866, %v9954
    %v9974 = vadd.f32 %v8867, %v9850
    %v9975 = vadd.f32 %v8868, %v9852
    %v9976 = vadd.f32 %v8869, %v9956
    %v9977 = vadd.f32 %v8870, %v9958
    %v9978 = vadd.f32 %v8871, %v9856
    %v9979 = vadd.f32 %v8872, %v9858
    %v9980 = vadd.f32 %v8873, %v9962
    %v9981 = vadd.f32 %v8874, %v9964
    %v9982 = vadd.f32 %v8875, %v9860
    %v9983 = vadd.f32 %v8876, %v9862
    %v9984 = vadd.f32 %v8877, %v9966
    %v9985 = vadd.f32 %v8878, %v9968
    %v9986 = vrot.slane %v7786, 7
    %v9987 = vrot.slane %v9986, 2
    %v9988 = vrot.slane %v8879, 7
    %v9989 = vsel %vm6658, %v9987, %v9988
    %v9990 = vrot.slane %v7801, 7
    %v9991 = vrot.slane %v9990, 2
    %v9992 = vrot.slane %v8880, 7
    %v9993 = vsel %vm6658, %v9991, %v9992
    %s9994 = scalar_lea.vmem [#allocation8], 5120
    %v9995 = vld [vmem:[%s9994] sm:$0xff]
    %v9996 = vld [vmem:[%s9994 + $0x8] sm:$0xff]
    %v9997 = vld [vmem:[%s9994 + $0x10] sm:$0xff]
    %v9998 = vld [vmem:[%s9994 + $0x18] sm:$0xff]
    %v9999 = vld [vmem:[%s9994 + $0x20] sm:$0xff]
    %v10000 = vld [vmem:[%s9994 + $0x28] sm:$0xff]
    %v10001 = vld [vmem:[%s9994 + $0x30] sm:$0xff]
    %v10002 = vld [vmem:[%s9994 + $0x38] sm:$0xff]
    %v10003 = vld [vmem:[%s9994 + $0x40] sm:$0xff]
    %v10004 = vld [vmem:[%s9994 + $0x48] sm:$0xff]
    %v10005 = vld [vmem:[%s9994 + $0x50] sm:$0xff]
    %v10006 = vld [vmem:[%s9994 + $0x58] sm:$0xff]
    %v10007 = vld [vmem:[%s9994 + $0x60] sm:$0xff]
    %v10008 = vld [vmem:[%s9994 + $0x68] sm:$0xff]
    %v10009 = vld [vmem:[%s9994 + $0x70] sm:$0xff]
    %v10010 = vld [vmem:[%s9994 + $0x78] sm:$0xff]
    %v10011 = vld [vmem:[%s9994 + $0x80] sm:$0xff]
    %v10012 = vld [vmem:[%s9994 + $0x88] sm:$0xff]
    %v10013 = vld [vmem:[%s9994 + $0x90] sm:$0xff]
    %v10014 = vld [vmem:[%s9994 + $0x98] sm:$0xff]
    %v10015 = vld [vmem:[%s9994 + $0xa0] sm:$0xff]
    %v10016 = vld [vmem:[%s9994 + $0xa8] sm:$0xff]
    %v10017 = vld [vmem:[%s9994 + $0xb0] sm:$0xff]
    %v10018 = vld [vmem:[%s9994 + $0xb8] sm:$0xff]
    %v10019 = vld [vmem:[%s9994 + $0xc0] sm:$0xff]
    %v10020 = vld [vmem:[%s9994 + $0xc8] sm:$0xff]
    %v10021 = vld [vmem:[%s9994 + $0xd0] sm:$0xff]
    %v10022 = vld [vmem:[%s9994 + $0xd8] sm:$0xff]
    %v10023 = vld [vmem:[%s9994 + $0xe0] sm:$0xff]
    %v10024 = vld [vmem:[%s9994 + $0xe8] sm:$0xff]
    %v10025 = vld [vmem:[%s9994 + $0xf0] sm:$0xff]
    %v10026 = vld [vmem:[%s9994 + $0xf8] sm:$0xff]
    %v10027 = vld [vmem:[%s9994 + $0x100] sm:$0xff]
    %v10028 = vld [vmem:[%s9994 + $0x108] sm:$0xff]
    %v10029 = vld [vmem:[%s9994 + $0x110] sm:$0xff]
    %v10030 = vld [vmem:[%s9994 + $0x118] sm:$0xff]
    %v10031 = vld [vmem:[%s9994 + $0x120] sm:$0xff]
    %v10032 = vld [vmem:[%s9994 + $0x128] sm:$0xff]
    %v10033 = vld [vmem:[%s9994 + $0x130] sm:$0xff]
    %v10034 = vld [vmem:[%s9994 + $0x138] sm:$0xff]
    %v10035 = vld [vmem:[%s9994 + $0x140] sm:$0xff]
    %v10036 = vld [vmem:[%s9994 + $0x148] sm:$0xff]
    %v10037 = vld [vmem:[%s9994 + $0x150] sm:$0xff]
    %v10038 = vld [vmem:[%s9994 + $0x158] sm:$0xff]
    %v10039 = vld [vmem:[%s9994 + $0x160] sm:$0xff]
    %v10040 = vld [vmem:[%s9994 + $0x168] sm:$0xff]
    %v10041 = vld [vmem:[%s9994 + $0x170] sm:$0xff]
    %v10042 = vld [vmem:[%s9994 + $0x178] sm:$0xff]
    %v10043 = vld [vmem:[%s9994 + $0x180] sm:$0xff]
    %v10044 = vld [vmem:[%s9994 + $0x188] sm:$0xff]
    %v10045 = vld [vmem:[%s9994 + $0x190] sm:$0xff]
    %v10046 = vld [vmem:[%s9994 + $0x198] sm:$0xff]
    %v10047 = vld [vmem:[%s9994 + $0x1a0] sm:$0xff]
    %v10048 = vld [vmem:[%s9994 + $0x1a8] sm:$0xff]
    %v10049 = vld [vmem:[%s9994 + $0x1b0] sm:$0xff]
    %v10050 = vld [vmem:[%s9994 + $0x1b8] sm:$0xff]
    %v10051 = vld [vmem:[%s9994 + $0x1c0] sm:$0xff]
    %v10052 = vld [vmem:[%s9994 + $0x1c8] sm:$0xff]
    %v10053 = vld [vmem:[%s9994 + $0x1d0] sm:$0xff]
    %v10054 = vld [vmem:[%s9994 + $0x1d8] sm:$0xff]
    %v10055 = vld [vmem:[%s9994 + $0x1e0] sm:$0xff]
    %v10056 = vld [vmem:[%s9994 + $0x1e8] sm:$0xff]
    %v10057 = vld [vmem:[%s9994 + $0x1f0] sm:$0xff]
    %v10058 = vld [vmem:[%s9994 + $0x1f8] sm:$0xff]
    %v10059 = vld [vmem:[%s9994 + $0x200] sm:$0xff]
    %v10060 = vld [vmem:[%s9994 + $0x208] sm:$0xff]
    %v10061 = vld [vmem:[%s9994 + $0x210] sm:$0xff]
    %v10062 = vld [vmem:[%s9994 + $0x218] sm:$0xff]
    %v10063 = vld [vmem:[%s9994 + $0x220] sm:$0xff]
    %v10064 = vld [vmem:[%s9994 + $0x228] sm:$0xff]
    %v10065 = vld [vmem:[%s9994 + $0x230] sm:$0xff]
    %v10066 = vld [vmem:[%s9994 + $0x238] sm:$0xff]
    %v10067 = vld [vmem:[%s9994 + $0x240] sm:$0xff]
    %v10068 = vld [vmem:[%s9994 + $0x248] sm:$0xff]
    %v10069 = vld [vmem:[%s9994 + $0x250] sm:$0xff]
    %v10070 = vld [vmem:[%s9994 + $0x258] sm:$0xff]
    %v10071 = vld [vmem:[%s9994 + $0x260] sm:$0xff]
    %v10072 = vld [vmem:[%s9994 + $0x268] sm:$0xff]
    %v10073 = vld [vmem:[%s9994 + $0x270] sm:$0xff]
    %v10074 = vld [vmem:[%s9994 + $0x278] sm:$0xff]
    %v10075 = vld [vmem:[%s9994 + $0x280] sm:$0xff]
    %v10076 = vld [vmem:[%s9994 + $0x288] sm:$0xff]
    %v10077 = vld [vmem:[%s9994 + $0x290] sm:$0xff]
    %v10078 = vld [vmem:[%s9994 + $0x298] sm:$0xff]
    %v10079 = vld [vmem:[%s9994 + $0x2a0] sm:$0xff]
    %v10080 = vld [vmem:[%s9994 + $0x2a8] sm:$0xff]
    %v10081 = vld [vmem:[%s9994 + $0x2b0] sm:$0xff]
    %v10082 = vld [vmem:[%s9994 + $0x2b8] sm:$0xff]
    %v10083 = vld [vmem:[%s9994 + $0x2c0] sm:$0xff]
    %v10084 = vld [vmem:[%s9994 + $0x2c8] sm:$0xff]
    %v10085 = vld [vmem:[%s9994 + $0x2d0] sm:$0xff]
    %v10086 = vld [vmem:[%s9994 + $0x2d8] sm:$0xff]
    %v10087 = vld [vmem:[%s9994 + $0x2e0] sm:$0xff]
    %v10088 = vld [vmem:[%s9994 + $0x2e8] sm:$0xff]
    %v10089 = vld [vmem:[%s9994 + $0x2f0] sm:$0xff]
    %v10090 = vld [vmem:[%s9994 + $0x2f8] sm:$0xff]
    %v10091 = vld [vmem:[%s9994 + $0x300] sm:$0xff]
    %v10092 = vld [vmem:[%s9994 + $0x308] sm:$0xff]
    %v10093 = vld [vmem:[%s9994 + $0x310] sm:$0xff]
    %v10094 = vld [vmem:[%s9994 + $0x318] sm:$0xff]
    %v10095 = vld [vmem:[%s9994 + $0x320] sm:$0xff]
    %v10096 = vld [vmem:[%s9994 + $0x328] sm:$0xff]
    %v10097 = vld [vmem:[%s9994 + $0x330] sm:$0xff]
    %v10098 = vld [vmem:[%s9994 + $0x338] sm:$0xff]
    %v10099 = vld [vmem:[%s9994 + $0x340] sm:$0xff]
    %v10100 = vld [vmem:[%s9994 + $0x348] sm:$0xff]
    %v10101 = vld [vmem:[%s9994 + $0x350] sm:$0xff]
    %v10102 = vld [vmem:[%s9994 + $0x358] sm:$0xff]
    %v10103 = vld [vmem:[%s9994 + $0x360] sm:$0xff]
    %v10104 = vld [vmem:[%s9994 + $0x368] sm:$0xff]
    %v10105 = vld [vmem:[%s9994 + $0x370] sm:$0xff]
    %v10106 = vld [vmem:[%s9994 + $0x378] sm:$0xff]
    %v10107 = vld [vmem:[%s9994 + $0x380] sm:$0xff]
    %v10108 = vld [vmem:[%s9994 + $0x388] sm:$0xff]
    %v10109 = vld [vmem:[%s9994 + $0x390] sm:$0xff]
    %v10110 = vld [vmem:[%s9994 + $0x398] sm:$0xff]
    %v10111 = vld [vmem:[%s9994 + $0x3a0] sm:$0xff]
    %v10112 = vld [vmem:[%s9994 + $0x3a8] sm:$0xff]
    %v10113 = vld [vmem:[%s9994 + $0x3b0] sm:$0xff]
    %v10114 = vld [vmem:[%s9994 + $0x3b8] sm:$0xff]
    %v10115 = vld [vmem:[%s9994 + $0x3c0] sm:$0xff]
    %v10116 = vld [vmem:[%s9994 + $0x3c8] sm:$0xff]
    %v10117 = vld [vmem:[%s9994 + $0x3d0] sm:$0xff]
    %v10118 = vld [vmem:[%s9994 + $0x3d8] sm:$0xff]
    %v10119 = vld [vmem:[%s9994 + $0x3e0] sm:$0xff]
    %v10120 = vld [vmem:[%s9994 + $0x3e8] sm:$0xff]
    %v10121 = vld [vmem:[%s9994 + $0x3f0] sm:$0xff]
    %v10122 = vld [vmem:[%s9994 + $0x3f8] sm:$0xff]
    %v10123 = vcombine.low %v6666, %v6670
    %v10124 = vcombine.high %v6666, %v6670
    %v10125 = vcombine.low %v6674, %v9989
    %v10126 = vcombine.high %v6674, %v9989
    %v10128 = vunpack.c.l.s4 1983009808
    %v10129 = vunpack.c.0.s8 %v10128
    %v10130 = vlaneseq
    %v10131 = vshrl.u32 %v10130, 7
    %v10132 = vsub.s32 %v10129, %v10131
    %v10133 = vrot.slane %v10123, %v10132
    %v10135 = vunpack.c.l.s4 1983009808
    %v10136 = vunpack.c.0.s8 %v10135
    %v10137 = vlaneseq
    %v10138 = vshrl.u32 %v10137, 7
    %v10139 = vsub.s32 %v10136, %v10138
    %v10140 = vrot.slane %v10124, %v10139
    %v10142 = vunpack.c.l.s4 1983009808
    %v10143 = vunpack.c.0.s8 %v10142
    %v10144 = vlaneseq
    %v10145 = vshrl.u32 %v10144, 7
    %v10146 = vsub.s32 %v10143, %v10145
    %v10147 = vrot.slane %v10125, %v10146
    %v10149 = vunpack.c.l.s4 1983009808
    %v10150 = vunpack.c.0.s8 %v10149
    %v10151 = vlaneseq
    %v10152 = vshrl.u32 %v10151, 7
    %v10153 = vsub.s32 %v10150, %v10152
    %v10154 = vrot.slane %v10126, %v10153
    %v10155 = vcombine.low %v10133, %v10147
    %v10156 = vcombine.high %v10133, %v10147
    %v10157 = vcombine.low %v10140, %v10154
    %v10158 = vcombine.high %v10140, %v10154
    %v10159 = vcombine.low %v6682, %v6686
    %v10160 = vcombine.high %v6682, %v6686
    %v10161 = vcombine.low %v6690, %v9993
    %v10162 = vcombine.high %v6690, %v9993
    %v10164 = vunpack.c.l.s4 1983009808
    %v10165 = vunpack.c.0.s8 %v10164
    %v10166 = vlaneseq
    %v10167 = vshrl.u32 %v10166, 7
    %v10168 = vsub.s32 %v10165, %v10167
    %v10169 = vrot.slane %v10159, %v10168
    %v10171 = vunpack.c.l.s4 1983009808
    %v10172 = vunpack.c.0.s8 %v10171
    %v10173 = vlaneseq
    %v10174 = vshrl.u32 %v10173, 7
    %v10175 = vsub.s32 %v10172, %v10174
    %v10176 = vrot.slane %v10160, %v10175
    %v10178 = vunpack.c.l.s4 1983009808
    %v10179 = vunpack.c.0.s8 %v10178
    %v10180 = vlaneseq
    %v10181 = vshrl.u32 %v10180, 7
    %v10182 = vsub.s32 %v10179, %v10181
    %v10183 = vrot.slane %v10161, %v10182
    %v10185 = vunpack.c.l.s4 1983009808
    %v10186 = vunpack.c.0.s8 %v10185
    %v10187 = vlaneseq
    %v10188 = vshrl.u32 %v10187, 7
    %v10189 = vsub.s32 %v10186, %v10188
    %v10190 = vrot.slane %v10162, %v10189
    %v10191 = vcombine.low %v10169, %v10183
    %v10192 = vcombine.high %v10169, %v10183
    %v10193 = vcombine.low %v10176, %v10190
    %v10194 = vcombine.high %v10176, %v10190
    %v10331 = vunpack.c.l.b16 %v9995
    %v10332 = vunpack.c.h.b16 %v9995
    %v10333 = vunpack.c.l.b16 %v9996
    %v10334 = vunpack.c.h.b16 %v9996
    %v10335 = vunpack.c.l.b16 %v9997
    %v10336 = vunpack.c.h.b16 %v9997
    %v10337 = vunpack.c.l.b16 %v9998
    %v10338 = vunpack.c.h.b16 %v9998
    %v10339 = vunpack.c.l.b16 %v9999
    %v10340 = vunpack.c.h.b16 %v9999
    %v10341 = vunpack.c.l.b16 %v10000
    %v10342 = vunpack.c.h.b16 %v10000
    %v10343 = vunpack.c.l.b16 %v10001
    %v10344 = vunpack.c.h.b16 %v10001
    %v10345 = vunpack.c.l.b16 %v10002
    %v10346 = vunpack.c.h.b16 %v10002
    %v10347 = vunpack.c.l.b16 %v10003
    %v10348 = vunpack.c.h.b16 %v10003
    %v10349 = vunpack.c.l.b16 %v10004
    %v10350 = vunpack.c.h.b16 %v10004
    %v10351 = vunpack.c.l.b16 %v10005
    %v10352 = vunpack.c.h.b16 %v10005
    %v10353 = vunpack.c.l.b16 %v10006
    %v10354 = vunpack.c.h.b16 %v10006
    %v10355 = vunpack.c.l.b16 %v10007
    %v10356 = vunpack.c.h.b16 %v10007
    %v10357 = vunpack.c.l.b16 %v10008
    %v10358 = vunpack.c.h.b16 %v10008
    %v10359 = vunpack.c.l.b16 %v10009
    %v10360 = vunpack.c.h.b16 %v10009
    %v10361 = vunpack.c.l.b16 %v10010
    %v10362 = vunpack.c.h.b16 %v10010
    %v10363 = vunpack.c.l.b16 %v10011
    %v10364 = vunpack.c.h.b16 %v10011
    %v10365 = vunpack.c.l.b16 %v10012
    %v10366 = vunpack.c.h.b16 %v10012
    %v10367 = vunpack.c.l.b16 %v10013
    %v10368 = vunpack.c.h.b16 %v10013
    %v10369 = vunpack.c.l.b16 %v10014
    %v10370 = vunpack.c.h.b16 %v10014
    %v10371 = vunpack.c.l.b16 %v10015
    %v10372 = vunpack.c.h.b16 %v10015
    %v10373 = vunpack.c.l.b16 %v10016
    %v10374 = vunpack.c.h.b16 %v10016
    %v10375 = vunpack.c.l.b16 %v10017
    %v10376 = vunpack.c.h.b16 %v10017
    %v10377 = vunpack.c.l.b16 %v10018
    %v10378 = vunpack.c.h.b16 %v10018
    %v10379 = vunpack.c.l.b16 %v10019
    %v10380 = vunpack.c.h.b16 %v10019
    %v10381 = vunpack.c.l.b16 %v10020
    %v10382 = vunpack.c.h.b16 %v10020
    %v10383 = vunpack.c.l.b16 %v10021
    %v10384 = vunpack.c.h.b16 %v10021
    %v10385 = vunpack.c.l.b16 %v10022
    %v10386 = vunpack.c.h.b16 %v10022
    %v10387 = vunpack.c.l.b16 %v10023
    %v10388 = vunpack.c.h.b16 %v10023
    %v10389 = vunpack.c.l.b16 %v10024
    %v10390 = vunpack.c.h.b16 %v10024
    %v10391 = vunpack.c.l.b16 %v10025
    %v10392 = vunpack.c.h.b16 %v10025
    %v10393 = vunpack.c.l.b16 %v10026
    %v10394 = vunpack.c.h.b16 %v10026
    %v10395 = vunpack.c.l.b16 %v10027
    %v10396 = vunpack.c.h.b16 %v10027
    %v10397 = vunpack.c.l.b16 %v10028
    %v10398 = vunpack.c.h.b16 %v10028
    %v10399 = vunpack.c.l.b16 %v10029
    %v10400 = vunpack.c.h.b16 %v10029
    %v10401 = vunpack.c.l.b16 %v10030
    %v10402 = vunpack.c.h.b16 %v10030
    %v10403 = vunpack.c.l.b16 %v10031
    %v10404 = vunpack.c.h.b16 %v10031
    %v10405 = vunpack.c.l.b16 %v10032
    %v10406 = vunpack.c.h.b16 %v10032
    %v10407 = vunpack.c.l.b16 %v10033
    %v10408 = vunpack.c.h.b16 %v10033
    %v10409 = vunpack.c.l.b16 %v10034
    %v10410 = vunpack.c.h.b16 %v10034
    %v10411 = vunpack.c.l.b16 %v10035
    %v10412 = vunpack.c.h.b16 %v10035
    %v10413 = vunpack.c.l.b16 %v10036
    %v10414 = vunpack.c.h.b16 %v10036
    %v10415 = vunpack.c.l.b16 %v10037
    %v10416 = vunpack.c.h.b16 %v10037
    %v10417 = vunpack.c.l.b16 %v10038
    %v10418 = vunpack.c.h.b16 %v10038
    %v10419 = vunpack.c.l.b16 %v10039
    %v10420 = vunpack.c.h.b16 %v10039
    %v10421 = vunpack.c.l.b16 %v10040
    %v10422 = vunpack.c.h.b16 %v10040
    %v10423 = vunpack.c.l.b16 %v10041
    %v10424 = vunpack.c.h.b16 %v10041
    %v10425 = vunpack.c.l.b16 %v10042
    %v10426 = vunpack.c.h.b16 %v10042
    %v10427 = vunpack.c.l.b16 %v10043
    %v10428 = vunpack.c.h.b16 %v10043
    %v10429 = vunpack.c.l.b16 %v10044
    %v10430 = vunpack.c.h.b16 %v10044
    %v10431 = vunpack.c.l.b16 %v10045
    %v10432 = vunpack.c.h.b16 %v10045
    %v10433 = vunpack.c.l.b16 %v10046
    %v10434 = vunpack.c.h.b16 %v10046
    %v10435 = vunpack.c.l.b16 %v10047
    %v10436 = vunpack.c.h.b16 %v10047
    %v10437 = vunpack.c.l.b16 %v10048
    %v10438 = vunpack.c.h.b16 %v10048
    %v10439 = vunpack.c.l.b16 %v10049
    %v10440 = vunpack.c.h.b16 %v10049
    %v10441 = vunpack.c.l.b16 %v10050
    %v10442 = vunpack.c.h.b16 %v10050
    %v10443 = vunpack.c.l.b16 %v10051
    %v10444 = vunpack.c.h.b16 %v10051
    %v10445 = vunpack.c.l.b16 %v10052
    %v10446 = vunpack.c.h.b16 %v10052
    %v10447 = vunpack.c.l.b16 %v10053
    %v10448 = vunpack.c.h.b16 %v10053
    %v10449 = vunpack.c.l.b16 %v10054
    %v10450 = vunpack.c.h.b16 %v10054
    %v10451 = vunpack.c.l.b16 %v10055
    %v10452 = vunpack.c.h.b16 %v10055
    %v10453 = vunpack.c.l.b16 %v10056
    %v10454 = vunpack.c.h.b16 %v10056
    %v10455 = vunpack.c.l.b16 %v10057
    %v10456 = vunpack.c.h.b16 %v10057
    %v10457 = vunpack.c.l.b16 %v10058
    %v10458 = vunpack.c.h.b16 %v10058
    %v10459 = vunpack.c.l.b16 %v10059
    %v10460 = vunpack.c.h.b16 %v10059
    %v10461 = vunpack.c.l.b16 %v10060
    %v10462 = vunpack.c.h.b16 %v10060
    %v10463 = vunpack.c.l.b16 %v10061
    %v10464 = vunpack.c.h.b16 %v10061
    %v10465 = vunpack.c.l.b16 %v10062
    %v10466 = vunpack.c.h.b16 %v10062
    %v10467 = vunpack.c.l.b16 %v10063
    %v10468 = vunpack.c.h.b16 %v10063
    %v10469 = vunpack.c.l.b16 %v10064
    %v10470 = vunpack.c.h.b16 %v10064
    %v10471 = vunpack.c.l.b16 %v10065
    %v10472 = vunpack.c.h.b16 %v10065
    %v10473 = vunpack.c.l.b16 %v10066
    %v10474 = vunpack.c.h.b16 %v10066
    %v10475 = vunpack.c.l.b16 %v10067
    %v10476 = vunpack.c.h.b16 %v10067
    %v10477 = vunpack.c.l.b16 %v10068
    %v10478 = vunpack.c.h.b16 %v10068
    %v10479 = vunpack.c.l.b16 %v10069
    %v10480 = vunpack.c.h.b16 %v10069
    %v10481 = vunpack.c.l.b16 %v10070
    %v10482 = vunpack.c.h.b16 %v10070
    %v10483 = vunpack.c.l.b16 %v10071
    %v10484 = vunpack.c.h.b16 %v10071
    %v10485 = vunpack.c.l.b16 %v10072
    %v10486 = vunpack.c.h.b16 %v10072
    %v10487 = vunpack.c.l.b16 %v10073
    %v10488 = vunpack.c.h.b16 %v10073
    %v10489 = vunpack.c.l.b16 %v10074
    %v10490 = vunpack.c.h.b16 %v10074
    %v10491 = vunpack.c.l.b16 %v10075
    %v10492 = vunpack.c.h.b16 %v10075
    %v10493 = vunpack.c.l.b16 %v10076
    %v10494 = vunpack.c.h.b16 %v10076
    %v10495 = vunpack.c.l.b16 %v10077
    %v10496 = vunpack.c.h.b16 %v10077
    %v10497 = vunpack.c.l.b16 %v10078
    %v10498 = vunpack.c.h.b16 %v10078
    %v10499 = vunpack.c.l.b16 %v10079
    %v10500 = vunpack.c.h.b16 %v10079
    %v10501 = vunpack.c.l.b16 %v10080
    %v10502 = vunpack.c.h.b16 %v10080
    %v10503 = vunpack.c.l.b16 %v10081
    %v10504 = vunpack.c.h.b16 %v10081
    %v10505 = vunpack.c.l.b16 %v10082
    %v10506 = vunpack.c.h.b16 %v10082
    %v10507 = vunpack.c.l.b16 %v10083
    %v10508 = vunpack.c.h.b16 %v10083
    %v10509 = vunpack.c.l.b16 %v10084
    %v10510 = vunpack.c.h.b16 %v10084
    %v10511 = vunpack.c.l.b16 %v10085
    %v10512 = vunpack.c.h.b16 %v10085
    %v10513 = vunpack.c.l.b16 %v10086
    %v10514 = vunpack.c.h.b16 %v10086
    %v10515 = vunpack.c.l.b16 %v10087
    %v10516 = vunpack.c.h.b16 %v10087
    %v10517 = vunpack.c.l.b16 %v10088
    %v10518 = vunpack.c.h.b16 %v10088
    %v10519 = vunpack.c.l.b16 %v10089
    %v10520 = vunpack.c.h.b16 %v10089
    %v10521 = vunpack.c.l.b16 %v10090
    %v10522 = vunpack.c.h.b16 %v10090
    %v10523 = vunpack.c.l.b16 %v10091
    %v10524 = vunpack.c.h.b16 %v10091
    %v10525 = vunpack.c.l.b16 %v10092
    %v10526 = vunpack.c.h.b16 %v10092
    %v10527 = vunpack.c.l.b16 %v10093
    %v10528 = vunpack.c.h.b16 %v10093
    %v10529 = vunpack.c.l.b16 %v10094
    %v10530 = vunpack.c.h.b16 %v10094
    %v10531 = vunpack.c.l.b16 %v10095
    %v10532 = vunpack.c.h.b16 %v10095
    %v10533 = vunpack.c.l.b16 %v10096
    %v10534 = vunpack.c.h.b16 %v10096
    %v10535 = vunpack.c.l.b16 %v10097
    %v10536 = vunpack.c.h.b16 %v10097
    %v10537 = vunpack.c.l.b16 %v10098
    %v10538 = vunpack.c.h.b16 %v10098
    %v10539 = vunpack.c.l.b16 %v10099
    %v10540 = vunpack.c.h.b16 %v10099
    %v10541 = vunpack.c.l.b16 %v10100
    %v10542 = vunpack.c.h.b16 %v10100
    %v10543 = vunpack.c.l.b16 %v10101
    %v10544 = vunpack.c.h.b16 %v10101
    %v10545 = vunpack.c.l.b16 %v10102
    %v10546 = vunpack.c.h.b16 %v10102
    %v10547 = vunpack.c.l.b16 %v10103
    %v10548 = vunpack.c.h.b16 %v10103
    %v10549 = vunpack.c.l.b16 %v10104
    %v10550 = vunpack.c.h.b16 %v10104
    %v10551 = vunpack.c.l.b16 %v10105
    %v10552 = vunpack.c.h.b16 %v10105
    %v10553 = vunpack.c.l.b16 %v10106
    %v10554 = vunpack.c.h.b16 %v10106
    %v10555 = vunpack.c.l.b16 %v10107
    %v10556 = vunpack.c.h.b16 %v10107
    %v10557 = vunpack.c.l.b16 %v10108
    %v10558 = vunpack.c.h.b16 %v10108
    %v10559 = vunpack.c.l.b16 %v10109
    %v10560 = vunpack.c.h.b16 %v10109
    %v10561 = vunpack.c.l.b16 %v10110
    %v10562 = vunpack.c.h.b16 %v10110
    %v10563 = vunpack.c.l.b16 %v10111
    %v10564 = vunpack.c.h.b16 %v10111
    %v10565 = vunpack.c.l.b16 %v10112
    %v10566 = vunpack.c.h.b16 %v10112
    %v10567 = vunpack.c.l.b16 %v10113
    %v10568 = vunpack.c.h.b16 %v10113
    %v10569 = vunpack.c.l.b16 %v10114
    %v10570 = vunpack.c.h.b16 %v10114
    %v10571 = vunpack.c.l.b16 %v10115
    %v10572 = vunpack.c.h.b16 %v10115
    %v10573 = vunpack.c.l.b16 %v10116
    %v10574 = vunpack.c.h.b16 %v10116
    %v10575 = vunpack.c.l.b16 %v10117
    %v10576 = vunpack.c.h.b16 %v10117
    %v10577 = vunpack.c.l.b16 %v10118
    %v10578 = vunpack.c.h.b16 %v10118
    %v10579 = vunpack.c.l.b16 %v10119
    %v10580 = vunpack.c.h.b16 %v10119
    %v10581 = vunpack.c.l.b16 %v10120
    %v10582 = vunpack.c.h.b16 %v10120
    %v10583 = vunpack.c.l.b16 %v10121
    %v10584 = vunpack.c.h.b16 %v10121
    %v10585 = vunpack.c.l.b16 %v10122
    %v10586 = vunpack.c.h.b16 %v10122
    %v10587 = vpack.c.b16 %v10335, %v10331
    %v10588 = vpack.c.b16 %v10336, %v10332
    %v10589 = vpack.c.b16 %v10337, %v10333
    %v10590 = vpack.c.b16 %v10338, %v10334
    %v10591 = vpack.c.b16 %v10343, %v10339
    %v10592 = vpack.c.b16 %v10344, %v10340
    %v10593 = vpack.c.b16 %v10345, %v10341
    %v10594 = vpack.c.b16 %v10346, %v10342
    %v10595 = vpack.c.b16 %v10351, %v10347
    %v10596 = vpack.c.b16 %v10352, %v10348
    %v10597 = vpack.c.b16 %v10353, %v10349
    %v10598 = vpack.c.b16 %v10354, %v10350
    %v10599 = vpack.c.b16 %v10359, %v10355
    %v10600 = vpack.c.b16 %v10360, %v10356
    %v10601 = vpack.c.b16 %v10361, %v10357
    %v10602 = vpack.c.b16 %v10362, %v10358
    %v10603 = vpack.c.b16 %v10367, %v10363
    %v10604 = vpack.c.b16 %v10368, %v10364
    %v10605 = vpack.c.b16 %v10369, %v10365
    %v10606 = vpack.c.b16 %v10370, %v10366
    %v10607 = vpack.c.b16 %v10375, %v10371
    %v10608 = vpack.c.b16 %v10376, %v10372
    %v10609 = vpack.c.b16 %v10377, %v10373
    %v10610 = vpack.c.b16 %v10378, %v10374
    %v10611 = vpack.c.b16 %v10383, %v10379
    %v10612 = vpack.c.b16 %v10384, %v10380
    %v10613 = vpack.c.b16 %v10385, %v10381
    %v10614 = vpack.c.b16 %v10386, %v10382
    %v10615 = vpack.c.b16 %v10391, %v10387
    %v10616 = vpack.c.b16 %v10392, %v10388
    %v10617 = vpack.c.b16 %v10393, %v10389
    %v10618 = vpack.c.b16 %v10394, %v10390
    %v10619 = vpack.c.b16 %v10399, %v10395
    %v10620 = vpack.c.b16 %v10400, %v10396
    %v10621 = vpack.c.b16 %v10401, %v10397
    %v10622 = vpack.c.b16 %v10402, %v10398
    %v10623 = vpack.c.b16 %v10407, %v10403
    %v10624 = vpack.c.b16 %v10408, %v10404
    %v10625 = vpack.c.b16 %v10409, %v10405
    %v10626 = vpack.c.b16 %v10410, %v10406
    %v10627 = vpack.c.b16 %v10415, %v10411
    %v10628 = vpack.c.b16 %v10416, %v10412
    %v10629 = vpack.c.b16 %v10417, %v10413
    %v10630 = vpack.c.b16 %v10418, %v10414
    %v10631 = vpack.c.b16 %v10423, %v10419
    %v10632 = vpack.c.b16 %v10424, %v10420
    %v10633 = vpack.c.b16 %v10425, %v10421
    %v10634 = vpack.c.b16 %v10426, %v10422
    %v10635 = vpack.c.b16 %v10431, %v10427
    %v10636 = vpack.c.b16 %v10432, %v10428
    %v10637 = vpack.c.b16 %v10433, %v10429
    %v10638 = vpack.c.b16 %v10434, %v10430
    %v10639 = vpack.c.b16 %v10439, %v10435
    %v10640 = vpack.c.b16 %v10440, %v10436
    %v10641 = vpack.c.b16 %v10441, %v10437
    %v10642 = vpack.c.b16 %v10442, %v10438
    %v10643 = vpack.c.b16 %v10447, %v10443
    %v10644 = vpack.c.b16 %v10448, %v10444
    %v10645 = vpack.c.b16 %v10449, %v10445
    %v10646 = vpack.c.b16 %v10450, %v10446
    %v10647 = vpack.c.b16 %v10455, %v10451
    %v10648 = vpack.c.b16 %v10456, %v10452
    %v10649 = vpack.c.b16 %v10457, %v10453
    %v10650 = vpack.c.b16 %v10458, %v10454
    %v10651 = vpack.c.b16 %v10463, %v10459
    %v10652 = vpack.c.b16 %v10464, %v10460
    %v10653 = vpack.c.b16 %v10465, %v10461
    %v10654 = vpack.c.b16 %v10466, %v10462
    %v10655 = vpack.c.b16 %v10471, %v10467
    %v10656 = vpack.c.b16 %v10472, %v10468
    %v10657 = vpack.c.b16 %v10473, %v10469
    %v10658 = vpack.c.b16 %v10474, %v10470
    %v10659 = vpack.c.b16 %v10479, %v10475
    %v10660 = vpack.c.b16 %v10480, %v10476
    %v10661 = vpack.c.b16 %v10481, %v10477
    %v10662 = vpack.c.b16 %v10482, %v10478
    %v10663 = vpack.c.b16 %v10487, %v10483
    %v10664 = vpack.c.b16 %v10488, %v10484
    %v10665 = vpack.c.b16 %v10489, %v10485
    %v10666 = vpack.c.b16 %v10490, %v10486
    %v10667 = vpack.c.b16 %v10495, %v10491
    %v10668 = vpack.c.b16 %v10496, %v10492
    %v10669 = vpack.c.b16 %v10497, %v10493
    %v10670 = vpack.c.b16 %v10498, %v10494
    %v10671 = vpack.c.b16 %v10503, %v10499
    %v10672 = vpack.c.b16 %v10504, %v10500
    %v10673 = vpack.c.b16 %v10505, %v10501
    %v10674 = vpack.c.b16 %v10506, %v10502
    %v10675 = vpack.c.b16 %v10511, %v10507
    %v10676 = vpack.c.b16 %v10512, %v10508
    %v10677 = vpack.c.b16 %v10513, %v10509
    %v10678 = vpack.c.b16 %v10514, %v10510
    %v10679 = vpack.c.b16 %v10519, %v10515
    %v10680 = vpack.c.b16 %v10520, %v10516
    %v10681 = vpack.c.b16 %v10521, %v10517
    %v10682 = vpack.c.b16 %v10522, %v10518
    %v10683 = vpack.c.b16 %v10527, %v10523
    %v10684 = vpack.c.b16 %v10528, %v10524
    %v10685 = vpack.c.b16 %v10529, %v10525
    %v10686 = vpack.c.b16 %v10530, %v10526
    %v10687 = vpack.c.b16 %v10535, %v10531
    %v10688 = vpack.c.b16 %v10536, %v10532
    %v10689 = vpack.c.b16 %v10537, %v10533
    %v10690 = vpack.c.b16 %v10538, %v10534
    %v10691 = vpack.c.b16 %v10543, %v10539
    %v10692 = vpack.c.b16 %v10544, %v10540
    %v10693 = vpack.c.b16 %v10545, %v10541
    %v10694 = vpack.c.b16 %v10546, %v10542
    %v10695 = vpack.c.b16 %v10551, %v10547
    %v10696 = vpack.c.b16 %v10552, %v10548
    %v10697 = vpack.c.b16 %v10553, %v10549
    %v10698 = vpack.c.b16 %v10554, %v10550
    %v10699 = vpack.c.b16 %v10559, %v10555
    %v10700 = vpack.c.b16 %v10560, %v10556
    %v10701 = vpack.c.b16 %v10561, %v10557
    %v10702 = vpack.c.b16 %v10562, %v10558
    %v10703 = vpack.c.b16 %v10567, %v10563
    %v10704 = vpack.c.b16 %v10568, %v10564
    %v10705 = vpack.c.b16 %v10569, %v10565
    %v10706 = vpack.c.b16 %v10570, %v10566
    %v10707 = vpack.c.b16 %v10575, %v10571
    %v10708 = vpack.c.b16 %v10576, %v10572
    %v10709 = vpack.c.b16 %v10577, %v10573
    %v10710 = vpack.c.b16 %v10578, %v10574
    %v10711 = vpack.c.b16 %v10583, %v10579
    %v10712 = vpack.c.b16 %v10584, %v10580
    %v10713 = vpack.c.b16 %v10585, %v10581
    %v10714 = vpack.c.b16 %v10586, %v10582
    %10843 = vmatprep.subr.bf16.mxu0 %v10616
    %10844 = vmatpush1.bf16.msra.mxu0 %v10615
    %10845 = vmatprep.subr.bf16.mxu0 %v10612
    %10846 = vmatpush1.bf16.msra.mxu0 %v10611
    %10847 = vmatprep.subr.bf16.mxu0 %v10608
    %10848 = vmatpush1.bf16.msra.mxu0 %v10607
    %10849 = vmatprep.subr.bf16.mxu0 %v10604
    %10850 = vmatpush1.bf16.msra.mxu0 %v10603
    %10851 = vmatprep.subr.bf16.mxu0 %v10600
    %10852 = vmatpush1.bf16.msra.mxu0 %v10599
    %10853 = vmatprep.subr.bf16.mxu0 %v10596
    %10854 = vmatpush1.bf16.msra.mxu0 %v10595
    %10855 = vmatprep.subr.bf16.mxu0 %v10592
    %10856 = vmatpush1.bf16.msra.mxu0 %v10591
    %10857 = vmatprep.subr.bf16.mxu0 %v10588
    %10858 = vmatpush1.bf16.msra.mxu0 %v10587
    %10859 = vmatprep.subr.bf16.mxu0 %v10648
    %10860 = vmatpush2.bf16.msra.mxu0 %v10647
    %10861 = vmatprep.subr.bf16.mxu0 %v10644
    %10862 = vmatpush2.bf16.msra.mxu0 %v10643
    %10863 = vmatprep.subr.bf16.mxu0 %v10640
    %10864 = vmatpush2.bf16.msra.mxu0 %v10639
    %10865 = vmatprep.subr.bf16.mxu0 %v10636
    %10866 = vmatpush2.bf16.msra.mxu0 %v10635
    %10867 = vmatprep.subr.bf16.mxu0 %v10632
    %10868 = vmatpush2.bf16.msra.mxu0 %v10631
    %10869 = vmatprep.subr.bf16.mxu0 %v10628
    %10870 = vmatpush2.bf16.msra.mxu0 %v10627
    %10871 = vmatprep.subr.bf16.mxu0 %v10624
    %10872 = vmatpush2.bf16.msra.mxu0 %v10623
    %10873 = vmatprep.subr.bf16.mxu0 %v10620
    %10874 = vmatpush2.bf16.msra.mxu0 %v10619
    %10875 = vmatprep.mubr.bf16.mxu0 %v10156
    %10876 = vmatmul.mubr.bf16.gmra.mxu0 %v10155
    %v10877 = vpop.f32.mrf.mxu0
    %v10878 = vadd.f32 0.0, %v10877
    %v10879 = vpop.f32.mrf.mxu0
    %v10880 = vadd.f32 0.0, %v10879
    %v10881 = vpop.f32.mrf.mxu0
    %v10882 = vadd.f32 0.0, %v10881
    %v10883 = vpop.f32.mrf.mxu0
    %v10884 = vadd.f32 0.0, %v10883
    %10885 = vmatprep.mubr.bf16.mxu0 %v10192
    %10886 = vmatmul.mubr.bf16.gmra.mxu0 %v10191
    %v10887 = vpop.f32.mrf.mxu0
    %v10888 = vadd.f32 0.0, %v10887
    %v10889 = vpop.f32.mrf.mxu0
    %v10890 = vadd.f32 0.0, %v10889
    %v10891 = vpop.f32.mrf.mxu0
    %v10892 = vadd.f32 0.0, %v10891
    %v10893 = vpop.f32.mrf.mxu0
    %v10894 = vadd.f32 0.0, %v10893
    %10895 = vdwg.mxu0
    %10896 = vmatprep.subr.bf16.mxu0 %v10680
    %10897 = vmatpush1.bf16.msra.mxu0 %v10679
    %10898 = vmatprep.subr.bf16.mxu0 %v10676
    %10899 = vmatpush1.bf16.msra.mxu0 %v10675
    %10900 = vmatprep.subr.bf16.mxu0 %v10672
    %10901 = vmatpush1.bf16.msra.mxu0 %v10671
    %10902 = vmatprep.subr.bf16.mxu0 %v10668
    %10903 = vmatpush1.bf16.msra.mxu0 %v10667
    %10904 = vmatprep.subr.bf16.mxu0 %v10664
    %10905 = vmatpush1.bf16.msra.mxu0 %v10663
    %10906 = vmatprep.subr.bf16.mxu0 %v10660
    %10907 = vmatpush1.bf16.msra.mxu0 %v10659
    %10908 = vmatprep.subr.bf16.mxu0 %v10656
    %10909 = vmatpush1.bf16.msra.mxu0 %v10655
    %10910 = vmatprep.subr.bf16.mxu0 %v10652
    %10911 = vmatpush1.bf16.msra.mxu0 %v10651
    %10912 = vmatprep.subr.bf16.mxu0 %v10712
    %10913 = vmatpush2.bf16.msra.mxu0 %v10711
    %10914 = vmatprep.subr.bf16.mxu0 %v10708
    %10915 = vmatpush2.bf16.msra.mxu0 %v10707
    %10916 = vmatprep.subr.bf16.mxu0 %v10704
    %10917 = vmatpush2.bf16.msra.mxu0 %v10703
    %10918 = vmatprep.subr.bf16.mxu0 %v10700
    %10919 = vmatpush2.bf16.msra.mxu0 %v10699
    %10920 = vmatprep.subr.bf16.mxu0 %v10696
    %10921 = vmatpush2.bf16.msra.mxu0 %v10695
    %10922 = vmatprep.subr.bf16.mxu0 %v10692
    %10923 = vmatpush2.bf16.msra.mxu0 %v10691
    %10924 = vmatprep.subr.bf16.mxu0 %v10688
    %10925 = vmatpush2.bf16.msra.mxu0 %v10687
    %10926 = vmatprep.subr.bf16.mxu0 %v10684
    %10927 = vmatpush2.bf16.msra.mxu0 %v10683
    %10928 = vmatprep.mubr.bf16.mxu0 %v10158
    %10929 = vmatmul.mubr.bf16.gmra.mxu0 %v10157
    %v10930 = vpop.f32.mrf.mxu0
    %v10931 = vadd.f32 %v10878, %v10930
    %v10932 = vpop.f32.mrf.mxu0
    %v10933 = vadd.f32 %v10880, %v10932
    %v10934 = vpop.f32.mrf.mxu0
    %v10935 = vadd.f32 %v10882, %v10934
    %v10936 = vpop.f32.mrf.mxu0
    %v10937 = vadd.f32 %v10884, %v10936
    %10938 = vmatprep.mubr.bf16.mxu0 %v10194
    %10939 = vmatmul.mubr.bf16.gmra.mxu0 %v10193
    %v10940 = vpop.f32.mrf.mxu0
    %v10941 = vadd.f32 %v10888, %v10940
    %v10942 = vpop.f32.mrf.mxu0
    %v10943 = vadd.f32 %v10890, %v10942
    %v10944 = vpop.f32.mrf.mxu0
    %v10945 = vadd.f32 %v10892, %v10944
    %v10946 = vpop.f32.mrf.mxu0
    %v10947 = vadd.f32 %v10894, %v10946
    %10948 = vdwg.mxu0
    %10949 = vmatprep.subr.bf16.mxu0 %v10618
    %10950 = vmatpush1.bf16.msra.mxu0 %v10617
    %10951 = vmatprep.subr.bf16.mxu0 %v10614
    %10952 = vmatpush1.bf16.msra.mxu0 %v10613
    %10953 = vmatprep.subr.bf16.mxu0 %v10610
    %10954 = vmatpush1.bf16.msra.mxu0 %v10609
    %10955 = vmatprep.subr.bf16.mxu0 %v10606
    %10956 = vmatpush1.bf16.msra.mxu0 %v10605
    %10957 = vmatprep.subr.bf16.mxu0 %v10602
    %10958 = vmatpush1.bf16.msra.mxu0 %v10601
    %10959 = vmatprep.subr.bf16.mxu0 %v10598
    %10960 = vmatpush1.bf16.msra.mxu0 %v10597
    %10961 = vmatprep.subr.bf16.mxu0 %v10594
    %10962 = vmatpush1.bf16.msra.mxu0 %v10593
    %10963 = vmatprep.subr.bf16.mxu0 %v10590
    %10964 = vmatpush1.bf16.msra.mxu0 %v10589
    %10965 = vmatprep.subr.bf16.mxu0 %v10650
    %10966 = vmatpush2.bf16.msra.mxu0 %v10649
    %10967 = vmatprep.subr.bf16.mxu0 %v10646
    %10968 = vmatpush2.bf16.msra.mxu0 %v10645
    %10969 = vmatprep.subr.bf16.mxu0 %v10642
    %10970 = vmatpush2.bf16.msra.mxu0 %v10641
    %10971 = vmatprep.subr.bf16.mxu0 %v10638
    %10972 = vmatpush2.bf16.msra.mxu0 %v10637
    %10973 = vmatprep.subr.bf16.mxu0 %v10634
    %10974 = vmatpush2.bf16.msra.mxu0 %v10633
    %10975 = vmatprep.subr.bf16.mxu0 %v10630
    %10976 = vmatpush2.bf16.msra.mxu0 %v10629
    %10977 = vmatprep.subr.bf16.mxu0 %v10626
    %10978 = vmatpush2.bf16.msra.mxu0 %v10625
    %10979 = vmatprep.subr.bf16.mxu0 %v10622
    %10980 = vmatpush2.bf16.msra.mxu0 %v10621
    %10981 = vmatprep.mubr.bf16.mxu0 %v10156
    %10982 = vmatmul.mubr.bf16.gmra.mxu0 %v10155
    %v10983 = vpop.f32.mrf.mxu0
    %v10984 = vadd.f32 0.0, %v10983
    %v10985 = vpop.f32.mrf.mxu0
    %v10986 = vadd.f32 0.0, %v10985
    %v10987 = vpop.f32.mrf.mxu0
    %v10988 = vadd.f32 0.0, %v10987
    %v10989 = vpop.f32.mrf.mxu0
    %v10990 = vadd.f32 0.0, %v10989
    %10991 = vmatprep.mubr.bf16.mxu0 %v10192
    %10992 = vmatmul.mubr.bf16.gmra.mxu0 %v10191
    %v10993 = vpop.f32.mrf.mxu0
    %v10994 = vadd.f32 0.0, %v10993
    %v10995 = vpop.f32.mrf.mxu0
    %v10996 = vadd.f32 0.0, %v10995
    %v10997 = vpop.f32.mrf.mxu0
    %v10998 = vadd.f32 0.0, %v10997
    %v10999 = vpop.f32.mrf.mxu0
    %v11000 = vadd.f32 0.0, %v10999
    %11001 = vdwg.mxu0
    %11002 = vmatprep.subr.bf16.mxu0 %v10682
    %11003 = vmatpush1.bf16.msra.mxu0 %v10681
    %11004 = vmatprep.subr.bf16.mxu0 %v10678
    %11005 = vmatpush1.bf16.msra.mxu0 %v10677
    %11006 = vmatprep.subr.bf16.mxu0 %v10674
    %11007 = vmatpush1.bf16.msra.mxu0 %v10673
    %11008 = vmatprep.subr.bf16.mxu0 %v10670
    %11009 = vmatpush1.bf16.msra.mxu0 %v10669
    %11010 = vmatprep.subr.bf16.mxu0 %v10666
    %11011 = vmatpush1.bf16.msra.mxu0 %v10665
    %11012 = vmatprep.subr.bf16.mxu0 %v10662
    %11013 = vmatpush1.bf16.msra.mxu0 %v10661
    %11014 = vmatprep.subr.bf16.mxu0 %v10658
    %11015 = vmatpush1.bf16.msra.mxu0 %v10657
    %11016 = vmatprep.subr.bf16.mxu0 %v10654
    %11017 = vmatpush1.bf16.msra.mxu0 %v10653
    %11018 = vmatprep.subr.bf16.mxu0 %v10714
    %11019 = vmatpush2.bf16.msra.mxu0 %v10713
    %11020 = vmatprep.subr.bf16.mxu0 %v10710
    %11021 = vmatpush2.bf16.msra.mxu0 %v10709
    %11022 = vmatprep.subr.bf16.mxu0 %v10706
    %11023 = vmatpush2.bf16.msra.mxu0 %v10705
    %11024 = vmatprep.subr.bf16.mxu0 %v10702
    %11025 = vmatpush2.bf16.msra.mxu0 %v10701
    %11026 = vmatprep.subr.bf16.mxu0 %v10698
    %11027 = vmatpush2.bf16.msra.mxu0 %v10697
    %11028 = vmatprep.subr.bf16.mxu0 %v10694
    %11029 = vmatpush2.bf16.msra.mxu0 %v10693
    %11030 = vmatprep.subr.bf16.mxu0 %v10690
    %11031 = vmatpush2.bf16.msra.mxu0 %v10689
    %11032 = vmatprep.subr.bf16.mxu0 %v10686
    %11033 = vmatpush2.bf16.msra.mxu0 %v10685
    %11034 = vmatprep.mubr.bf16.mxu0 %v10158
    %11035 = vmatmul.mubr.bf16.gmra.mxu0 %v10157
    %v11036 = vpop.f32.mrf.mxu0
    %v11037 = vadd.f32 %v10984, %v11036
    %v11038 = vpop.f32.mrf.mxu0
    %v11039 = vadd.f32 %v10986, %v11038
    %v11040 = vpop.f32.mrf.mxu0
    %v11041 = vadd.f32 %v10988, %v11040
    %v11042 = vpop.f32.mrf.mxu0
    %v11043 = vadd.f32 %v10990, %v11042
    %11044 = vmatprep.mubr.bf16.mxu0 %v10194
    %11045 = vmatmul.mubr.bf16.gmra.mxu0 %v10193
    %v11046 = vpop.f32.mrf.mxu0
    %v11047 = vadd.f32 %v10994, %v11046
    %v11048 = vpop.f32.mrf.mxu0
    %v11049 = vadd.f32 %v10996, %v11048
    %v11050 = vpop.f32.mrf.mxu0
    %v11051 = vadd.f32 %v10998, %v11050
    %v11052 = vpop.f32.mrf.mxu0
    %v11053 = vadd.f32 %v11000, %v11052
    %11054 = vdwg.mxu0
    %v11055 = vadd.f32 %v9970, %v10931
    %v11056 = vadd.f32 %v9971, %v10933
    %v11057 = vadd.f32 %v9972, %v11037
    %v11058 = vadd.f32 %v9973, %v11039
    %v11059 = vadd.f32 %v9974, %v10935
    %v11060 = vadd.f32 %v9975, %v10937
    %v11061 = vadd.f32 %v9976, %v11041
    %v11062 = vadd.f32 %v9977, %v11043
    %v11063 = vadd.f32 %v9978, %v10941
    %v11064 = vadd.f32 %v9979, %v10943
    %v11065 = vadd.f32 %v9980, %v11047
    %v11066 = vadd.f32 %v9981, %v11049
    %v11067 = vadd.f32 %v9982, %v10945
    %v11068 = vadd.f32 %v9983, %v10947
    %v11069 = vadd.f32 %v9984, %v11051
    %v11070 = vadd.f32 %v9985, %v11053
    %v11076 = vunpack.c.l.s4 1983009808
    %v11077 = vunpack.c.0.s8 %v11076
    %v11078 = vlaneseq
    %v11079 = vshrl.u32 %v11078, 7
    %v11080 = vsub.s32 %v11077, %v11079
    %v11081 = vrot.slane %v4254, %v11080
    %v11083 = vunpack.c.l.s4 1983009808
    %v11084 = vunpack.c.0.s8 %v11083
    %v11085 = vlaneseq
    %v11086 = vshrl.u32 %v11085, 7
    %v11087 = vsub.s32 %v11084, %v11086
    %v11088 = vrot.slane %v4255, %v11087
    %v11089 = vcombine.low %v11081, %v11088
    %v11091 = vunpack.c.l.s4 1983009808
    %v11092 = vunpack.c.0.s8 %v11091
    %v11093 = vlaneseq
    %v11094 = vshrl.u32 %v11093, 7
    %v11095 = vsub.s32 %v11092, %v11094
    %v11096 = vrot.slane %v4266, %v11095
    %v11098 = vunpack.c.l.s4 1983009808
    %v11099 = vunpack.c.0.s8 %v11098
    %v11100 = vlaneseq
    %v11101 = vshrl.u32 %v11100, 7
    %v11102 = vsub.s32 %v11099, %v11101
    %v11103 = vrot.slane %v4267, %v11102
    %v11104 = vcombine.low %v11096, %v11103
    %s11105 = scalar_lea.vmem [#allocation8], 6144
    %v11106 = vld [vmem:[%s11105] sm:$0xff]
    %v11107 = vld [vmem:[%s11105 + $0x8] sm:$0xff]
    %v11108 = vld [vmem:[%s11105 + $0x10] sm:$0xff]
    %v11109 = vld [vmem:[%s11105 + $0x18] sm:$0xff]
    %v11110 = vld [vmem:[%s11105 + $0x20] sm:$0xff]
    %v11111 = vld [vmem:[%s11105 + $0x28] sm:$0xff]
    %v11112 = vld [vmem:[%s11105 + $0x30] sm:$0xff]
    %v11113 = vld [vmem:[%s11105 + $0x38] sm:$0xff]
    %v11114 = vld [vmem:[%s11105 + $0x40] sm:$0xff]
    %v11115 = vld [vmem:[%s11105 + $0x48] sm:$0xff]
    %v11116 = vld [vmem:[%s11105 + $0x50] sm:$0xff]
    %v11117 = vld [vmem:[%s11105 + $0x58] sm:$0xff]
    %v11118 = vld [vmem:[%s11105 + $0x60] sm:$0xff]
    %v11119 = vld [vmem:[%s11105 + $0x68] sm:$0xff]
    %v11120 = vld [vmem:[%s11105 + $0x70] sm:$0xff]
    %v11121 = vld [vmem:[%s11105 + $0x78] sm:$0xff]
    %v11122 = vld [vmem:[%s11105 + $0x80] sm:$0xff]
    %v11123 = vld [vmem:[%s11105 + $0x88] sm:$0xff]
    %v11124 = vld [vmem:[%s11105 + $0x90] sm:$0xff]
    %v11125 = vld [vmem:[%s11105 + $0x98] sm:$0xff]
    %v11126 = vld [vmem:[%s11105 + $0xa0] sm:$0xff]
    %v11127 = vld [vmem:[%s11105 + $0xa8] sm:$0xff]
    %v11128 = vld [vmem:[%s11105 + $0xb0] sm:$0xff]
    %v11129 = vld [vmem:[%s11105 + $0xb8] sm:$0xff]
    %v11130 = vld [vmem:[%s11105 + $0xc0] sm:$0xff]
    %v11131 = vld [vmem:[%s11105 + $0xc8] sm:$0xff]
    %v11132 = vld [vmem:[%s11105 + $0xd0] sm:$0xff]
    %v11133 = vld [vmem:[%s11105 + $0xd8] sm:$0xff]
    %v11134 = vld [vmem:[%s11105 + $0xe0] sm:$0xff]
    %v11135 = vld [vmem:[%s11105 + $0xe8] sm:$0xff]
    %v11136 = vld [vmem:[%s11105 + $0xf0] sm:$0xff]
    %v11137 = vld [vmem:[%s11105 + $0xf8] sm:$0xff]
    %v11138 = vld [vmem:[%s11105 + $0x100] sm:$0xff]
    %v11139 = vld [vmem:[%s11105 + $0x108] sm:$0xff]
    %v11140 = vld [vmem:[%s11105 + $0x110] sm:$0xff]
    %v11141 = vld [vmem:[%s11105 + $0x118] sm:$0xff]
    %v11142 = vld [vmem:[%s11105 + $0x120] sm:$0xff]
    %v11143 = vld [vmem:[%s11105 + $0x128] sm:$0xff]
    %v11144 = vld [vmem:[%s11105 + $0x130] sm:$0xff]
    %v11145 = vld [vmem:[%s11105 + $0x138] sm:$0xff]
    %v11146 = vld [vmem:[%s11105 + $0x140] sm:$0xff]
    %v11147 = vld [vmem:[%s11105 + $0x148] sm:$0xff]
    %v11148 = vld [vmem:[%s11105 + $0x150] sm:$0xff]
    %v11149 = vld [vmem:[%s11105 + $0x158] sm:$0xff]
    %v11150 = vld [vmem:[%s11105 + $0x160] sm:$0xff]
    %v11151 = vld [vmem:[%s11105 + $0x168] sm:$0xff]
    %v11152 = vld [vmem:[%s11105 + $0x170] sm:$0xff]
    %v11153 = vld [vmem:[%s11105 + $0x178] sm:$0xff]
    %v11154 = vld [vmem:[%s11105 + $0x180] sm:$0xff]
    %v11155 = vld [vmem:[%s11105 + $0x188] sm:$0xff]
    %v11156 = vld [vmem:[%s11105 + $0x190] sm:$0xff]
    %v11157 = vld [vmem:[%s11105 + $0x198] sm:$0xff]
    %v11158 = vld [vmem:[%s11105 + $0x1a0] sm:$0xff]
    %v11159 = vld [vmem:[%s11105 + $0x1a8] sm:$0xff]
    %v11160 = vld [vmem:[%s11105 + $0x1b0] sm:$0xff]
    %v11161 = vld [vmem:[%s11105 + $0x1b8] sm:$0xff]
    %v11162 = vld [vmem:[%s11105 + $0x1c0] sm:$0xff]
    %v11163 = vld [vmem:[%s11105 + $0x1c8] sm:$0xff]
    %v11164 = vld [vmem:[%s11105 + $0x1d0] sm:$0xff]
    %v11165 = vld [vmem:[%s11105 + $0x1d8] sm:$0xff]
    %v11166 = vld [vmem:[%s11105 + $0x1e0] sm:$0xff]
    %v11167 = vld [vmem:[%s11105 + $0x1e8] sm:$0xff]
    %v11168 = vld [vmem:[%s11105 + $0x1f0] sm:$0xff]
    %v11169 = vld [vmem:[%s11105 + $0x1f8] sm:$0xff]
    %v11170 = vld [vmem:[%s11105 + $0x200] sm:$0xff]
    %v11171 = vld [vmem:[%s11105 + $0x208] sm:$0xff]
    %v11172 = vld [vmem:[%s11105 + $0x210] sm:$0xff]
    %v11173 = vld [vmem:[%s11105 + $0x218] sm:$0xff]
    %v11174 = vld [vmem:[%s11105 + $0x220] sm:$0xff]
    %v11175 = vld [vmem:[%s11105 + $0x228] sm:$0xff]
    %v11176 = vld [vmem:[%s11105 + $0x230] sm:$0xff]
    %v11177 = vld [vmem:[%s11105 + $0x238] sm:$0xff]
    %v11178 = vld [vmem:[%s11105 + $0x240] sm:$0xff]
    %v11179 = vld [vmem:[%s11105 + $0x248] sm:$0xff]
    %v11180 = vld [vmem:[%s11105 + $0x250] sm:$0xff]
    %v11181 = vld [vmem:[%s11105 + $0x258] sm:$0xff]
    %v11182 = vld [vmem:[%s11105 + $0x260] sm:$0xff]
    %v11183 = vld [vmem:[%s11105 + $0x268] sm:$0xff]
    %v11184 = vld [vmem:[%s11105 + $0x270] sm:$0xff]
    %v11185 = vld [vmem:[%s11105 + $0x278] sm:$0xff]
    %v11186 = vld [vmem:[%s11105 + $0x280] sm:$0xff]
    %v11187 = vld [vmem:[%s11105 + $0x288] sm:$0xff]
    %v11188 = vld [vmem:[%s11105 + $0x290] sm:$0xff]
    %v11189 = vld [vmem:[%s11105 + $0x298] sm:$0xff]
    %v11190 = vld [vmem:[%s11105 + $0x2a0] sm:$0xff]
    %v11191 = vld [vmem:[%s11105 + $0x2a8] sm:$0xff]
    %v11192 = vld [vmem:[%s11105 + $0x2b0] sm:$0xff]
    %v11193 = vld [vmem:[%s11105 + $0x2b8] sm:$0xff]
    %v11194 = vld [vmem:[%s11105 + $0x2c0] sm:$0xff]
    %v11195 = vld [vmem:[%s11105 + $0x2c8] sm:$0xff]
    %v11196 = vld [vmem:[%s11105 + $0x2d0] sm:$0xff]
    %v11197 = vld [vmem:[%s11105 + $0x2d8] sm:$0xff]
    %v11198 = vld [vmem:[%s11105 + $0x2e0] sm:$0xff]
    %v11199 = vld [vmem:[%s11105 + $0x2e8] sm:$0xff]
    %v11200 = vld [vmem:[%s11105 + $0x2f0] sm:$0xff]
    %v11201 = vld [vmem:[%s11105 + $0x2f8] sm:$0xff]
    %v11202 = vld [vmem:[%s11105 + $0x300] sm:$0xff]
    %v11203 = vld [vmem:[%s11105 + $0x308] sm:$0xff]
    %v11204 = vld [vmem:[%s11105 + $0x310] sm:$0xff]
    %v11205 = vld [vmem:[%s11105 + $0x318] sm:$0xff]
    %v11206 = vld [vmem:[%s11105 + $0x320] sm:$0xff]
    %v11207 = vld [vmem:[%s11105 + $0x328] sm:$0xff]
    %v11208 = vld [vmem:[%s11105 + $0x330] sm:$0xff]
    %v11209 = vld [vmem:[%s11105 + $0x338] sm:$0xff]
    %v11210 = vld [vmem:[%s11105 + $0x340] sm:$0xff]
    %v11211 = vld [vmem:[%s11105 + $0x348] sm:$0xff]
    %v11212 = vld [vmem:[%s11105 + $0x350] sm:$0xff]
    %v11213 = vld [vmem:[%s11105 + $0x358] sm:$0xff]
    %v11214 = vld [vmem:[%s11105 + $0x360] sm:$0xff]
    %v11215 = vld [vmem:[%s11105 + $0x368] sm:$0xff]
    %v11216 = vld [vmem:[%s11105 + $0x370] sm:$0xff]
    %v11217 = vld [vmem:[%s11105 + $0x378] sm:$0xff]
    %v11218 = vld [vmem:[%s11105 + $0x380] sm:$0xff]
    %v11219 = vld [vmem:[%s11105 + $0x388] sm:$0xff]
    %v11220 = vld [vmem:[%s11105 + $0x390] sm:$0xff]
    %v11221 = vld [vmem:[%s11105 + $0x398] sm:$0xff]
    %v11222 = vld [vmem:[%s11105 + $0x3a0] sm:$0xff]
    %v11223 = vld [vmem:[%s11105 + $0x3a8] sm:$0xff]
    %v11224 = vld [vmem:[%s11105 + $0x3b0] sm:$0xff]
    %v11225 = vld [vmem:[%s11105 + $0x3b8] sm:$0xff]
    %v11226 = vld [vmem:[%s11105 + $0x3c0] sm:$0xff]
    %v11227 = vld [vmem:[%s11105 + $0x3c8] sm:$0xff]
    %v11228 = vld [vmem:[%s11105 + $0x3d0] sm:$0xff]
    %v11229 = vld [vmem:[%s11105 + $0x3d8] sm:$0xff]
    %v11230 = vld [vmem:[%s11105 + $0x3e0] sm:$0xff]
    %v11231 = vld [vmem:[%s11105 + $0x3e8] sm:$0xff]
    %v11232 = vld [vmem:[%s11105 + $0x3f0] sm:$0xff]
    %v11233 = vld [vmem:[%s11105 + $0x3f8] sm:$0xff]
    %v11234 = vcombine.low %v7786, %v11089
    %v11235 = vcombine.high %v7786, %v11089
    %v11237 = vunpack.c.l.s4 1983009808
    %v11238 = vunpack.c.0.s8 %v11237
    %v11239 = vlaneseq
    %v11240 = vshrl.u32 %v11239, 7
    %v11241 = vsub.s32 %v11238, %v11240
    %v11242 = vrot.slane %v11234, %v11241
    %v11244 = vunpack.c.l.s4 1983009808
    %v11245 = vunpack.c.0.s8 %v11244
    %v11246 = vlaneseq
    %v11247 = vshrl.u32 %v11246, 7
    %v11248 = vsub.s32 %v11245, %v11247
    %v11249 = vrot.slane %v11235, %v11248
    %v11250 = vcombine.low %v5744, %v11242
    %v11251 = vcombine.high %v5744, %v11242
    %v11252 = vcombine.low %v5751, %v11249
    %v11253 = vcombine.high %v5751, %v11249
    %v11254 = vcombine.low %v7801, %v11104
    %v11255 = vcombine.high %v7801, %v11104
    %v11257 = vunpack.c.l.s4 1983009808
    %v11258 = vunpack.c.0.s8 %v11257
    %v11259 = vlaneseq
    %v11260 = vshrl.u32 %v11259, 7
    %v11261 = vsub.s32 %v11258, %v11260
    %v11262 = vrot.slane %v11254, %v11261
    %v11264 = vunpack.c.l.s4 1983009808
    %v11265 = vunpack.c.0.s8 %v11264
    %v11266 = vlaneseq
    %v11267 = vshrl.u32 %v11266, 7
    %v11268 = vsub.s32 %v11265, %v11267
    %v11269 = vrot.slane %v11255, %v11268
    %v11270 = vcombine.low %v5780, %v11262
    %v11271 = vcombine.high %v5780, %v11262
    %v11272 = vcombine.low %v5787, %v11269
    %v11273 = vcombine.high %v5787, %v11269
    %v11410 = vunpack.c.l.b16 %v11106
    %v11411 = vunpack.c.h.b16 %v11106
    %v11412 = vunpack.c.l.b16 %v11107
    %v11413 = vunpack.c.h.b16 %v11107
    %v11414 = vunpack.c.l.b16 %v11108
    %v11415 = vunpack.c.h.b16 %v11108
    %v11416 = vunpack.c.l.b16 %v11109
    %v11417 = vunpack.c.h.b16 %v11109
    %v11418 = vunpack.c.l.b16 %v11110
    %v11419 = vunpack.c.h.b16 %v11110
    %v11420 = vunpack.c.l.b16 %v11111
    %v11421 = vunpack.c.h.b16 %v11111
    %v11422 = vunpack.c.l.b16 %v11112
    %v11423 = vunpack.c.h.b16 %v11112
    %v11424 = vunpack.c.l.b16 %v11113
    %v11425 = vunpack.c.h.b16 %v11113
    %v11426 = vunpack.c.l.b16 %v11114
    %v11427 = vunpack.c.h.b16 %v11114
    %v11428 = vunpack.c.l.b16 %v11115
    %v11429 = vunpack.c.h.b16 %v11115
    %v11430 = vunpack.c.l.b16 %v11116
    %v11431 = vunpack.c.h.b16 %v11116
    %v11432 = vunpack.c.l.b16 %v11117
    %v11433 = vunpack.c.h.b16 %v11117
    %v11434 = vunpack.c.l.b16 %v11118
    %v11435 = vunpack.c.h.b16 %v11118
    %v11436 = vunpack.c.l.b16 %v11119
    %v11437 = vunpack.c.h.b16 %v11119
    %v11438 = vunpack.c.l.b16 %v11120
    %v11439 = vunpack.c.h.b16 %v11120
    %v11440 = vunpack.c.l.b16 %v11121
    %v11441 = vunpack.c.h.b16 %v11121
    %v11442 = vunpack.c.l.b16 %v11122
    %v11443 = vunpack.c.h.b16 %v11122
    %v11444 = vunpack.c.l.b16 %v11123
    %v11445 = vunpack.c.h.b16 %v11123
    %v11446 = vunpack.c.l.b16 %v11124
    %v11447 = vunpack.c.h.b16 %v11124
    %v11448 = vunpack.c.l.b16 %v11125
    %v11449 = vunpack.c.h.b16 %v11125
    %v11450 = vunpack.c.l.b16 %v11126
    %v11451 = vunpack.c.h.b16 %v11126
    %v11452 = vunpack.c.l.b16 %v11127
    %v11453 = vunpack.c.h.b16 %v11127
    %v11454 = vunpack.c.l.b16 %v11128
    %v11455 = vunpack.c.h.b16 %v11128
    %v11456 = vunpack.c.l.b16 %v11129
    %v11457 = vunpack.c.h.b16 %v11129
    %v11458 = vunpack.c.l.b16 %v11130
    %v11459 = vunpack.c.h.b16 %v11130
    %v11460 = vunpack.c.l.b16 %v11131
    %v11461 = vunpack.c.h.b16 %v11131
    %v11462 = vunpack.c.l.b16 %v11132
    %v11463 = vunpack.c.h.b16 %v11132
    %v11464 = vunpack.c.l.b16 %v11133
    %v11465 = vunpack.c.h.b16 %v11133
    %v11466 = vunpack.c.l.b16 %v11134
    %v11467 = vunpack.c.h.b16 %v11134
    %v11468 = vunpack.c.l.b16 %v11135
    %v11469 = vunpack.c.h.b16 %v11135
    %v11470 = vunpack.c.l.b16 %v11136
    %v11471 = vunpack.c.h.b16 %v11136
    %v11472 = vunpack.c.l.b16 %v11137
    %v11473 = vunpack.c.h.b16 %v11137
    %v11474 = vunpack.c.l.b16 %v11138
    %v11475 = vunpack.c.h.b16 %v11138
    %v11476 = vunpack.c.l.b16 %v11139
    %v11477 = vunpack.c.h.b16 %v11139
    %v11478 = vunpack.c.l.b16 %v11140
    %v11479 = vunpack.c.h.b16 %v11140
    %v11480 = vunpack.c.l.b16 %v11141
    %v11481 = vunpack.c.h.b16 %v11141
    %v11482 = vunpack.c.l.b16 %v11142
    %v11483 = vunpack.c.h.b16 %v11142
    %v11484 = vunpack.c.l.b16 %v11143
    %v11485 = vunpack.c.h.b16 %v11143
    %v11486 = vunpack.c.l.b16 %v11144
    %v11487 = vunpack.c.h.b16 %v11144
    %v11488 = vunpack.c.l.b16 %v11145
    %v11489 = vunpack.c.h.b16 %v11145
    %v11490 = vunpack.c.l.b16 %v11146
    %v11491 = vunpack.c.h.b16 %v11146
    %v11492 = vunpack.c.l.b16 %v11147
    %v11493 = vunpack.c.h.b16 %v11147
    %v11494 = vunpack.c.l.b16 %v11148
    %v11495 = vunpack.c.h.b16 %v11148
    %v11496 = vunpack.c.l.b16 %v11149
    %v11497 = vunpack.c.h.b16 %v11149
    %v11498 = vunpack.c.l.b16 %v11150
    %v11499 = vunpack.c.h.b16 %v11150
    %v11500 = vunpack.c.l.b16 %v11151
    %v11501 = vunpack.c.h.b16 %v11151
    %v11502 = vunpack.c.l.b16 %v11152
    %v11503 = vunpack.c.h.b16 %v11152
    %v11504 = vunpack.c.l.b16 %v11153
    %v11505 = vunpack.c.h.b16 %v11153
    %v11506 = vunpack.c.l.b16 %v11154
    %v11507 = vunpack.c.h.b16 %v11154
    %v11508 = vunpack.c.l.b16 %v11155
    %v11509 = vunpack.c.h.b16 %v11155
    %v11510 = vunpack.c.l.b16 %v11156
    %v11511 = vunpack.c.h.b16 %v11156
    %v11512 = vunpack.c.l.b16 %v11157
    %v11513 = vunpack.c.h.b16 %v11157
    %v11514 = vunpack.c.l.b16 %v11158
    %v11515 = vunpack.c.h.b16 %v11158
    %v11516 = vunpack.c.l.b16 %v11159
    %v11517 = vunpack.c.h.b16 %v11159
    %v11518 = vunpack.c.l.b16 %v11160
    %v11519 = vunpack.c.h.b16 %v11160
    %v11520 = vunpack.c.l.b16 %v11161
    %v11521 = vunpack.c.h.b16 %v11161
    %v11522 = vunpack.c.l.b16 %v11162
    %v11523 = vunpack.c.h.b16 %v11162
    %v11524 = vunpack.c.l.b16 %v11163
    %v11525 = vunpack.c.h.b16 %v11163
    %v11526 = vunpack.c.l.b16 %v11164
    %v11527 = vunpack.c.h.b16 %v11164
    %v11528 = vunpack.c.l.b16 %v11165
    %v11529 = vunpack.c.h.b16 %v11165
    %v11530 = vunpack.c.l.b16 %v11166
    %v11531 = vunpack.c.h.b16 %v11166
    %v11532 = vunpack.c.l.b16 %v11167
    %v11533 = vunpack.c.h.b16 %v11167
    %v11534 = vunpack.c.l.b16 %v11168
    %v11535 = vunpack.c.h.b16 %v11168
    %v11536 = vunpack.c.l.b16 %v11169
    %v11537 = vunpack.c.h.b16 %v11169
    %v11538 = vunpack.c.l.b16 %v11170
    %v11539 = vunpack.c.h.b16 %v11170
    %v11540 = vunpack.c.l.b16 %v11171
    %v11541 = vunpack.c.h.b16 %v11171
    %v11542 = vunpack.c.l.b16 %v11172
    %v11543 = vunpack.c.h.b16 %v11172
    %v11544 = vunpack.c.l.b16 %v11173
    %v11545 = vunpack.c.h.b16 %v11173
    %v11546 = vunpack.c.l.b16 %v11174
    %v11547 = vunpack.c.h.b16 %v11174
    %v11548 = vunpack.c.l.b16 %v11175
    %v11549 = vunpack.c.h.b16 %v11175
    %v11550 = vunpack.c.l.b16 %v11176
    %v11551 = vunpack.c.h.b16 %v11176
    %v11552 = vunpack.c.l.b16 %v11177
    %v11553 = vunpack.c.h.b16 %v11177
    %v11554 = vunpack.c.l.b16 %v11178
    %v11555 = vunpack.c.h.b16 %v11178
    %v11556 = vunpack.c.l.b16 %v11179
    %v11557 = vunpack.c.h.b16 %v11179
    %v11558 = vunpack.c.l.b16 %v11180
    %v11559 = vunpack.c.h.b16 %v11180
    %v11560 = vunpack.c.l.b16 %v11181
    %v11561 = vunpack.c.h.b16 %v11181
    %v11562 = vunpack.c.l.b16 %v11182
    %v11563 = vunpack.c.h.b16 %v11182
    %v11564 = vunpack.c.l.b16 %v11183
    %v11565 = vunpack.c.h.b16 %v11183
    %v11566 = vunpack.c.l.b16 %v11184
    %v11567 = vunpack.c.h.b16 %v11184
    %v11568 = vunpack.c.l.b16 %v11185
    %v11569 = vunpack.c.h.b16 %v11185
    %v11570 = vunpack.c.l.b16 %v11186
    %v11571 = vunpack.c.h.b16 %v11186
    %v11572 = vunpack.c.l.b16 %v11187
    %v11573 = vunpack.c.h.b16 %v11187
    %v11574 = vunpack.c.l.b16 %v11188
    %v11575 = vunpack.c.h.b16 %v11188
    %v11576 = vunpack.c.l.b16 %v11189
    %v11577 = vunpack.c.h.b16 %v11189
    %v11578 = vunpack.c.l.b16 %v11190
    %v11579 = vunpack.c.h.b16 %v11190
    %v11580 = vunpack.c.l.b16 %v11191
    %v11581 = vunpack.c.h.b16 %v11191
    %v11582 = vunpack.c.l.b16 %v11192
    %v11583 = vunpack.c.h.b16 %v11192
    %v11584 = vunpack.c.l.b16 %v11193
    %v11585 = vunpack.c.h.b16 %v11193
    %v11586 = vunpack.c.l.b16 %v11194
    %v11587 = vunpack.c.h.b16 %v11194
    %v11588 = vunpack.c.l.b16 %v11195
    %v11589 = vunpack.c.h.b16 %v11195
    %v11590 = vunpack.c.l.b16 %v11196
    %v11591 = vunpack.c.h.b16 %v11196
    %v11592 = vunpack.c.l.b16 %v11197
    %v11593 = vunpack.c.h.b16 %v11197
    %v11594 = vunpack.c.l.b16 %v11198
    %v11595 = vunpack.c.h.b16 %v11198
    %v11596 = vunpack.c.l.b16 %v11199
    %v11597 = vunpack.c.h.b16 %v11199
    %v11598 = vunpack.c.l.b16 %v11200
    %v11599 = vunpack.c.h.b16 %v11200
    %v11600 = vunpack.c.l.b16 %v11201
    %v11601 = vunpack.c.h.b16 %v11201
    %v11602 = vunpack.c.l.b16 %v11202
    %v11603 = vunpack.c.h.b16 %v11202
    %v11604 = vunpack.c.l.b16 %v11203
    %v11605 = vunpack.c.h.b16 %v11203
    %v11606 = vunpack.c.l.b16 %v11204
    %v11607 = vunpack.c.h.b16 %v11204
    %v11608 = vunpack.c.l.b16 %v11205
    %v11609 = vunpack.c.h.b16 %v11205
    %v11610 = vunpack.c.l.b16 %v11206
    %v11611 = vunpack.c.h.b16 %v11206
    %v11612 = vunpack.c.l.b16 %v11207
    %v11613 = vunpack.c.h.b16 %v11207
    %v11614 = vunpack.c.l.b16 %v11208
    %v11615 = vunpack.c.h.b16 %v11208
    %v11616 = vunpack.c.l.b16 %v11209
    %v11617 = vunpack.c.h.b16 %v11209
    %v11618 = vunpack.c.l.b16 %v11210
    %v11619 = vunpack.c.h.b16 %v11210
    %v11620 = vunpack.c.l.b16 %v11211
    %v11621 = vunpack.c.h.b16 %v11211
    %v11622 = vunpack.c.l.b16 %v11212
    %v11623 = vunpack.c.h.b16 %v11212
    %v11624 = vunpack.c.l.b16 %v11213
    %v11625 = vunpack.c.h.b16 %v11213
    %v11626 = vunpack.c.l.b16 %v11214
    %v11627 = vunpack.c.h.b16 %v11214
    %v11628 = vunpack.c.l.b16 %v11215
    %v11629 = vunpack.c.h.b16 %v11215
    %v11630 = vunpack.c.l.b16 %v11216
    %v11631 = vunpack.c.h.b16 %v11216
    %v11632 = vunpack.c.l.b16 %v11217
    %v11633 = vunpack.c.h.b16 %v11217
    %v11634 = vunpack.c.l.b16 %v11218
    %v11635 = vunpack.c.h.b16 %v11218
    %v11636 = vunpack.c.l.b16 %v11219
    %v11637 = vunpack.c.h.b16 %v11219
    %v11638 = vunpack.c.l.b16 %v11220
    %v11639 = vunpack.c.h.b16 %v11220
    %v11640 = vunpack.c.l.b16 %v11221
    %v11641 = vunpack.c.h.b16 %v11221
    %v11642 = vunpack.c.l.b16 %v11222
    %v11643 = vunpack.c.h.b16 %v11222
    %v11644 = vunpack.c.l.b16 %v11223
    %v11645 = vunpack.c.h.b16 %v11223
    %v11646 = vunpack.c.l.b16 %v11224
    %v11647 = vunpack.c.h.b16 %v11224
    %v11648 = vunpack.c.l.b16 %v11225
    %v11649 = vunpack.c.h.b16 %v11225
    %v11650 = vunpack.c.l.b16 %v11226
    %v11651 = vunpack.c.h.b16 %v11226
    %v11652 = vunpack.c.l.b16 %v11227
    %v11653 = vunpack.c.h.b16 %v11227
    %v11654 = vunpack.c.l.b16 %v11228
    %v11655 = vunpack.c.h.b16 %v11228
    %v11656 = vunpack.c.l.b16 %v11229
    %v11657 = vunpack.c.h.b16 %v11229
    %v11658 = vunpack.c.l.b16 %v11230
    %v11659 = vunpack.c.h.b16 %v11230
    %v11660 = vunpack.c.l.b16 %v11231
    %v11661 = vunpack.c.h.b16 %v11231
    %v11662 = vunpack.c.l.b16 %v11232
    %v11663 = vunpack.c.h.b16 %v11232
    %v11664 = vunpack.c.l.b16 %v11233
    %v11665 = vunpack.c.h.b16 %v11233
    %v11666 = vpack.c.b16 %v11414, %v11410
    %v11667 = vpack.c.b16 %v11415, %v11411
    %v11668 = vpack.c.b16 %v11416, %v11412
    %v11669 = vpack.c.b16 %v11417, %v11413
    %v11670 = vpack.c.b16 %v11422, %v11418
    %v11671 = vpack.c.b16 %v11423, %v11419
    %v11672 = vpack.c.b16 %v11424, %v11420
    %v11673 = vpack.c.b16 %v11425, %v11421
    %v11674 = vpack.c.b16 %v11430, %v11426
    %v11675 = vpack.c.b16 %v11431, %v11427
    %v11676 = vpack.c.b16 %v11432, %v11428
    %v11677 = vpack.c.b16 %v11433, %v11429
    %v11678 = vpack.c.b16 %v11438, %v11434
    %v11679 = vpack.c.b16 %v11439, %v11435
    %v11680 = vpack.c.b16 %v11440, %v11436
    %v11681 = vpack.c.b16 %v11441, %v11437
    %v11682 = vpack.c.b16 %v11446, %v11442
    %v11683 = vpack.c.b16 %v11447, %v11443
    %v11684 = vpack.c.b16 %v11448, %v11444
    %v11685 = vpack.c.b16 %v11449, %v11445
    %v11686 = vpack.c.b16 %v11454, %v11450
    %v11687 = vpack.c.b16 %v11455, %v11451
    %v11688 = vpack.c.b16 %v11456, %v11452
    %v11689 = vpack.c.b16 %v11457, %v11453
    %v11690 = vpack.c.b16 %v11462, %v11458
    %v11691 = vpack.c.b16 %v11463, %v11459
    %v11692 = vpack.c.b16 %v11464, %v11460
    %v11693 = vpack.c.b16 %v11465, %v11461
    %v11694 = vpack.c.b16 %v11470, %v11466
    %v11695 = vpack.c.b16 %v11471, %v11467
    %v11696 = vpack.c.b16 %v11472, %v11468
    %v11697 = vpack.c.b16 %v11473, %v11469
    %v11698 = vpack.c.b16 %v11478, %v11474
    %v11699 = vpack.c.b16 %v11479, %v11475
    %v11700 = vpack.c.b16 %v11480, %v11476
    %v11701 = vpack.c.b16 %v11481, %v11477
    %v11702 = vpack.c.b16 %v11486, %v11482
    %v11703 = vpack.c.b16 %v11487, %v11483
    %v11704 = vpack.c.b16 %v11488, %v11484
    %v11705 = vpack.c.b16 %v11489, %v11485
    %v11706 = vpack.c.b16 %v11494, %v11490
    %v11707 = vpack.c.b16 %v11495, %v11491
    %v11708 = vpack.c.b16 %v11496, %v11492
    %v11709 = vpack.c.b16 %v11497, %v11493
    %v11710 = vpack.c.b16 %v11502, %v11498
    %v11711 = vpack.c.b16 %v11503, %v11499
    %v11712 = vpack.c.b16 %v11504, %v11500
    %v11713 = vpack.c.b16 %v11505, %v11501
    %v11714 = vpack.c.b16 %v11510, %v11506
    %v11715 = vpack.c.b16 %v11511, %v11507
    %v11716 = vpack.c.b16 %v11512, %v11508
    %v11717 = vpack.c.b16 %v11513, %v11509
    %v11718 = vpack.c.b16 %v11518, %v11514
    %v11719 = vpack.c.b16 %v11519, %v11515
    %v11720 = vpack.c.b16 %v11520, %v11516
    %v11721 = vpack.c.b16 %v11521, %v11517
    %v11722 = vpack.c.b16 %v11526, %v11522
    %v11723 = vpack.c.b16 %v11527, %v11523
    %v11724 = vpack.c.b16 %v11528, %v11524
    %v11725 = vpack.c.b16 %v11529, %v11525
    %v11726 = vpack.c.b16 %v11534, %v11530
    %v11727 = vpack.c.b16 %v11535, %v11531
    %v11728 = vpack.c.b16 %v11536, %v11532
    %v11729 = vpack.c.b16 %v11537, %v11533
    %v11730 = vpack.c.b16 %v11542, %v11538
    %v11731 = vpack.c.b16 %v11543, %v11539
    %v11732 = vpack.c.b16 %v11544, %v11540
    %v11733 = vpack.c.b16 %v11545, %v11541
    %v11734 = vpack.c.b16 %v11550, %v11546
    %v11735 = vpack.c.b16 %v11551, %v11547
    %v11736 = vpack.c.b16 %v11552, %v11548
    %v11737 = vpack.c.b16 %v11553, %v11549
    %v11738 = vpack.c.b16 %v11558, %v11554
    %v11739 = vpack.c.b16 %v11559, %v11555
    %v11740 = vpack.c.b16 %v11560, %v11556
    %v11741 = vpack.c.b16 %v11561, %v11557
    %v11742 = vpack.c.b16 %v11566, %v11562
    %v11743 = vpack.c.b16 %v11567, %v11563
    %v11744 = vpack.c.b16 %v11568, %v11564
    %v11745 = vpack.c.b16 %v11569, %v11565
    %v11746 = vpack.c.b16 %v11574, %v11570
    %v11747 = vpack.c.b16 %v11575, %v11571
    %v11748 = vpack.c.b16 %v11576, %v11572
    %v11749 = vpack.c.b16 %v11577, %v11573
    %v11750 = vpack.c.b16 %v11582, %v11578
    %v11751 = vpack.c.b16 %v11583, %v11579
    %v11752 = vpack.c.b16 %v11584, %v11580
    %v11753 = vpack.c.b16 %v11585, %v11581
    %v11754 = vpack.c.b16 %v11590, %v11586
    %v11755 = vpack.c.b16 %v11591, %v11587
    %v11756 = vpack.c.b16 %v11592, %v11588
    %v11757 = vpack.c.b16 %v11593, %v11589
    %v11758 = vpack.c.b16 %v11598, %v11594
    %v11759 = vpack.c.b16 %v11599, %v11595
    %v11760 = vpack.c.b16 %v11600, %v11596
    %v11761 = vpack.c.b16 %v11601, %v11597
    %v11762 = vpack.c.b16 %v11606, %v11602
    %v11763 = vpack.c.b16 %v11607, %v11603
    %v11764 = vpack.c.b16 %v11608, %v11604
    %v11765 = vpack.c.b16 %v11609, %v11605
    %v11766 = vpack.c.b16 %v11614, %v11610
    %v11767 = vpack.c.b16 %v11615, %v11611
    %v11768 = vpack.c.b16 %v11616, %v11612
    %v11769 = vpack.c.b16 %v11617, %v11613
    %v11770 = vpack.c.b16 %v11622, %v11618
    %v11771 = vpack.c.b16 %v11623, %v11619
    %v11772 = vpack.c.b16 %v11624, %v11620
    %v11773 = vpack.c.b16 %v11625, %v11621
    %v11774 = vpack.c.b16 %v11630, %v11626
    %v11775 = vpack.c.b16 %v11631, %v11627
    %v11776 = vpack.c.b16 %v11632, %v11628
    %v11777 = vpack.c.b16 %v11633, %v11629
    %v11778 = vpack.c.b16 %v11638, %v11634
    %v11779 = vpack.c.b16 %v11639, %v11635
    %v11780 = vpack.c.b16 %v11640, %v11636
    %v11781 = vpack.c.b16 %v11641, %v11637
    %v11782 = vpack.c.b16 %v11646, %v11642
    %v11783 = vpack.c.b16 %v11647, %v11643
    %v11784 = vpack.c.b16 %v11648, %v11644
    %v11785 = vpack.c.b16 %v11649, %v11645
    %v11786 = vpack.c.b16 %v11654, %v11650
    %v11787 = vpack.c.b16 %v11655, %v11651
    %v11788 = vpack.c.b16 %v11656, %v11652
    %v11789 = vpack.c.b16 %v11657, %v11653
    %v11790 = vpack.c.b16 %v11662, %v11658
    %v11791 = vpack.c.b16 %v11663, %v11659
    %v11792 = vpack.c.b16 %v11664, %v11660
    %v11793 = vpack.c.b16 %v11665, %v11661
    %11922 = vmatprep.subr.bf16.mxu0 %v11695
    %11923 = vmatpush1.bf16.msra.mxu0 %v11694
    %11924 = vmatprep.subr.bf16.mxu0 %v11691
    %11925 = vmatpush1.bf16.msra.mxu0 %v11690
    %11926 = vmatprep.subr.bf16.mxu0 %v11687
    %11927 = vmatpush1.bf16.msra.mxu0 %v11686
    %11928 = vmatprep.subr.bf16.mxu0 %v11683
    %11929 = vmatpush1.bf16.msra.mxu0 %v11682
    %11930 = vmatprep.subr.bf16.mxu0 %v11679
    %11931 = vmatpush1.bf16.msra.mxu0 %v11678
    %11932 = vmatprep.subr.bf16.mxu0 %v11675
    %11933 = vmatpush1.bf16.msra.mxu0 %v11674
    %11934 = vmatprep.subr.bf16.mxu0 %v11671
    %11935 = vmatpush1.bf16.msra.mxu0 %v11670
    %11936 = vmatprep.subr.bf16.mxu0 %v11667
    %11937 = vmatpush1.bf16.msra.mxu0 %v11666
    %11938 = vmatprep.subr.bf16.mxu0 %v11727
    %11939 = vmatpush2.bf16.msra.mxu0 %v11726
    %11940 = vmatprep.subr.bf16.mxu0 %v11723
    %11941 = vmatpush2.bf16.msra.mxu0 %v11722
    %11942 = vmatprep.subr.bf16.mxu0 %v11719
    %11943 = vmatpush2.bf16.msra.mxu0 %v11718
    %11944 = vmatprep.subr.bf16.mxu0 %v11715
    %11945 = vmatpush2.bf16.msra.mxu0 %v11714
    %11946 = vmatprep.subr.bf16.mxu0 %v11711
    %11947 = vmatpush2.bf16.msra.mxu0 %v11710
    %11948 = vmatprep.subr.bf16.mxu0 %v11707
    %11949 = vmatpush2.bf16.msra.mxu0 %v11706
    %11950 = vmatprep.subr.bf16.mxu0 %v11703
    %11951 = vmatpush2.bf16.msra.mxu0 %v11702
    %11952 = vmatprep.subr.bf16.mxu0 %v11699
    %11953 = vmatpush2.bf16.msra.mxu0 %v11698
    %11954 = vmatprep.mubr.bf16.mxu0 %v11251
    %11955 = vmatmul.mubr.bf16.gmra.mxu0 %v11250
    %v11956 = vpop.f32.mrf.mxu0
    %v11957 = vadd.f32 0.0, %v11956
    %v11958 = vpop.f32.mrf.mxu0
    %v11959 = vadd.f32 0.0, %v11958
    %v11960 = vpop.f32.mrf.mxu0
    %v11961 = vadd.f32 0.0, %v11960
    %v11962 = vpop.f32.mrf.mxu0
    %v11963 = vadd.f32 0.0, %v11962
    %11964 = vmatprep.mubr.bf16.mxu0 %v11271
    %11965 = vmatmul.mubr.bf16.gmra.mxu0 %v11270
    %v11966 = vpop.f32.mrf.mxu0
    %v11967 = vadd.f32 0.0, %v11966
    %v11968 = vpop.f32.mrf.mxu0
    %v11969 = vadd.f32 0.0, %v11968
    %v11970 = vpop.f32.mrf.mxu0
    %v11971 = vadd.f32 0.0, %v11970
    %v11972 = vpop.f32.mrf.mxu0
    %v11973 = vadd.f32 0.0, %v11972
    %11974 = vdwg.mxu0
    %11975 = vmatprep.subr.bf16.mxu0 %v11759
    %11976 = vmatpush1.bf16.msra.mxu0 %v11758
    %11977 = vmatprep.subr.bf16.mxu0 %v11755
    %11978 = vmatpush1.bf16.msra.mxu0 %v11754
    %11979 = vmatprep.subr.bf16.mxu0 %v11751
    %11980 = vmatpush1.bf16.msra.mxu0 %v11750
    %11981 = vmatprep.subr.bf16.mxu0 %v11747
    %11982 = vmatpush1.bf16.msra.mxu0 %v11746
    %11983 = vmatprep.subr.bf16.mxu0 %v11743
    %11984 = vmatpush1.bf16.msra.mxu0 %v11742
    %11985 = vmatprep.subr.bf16.mxu0 %v11739
    %11986 = vmatpush1.bf16.msra.mxu0 %v11738
    %11987 = vmatprep.subr.bf16.mxu0 %v11735
    %11988 = vmatpush1.bf16.msra.mxu0 %v11734
    %11989 = vmatprep.subr.bf16.mxu0 %v11731
    %11990 = vmatpush1.bf16.msra.mxu0 %v11730
    %11991 = vmatprep.subr.bf16.mxu0 %v11791
    %11992 = vmatpush2.bf16.msra.mxu0 %v11790
    %11993 = vmatprep.subr.bf16.mxu0 %v11787
    %11994 = vmatpush2.bf16.msra.mxu0 %v11786
    %11995 = vmatprep.subr.bf16.mxu0 %v11783
    %11996 = vmatpush2.bf16.msra.mxu0 %v11782
    %11997 = vmatprep.subr.bf16.mxu0 %v11779
    %11998 = vmatpush2.bf16.msra.mxu0 %v11778
    %11999 = vmatprep.subr.bf16.mxu0 %v11775
    %12000 = vmatpush2.bf16.msra.mxu0 %v11774
    %12001 = vmatprep.subr.bf16.mxu0 %v11771
    %12002 = vmatpush2.bf16.msra.mxu0 %v11770
    %12003 = vmatprep.subr.bf16.mxu0 %v11767
    %12004 = vmatpush2.bf16.msra.mxu0 %v11766
    %12005 = vmatprep.subr.bf16.mxu0 %v11763
    %12006 = vmatpush2.bf16.msra.mxu0 %v11762
    %12007 = vmatprep.mubr.bf16.mxu0 %v11253
    %12008 = vmatmul.mubr.bf16.gmra.mxu0 %v11252
    %v12009 = vpop.f32.mrf.mxu0
    %v12010 = vadd.f32 %v11957, %v12009
    %v12011 = vpop.f32.mrf.mxu0
    %v12012 = vadd.f32 %v11959, %v12011
    %v12013 = vpop.f32.mrf.mxu0
    %v12014 = vadd.f32 %v11961, %v12013
    %v12015 = vpop.f32.mrf.mxu0
    %v12016 = vadd.f32 %v11963, %v12015
    %12017 = vmatprep.mubr.bf16.mxu0 %v11273
    %12018 = vmatmul.mubr.bf16.gmra.mxu0 %v11272
    %v12019 = vpop.f32.mrf.mxu0
    %v12020 = vadd.f32 %v11967, %v12019
    %v12021 = vpop.f32.mrf.mxu0
    %v12022 = vadd.f32 %v11969, %v12021
    %v12023 = vpop.f32.mrf.mxu0
    %v12024 = vadd.f32 %v11971, %v12023
    %v12025 = vpop.f32.mrf.mxu0
    %v12026 = vadd.f32 %v11973, %v12025
    %12027 = vdwg.mxu0
    %12028 = vmatprep.subr.bf16.mxu0 %v11697
    %12029 = vmatpush1.bf16.msra.mxu0 %v11696
    %12030 = vmatprep.subr.bf16.mxu0 %v11693
    %12031 = vmatpush1.bf16.msra.mxu0 %v11692
    %12032 = vmatprep.subr.bf16.mxu0 %v11689
    %12033 = vmatpush1.bf16.msra.mxu0 %v11688
    %12034 = vmatprep.subr.bf16.mxu0 %v11685
    %12035 = vmatpush1.bf16.msra.mxu0 %v11684
    %12036 = vmatprep.subr.bf16.mxu0 %v11681
    %12037 = vmatpush1.bf16.msra.mxu0 %v11680
    %12038 = vmatprep.subr.bf16.mxu0 %v11677
    %12039 = vmatpush1.bf16.msra.mxu0 %v11676
    %12040 = vmatprep.subr.bf16.mxu0 %v11673
    %12041 = vmatpush1.bf16.msra.mxu0 %v11672
    %12042 = vmatprep.subr.bf16.mxu0 %v11669
    %12043 = vmatpush1.bf16.msra.mxu0 %v11668
    %12044 = vmatprep.subr.bf16.mxu0 %v11729
    %12045 = vmatpush2.bf16.msra.mxu0 %v11728
    %12046 = vmatprep.subr.bf16.mxu0 %v11725
    %12047 = vmatpush2.bf16.msra.mxu0 %v11724
    %12048 = vmatprep.subr.bf16.mxu0 %v11721
    %12049 = vmatpush2.bf16.msra.mxu0 %v11720
    %12050 = vmatprep.subr.bf16.mxu0 %v11717
    %12051 = vmatpush2.bf16.msra.mxu0 %v11716
    %12052 = vmatprep.subr.bf16.mxu0 %v11713
    %12053 = vmatpush2.bf16.msra.mxu0 %v11712
    %12054 = vmatprep.subr.bf16.mxu0 %v11709
    %12055 = vmatpush2.bf16.msra.mxu0 %v11708
    %12056 = vmatprep.subr.bf16.mxu0 %v11705
    %12057 = vmatpush2.bf16.msra.mxu0 %v11704
    %12058 = vmatprep.subr.bf16.mxu0 %v11701
    %12059 = vmatpush2.bf16.msra.mxu0 %v11700
    %12060 = vmatprep.mubr.bf16.mxu0 %v11251
    %12061 = vmatmul.mubr.bf16.gmra.mxu0 %v11250
    %v12062 = vpop.f32.mrf.mxu0
    %v12063 = vadd.f32 0.0, %v12062
    %v12064 = vpop.f32.mrf.mxu0
    %v12065 = vadd.f32 0.0, %v12064
    %v12066 = vpop.f32.mrf.mxu0
    %v12067 = vadd.f32 0.0, %v12066
    %v12068 = vpop.f32.mrf.mxu0
    %v12069 = vadd.f32 0.0, %v12068
    %12070 = vmatprep.mubr.bf16.mxu0 %v11271
    %12071 = vmatmul.mubr.bf16.gmra.mxu0 %v11270
    %v12072 = vpop.f32.mrf.mxu0
    %v12073 = vadd.f32 0.0, %v12072
    %v12074 = vpop.f32.mrf.mxu0
    %v12075 = vadd.f32 0.0, %v12074
    %v12076 = vpop.f32.mrf.mxu0
    %v12077 = vadd.f32 0.0, %v12076
    %v12078 = vpop.f32.mrf.mxu0
    %v12079 = vadd.f32 0.0, %v12078
    %12080 = vdwg.mxu0
    %12081 = vmatprep.subr.bf16.mxu0 %v11761
    %12082 = vmatpush1.bf16.msra.mxu0 %v11760
    %12083 = vmatprep.subr.bf16.mxu0 %v11757
    %12084 = vmatpush1.bf16.msra.mxu0 %v11756
    %12085 = vmatprep.subr.bf16.mxu0 %v11753
    %12086 = vmatpush1.bf16.msra.mxu0 %v11752
    %12087 = vmatprep.subr.bf16.mxu0 %v11749
    %12088 = vmatpush1.bf16.msra.mxu0 %v11748
    %12089 = vmatprep.subr.bf16.mxu0 %v11745
    %12090 = vmatpush1.bf16.msra.mxu0 %v11744
    %12091 = vmatprep.subr.bf16.mxu0 %v11741
    %12092 = vmatpush1.bf16.msra.mxu0 %v11740
    %12093 = vmatprep.subr.bf16.mxu0 %v11737
    %12094 = vmatpush1.bf16.msra.mxu0 %v11736
    %12095 = vmatprep.subr.bf16.mxu0 %v11733
    %12096 = vmatpush1.bf16.msra.mxu0 %v11732
    %12097 = vmatprep.subr.bf16.mxu0 %v11793
    %12098 = vmatpush2.bf16.msra.mxu0 %v11792
    %12099 = vmatprep.subr.bf16.mxu0 %v11789
    %12100 = vmatpush2.bf16.msra.mxu0 %v11788
    %12101 = vmatprep.subr.bf16.mxu0 %v11785
    %12102 = vmatpush2.bf16.msra.mxu0 %v11784
    %12103 = vmatprep.subr.bf16.mxu0 %v11781
    %12104 = vmatpush2.bf16.msra.mxu0 %v11780
    %12105 = vmatprep.subr.bf16.mxu0 %v11777
    %12106 = vmatpush2.bf16.msra.mxu0 %v11776
    %12107 = vmatprep.subr.bf16.mxu0 %v11773
    %12108 = vmatpush2.bf16.msra.mxu0 %v11772
    %12109 = vmatprep.subr.bf16.mxu0 %v11769
    %12110 = vmatpush2.bf16.msra.mxu0 %v11768
    %12111 = vmatprep.subr.bf16.mxu0 %v11765
    %12112 = vmatpush2.bf16.msra.mxu0 %v11764
    %12113 = vmatprep.mubr.bf16.mxu0 %v11253
    %12114 = vmatmul.mubr.bf16.gmra.mxu0 %v11252
    %v12115 = vpop.f32.mrf.mxu0
    %v12116 = vadd.f32 %v12063, %v12115
    %v12117 = vpop.f32.mrf.mxu0
    %v12118 = vadd.f32 %v12065, %v12117
    %v12119 = vpop.f32.mrf.mxu0
    %v12120 = vadd.f32 %v12067, %v12119
    %v12121 = vpop.f32.mrf.mxu0
    %v12122 = vadd.f32 %v12069, %v12121
    %12123 = vmatprep.mubr.bf16.mxu0 %v11273
    %12124 = vmatmul.mubr.bf16.gmra.mxu0 %v11272
    %v12125 = vpop.f32.mrf.mxu0
    %v12126 = vadd.f32 %v12073, %v12125
    %v12127 = vpop.f32.mrf.mxu0
    %v12128 = vadd.f32 %v12075, %v12127
    %v12129 = vpop.f32.mrf.mxu0
    %v12130 = vadd.f32 %v12077, %v12129
    %v12131 = vpop.f32.mrf.mxu0
    %v12132 = vadd.f32 %v12079, %v12131
    %12133 = vdwg.mxu0
    %v12134 = vadd.f32 %v11055, %v12010
    %v12135 = vadd.f32 %v11056, %v12012
    %v12136 = vadd.f32 %v11057, %v12116
    %v12137 = vadd.f32 %v11058, %v12118
    %v12138 = vadd.f32 %v11059, %v12014
    %v12139 = vadd.f32 %v11060, %v12016
    %v12140 = vadd.f32 %v11061, %v12120
    %v12141 = vadd.f32 %v11062, %v12122
    %v12142 = vadd.f32 %v11063, %v12020
    %v12143 = vadd.f32 %v11064, %v12022
    %v12144 = vadd.f32 %v11065, %v12126
    %v12145 = vadd.f32 %v11066, %v12128
    %v12146 = vadd.f32 %v11067, %v12024
    %v12147 = vadd.f32 %v11068, %v12026
    %v12148 = vadd.f32 %v11069, %v12130
    %v12149 = vadd.f32 %v11070, %v12132
    %v12150 = vcombine.high %v11081, %v11088
    %v12151 = vcombine.high %v11096, %v11103
    %v12153 = vshrl.u32 %v11089, 16
    %v12155 = vrot.slane %v12153, 6
    %v12156 = vshll.u32 %v11089, 16
    %v12158 = vrot.slane %v12156, 7
    %v12159 = vor.u32 %v12155, %v12158
    %v12160 = vrot.slane %v12159, 2
    %v12162 = vshll.u32 %v12150, 16
    %v12164 = vrot.slane %v12162, 7
    %v12165 = vsel %vm4546, %v12160, %v12164
    %v12167 = vshrl.u32 %v11104, 16
    %v12169 = vrot.slane %v12167, 6
    %v12170 = vshll.u32 %v11104, 16
    %v12172 = vrot.slane %v12170, 7
    %v12173 = vor.u32 %v12169, %v12172
    %v12174 = vrot.slane %v12173, 2
    %v12176 = vshll.u32 %v12151, 16
    %v12178 = vrot.slane %v12176, 7
    %v12179 = vsel %vm4546, %v12174, %v12178
    %s12180 = scalar_lea.vmem [#allocation8], 7168
    %v12181 = vld [vmem:[%s12180] sm:$0xff]
    %v12182 = vld [vmem:[%s12180 + $0x8] sm:$0xff]
    %v12183 = vld [vmem:[%s12180 + $0x10] sm:$0xff]
    %v12184 = vld [vmem:[%s12180 + $0x18] sm:$0xff]
    %v12185 = vld [vmem:[%s12180 + $0x20] sm:$0xff]
    %v12186 = vld [vmem:[%s12180 + $0x28] sm:$0xff]
    %v12187 = vld [vmem:[%s12180 + $0x30] sm:$0xff]
    %v12188 = vld [vmem:[%s12180 + $0x38] sm:$0xff]
    %v12189 = vld [vmem:[%s12180 + $0x40] sm:$0xff]
    %v12190 = vld [vmem:[%s12180 + $0x48] sm:$0xff]
    %v12191 = vld [vmem:[%s12180 + $0x50] sm:$0xff]
    %v12192 = vld [vmem:[%s12180 + $0x58] sm:$0xff]
    %v12193 = vld [vmem:[%s12180 + $0x60] sm:$0xff]
    %v12194 = vld [vmem:[%s12180 + $0x68] sm:$0xff]
    %v12195 = vld [vmem:[%s12180 + $0x70] sm:$0xff]
    %v12196 = vld [vmem:[%s12180 + $0x78] sm:$0xff]
    %v12197 = vld [vmem:[%s12180 + $0x80] sm:$0xff]
    %v12198 = vld [vmem:[%s12180 + $0x88] sm:$0xff]
    %v12199 = vld [vmem:[%s12180 + $0x90] sm:$0xff]
    %v12200 = vld [vmem:[%s12180 + $0x98] sm:$0xff]
    %v12201 = vld [vmem:[%s12180 + $0xa0] sm:$0xff]
    %v12202 = vld [vmem:[%s12180 + $0xa8] sm:$0xff]
    %v12203 = vld [vmem:[%s12180 + $0xb0] sm:$0xff]
    %v12204 = vld [vmem:[%s12180 + $0xb8] sm:$0xff]
    %v12205 = vld [vmem:[%s12180 + $0xc0] sm:$0xff]
    %v12206 = vld [vmem:[%s12180 + $0xc8] sm:$0xff]
    %v12207 = vld [vmem:[%s12180 + $0xd0] sm:$0xff]
    %v12208 = vld [vmem:[%s12180 + $0xd8] sm:$0xff]
    %v12209 = vld [vmem:[%s12180 + $0xe0] sm:$0xff]
    %v12210 = vld [vmem:[%s12180 + $0xe8] sm:$0xff]
    %v12211 = vld [vmem:[%s12180 + $0xf0] sm:$0xff]
    %v12212 = vld [vmem:[%s12180 + $0xf8] sm:$0xff]
    %v12213 = vld [vmem:[%s12180 + $0x100] sm:$0xff]
    %v12214 = vld [vmem:[%s12180 + $0x108] sm:$0xff]
    %v12215 = vld [vmem:[%s12180 + $0x110] sm:$0xff]
    %v12216 = vld [vmem:[%s12180 + $0x118] sm:$0xff]
    %v12217 = vld [vmem:[%s12180 + $0x120] sm:$0xff]
    %v12218 = vld [vmem:[%s12180 + $0x128] sm:$0xff]
    %v12219 = vld [vmem:[%s12180 + $0x130] sm:$0xff]
    %v12220 = vld [vmem:[%s12180 + $0x138] sm:$0xff]
    %v12221 = vld [vmem:[%s12180 + $0x140] sm:$0xff]
    %v12222 = vld [vmem:[%s12180 + $0x148] sm:$0xff]
    %v12223 = vld [vmem:[%s12180 + $0x150] sm:$0xff]
    %v12224 = vld [vmem:[%s12180 + $0x158] sm:$0xff]
    %v12225 = vld [vmem:[%s12180 + $0x160] sm:$0xff]
    %v12226 = vld [vmem:[%s12180 + $0x168] sm:$0xff]
    %v12227 = vld [vmem:[%s12180 + $0x170] sm:$0xff]
    %v12228 = vld [vmem:[%s12180 + $0x178] sm:$0xff]
    %v12229 = vld [vmem:[%s12180 + $0x180] sm:$0xff]
    %v12230 = vld [vmem:[%s12180 + $0x188] sm:$0xff]
    %v12231 = vld [vmem:[%s12180 + $0x190] sm:$0xff]
    %v12232 = vld [vmem:[%s12180 + $0x198] sm:$0xff]
    %v12233 = vld [vmem:[%s12180 + $0x1a0] sm:$0xff]
    %v12234 = vld [vmem:[%s12180 + $0x1a8] sm:$0xff]
    %v12235 = vld [vmem:[%s12180 + $0x1b0] sm:$0xff]
    %v12236 = vld [vmem:[%s12180 + $0x1b8] sm:$0xff]
    %v12237 = vld [vmem:[%s12180 + $0x1c0] sm:$0xff]
    %v12238 = vld [vmem:[%s12180 + $0x1c8] sm:$0xff]
    %v12239 = vld [vmem:[%s12180 + $0x1d0] sm:$0xff]
    %v12240 = vld [vmem:[%s12180 + $0x1d8] sm:$0xff]
    %v12241 = vld [vmem:[%s12180 + $0x1e0] sm:$0xff]
    %v12242 = vld [vmem:[%s12180 + $0x1e8] sm:$0xff]
    %v12243 = vld [vmem:[%s12180 + $0x1f0] sm:$0xff]
    %v12244 = vld [vmem:[%s12180 + $0x1f8] sm:$0xff]
    %v12245 = vld [vmem:[%s12180 + $0x200] sm:$0xff]
    %v12246 = vld [vmem:[%s12180 + $0x208] sm:$0xff]
    %v12247 = vld [vmem:[%s12180 + $0x210] sm:$0xff]
    %v12248 = vld [vmem:[%s12180 + $0x218] sm:$0xff]
    %v12249 = vld [vmem:[%s12180 + $0x220] sm:$0xff]
    %v12250 = vld [vmem:[%s12180 + $0x228] sm:$0xff]
    %v12251 = vld [vmem:[%s12180 + $0x230] sm:$0xff]
    %v12252 = vld [vmem:[%s12180 + $0x238] sm:$0xff]
    %v12253 = vld [vmem:[%s12180 + $0x240] sm:$0xff]
    %v12254 = vld [vmem:[%s12180 + $0x248] sm:$0xff]
    %v12255 = vld [vmem:[%s12180 + $0x250] sm:$0xff]
    %v12256 = vld [vmem:[%s12180 + $0x258] sm:$0xff]
    %v12257 = vld [vmem:[%s12180 + $0x260] sm:$0xff]
    %v12258 = vld [vmem:[%s12180 + $0x268] sm:$0xff]
    %v12259 = vld [vmem:[%s12180 + $0x270] sm:$0xff]
    %v12260 = vld [vmem:[%s12180 + $0x278] sm:$0xff]
    %v12261 = vld [vmem:[%s12180 + $0x280] sm:$0xff]
    %v12262 = vld [vmem:[%s12180 + $0x288] sm:$0xff]
    %v12263 = vld [vmem:[%s12180 + $0x290] sm:$0xff]
    %v12264 = vld [vmem:[%s12180 + $0x298] sm:$0xff]
    %v12265 = vld [vmem:[%s12180 + $0x2a0] sm:$0xff]
    %v12266 = vld [vmem:[%s12180 + $0x2a8] sm:$0xff]
    %v12267 = vld [vmem:[%s12180 + $0x2b0] sm:$0xff]
    %v12268 = vld [vmem:[%s12180 + $0x2b8] sm:$0xff]
    %v12269 = vld [vmem:[%s12180 + $0x2c0] sm:$0xff]
    %v12270 = vld [vmem:[%s12180 + $0x2c8] sm:$0xff]
    %v12271 = vld [vmem:[%s12180 + $0x2d0] sm:$0xff]
    %v12272 = vld [vmem:[%s12180 + $0x2d8] sm:$0xff]
    %v12273 = vld [vmem:[%s12180 + $0x2e0] sm:$0xff]
    %v12274 = vld [vmem:[%s12180 + $0x2e8] sm:$0xff]
    %v12275 = vld [vmem:[%s12180 + $0x2f0] sm:$0xff]
    %v12276 = vld [vmem:[%s12180 + $0x2f8] sm:$0xff]
    %v12277 = vld [vmem:[%s12180 + $0x300] sm:$0xff]
    %v12278 = vld [vmem:[%s12180 + $0x308] sm:$0xff]
    %v12279 = vld [vmem:[%s12180 + $0x310] sm:$0xff]
    %v12280 = vld [vmem:[%s12180 + $0x318] sm:$0xff]
    %v12281 = vld [vmem:[%s12180 + $0x320] sm:$0xff]
    %v12282 = vld [vmem:[%s12180 + $0x328] sm:$0xff]
    %v12283 = vld [vmem:[%s12180 + $0x330] sm:$0xff]
    %v12284 = vld [vmem:[%s12180 + $0x338] sm:$0xff]
    %v12285 = vld [vmem:[%s12180 + $0x340] sm:$0xff]
    %v12286 = vld [vmem:[%s12180 + $0x348] sm:$0xff]
    %v12287 = vld [vmem:[%s12180 + $0x350] sm:$0xff]
    %v12288 = vld [vmem:[%s12180 + $0x358] sm:$0xff]
    %v12289 = vld [vmem:[%s12180 + $0x360] sm:$0xff]
    %v12290 = vld [vmem:[%s12180 + $0x368] sm:$0xff]
    %v12291 = vld [vmem:[%s12180 + $0x370] sm:$0xff]
    %v12292 = vld [vmem:[%s12180 + $0x378] sm:$0xff]
    %v12293 = vld [vmem:[%s12180 + $0x380] sm:$0xff]
    %v12294 = vld [vmem:[%s12180 + $0x388] sm:$0xff]
    %v12295 = vld [vmem:[%s12180 + $0x390] sm:$0xff]
    %v12296 = vld [vmem:[%s12180 + $0x398] sm:$0xff]
    %v12297 = vld [vmem:[%s12180 + $0x3a0] sm:$0xff]
    %v12298 = vld [vmem:[%s12180 + $0x3a8] sm:$0xff]
    %v12299 = vld [vmem:[%s12180 + $0x3b0] sm:$0xff]
    %v12300 = vld [vmem:[%s12180 + $0x3b8] sm:$0xff]
    %v12301 = vld [vmem:[%s12180 + $0x3c0] sm:$0xff]
    %v12302 = vld [vmem:[%s12180 + $0x3c8] sm:$0xff]
    %v12303 = vld [vmem:[%s12180 + $0x3d0] sm:$0xff]
    %v12304 = vld [vmem:[%s12180 + $0x3d8] sm:$0xff]
    %v12305 = vld [vmem:[%s12180 + $0x3e0] sm:$0xff]
    %v12306 = vld [vmem:[%s12180 + $0x3e8] sm:$0xff]
    %v12307 = vld [vmem:[%s12180 + $0x3f0] sm:$0xff]
    %v12308 = vld [vmem:[%s12180 + $0x3f8] sm:$0xff]
    %v12309 = vcombine.low %v8894, %v12165
    %v12310 = vcombine.high %v8894, %v12165
    %v12312 = vunpack.c.l.s4 1983009808
    %v12313 = vunpack.c.0.s8 %v12312
    %v12314 = vlaneseq
    %v12315 = vshrl.u32 %v12314, 7
    %v12316 = vsub.s32 %v12313, %v12315
    %v12317 = vrot.slane %v12309, %v12316
    %v12319 = vunpack.c.l.s4 1983009808
    %v12320 = vunpack.c.0.s8 %v12319
    %v12321 = vlaneseq
    %v12322 = vshrl.u32 %v12321, 7
    %v12323 = vsub.s32 %v12320, %v12322
    %v12324 = vrot.slane %v12310, %v12323
    %v12325 = vcombine.low %v4812, %v12317
    %v12326 = vcombine.high %v4812, %v12317
    %v12327 = vcombine.low %v4819, %v12324
    %v12328 = vcombine.high %v4819, %v12324
    %v12329 = vcombine.low %v8908, %v12179
    %v12330 = vcombine.high %v8908, %v12179
    %v12332 = vunpack.c.l.s4 1983009808
    %v12333 = vunpack.c.0.s8 %v12332
    %v12334 = vlaneseq
    %v12335 = vshrl.u32 %v12334, 7
    %v12336 = vsub.s32 %v12333, %v12335
    %v12337 = vrot.slane %v12329, %v12336
    %v12339 = vunpack.c.l.s4 1983009808
    %v12340 = vunpack.c.0.s8 %v12339
    %v12341 = vlaneseq
    %v12342 = vshrl.u32 %v12341, 7
    %v12343 = vsub.s32 %v12340, %v12342
    %v12344 = vrot.slane %v12330, %v12343
    %v12345 = vcombine.low %v4848, %v12337
    %v12346 = vcombine.high %v4848, %v12337
    %v12347 = vcombine.low %v4855, %v12344
    %v12348 = vcombine.high %v4855, %v12344
    %v12485 = vunpack.c.l.b16 %v12181
    %v12486 = vunpack.c.h.b16 %v12181
    %v12487 = vunpack.c.l.b16 %v12182
    %v12488 = vunpack.c.h.b16 %v12182
    %v12489 = vunpack.c.l.b16 %v12183
    %v12490 = vunpack.c.h.b16 %v12183
    %v12491 = vunpack.c.l.b16 %v12184
    %v12492 = vunpack.c.h.b16 %v12184
    %v12493 = vunpack.c.l.b16 %v12185
    %v12494 = vunpack.c.h.b16 %v12185
    %v12495 = vunpack.c.l.b16 %v12186
    %v12496 = vunpack.c.h.b16 %v12186
    %v12497 = vunpack.c.l.b16 %v12187
    %v12498 = vunpack.c.h.b16 %v12187
    %v12499 = vunpack.c.l.b16 %v12188
    %v12500 = vunpack.c.h.b16 %v12188
    %v12501 = vunpack.c.l.b16 %v12189
    %v12502 = vunpack.c.h.b16 %v12189
    %v12503 = vunpack.c.l.b16 %v12190
    %v12504 = vunpack.c.h.b16 %v12190
    %v12505 = vunpack.c.l.b16 %v12191
    %v12506 = vunpack.c.h.b16 %v12191
    %v12507 = vunpack.c.l.b16 %v12192
    %v12508 = vunpack.c.h.b16 %v12192
    %v12509 = vunpack.c.l.b16 %v12193
    %v12510 = vunpack.c.h.b16 %v12193
    %v12511 = vunpack.c.l.b16 %v12194
    %v12512 = vunpack.c.h.b16 %v12194
    %v12513 = vunpack.c.l.b16 %v12195
    %v12514 = vunpack.c.h.b16 %v12195
    %v12515 = vunpack.c.l.b16 %v12196
    %v12516 = vunpack.c.h.b16 %v12196
    %v12517 = vunpack.c.l.b16 %v12197
    %v12518 = vunpack.c.h.b16 %v12197
    %v12519 = vunpack.c.l.b16 %v12198
    %v12520 = vunpack.c.h.b16 %v12198
    %v12521 = vunpack.c.l.b16 %v12199
    %v12522 = vunpack.c.h.b16 %v12199
    %v12523 = vunpack.c.l.b16 %v12200
    %v12524 = vunpack.c.h.b16 %v12200
    %v12525 = vunpack.c.l.b16 %v12201
    %v12526 = vunpack.c.h.b16 %v12201
    %v12527 = vunpack.c.l.b16 %v12202
    %v12528 = vunpack.c.h.b16 %v12202
    %v12529 = vunpack.c.l.b16 %v12203
    %v12530 = vunpack.c.h.b16 %v12203
    %v12531 = vunpack.c.l.b16 %v12204
    %v12532 = vunpack.c.h.b16 %v12204
    %v12533 = vunpack.c.l.b16 %v12205
    %v12534 = vunpack.c.h.b16 %v12205
    %v12535 = vunpack.c.l.b16 %v12206
    %v12536 = vunpack.c.h.b16 %v12206
    %v12537 = vunpack.c.l.b16 %v12207
    %v12538 = vunpack.c.h.b16 %v12207
    %v12539 = vunpack.c.l.b16 %v12208
    %v12540 = vunpack.c.h.b16 %v12208
    %v12541 = vunpack.c.l.b16 %v12209
    %v12542 = vunpack.c.h.b16 %v12209
    %v12543 = vunpack.c.l.b16 %v12210
    %v12544 = vunpack.c.h.b16 %v12210
    %v12545 = vunpack.c.l.b16 %v12211
    %v12546 = vunpack.c.h.b16 %v12211
    %v12547 = vunpack.c.l.b16 %v12212
    %v12548 = vunpack.c.h.b16 %v12212
    %v12549 = vunpack.c.l.b16 %v12213
    %v12550 = vunpack.c.h.b16 %v12213
    %v12551 = vunpack.c.l.b16 %v12214
    %v12552 = vunpack.c.h.b16 %v12214
    %v12553 = vunpack.c.l.b16 %v12215
    %v12554 = vunpack.c.h.b16 %v12215
    %v12555 = vunpack.c.l.b16 %v12216
    %v12556 = vunpack.c.h.b16 %v12216
    %v12557 = vunpack.c.l.b16 %v12217
    %v12558 = vunpack.c.h.b16 %v12217
    %v12559 = vunpack.c.l.b16 %v12218
    %v12560 = vunpack.c.h.b16 %v12218
    %v12561 = vunpack.c.l.b16 %v12219
    %v12562 = vunpack.c.h.b16 %v12219
    %v12563 = vunpack.c.l.b16 %v12220
    %v12564 = vunpack.c.h.b16 %v12220
    %v12565 = vunpack.c.l.b16 %v12221
    %v12566 = vunpack.c.h.b16 %v12221
    %v12567 = vunpack.c.l.b16 %v12222
    %v12568 = vunpack.c.h.b16 %v12222
    %v12569 = vunpack.c.l.b16 %v12223
    %v12570 = vunpack.c.h.b16 %v12223
    %v12571 = vunpack.c.l.b16 %v12224
    %v12572 = vunpack.c.h.b16 %v12224
    %v12573 = vunpack.c.l.b16 %v12225
    %v12574 = vunpack.c.h.b16 %v12225
    %v12575 = vunpack.c.l.b16 %v12226
    %v12576 = vunpack.c.h.b16 %v12226
    %v12577 = vunpack.c.l.b16 %v12227
    %v12578 = vunpack.c.h.b16 %v12227
    %v12579 = vunpack.c.l.b16 %v12228
    %v12580 = vunpack.c.h.b16 %v12228
    %v12581 = vunpack.c.l.b16 %v12229
    %v12582 = vunpack.c.h.b16 %v12229
    %v12583 = vunpack.c.l.b16 %v12230
    %v12584 = vunpack.c.h.b16 %v12230
    %v12585 = vunpack.c.l.b16 %v12231
    %v12586 = vunpack.c.h.b16 %v12231
    %v12587 = vunpack.c.l.b16 %v12232
    %v12588 = vunpack.c.h.b16 %v12232
    %v12589 = vunpack.c.l.b16 %v12233
    %v12590 = vunpack.c.h.b16 %v12233
    %v12591 = vunpack.c.l.b16 %v12234
    %v12592 = vunpack.c.h.b16 %v12234
    %v12593 = vunpack.c.l.b16 %v12235
    %v12594 = vunpack.c.h.b16 %v12235
    %v12595 = vunpack.c.l.b16 %v12236
    %v12596 = vunpack.c.h.b16 %v12236
    %v12597 = vunpack.c.l.b16 %v12237
    %v12598 = vunpack.c.h.b16 %v12237
    %v12599 = vunpack.c.l.b16 %v12238
    %v12600 = vunpack.c.h.b16 %v12238
    %v12601 = vunpack.c.l.b16 %v12239
    %v12602 = vunpack.c.h.b16 %v12239
    %v12603 = vunpack.c.l.b16 %v12240
    %v12604 = vunpack.c.h.b16 %v12240
    %v12605 = vunpack.c.l.b16 %v12241
    %v12606 = vunpack.c.h.b16 %v12241
    %v12607 = vunpack.c.l.b16 %v12242
    %v12608 = vunpack.c.h.b16 %v12242
    %v12609 = vunpack.c.l.b16 %v12243
    %v12610 = vunpack.c.h.b16 %v12243
    %v12611 = vunpack.c.l.b16 %v12244
    %v12612 = vunpack.c.h.b16 %v12244
    %v12613 = vunpack.c.l.b16 %v12245
    %v12614 = vunpack.c.h.b16 %v12245
    %v12615 = vunpack.c.l.b16 %v12246
    %v12616 = vunpack.c.h.b16 %v12246
    %v12617 = vunpack.c.l.b16 %v12247
    %v12618 = vunpack.c.h.b16 %v12247
    %v12619 = vunpack.c.l.b16 %v12248
    %v12620 = vunpack.c.h.b16 %v12248
    %v12621 = vunpack.c.l.b16 %v12249
    %v12622 = vunpack.c.h.b16 %v12249
    %v12623 = vunpack.c.l.b16 %v12250
    %v12624 = vunpack.c.h.b16 %v12250
    %v12625 = vunpack.c.l.b16 %v12251
    %v12626 = vunpack.c.h.b16 %v12251
    %v12627 = vunpack.c.l.b16 %v12252
    %v12628 = vunpack.c.h.b16 %v12252
    %v12629 = vunpack.c.l.b16 %v12253
    %v12630 = vunpack.c.h.b16 %v12253
    %v12631 = vunpack.c.l.b16 %v12254
    %v12632 = vunpack.c.h.b16 %v12254
    %v12633 = vunpack.c.l.b16 %v12255
    %v12634 = vunpack.c.h.b16 %v12255
    %v12635 = vunpack.c.l.b16 %v12256
    %v12636 = vunpack.c.h.b16 %v12256
    %v12637 = vunpack.c.l.b16 %v12257
    %v12638 = vunpack.c.h.b16 %v12257
    %v12639 = vunpack.c.l.b16 %v12258
    %v12640 = vunpack.c.h.b16 %v12258
    %v12641 = vunpack.c.l.b16 %v12259
    %v12642 = vunpack.c.h.b16 %v12259
    %v12643 = vunpack.c.l.b16 %v12260
    %v12644 = vunpack.c.h.b16 %v12260
    %v12645 = vunpack.c.l.b16 %v12261
    %v12646 = vunpack.c.h.b16 %v12261
    %v12647 = vunpack.c.l.b16 %v12262
    %v12648 = vunpack.c.h.b16 %v12262
    %v12649 = vunpack.c.l.b16 %v12263
    %v12650 = vunpack.c.h.b16 %v12263
    %v12651 = vunpack.c.l.b16 %v12264
    %v12652 = vunpack.c.h.b16 %v12264
    %v12653 = vunpack.c.l.b16 %v12265
    %v12654 = vunpack.c.h.b16 %v12265
    %v12655 = vunpack.c.l.b16 %v12266
    %v12656 = vunpack.c.h.b16 %v12266
    %v12657 = vunpack.c.l.b16 %v12267
    %v12658 = vunpack.c.h.b16 %v12267
    %v12659 = vunpack.c.l.b16 %v12268
    %v12660 = vunpack.c.h.b16 %v12268
    %v12661 = vunpack.c.l.b16 %v12269
    %v12662 = vunpack.c.h.b16 %v12269
    %v12663 = vunpack.c.l.b16 %v12270
    %v12664 = vunpack.c.h.b16 %v12270
    %v12665 = vunpack.c.l.b16 %v12271
    %v12666 = vunpack.c.h.b16 %v12271
    %v12667 = vunpack.c.l.b16 %v12272
    %v12668 = vunpack.c.h.b16 %v12272
    %v12669 = vunpack.c.l.b16 %v12273
    %v12670 = vunpack.c.h.b16 %v12273
    %v12671 = vunpack.c.l.b16 %v12274
    %v12672 = vunpack.c.h.b16 %v12274
    %v12673 = vunpack.c.l.b16 %v12275
    %v12674 = vunpack.c.h.b16 %v12275
    %v12675 = vunpack.c.l.b16 %v12276
    %v12676 = vunpack.c.h.b16 %v12276
    %v12677 = vunpack.c.l.b16 %v12277
    %v12678 = vunpack.c.h.b16 %v12277
    %v12679 = vunpack.c.l.b16 %v12278
    %v12680 = vunpack.c.h.b16 %v12278
    %v12681 = vunpack.c.l.b16 %v12279
    %v12682 = vunpack.c.h.b16 %v12279
    %v12683 = vunpack.c.l.b16 %v12280
    %v12684 = vunpack.c.h.b16 %v12280
    %v12685 = vunpack.c.l.b16 %v12281
    %v12686 = vunpack.c.h.b16 %v12281
    %v12687 = vunpack.c.l.b16 %v12282
    %v12688 = vunpack.c.h.b16 %v12282
    %v12689 = vunpack.c.l.b16 %v12283
    %v12690 = vunpack.c.h.b16 %v12283
    %v12691 = vunpack.c.l.b16 %v12284
    %v12692 = vunpack.c.h.b16 %v12284
    %v12693 = vunpack.c.l.b16 %v12285
    %v12694 = vunpack.c.h.b16 %v12285
    %v12695 = vunpack.c.l.b16 %v12286
    %v12696 = vunpack.c.h.b16 %v12286
    %v12697 = vunpack.c.l.b16 %v12287
    %v12698 = vunpack.c.h.b16 %v12287
    %v12699 = vunpack.c.l.b16 %v12288
    %v12700 = vunpack.c.h.b16 %v12288
    %v12701 = vunpack.c.l.b16 %v12289
    %v12702 = vunpack.c.h.b16 %v12289
    %v12703 = vunpack.c.l.b16 %v12290
    %v12704 = vunpack.c.h.b16 %v12290
    %v12705 = vunpack.c.l.b16 %v12291
    %v12706 = vunpack.c.h.b16 %v12291
    %v12707 = vunpack.c.l.b16 %v12292
    %v12708 = vunpack.c.h.b16 %v12292
    %v12709 = vunpack.c.l.b16 %v12293
    %v12710 = vunpack.c.h.b16 %v12293
    %v12711 = vunpack.c.l.b16 %v12294
    %v12712 = vunpack.c.h.b16 %v12294
    %v12713 = vunpack.c.l.b16 %v12295
    %v12714 = vunpack.c.h.b16 %v12295
    %v12715 = vunpack.c.l.b16 %v12296
    %v12716 = vunpack.c.h.b16 %v12296
    %v12717 = vunpack.c.l.b16 %v12297
    %v12718 = vunpack.c.h.b16 %v12297
    %v12719 = vunpack.c.l.b16 %v12298
    %v12720 = vunpack.c.h.b16 %v12298
    %v12721 = vunpack.c.l.b16 %v12299
    %v12722 = vunpack.c.h.b16 %v12299
    %v12723 = vunpack.c.l.b16 %v12300
    %v12724 = vunpack.c.h.b16 %v12300
    %v12725 = vunpack.c.l.b16 %v12301
    %v12726 = vunpack.c.h.b16 %v12301
    %v12727 = vunpack.c.l.b16 %v12302
    %v12728 = vunpack.c.h.b16 %v12302
    %v12729 = vunpack.c.l.b16 %v12303
    %v12730 = vunpack.c.h.b16 %v12303
    %v12731 = vunpack.c.l.b16 %v12304
    %v12732 = vunpack.c.h.b16 %v12304
    %v12733 = vunpack.c.l.b16 %v12305
    %v12734 = vunpack.c.h.b16 %v12305
    %v12735 = vunpack.c.l.b16 %v12306
    %v12736 = vunpack.c.h.b16 %v12306
    %v12737 = vunpack.c.l.b16 %v12307
    %v12738 = vunpack.c.h.b16 %v12307
    %v12739 = vunpack.c.l.b16 %v12308
    %v12740 = vunpack.c.h.b16 %v12308
    %v12741 = vpack.c.b16 %v12489, %v12485
    %v12742 = vpack.c.b16 %v12490, %v12486
    %v12743 = vpack.c.b16 %v12491, %v12487
    %v12744 = vpack.c.b16 %v12492, %v12488
    %v12745 = vpack.c.b16 %v12497, %v12493
    %v12746 = vpack.c.b16 %v12498, %v12494
    %v12747 = vpack.c.b16 %v12499, %v12495
    %v12748 = vpack.c.b16 %v12500, %v12496
    %v12749 = vpack.c.b16 %v12505, %v12501
    %v12750 = vpack.c.b16 %v12506, %v12502
    %v12751 = vpack.c.b16 %v12507, %v12503
    %v12752 = vpack.c.b16 %v12508, %v12504
    %v12753 = vpack.c.b16 %v12513, %v12509
    %v12754 = vpack.c.b16 %v12514, %v12510
    %v12755 = vpack.c.b16 %v12515, %v12511
    %v12756 = vpack.c.b16 %v12516, %v12512
    %v12757 = vpack.c.b16 %v12521, %v12517
    %v12758 = vpack.c.b16 %v12522, %v12518
    %v12759 = vpack.c.b16 %v12523, %v12519
    %v12760 = vpack.c.b16 %v12524, %v12520
    %v12761 = vpack.c.b16 %v12529, %v12525
    %v12762 = vpack.c.b16 %v12530, %v12526
    %v12763 = vpack.c.b16 %v12531, %v12527
    %v12764 = vpack.c.b16 %v12532, %v12528
    %v12765 = vpack.c.b16 %v12537, %v12533
    %v12766 = vpack.c.b16 %v12538, %v12534
    %v12767 = vpack.c.b16 %v12539, %v12535
    %v12768 = vpack.c.b16 %v12540, %v12536
    %v12769 = vpack.c.b16 %v12545, %v12541
    %v12770 = vpack.c.b16 %v12546, %v12542
    %v12771 = vpack.c.b16 %v12547, %v12543
    %v12772 = vpack.c.b16 %v12548, %v12544
    %v12773 = vpack.c.b16 %v12553, %v12549
    %v12774 = vpack.c.b16 %v12554, %v12550
    %v12775 = vpack.c.b16 %v12555, %v12551
    %v12776 = vpack.c.b16 %v12556, %v12552
    %v12777 = vpack.c.b16 %v12561, %v12557
    %v12778 = vpack.c.b16 %v12562, %v12558
    %v12779 = vpack.c.b16 %v12563, %v12559
    %v12780 = vpack.c.b16 %v12564, %v12560
    %v12781 = vpack.c.b16 %v12569, %v12565
    %v12782 = vpack.c.b16 %v12570, %v12566
    %v12783 = vpack.c.b16 %v12571, %v12567
    %v12784 = vpack.c.b16 %v12572, %v12568
    %v12785 = vpack.c.b16 %v12577, %v12573
    %v12786 = vpack.c.b16 %v12578, %v12574
    %v12787 = vpack.c.b16 %v12579, %v12575
    %v12788 = vpack.c.b16 %v12580, %v12576
    %v12789 = vpack.c.b16 %v12585, %v12581
    %v12790 = vpack.c.b16 %v12586, %v12582
    %v12791 = vpack.c.b16 %v12587, %v12583
    %v12792 = vpack.c.b16 %v12588, %v12584
    %v12793 = vpack.c.b16 %v12593, %v12589
    %v12794 = vpack.c.b16 %v12594, %v12590
    %v12795 = vpack.c.b16 %v12595, %v12591
    %v12796 = vpack.c.b16 %v12596, %v12592
    %v12797 = vpack.c.b16 %v12601, %v12597
    %v12798 = vpack.c.b16 %v12602, %v12598
    %v12799 = vpack.c.b16 %v12603, %v12599
    %v12800 = vpack.c.b16 %v12604, %v12600
    %v12801 = vpack.c.b16 %v12609, %v12605
    %v12802 = vpack.c.b16 %v12610, %v12606
    %v12803 = vpack.c.b16 %v12611, %v12607
    %v12804 = vpack.c.b16 %v12612, %v12608
    %v12805 = vpack.c.b16 %v12617, %v12613
    %v12806 = vpack.c.b16 %v12618, %v12614
    %v12807 = vpack.c.b16 %v12619, %v12615
    %v12808 = vpack.c.b16 %v12620, %v12616
    %v12809 = vpack.c.b16 %v12625, %v12621
    %v12810 = vpack.c.b16 %v12626, %v12622
    %v12811 = vpack.c.b16 %v12627, %v12623
    %v12812 = vpack.c.b16 %v12628, %v12624
    %v12813 = vpack.c.b16 %v12633, %v12629
    %v12814 = vpack.c.b16 %v12634, %v12630
    %v12815 = vpack.c.b16 %v12635, %v12631
    %v12816 = vpack.c.b16 %v12636, %v12632
    %v12817 = vpack.c.b16 %v12641, %v12637
    %v12818 = vpack.c.b16 %v12642, %v12638
    %v12819 = vpack.c.b16 %v12643, %v12639
    %v12820 = vpack.c.b16 %v12644, %v12640
    %v12821 = vpack.c.b16 %v12649, %v12645
    %v12822 = vpack.c.b16 %v12650, %v12646
    %v12823 = vpack.c.b16 %v12651, %v12647
    %v12824 = vpack.c.b16 %v12652, %v12648
    %v12825 = vpack.c.b16 %v12657, %v12653
    %v12826 = vpack.c.b16 %v12658, %v12654
    %v12827 = vpack.c.b16 %v12659, %v12655
    %v12828 = vpack.c.b16 %v12660, %v12656
    %v12829 = vpack.c.b16 %v12665, %v12661
    %v12830 = vpack.c.b16 %v12666, %v12662
    %v12831 = vpack.c.b16 %v12667, %v12663
    %v12832 = vpack.c.b16 %v12668, %v12664
    %v12833 = vpack.c.b16 %v12673, %v12669
    %v12834 = vpack.c.b16 %v12674, %v12670
    %v12835 = vpack.c.b16 %v12675, %v12671
    %v12836 = vpack.c.b16 %v12676, %v12672
    %v12837 = vpack.c.b16 %v12681, %v12677
    %v12838 = vpack.c.b16 %v12682, %v12678
    %v12839 = vpack.c.b16 %v12683, %v12679
    %v12840 = vpack.c.b16 %v12684, %v12680
    %v12841 = vpack.c.b16 %v12689, %v12685
    %v12842 = vpack.c.b16 %v12690, %v12686
    %v12843 = vpack.c.b16 %v12691, %v12687
    %v12844 = vpack.c.b16 %v12692, %v12688
    %v12845 = vpack.c.b16 %v12697, %v12693
    %v12846 = vpack.c.b16 %v12698, %v12694
    %v12847 = vpack.c.b16 %v12699, %v12695
    %v12848 = vpack.c.b16 %v12700, %v12696
    %v12849 = vpack.c.b16 %v12705, %v12701
    %v12850 = vpack.c.b16 %v12706, %v12702
    %v12851 = vpack.c.b16 %v12707, %v12703
    %v12852 = vpack.c.b16 %v12708, %v12704
    %v12853 = vpack.c.b16 %v12713, %v12709
    %v12854 = vpack.c.b16 %v12714, %v12710
    %v12855 = vpack.c.b16 %v12715, %v12711
    %v12856 = vpack.c.b16 %v12716, %v12712
    %v12857 = vpack.c.b16 %v12721, %v12717
    %v12858 = vpack.c.b16 %v12722, %v12718
    %v12859 = vpack.c.b16 %v12723, %v12719
    %v12860 = vpack.c.b16 %v12724, %v12720
    %v12861 = vpack.c.b16 %v12729, %v12725
    %v12862 = vpack.c.b16 %v12730, %v12726
    %v12863 = vpack.c.b16 %v12731, %v12727
    %v12864 = vpack.c.b16 %v12732, %v12728
    %v12865 = vpack.c.b16 %v12737, %v12733
    %v12866 = vpack.c.b16 %v12738, %v12734
    %v12867 = vpack.c.b16 %v12739, %v12735
    %v12868 = vpack.c.b16 %v12740, %v12736
    %12997 = vmatprep.subr.bf16.mxu0 %v12770
    %12998 = vmatpush1.bf16.msra.mxu0 %v12769
    %12999 = vmatprep.subr.bf16.mxu0 %v12766
    %13000 = vmatpush1.bf16.msra.mxu0 %v12765
    %13001 = vmatprep.subr.bf16.mxu0 %v12762
    %13002 = vmatpush1.bf16.msra.mxu0 %v12761
    %13003 = vmatprep.subr.bf16.mxu0 %v12758
    %13004 = vmatpush1.bf16.msra.mxu0 %v12757
    %13005 = vmatprep.subr.bf16.mxu0 %v12754
    %13006 = vmatpush1.bf16.msra.mxu0 %v12753
    %13007 = vmatprep.subr.bf16.mxu0 %v12750
    %13008 = vmatpush1.bf16.msra.mxu0 %v12749
    %13009 = vmatprep.subr.bf16.mxu0 %v12746
    %13010 = vmatpush1.bf16.msra.mxu0 %v12745
    %13011 = vmatprep.subr.bf16.mxu0 %v12742
    %13012 = vmatpush1.bf16.msra.mxu0 %v12741
    %13013 = vmatprep.subr.bf16.mxu0 %v12802
    %13014 = vmatpush2.bf16.msra.mxu0 %v12801
    %13015 = vmatprep.subr.bf16.mxu0 %v12798
    %13016 = vmatpush2.bf16.msra.mxu0 %v12797
    %13017 = vmatprep.subr.bf16.mxu0 %v12794
    %13018 = vmatpush2.bf16.msra.mxu0 %v12793
    %13019 = vmatprep.subr.bf16.mxu0 %v12790
    %13020 = vmatpush2.bf16.msra.mxu0 %v12789
    %13021 = vmatprep.subr.bf16.mxu0 %v12786
    %13022 = vmatpush2.bf16.msra.mxu0 %v12785
    %13023 = vmatprep.subr.bf16.mxu0 %v12782
    %13024 = vmatpush2.bf16.msra.mxu0 %v12781
    %13025 = vmatprep.subr.bf16.mxu0 %v12778
    %13026 = vmatpush2.bf16.msra.mxu0 %v12777
    %13027 = vmatprep.subr.bf16.mxu0 %v12774
    %13028 = vmatpush2.bf16.msra.mxu0 %v12773
    %13029 = vmatprep.mubr.bf16.mxu0 %v12326
    %13030 = vmatmul.mubr.bf16.gmra.mxu0 %v12325
    %v13031 = vpop.f32.mrf.mxu0
    %v13032 = vadd.f32 0.0, %v13031
    %v13033 = vpop.f32.mrf.mxu0
    %v13034 = vadd.f32 0.0, %v13033
    %v13035 = vpop.f32.mrf.mxu0
    %v13036 = vadd.f32 0.0, %v13035
    %v13037 = vpop.f32.mrf.mxu0
    %v13038 = vadd.f32 0.0, %v13037
    %13039 = vmatprep.mubr.bf16.mxu0 %v12346
    %13040 = vmatmul.mubr.bf16.gmra.mxu0 %v12345
    %v13041 = vpop.f32.mrf.mxu0
    %v13042 = vadd.f32 0.0, %v13041
    %v13043 = vpop.f32.mrf.mxu0
    %v13044 = vadd.f32 0.0, %v13043
    %v13045 = vpop.f32.mrf.mxu0
    %v13046 = vadd.f32 0.0, %v13045
    %v13047 = vpop.f32.mrf.mxu0
    %v13048 = vadd.f32 0.0, %v13047
    %13049 = vdwg.mxu0
    %13050 = vmatprep.subr.bf16.mxu0 %v12834
    %13051 = vmatpush1.bf16.msra.mxu0 %v12833
    %13052 = vmatprep.subr.bf16.mxu0 %v12830
    %13053 = vmatpush1.bf16.msra.mxu0 %v12829
    %13054 = vmatprep.subr.bf16.mxu0 %v12826
    %13055 = vmatpush1.bf16.msra.mxu0 %v12825
    %13056 = vmatprep.subr.bf16.mxu0 %v12822
    %13057 = vmatpush1.bf16.msra.mxu0 %v12821
    %13058 = vmatprep.subr.bf16.mxu0 %v12818
    %13059 = vmatpush1.bf16.msra.mxu0 %v12817
    %13060 = vmatprep.subr.bf16.mxu0 %v12814
    %13061 = vmatpush1.bf16.msra.mxu0 %v12813
    %13062 = vmatprep.subr.bf16.mxu0 %v12810
    %13063 = vmatpush1.bf16.msra.mxu0 %v12809
    %13064 = vmatprep.subr.bf16.mxu0 %v12806
    %13065 = vmatpush1.bf16.msra.mxu0 %v12805
    %13066 = vmatprep.subr.bf16.mxu0 %v12866
    %13067 = vmatpush2.bf16.msra.mxu0 %v12865
    %13068 = vmatprep.subr.bf16.mxu0 %v12862
    %13069 = vmatpush2.bf16.msra.mxu0 %v12861
    %13070 = vmatprep.subr.bf16.mxu0 %v12858
    %13071 = vmatpush2.bf16.msra.mxu0 %v12857
    %13072 = vmatprep.subr.bf16.mxu0 %v12854
    %13073 = vmatpush2.bf16.msra.mxu0 %v12853
    %13074 = vmatprep.subr.bf16.mxu0 %v12850
    %13075 = vmatpush2.bf16.msra.mxu0 %v12849
    %13076 = vmatprep.subr.bf16.mxu0 %v12846
    %13077 = vmatpush2.bf16.msra.mxu0 %v12845
    %13078 = vmatprep.subr.bf16.mxu0 %v12842
    %13079 = vmatpush2.bf16.msra.mxu0 %v12841
    %13080 = vmatprep.subr.bf16.mxu0 %v12838
    %13081 = vmatpush2.bf16.msra.mxu0 %v12837
    %13082 = vmatprep.mubr.bf16.mxu0 %v12328
    %13083 = vmatmul.mubr.bf16.gmra.mxu0 %v12327
    %v13084 = vpop.f32.mrf.mxu0
    %v13085 = vadd.f32 %v13032, %v13084
    %v13086 = vpop.f32.mrf.mxu0
    %v13087 = vadd.f32 %v13034, %v13086
    %v13088 = vpop.f32.mrf.mxu0
    %v13089 = vadd.f32 %v13036, %v13088
    %v13090 = vpop.f32.mrf.mxu0
    %v13091 = vadd.f32 %v13038, %v13090
    %13092 = vmatprep.mubr.bf16.mxu0 %v12348
    %13093 = vmatmul.mubr.bf16.gmra.mxu0 %v12347
    %v13094 = vpop.f32.mrf.mxu0
    %v13095 = vadd.f32 %v13042, %v13094
    %v13096 = vpop.f32.mrf.mxu0
    %v13097 = vadd.f32 %v13044, %v13096
    %v13098 = vpop.f32.mrf.mxu0
    %v13099 = vadd.f32 %v13046, %v13098
    %v13100 = vpop.f32.mrf.mxu0
    %v13101 = vadd.f32 %v13048, %v13100
    %13102 = vdwg.mxu0
    %13103 = vmatprep.subr.bf16.mxu0 %v12772
    %13104 = vmatpush1.bf16.msra.mxu0 %v12771
    %13105 = vmatprep.subr.bf16.mxu0 %v12768
    %13106 = vmatpush1.bf16.msra.mxu0 %v12767
    %13107 = vmatprep.subr.bf16.mxu0 %v12764
    %13108 = vmatpush1.bf16.msra.mxu0 %v12763
    %13109 = vmatprep.subr.bf16.mxu0 %v12760
    %13110 = vmatpush1.bf16.msra.mxu0 %v12759
    %13111 = vmatprep.subr.bf16.mxu0 %v12756
    %13112 = vmatpush1.bf16.msra.mxu0 %v12755
    %13113 = vmatprep.subr.bf16.mxu0 %v12752
    %13114 = vmatpush1.bf16.msra.mxu0 %v12751
    %13115 = vmatprep.subr.bf16.mxu0 %v12748
    %13116 = vmatpush1.bf16.msra.mxu0 %v12747
    %13117 = vmatprep.subr.bf16.mxu0 %v12744
    %13118 = vmatpush1.bf16.msra.mxu0 %v12743
    %13119 = vmatprep.subr.bf16.mxu0 %v12804
    %13120 = vmatpush2.bf16.msra.mxu0 %v12803
    %13121 = vmatprep.subr.bf16.mxu0 %v12800
    %13122 = vmatpush2.bf16.msra.mxu0 %v12799
    %13123 = vmatprep.subr.bf16.mxu0 %v12796
    %13124 = vmatpush2.bf16.msra.mxu0 %v12795
    %13125 = vmatprep.subr.bf16.mxu0 %v12792
    %13126 = vmatpush2.bf16.msra.mxu0 %v12791
    %13127 = vmatprep.subr.bf16.mxu0 %v12788
    %13128 = vmatpush2.bf16.msra.mxu0 %v12787
    %13129 = vmatprep.subr.bf16.mxu0 %v12784
    %13130 = vmatpush2.bf16.msra.mxu0 %v12783
    %13131 = vmatprep.subr.bf16.mxu0 %v12780
    %13132 = vmatpush2.bf16.msra.mxu0 %v12779
    %13133 = vmatprep.subr.bf16.mxu0 %v12776
    %13134 = vmatpush2.bf16.msra.mxu0 %v12775
    %13135 = vmatprep.mubr.bf16.mxu0 %v12326
    %13136 = vmatmul.mubr.bf16.gmra.mxu0 %v12325
    %v13137 = vpop.f32.mrf.mxu0
    %v13138 = vadd.f32 0.0, %v13137
    %v13139 = vpop.f32.mrf.mxu0
    %v13140 = vadd.f32 0.0, %v13139
    %v13141 = vpop.f32.mrf.mxu0
    %v13142 = vadd.f32 0.0, %v13141
    %v13143 = vpop.f32.mrf.mxu0
    %v13144 = vadd.f32 0.0, %v13143
    %13145 = vmatprep.mubr.bf16.mxu0 %v12346
    %13146 = vmatmul.mubr.bf16.gmra.mxu0 %v12345
    %v13147 = vpop.f32.mrf.mxu0
    %v13148 = vadd.f32 0.0, %v13147
    %v13149 = vpop.f32.mrf.mxu0
    %v13150 = vadd.f32 0.0, %v13149
    %v13151 = vpop.f32.mrf.mxu0
    %v13152 = vadd.f32 0.0, %v13151
    %v13153 = vpop.f32.mrf.mxu0
    %v13154 = vadd.f32 0.0, %v13153
    %13155 = vdwg.mxu0
    %13156 = vmatprep.subr.bf16.mxu0 %v12836
    %13157 = vmatpush1.bf16.msra.mxu0 %v12835
    %13158 = vmatprep.subr.bf16.mxu0 %v12832
    %13159 = vmatpush1.bf16.msra.mxu0 %v12831
    %13160 = vmatprep.subr.bf16.mxu0 %v12828
    %13161 = vmatpush1.bf16.msra.mxu0 %v12827
    %13162 = vmatprep.subr.bf16.mxu0 %v12824
    %13163 = vmatpush1.bf16.msra.mxu0 %v12823
    %13164 = vmatprep.subr.bf16.mxu0 %v12820
    %13165 = vmatpush1.bf16.msra.mxu0 %v12819
    %13166 = vmatprep.subr.bf16.mxu0 %v12816
    %13167 = vmatpush1.bf16.msra.mxu0 %v12815
    %13168 = vmatprep.subr.bf16.mxu0 %v12812
    %13169 = vmatpush1.bf16.msra.mxu0 %v12811
    %13170 = vmatprep.subr.bf16.mxu0 %v12808
    %13171 = vmatpush1.bf16.msra.mxu0 %v12807
    %13172 = vmatprep.subr.bf16.mxu0 %v12868
    %13173 = vmatpush2.bf16.msra.mxu0 %v12867
    %13174 = vmatprep.subr.bf16.mxu0 %v12864
    %13175 = vmatpush2.bf16.msra.mxu0 %v12863
    %13176 = vmatprep.subr.bf16.mxu0 %v12860
    %13177 = vmatpush2.bf16.msra.mxu0 %v12859
    %13178 = vmatprep.subr.bf16.mxu0 %v12856
    %13179 = vmatpush2.bf16.msra.mxu0 %v12855
    %13180 = vmatprep.subr.bf16.mxu0 %v12852
    %13181 = vmatpush2.bf16.msra.mxu0 %v12851
    %13182 = vmatprep.subr.bf16.mxu0 %v12848
    %13183 = vmatpush2.bf16.msra.mxu0 %v12847
    %13184 = vmatprep.subr.bf16.mxu0 %v12844
    %13185 = vmatpush2.bf16.msra.mxu0 %v12843
    %13186 = vmatprep.subr.bf16.mxu0 %v12840
    %13187 = vmatpush2.bf16.msra.mxu0 %v12839
    %13188 = vmatprep.mubr.bf16.mxu0 %v12328
    %13189 = vmatmul.mubr.bf16.gmra.mxu0 %v12327
    %v13190 = vpop.f32.mrf.mxu0
    %v13191 = vadd.f32 %v13138, %v13190
    %v13192 = vpop.f32.mrf.mxu0
    %v13193 = vadd.f32 %v13140, %v13192
    %v13194 = vpop.f32.mrf.mxu0
    %v13195 = vadd.f32 %v13142, %v13194
    %v13196 = vpop.f32.mrf.mxu0
    %v13197 = vadd.f32 %v13144, %v13196
    %13198 = vmatprep.mubr.bf16.mxu0 %v12348
    %13199 = vmatmul.mubr.bf16.gmra.mxu0 %v12347
    %v13200 = vpop.f32.mrf.mxu0
    %v13201 = vadd.f32 %v13148, %v13200
    %v13202 = vpop.f32.mrf.mxu0
    %v13203 = vadd.f32 %v13150, %v13202
    %v13204 = vpop.f32.mrf.mxu0
    %v13205 = vadd.f32 %v13152, %v13204
    %v13206 = vpop.f32.mrf.mxu0
    %v13207 = vadd.f32 %v13154, %v13206
    %13208 = vdwg.mxu0
    %v13209 = vadd.f32 %v12134, %v13085
    %v13210 = vadd.f32 %v12135, %v13087
    %v13211 = vadd.f32 %v12136, %v13191
    %v13212 = vadd.f32 %v12137, %v13193
    %v13213 = vadd.f32 %v12138, %v13089
    %v13214 = vadd.f32 %v12139, %v13091
    %v13215 = vadd.f32 %v12140, %v13195
    %v13216 = vadd.f32 %v12141, %v13197
    %v13217 = vadd.f32 %v12142, %v13095
    %v13218 = vadd.f32 %v12143, %v13097
    %v13219 = vadd.f32 %v12144, %v13201
    %v13220 = vadd.f32 %v12145, %v13203
    %v13221 = vadd.f32 %v12146, %v13099
    %v13222 = vadd.f32 %v12147, %v13101
    %v13223 = vadd.f32 %v12148, %v13205
    %v13224 = vadd.f32 %v12149, %v13207
    %v13225 = vrot.slane %v11089, 7
    %v13226 = vrot.slane %v13225, 2
    %v13227 = vrot.slane %v12150, 7
    %v13228 = vsel %vm6658, %v13226, %v13227
    %v13229 = vrot.slane %v11104, 7
    %v13230 = vrot.slane %v13229, 2
    %v13231 = vrot.slane %v12151, 7
    %v13232 = vsel %vm6658, %v13230, %v13231
    %s13233 = scalar_lea.vmem [#allocation8], 8192
    %v13234 = vld [vmem:[%s13233] sm:$0xff]
    %v13235 = vld [vmem:[%s13233 + $0x8] sm:$0xff]
    %v13236 = vld [vmem:[%s13233 + $0x10] sm:$0xff]
    %v13237 = vld [vmem:[%s13233 + $0x18] sm:$0xff]
    %v13238 = vld [vmem:[%s13233 + $0x20] sm:$0xff]
    %v13239 = vld [vmem:[%s13233 + $0x28] sm:$0xff]
    %v13240 = vld [vmem:[%s13233 + $0x30] sm:$0xff]
    %v13241 = vld [vmem:[%s13233 + $0x38] sm:$0xff]
    %v13242 = vld [vmem:[%s13233 + $0x40] sm:$0xff]
    %v13243 = vld [vmem:[%s13233 + $0x48] sm:$0xff]
    %v13244 = vld [vmem:[%s13233 + $0x50] sm:$0xff]
    %v13245 = vld [vmem:[%s13233 + $0x58] sm:$0xff]
    %v13246 = vld [vmem:[%s13233 + $0x60] sm:$0xff]
    %v13247 = vld [vmem:[%s13233 + $0x68] sm:$0xff]
    %v13248 = vld [vmem:[%s13233 + $0x70] sm:$0xff]
    %v13249 = vld [vmem:[%s13233 + $0x78] sm:$0xff]
    %v13250 = vld [vmem:[%s13233 + $0x80] sm:$0xff]
    %v13251 = vld [vmem:[%s13233 + $0x88] sm:$0xff]
    %v13252 = vld [vmem:[%s13233 + $0x90] sm:$0xff]
    %v13253 = vld [vmem:[%s13233 + $0x98] sm:$0xff]
    %v13254 = vld [vmem:[%s13233 + $0xa0] sm:$0xff]
    %v13255 = vld [vmem:[%s13233 + $0xa8] sm:$0xff]
    %v13256 = vld [vmem:[%s13233 + $0xb0] sm:$0xff]
    %v13257 = vld [vmem:[%s13233 + $0xb8] sm:$0xff]
    %v13258 = vld [vmem:[%s13233 + $0xc0] sm:$0xff]
    %v13259 = vld [vmem:[%s13233 + $0xc8] sm:$0xff]
    %v13260 = vld [vmem:[%s13233 + $0xd0] sm:$0xff]
    %v13261 = vld [vmem:[%s13233 + $0xd8] sm:$0xff]
    %v13262 = vld [vmem:[%s13233 + $0xe0] sm:$0xff]
    %v13263 = vld [vmem:[%s13233 + $0xe8] sm:$0xff]
    %v13264 = vld [vmem:[%s13233 + $0xf0] sm:$0xff]
    %v13265 = vld [vmem:[%s13233 + $0xf8] sm:$0xff]
    %v13266 = vld [vmem:[%s13233 + $0x100] sm:$0xff]
    %v13267 = vld [vmem:[%s13233 + $0x108] sm:$0xff]
    %v13268 = vld [vmem:[%s13233 + $0x110] sm:$0xff]
    %v13269 = vld [vmem:[%s13233 + $0x118] sm:$0xff]
    %v13270 = vld [vmem:[%s13233 + $0x120] sm:$0xff]
    %v13271 = vld [vmem:[%s13233 + $0x128] sm:$0xff]
    %v13272 = vld [vmem:[%s13233 + $0x130] sm:$0xff]
    %v13273 = vld [vmem:[%s13233 + $0x138] sm:$0xff]
    %v13274 = vld [vmem:[%s13233 + $0x140] sm:$0xff]
    %v13275 = vld [vmem:[%s13233 + $0x148] sm:$0xff]
    %v13276 = vld [vmem:[%s13233 + $0x150] sm:$0xff]
    %v13277 = vld [vmem:[%s13233 + $0x158] sm:$0xff]
    %v13278 = vld [vmem:[%s13233 + $0x160] sm:$0xff]
    %v13279 = vld [vmem:[%s13233 + $0x168] sm:$0xff]
    %v13280 = vld [vmem:[%s13233 + $0x170] sm:$0xff]
    %v13281 = vld [vmem:[%s13233 + $0x178] sm:$0xff]
    %v13282 = vld [vmem:[%s13233 + $0x180] sm:$0xff]
    %v13283 = vld [vmem:[%s13233 + $0x188] sm:$0xff]
    %v13284 = vld [vmem:[%s13233 + $0x190] sm:$0xff]
    %v13285 = vld [vmem:[%s13233 + $0x198] sm:$0xff]
    %v13286 = vld [vmem:[%s13233 + $0x1a0] sm:$0xff]
    %v13287 = vld [vmem:[%s13233 + $0x1a8] sm:$0xff]
    %v13288 = vld [vmem:[%s13233 + $0x1b0] sm:$0xff]
    %v13289 = vld [vmem:[%s13233 + $0x1b8] sm:$0xff]
    %v13290 = vld [vmem:[%s13233 + $0x1c0] sm:$0xff]
    %v13291 = vld [vmem:[%s13233 + $0x1c8] sm:$0xff]
    %v13292 = vld [vmem:[%s13233 + $0x1d0] sm:$0xff]
    %v13293 = vld [vmem:[%s13233 + $0x1d8] sm:$0xff]
    %v13294 = vld [vmem:[%s13233 + $0x1e0] sm:$0xff]
    %v13295 = vld [vmem:[%s13233 + $0x1e8] sm:$0xff]
    %v13296 = vld [vmem:[%s13233 + $0x1f0] sm:$0xff]
    %v13297 = vld [vmem:[%s13233 + $0x1f8] sm:$0xff]
    %v13298 = vld [vmem:[%s13233 + $0x200] sm:$0xff]
    %v13299 = vld [vmem:[%s13233 + $0x208] sm:$0xff]
    %v13300 = vld [vmem:[%s13233 + $0x210] sm:$0xff]
    %v13301 = vld [vmem:[%s13233 + $0x218] sm:$0xff]
    %v13302 = vld [vmem:[%s13233 + $0x220] sm:$0xff]
    %v13303 = vld [vmem:[%s13233 + $0x228] sm:$0xff]
    %v13304 = vld [vmem:[%s13233 + $0x230] sm:$0xff]
    %v13305 = vld [vmem:[%s13233 + $0x238] sm:$0xff]
    %v13306 = vld [vmem:[%s13233 + $0x240] sm:$0xff]
    %v13307 = vld [vmem:[%s13233 + $0x248] sm:$0xff]
    %v13308 = vld [vmem:[%s13233 + $0x250] sm:$0xff]
    %v13309 = vld [vmem:[%s13233 + $0x258] sm:$0xff]
    %v13310 = vld [vmem:[%s13233 + $0x260] sm:$0xff]
    %v13311 = vld [vmem:[%s13233 + $0x268] sm:$0xff]
    %v13312 = vld [vmem:[%s13233 + $0x270] sm:$0xff]
    %v13313 = vld [vmem:[%s13233 + $0x278] sm:$0xff]
    %v13314 = vld [vmem:[%s13233 + $0x280] sm:$0xff]
    %v13315 = vld [vmem:[%s13233 + $0x288] sm:$0xff]
    %v13316 = vld [vmem:[%s13233 + $0x290] sm:$0xff]
    %v13317 = vld [vmem:[%s13233 + $0x298] sm:$0xff]
    %v13318 = vld [vmem:[%s13233 + $0x2a0] sm:$0xff]
    %v13319 = vld [vmem:[%s13233 + $0x2a8] sm:$0xff]
    %v13320 = vld [vmem:[%s13233 + $0x2b0] sm:$0xff]
    %v13321 = vld [vmem:[%s13233 + $0x2b8] sm:$0xff]
    %v13322 = vld [vmem:[%s13233 + $0x2c0] sm:$0xff]
    %v13323 = vld [vmem:[%s13233 + $0x2c8] sm:$0xff]
    %v13324 = vld [vmem:[%s13233 + $0x2d0] sm:$0xff]
    %v13325 = vld [vmem:[%s13233 + $0x2d8] sm:$0xff]
    %v13326 = vld [vmem:[%s13233 + $0x2e0] sm:$0xff]
    %v13327 = vld [vmem:[%s13233 + $0x2e8] sm:$0xff]
    %v13328 = vld [vmem:[%s13233 + $0x2f0] sm:$0xff]
    %v13329 = vld [vmem:[%s13233 + $0x2f8] sm:$0xff]
    %v13330 = vld [vmem:[%s13233 + $0x300] sm:$0xff]
    %v13331 = vld [vmem:[%s13233 + $0x308] sm:$0xff]
    %v13332 = vld [vmem:[%s13233 + $0x310] sm:$0xff]
    %v13333 = vld [vmem:[%s13233 + $0x318] sm:$0xff]
    %v13334 = vld [vmem:[%s13233 + $0x320] sm:$0xff]
    %v13335 = vld [vmem:[%s13233 + $0x328] sm:$0xff]
    %v13336 = vld [vmem:[%s13233 + $0x330] sm:$0xff]
    %v13337 = vld [vmem:[%s13233 + $0x338] sm:$0xff]
    %v13338 = vld [vmem:[%s13233 + $0x340] sm:$0xff]
    %v13339 = vld [vmem:[%s13233 + $0x348] sm:$0xff]
    %v13340 = vld [vmem:[%s13233 + $0x350] sm:$0xff]
    %v13341 = vld [vmem:[%s13233 + $0x358] sm:$0xff]
    %v13342 = vld [vmem:[%s13233 + $0x360] sm:$0xff]
    %v13343 = vld [vmem:[%s13233 + $0x368] sm:$0xff]
    %v13344 = vld [vmem:[%s13233 + $0x370] sm:$0xff]
    %v13345 = vld [vmem:[%s13233 + $0x378] sm:$0xff]
    %v13346 = vld [vmem:[%s13233 + $0x380] sm:$0xff]
    %v13347 = vld [vmem:[%s13233 + $0x388] sm:$0xff]
    %v13348 = vld [vmem:[%s13233 + $0x390] sm:$0xff]
    %v13349 = vld [vmem:[%s13233 + $0x398] sm:$0xff]
    %v13350 = vld [vmem:[%s13233 + $0x3a0] sm:$0xff]
    %v13351 = vld [vmem:[%s13233 + $0x3a8] sm:$0xff]
    %v13352 = vld [vmem:[%s13233 + $0x3b0] sm:$0xff]
    %v13353 = vld [vmem:[%s13233 + $0x3b8] sm:$0xff]
    %v13354 = vld [vmem:[%s13233 + $0x3c0] sm:$0xff]
    %v13355 = vld [vmem:[%s13233 + $0x3c8] sm:$0xff]
    %v13356 = vld [vmem:[%s13233 + $0x3d0] sm:$0xff]
    %v13357 = vld [vmem:[%s13233 + $0x3d8] sm:$0xff]
    %v13358 = vld [vmem:[%s13233 + $0x3e0] sm:$0xff]
    %v13359 = vld [vmem:[%s13233 + $0x3e8] sm:$0xff]
    %v13360 = vld [vmem:[%s13233 + $0x3f0] sm:$0xff]
    %v13361 = vld [vmem:[%s13233 + $0x3f8] sm:$0xff]
    %v13362 = vcombine.low %v9989, %v13228
    %v13363 = vcombine.high %v9989, %v13228
    %v13365 = vunpack.c.l.s4 1983009808
    %v13366 = vunpack.c.0.s8 %v13365
    %v13367 = vlaneseq
    %v13368 = vshrl.u32 %v13367, 7
    %v13369 = vsub.s32 %v13366, %v13368
    %v13370 = vrot.slane %v13362, %v13369
    %v13372 = vunpack.c.l.s4 1983009808
    %v13373 = vunpack.c.0.s8 %v13372
    %v13374 = vlaneseq
    %v13375 = vshrl.u32 %v13374, 7
    %v13376 = vsub.s32 %v13373, %v13375
    %v13377 = vrot.slane %v13363, %v13376
    %v13378 = vcombine.low %v6844, %v13370
    %v13379 = vcombine.high %v6844, %v13370
    %v13380 = vcombine.low %v6851, %v13377
    %v13381 = vcombine.high %v6851, %v13377
    %v13382 = vcombine.low %v9993, %v13232
    %v13383 = vcombine.high %v9993, %v13232
    %v13385 = vunpack.c.l.s4 1983009808
    %v13386 = vunpack.c.0.s8 %v13385
    %v13387 = vlaneseq
    %v13388 = vshrl.u32 %v13387, 7
    %v13389 = vsub.s32 %v13386, %v13388
    %v13390 = vrot.slane %v13382, %v13389
    %v13392 = vunpack.c.l.s4 1983009808
    %v13393 = vunpack.c.0.s8 %v13392
    %v13394 = vlaneseq
    %v13395 = vshrl.u32 %v13394, 7
    %v13396 = vsub.s32 %v13393, %v13395
    %v13397 = vrot.slane %v13383, %v13396
    %v13398 = vcombine.low %v6880, %v13390
    %v13399 = vcombine.high %v6880, %v13390
    %v13400 = vcombine.low %v6887, %v13397
    %v13401 = vcombine.high %v6887, %v13397
    %v13538 = vunpack.c.l.b16 %v13234
    %v13539 = vunpack.c.h.b16 %v13234
    %v13540 = vunpack.c.l.b16 %v13235
    %v13541 = vunpack.c.h.b16 %v13235
    %v13542 = vunpack.c.l.b16 %v13236
    %v13543 = vunpack.c.h.b16 %v13236
    %v13544 = vunpack.c.l.b16 %v13237
    %v13545 = vunpack.c.h.b16 %v13237
    %v13546 = vunpack.c.l.b16 %v13238
    %v13547 = vunpack.c.h.b16 %v13238
    %v13548 = vunpack.c.l.b16 %v13239
    %v13549 = vunpack.c.h.b16 %v13239
    %v13550 = vunpack.c.l.b16 %v13240
    %v13551 = vunpack.c.h.b16 %v13240
    %v13552 = vunpack.c.l.b16 %v13241
    %v13553 = vunpack.c.h.b16 %v13241
    %v13554 = vunpack.c.l.b16 %v13242
    %v13555 = vunpack.c.h.b16 %v13242
    %v13556 = vunpack.c.l.b16 %v13243
    %v13557 = vunpack.c.h.b16 %v13243
    %v13558 = vunpack.c.l.b16 %v13244
    %v13559 = vunpack.c.h.b16 %v13244
    %v13560 = vunpack.c.l.b16 %v13245
    %v13561 = vunpack.c.h.b16 %v13245
    %v13562 = vunpack.c.l.b16 %v13246
    %v13563 = vunpack.c.h.b16 %v13246
    %v13564 = vunpack.c.l.b16 %v13247
    %v13565 = vunpack.c.h.b16 %v13247
    %v13566 = vunpack.c.l.b16 %v13248
    %v13567 = vunpack.c.h.b16 %v13248
    %v13568 = vunpack.c.l.b16 %v13249
    %v13569 = vunpack.c.h.b16 %v13249
    %v13570 = vunpack.c.l.b16 %v13250
    %v13571 = vunpack.c.h.b16 %v13250
    %v13572 = vunpack.c.l.b16 %v13251
    %v13573 = vunpack.c.h.b16 %v13251
    %v13574 = vunpack.c.l.b16 %v13252
    %v13575 = vunpack.c.h.b16 %v13252
    %v13576 = vunpack.c.l.b16 %v13253
    %v13577 = vunpack.c.h.b16 %v13253
    %v13578 = vunpack.c.l.b16 %v13254
    %v13579 = vunpack.c.h.b16 %v13254
    %v13580 = vunpack.c.l.b16 %v13255
    %v13581 = vunpack.c.h.b16 %v13255
    %v13582 = vunpack.c.l.b16 %v13256
    %v13583 = vunpack.c.h.b16 %v13256
    %v13584 = vunpack.c.l.b16 %v13257
    %v13585 = vunpack.c.h.b16 %v13257
    %v13586 = vunpack.c.l.b16 %v13258
    %v13587 = vunpack.c.h.b16 %v13258
    %v13588 = vunpack.c.l.b16 %v13259
    %v13589 = vunpack.c.h.b16 %v13259
    %v13590 = vunpack.c.l.b16 %v13260
    %v13591 = vunpack.c.h.b16 %v13260
    %v13592 = vunpack.c.l.b16 %v13261
    %v13593 = vunpack.c.h.b16 %v13261
    %v13594 = vunpack.c.l.b16 %v13262
    %v13595 = vunpack.c.h.b16 %v13262
    %v13596 = vunpack.c.l.b16 %v13263
    %v13597 = vunpack.c.h.b16 %v13263
    %v13598 = vunpack.c.l.b16 %v13264
    %v13599 = vunpack.c.h.b16 %v13264
    %v13600 = vunpack.c.l.b16 %v13265
    %v13601 = vunpack.c.h.b16 %v13265
    %v13602 = vunpack.c.l.b16 %v13266
    %v13603 = vunpack.c.h.b16 %v13266
    %v13604 = vunpack.c.l.b16 %v13267
    %v13605 = vunpack.c.h.b16 %v13267
    %v13606 = vunpack.c.l.b16 %v13268
    %v13607 = vunpack.c.h.b16 %v13268
    %v13608 = vunpack.c.l.b16 %v13269
    %v13609 = vunpack.c.h.b16 %v13269
    %v13610 = vunpack.c.l.b16 %v13270
    %v13611 = vunpack.c.h.b16 %v13270
    %v13612 = vunpack.c.l.b16 %v13271
    %v13613 = vunpack.c.h.b16 %v13271
    %v13614 = vunpack.c.l.b16 %v13272
    %v13615 = vunpack.c.h.b16 %v13272
    %v13616 = vunpack.c.l.b16 %v13273
    %v13617 = vunpack.c.h.b16 %v13273
    %v13618 = vunpack.c.l.b16 %v13274
    %v13619 = vunpack.c.h.b16 %v13274
    %v13620 = vunpack.c.l.b16 %v13275
    %v13621 = vunpack.c.h.b16 %v13275
    %v13622 = vunpack.c.l.b16 %v13276
    %v13623 = vunpack.c.h.b16 %v13276
    %v13624 = vunpack.c.l.b16 %v13277
    %v13625 = vunpack.c.h.b16 %v13277
    %v13626 = vunpack.c.l.b16 %v13278
    %v13627 = vunpack.c.h.b16 %v13278
    %v13628 = vunpack.c.l.b16 %v13279
    %v13629 = vunpack.c.h.b16 %v13279
    %v13630 = vunpack.c.l.b16 %v13280
    %v13631 = vunpack.c.h.b16 %v13280
    %v13632 = vunpack.c.l.b16 %v13281
    %v13633 = vunpack.c.h.b16 %v13281
    %v13634 = vunpack.c.l.b16 %v13282
    %v13635 = vunpack.c.h.b16 %v13282
    %v13636 = vunpack.c.l.b16 %v13283
    %v13637 = vunpack.c.h.b16 %v13283
    %v13638 = vunpack.c.l.b16 %v13284
    %v13639 = vunpack.c.h.b16 %v13284
    %v13640 = vunpack.c.l.b16 %v13285
    %v13641 = vunpack.c.h.b16 %v13285
    %v13642 = vunpack.c.l.b16 %v13286
    %v13643 = vunpack.c.h.b16 %v13286
    %v13644 = vunpack.c.l.b16 %v13287
    %v13645 = vunpack.c.h.b16 %v13287
    %v13646 = vunpack.c.l.b16 %v13288
    %v13647 = vunpack.c.h.b16 %v13288
    %v13648 = vunpack.c.l.b16 %v13289
    %v13649 = vunpack.c.h.b16 %v13289
    %v13650 = vunpack.c.l.b16 %v13290
    %v13651 = vunpack.c.h.b16 %v13290
    %v13652 = vunpack.c.l.b16 %v13291
    %v13653 = vunpack.c.h.b16 %v13291
    %v13654 = vunpack.c.l.b16 %v13292
    %v13655 = vunpack.c.h.b16 %v13292
    %v13656 = vunpack.c.l.b16 %v13293
    %v13657 = vunpack.c.h.b16 %v13293
    %v13658 = vunpack.c.l.b16 %v13294
    %v13659 = vunpack.c.h.b16 %v13294
    %v13660 = vunpack.c.l.b16 %v13295
    %v13661 = vunpack.c.h.b16 %v13295
    %v13662 = vunpack.c.l.b16 %v13296
    %v13663 = vunpack.c.h.b16 %v13296
    %v13664 = vunpack.c.l.b16 %v13297
    %v13665 = vunpack.c.h.b16 %v13297
    %v13666 = vunpack.c.l.b16 %v13298
    %v13667 = vunpack.c.h.b16 %v13298
    %v13668 = vunpack.c.l.b16 %v13299
    %v13669 = vunpack.c.h.b16 %v13299
    %v13670 = vunpack.c.l.b16 %v13300
    %v13671 = vunpack.c.h.b16 %v13300
    %v13672 = vunpack.c.l.b16 %v13301
    %v13673 = vunpack.c.h.b16 %v13301
    %v13674 = vunpack.c.l.b16 %v13302
    %v13675 = vunpack.c.h.b16 %v13302
    %v13676 = vunpack.c.l.b16 %v13303
    %v13677 = vunpack.c.h.b16 %v13303
    %v13678 = vunpack.c.l.b16 %v13304
    %v13679 = vunpack.c.h.b16 %v13304
    %v13680 = vunpack.c.l.b16 %v13305
    %v13681 = vunpack.c.h.b16 %v13305
    %v13682 = vunpack.c.l.b16 %v13306
    %v13683 = vunpack.c.h.b16 %v13306
    %v13684 = vunpack.c.l.b16 %v13307
    %v13685 = vunpack.c.h.b16 %v13307
    %v13686 = vunpack.c.l.b16 %v13308
    %v13687 = vunpack.c.h.b16 %v13308
    %v13688 = vunpack.c.l.b16 %v13309
    %v13689 = vunpack.c.h.b16 %v13309
    %v13690 = vunpack.c.l.b16 %v13310
    %v13691 = vunpack.c.h.b16 %v13310
    %v13692 = vunpack.c.l.b16 %v13311
    %v13693 = vunpack.c.h.b16 %v13311
    %v13694 = vunpack.c.l.b16 %v13312
    %v13695 = vunpack.c.h.b16 %v13312
    %v13696 = vunpack.c.l.b16 %v13313
    %v13697 = vunpack.c.h.b16 %v13313
    %v13698 = vunpack.c.l.b16 %v13314
    %v13699 = vunpack.c.h.b16 %v13314
    %v13700 = vunpack.c.l.b16 %v13315
    %v13701 = vunpack.c.h.b16 %v13315
    %v13702 = vunpack.c.l.b16 %v13316
    %v13703 = vunpack.c.h.b16 %v13316
    %v13704 = vunpack.c.l.b16 %v13317
    %v13705 = vunpack.c.h.b16 %v13317
    %v13706 = vunpack.c.l.b16 %v13318
    %v13707 = vunpack.c.h.b16 %v13318
    %v13708 = vunpack.c.l.b16 %v13319
    %v13709 = vunpack.c.h.b16 %v13319
    %v13710 = vunpack.c.l.b16 %v13320
    %v13711 = vunpack.c.h.b16 %v13320
    %v13712 = vunpack.c.l.b16 %v13321
    %v13713 = vunpack.c.h.b16 %v13321
    %v13714 = vunpack.c.l.b16 %v13322
    %v13715 = vunpack.c.h.b16 %v13322
    %v13716 = vunpack.c.l.b16 %v13323
    %v13717 = vunpack.c.h.b16 %v13323
    %v13718 = vunpack.c.l.b16 %v13324
    %v13719 = vunpack.c.h.b16 %v13324
    %v13720 = vunpack.c.l.b16 %v13325
    %v13721 = vunpack.c.h.b16 %v13325
    %v13722 = vunpack.c.l.b16 %v13326
    %v13723 = vunpack.c.h.b16 %v13326
    %v13724 = vunpack.c.l.b16 %v13327
    %v13725 = vunpack.c.h.b16 %v13327
    %v13726 = vunpack.c.l.b16 %v13328
    %v13727 = vunpack.c.h.b16 %v13328
    %v13728 = vunpack.c.l.b16 %v13329
    %v13729 = vunpack.c.h.b16 %v13329
    %v13730 = vunpack.c.l.b16 %v13330
    %v13731 = vunpack.c.h.b16 %v13330
    %v13732 = vunpack.c.l.b16 %v13331
    %v13733 = vunpack.c.h.b16 %v13331
    %v13734 = vunpack.c.l.b16 %v13332
    %v13735 = vunpack.c.h.b16 %v13332
    %v13736 = vunpack.c.l.b16 %v13333
    %v13737 = vunpack.c.h.b16 %v13333
    %v13738 = vunpack.c.l.b16 %v13334
    %v13739 = vunpack.c.h.b16 %v13334
    %v13740 = vunpack.c.l.b16 %v13335
    %v13741 = vunpack.c.h.b16 %v13335
    %v13742 = vunpack.c.l.b16 %v13336
    %v13743 = vunpack.c.h.b16 %v13336
    %v13744 = vunpack.c.l.b16 %v13337
    %v13745 = vunpack.c.h.b16 %v13337
    %v13746 = vunpack.c.l.b16 %v13338
    %v13747 = vunpack.c.h.b16 %v13338
    %v13748 = vunpack.c.l.b16 %v13339
    %v13749 = vunpack.c.h.b16 %v13339
    %v13750 = vunpack.c.l.b16 %v13340
    %v13751 = vunpack.c.h.b16 %v13340
    %v13752 = vunpack.c.l.b16 %v13341
    %v13753 = vunpack.c.h.b16 %v13341
    %v13754 = vunpack.c.l.b16 %v13342
    %v13755 = vunpack.c.h.b16 %v13342
    %v13756 = vunpack.c.l.b16 %v13343
    %v13757 = vunpack.c.h.b16 %v13343
    %v13758 = vunpack.c.l.b16 %v13344
    %v13759 = vunpack.c.h.b16 %v13344
    %v13760 = vunpack.c.l.b16 %v13345
    %v13761 = vunpack.c.h.b16 %v13345
    %v13762 = vunpack.c.l.b16 %v13346
    %v13763 = vunpack.c.h.b16 %v13346
    %v13764 = vunpack.c.l.b16 %v13347
    %v13765 = vunpack.c.h.b16 %v13347
    %v13766 = vunpack.c.l.b16 %v13348
    %v13767 = vunpack.c.h.b16 %v13348
    %v13768 = vunpack.c.l.b16 %v13349
    %v13769 = vunpack.c.h.b16 %v13349
    %v13770 = vunpack.c.l.b16 %v13350
    %v13771 = vunpack.c.h.b16 %v13350
    %v13772 = vunpack.c.l.b16 %v13351
    %v13773 = vunpack.c.h.b16 %v13351
    %v13774 = vunpack.c.l.b16 %v13352
    %v13775 = vunpack.c.h.b16 %v13352
    %v13776 = vunpack.c.l.b16 %v13353
    %v13777 = vunpack.c.h.b16 %v13353
    %v13778 = vunpack.c.l.b16 %v13354
    %v13779 = vunpack.c.h.b16 %v13354
    %v13780 = vunpack.c.l.b16 %v13355
    %v13781 = vunpack.c.h.b16 %v13355
    %v13782 = vunpack.c.l.b16 %v13356
    %v13783 = vunpack.c.h.b16 %v13356
    %v13784 = vunpack.c.l.b16 %v13357
    %v13785 = vunpack.c.h.b16 %v13357
    %v13786 = vunpack.c.l.b16 %v13358
    %v13787 = vunpack.c.h.b16 %v13358
    %v13788 = vunpack.c.l.b16 %v13359
    %v13789 = vunpack.c.h.b16 %v13359
    %v13790 = vunpack.c.l.b16 %v13360
    %v13791 = vunpack.c.h.b16 %v13360
    %v13792 = vunpack.c.l.b16 %v13361
    %v13793 = vunpack.c.h.b16 %v13361
    %v13794 = vpack.c.b16 %v13542, %v13538
    %v13795 = vpack.c.b16 %v13543, %v13539
    %v13796 = vpack.c.b16 %v13544, %v13540
    %v13797 = vpack.c.b16 %v13545, %v13541
    %v13798 = vpack.c.b16 %v13550, %v13546
    %v13799 = vpack.c.b16 %v13551, %v13547
    %v13800 = vpack.c.b16 %v13552, %v13548
    %v13801 = vpack.c.b16 %v13553, %v13549
    %v13802 = vpack.c.b16 %v13558, %v13554
    %v13803 = vpack.c.b16 %v13559, %v13555
    %v13804 = vpack.c.b16 %v13560, %v13556
    %v13805 = vpack.c.b16 %v13561, %v13557
    %v13806 = vpack.c.b16 %v13566, %v13562
    %v13807 = vpack.c.b16 %v13567, %v13563
    %v13808 = vpack.c.b16 %v13568, %v13564
    %v13809 = vpack.c.b16 %v13569, %v13565
    %v13810 = vpack.c.b16 %v13574, %v13570
    %v13811 = vpack.c.b16 %v13575, %v13571
    %v13812 = vpack.c.b16 %v13576, %v13572
    %v13813 = vpack.c.b16 %v13577, %v13573
    %v13814 = vpack.c.b16 %v13582, %v13578
    %v13815 = vpack.c.b16 %v13583, %v13579
    %v13816 = vpack.c.b16 %v13584, %v13580
    %v13817 = vpack.c.b16 %v13585, %v13581
    %v13818 = vpack.c.b16 %v13590, %v13586
    %v13819 = vpack.c.b16 %v13591, %v13587
    %v13820 = vpack.c.b16 %v13592, %v13588
    %v13821 = vpack.c.b16 %v13593, %v13589
    %v13822 = vpack.c.b16 %v13598, %v13594
    %v13823 = vpack.c.b16 %v13599, %v13595
    %v13824 = vpack.c.b16 %v13600, %v13596
    %v13825 = vpack.c.b16 %v13601, %v13597
    %v13826 = vpack.c.b16 %v13606, %v13602
    %v13827 = vpack.c.b16 %v13607, %v13603
    %v13828 = vpack.c.b16 %v13608, %v13604
    %v13829 = vpack.c.b16 %v13609, %v13605
    %v13830 = vpack.c.b16 %v13614, %v13610
    %v13831 = vpack.c.b16 %v13615, %v13611
    %v13832 = vpack.c.b16 %v13616, %v13612
    %v13833 = vpack.c.b16 %v13617, %v13613
    %v13834 = vpack.c.b16 %v13622, %v13618
    %v13835 = vpack.c.b16 %v13623, %v13619
    %v13836 = vpack.c.b16 %v13624, %v13620
    %v13837 = vpack.c.b16 %v13625, %v13621
    %v13838 = vpack.c.b16 %v13630, %v13626
    %v13839 = vpack.c.b16 %v13631, %v13627
    %v13840 = vpack.c.b16 %v13632, %v13628
    %v13841 = vpack.c.b16 %v13633, %v13629
    %v13842 = vpack.c.b16 %v13638, %v13634
    %v13843 = vpack.c.b16 %v13639, %v13635
    %v13844 = vpack.c.b16 %v13640, %v13636
    %v13845 = vpack.c.b16 %v13641, %v13637
    %v13846 = vpack.c.b16 %v13646, %v13642
    %v13847 = vpack.c.b16 %v13647, %v13643
    %v13848 = vpack.c.b16 %v13648, %v13644
    %v13849 = vpack.c.b16 %v13649, %v13645
    %v13850 = vpack.c.b16 %v13654, %v13650
    %v13851 = vpack.c.b16 %v13655, %v13651
    %v13852 = vpack.c.b16 %v13656, %v13652
    %v13853 = vpack.c.b16 %v13657, %v13653
    %v13854 = vpack.c.b16 %v13662, %v13658
    %v13855 = vpack.c.b16 %v13663, %v13659
    %v13856 = vpack.c.b16 %v13664, %v13660
    %v13857 = vpack.c.b16 %v13665, %v13661
    %v13858 = vpack.c.b16 %v13670, %v13666
    %v13859 = vpack.c.b16 %v13671, %v13667
    %v13860 = vpack.c.b16 %v13672, %v13668
    %v13861 = vpack.c.b16 %v13673, %v13669
    %v13862 = vpack.c.b16 %v13678, %v13674
    %v13863 = vpack.c.b16 %v13679, %v13675
    %v13864 = vpack.c.b16 %v13680, %v13676
    %v13865 = vpack.c.b16 %v13681, %v13677
    %v13866 = vpack.c.b16 %v13686, %v13682
    %v13867 = vpack.c.b16 %v13687, %v13683
    %v13868 = vpack.c.b16 %v13688, %v13684
    %v13869 = vpack.c.b16 %v13689, %v13685
    %v13870 = vpack.c.b16 %v13694, %v13690
    %v13871 = vpack.c.b16 %v13695, %v13691
    %v13872 = vpack.c.b16 %v13696, %v13692
    %v13873 = vpack.c.b16 %v13697, %v13693
    %v13874 = vpack.c.b16 %v13702, %v13698
    %v13875 = vpack.c.b16 %v13703, %v13699
    %v13876 = vpack.c.b16 %v13704, %v13700
    %v13877 = vpack.c.b16 %v13705, %v13701
    %v13878 = vpack.c.b16 %v13710, %v13706
    %v13879 = vpack.c.b16 %v13711, %v13707
    %v13880 = vpack.c.b16 %v13712, %v13708
    %v13881 = vpack.c.b16 %v13713, %v13709
    %v13882 = vpack.c.b16 %v13718, %v13714
    %v13883 = vpack.c.b16 %v13719, %v13715
    %v13884 = vpack.c.b16 %v13720, %v13716
    %v13885 = vpack.c.b16 %v13721, %v13717
    %v13886 = vpack.c.b16 %v13726, %v13722
    %v13887 = vpack.c.b16 %v13727, %v13723
    %v13888 = vpack.c.b16 %v13728, %v13724
    %v13889 = vpack.c.b16 %v13729, %v13725
    %v13890 = vpack.c.b16 %v13734, %v13730
    %v13891 = vpack.c.b16 %v13735, %v13731
    %v13892 = vpack.c.b16 %v13736, %v13732
    %v13893 = vpack.c.b16 %v13737, %v13733
    %v13894 = vpack.c.b16 %v13742, %v13738
    %v13895 = vpack.c.b16 %v13743, %v13739
    %v13896 = vpack.c.b16 %v13744, %v13740
    %v13897 = vpack.c.b16 %v13745, %v13741
    %v13898 = vpack.c.b16 %v13750, %v13746
    %v13899 = vpack.c.b16 %v13751, %v13747
    %v13900 = vpack.c.b16 %v13752, %v13748
    %v13901 = vpack.c.b16 %v13753, %v13749
    %v13902 = vpack.c.b16 %v13758, %v13754
    %v13903 = vpack.c.b16 %v13759, %v13755
    %v13904 = vpack.c.b16 %v13760, %v13756
    %v13905 = vpack.c.b16 %v13761, %v13757
    %v13906 = vpack.c.b16 %v13766, %v13762
    %v13907 = vpack.c.b16 %v13767, %v13763
    %v13908 = vpack.c.b16 %v13768, %v13764
    %v13909 = vpack.c.b16 %v13769, %v13765
    %v13910 = vpack.c.b16 %v13774, %v13770
    %v13911 = vpack.c.b16 %v13775, %v13771
    %v13912 = vpack.c.b16 %v13776, %v13772
    %v13913 = vpack.c.b16 %v13777, %v13773
    %v13914 = vpack.c.b16 %v13782, %v13778
    %v13915 = vpack.c.b16 %v13783, %v13779
    %v13916 = vpack.c.b16 %v13784, %v13780
    %v13917 = vpack.c.b16 %v13785, %v13781
    %v13918 = vpack.c.b16 %v13790, %v13786
    %v13919 = vpack.c.b16 %v13791, %v13787
    %v13920 = vpack.c.b16 %v13792, %v13788
    %v13921 = vpack.c.b16 %v13793, %v13789
    %14050 = vmatprep.subr.bf16.mxu0 %v13823
    %14051 = vmatpush1.bf16.msra.mxu0 %v13822
    %14052 = vmatprep.subr.bf16.mxu0 %v13819
    %14053 = vmatpush1.bf16.msra.mxu0 %v13818
    %14054 = vmatprep.subr.bf16.mxu0 %v13815
    %14055 = vmatpush1.bf16.msra.mxu0 %v13814
    %14056 = vmatprep.subr.bf16.mxu0 %v13811
    %14057 = vmatpush1.bf16.msra.mxu0 %v13810
    %14058 = vmatprep.subr.bf16.mxu0 %v13807
    %14059 = vmatpush1.bf16.msra.mxu0 %v13806
    %14060 = vmatprep.subr.bf16.mxu0 %v13803
    %14061 = vmatpush1.bf16.msra.mxu0 %v13802
    %14062 = vmatprep.subr.bf16.mxu0 %v13799
    %14063 = vmatpush1.bf16.msra.mxu0 %v13798
    %14064 = vmatprep.subr.bf16.mxu0 %v13795
    %14065 = vmatpush1.bf16.msra.mxu0 %v13794
    %14066 = vmatprep.subr.bf16.mxu0 %v13855
    %14067 = vmatpush2.bf16.msra.mxu0 %v13854
    %14068 = vmatprep.subr.bf16.mxu0 %v13851
    %14069 = vmatpush2.bf16.msra.mxu0 %v13850
    %14070 = vmatprep.subr.bf16.mxu0 %v13847
    %14071 = vmatpush2.bf16.msra.mxu0 %v13846
    %14072 = vmatprep.subr.bf16.mxu0 %v13843
    %14073 = vmatpush2.bf16.msra.mxu0 %v13842
    %14074 = vmatprep.subr.bf16.mxu0 %v13839
    %14075 = vmatpush2.bf16.msra.mxu0 %v13838
    %14076 = vmatprep.subr.bf16.mxu0 %v13835
    %14077 = vmatpush2.bf16.msra.mxu0 %v13834
    %14078 = vmatprep.subr.bf16.mxu0 %v13831
    %14079 = vmatpush2.bf16.msra.mxu0 %v13830
    %14080 = vmatprep.subr.bf16.mxu0 %v13827
    %14081 = vmatpush2.bf16.msra.mxu0 %v13826
    %14082 = vmatprep.mubr.bf16.mxu0 %v13379
    %14083 = vmatmul.mubr.bf16.gmra.mxu0 %v13378
    %v14084 = vpop.f32.mrf.mxu0
    %v14085 = vadd.f32 0.0, %v14084
    %v14086 = vpop.f32.mrf.mxu0
    %v14087 = vadd.f32 0.0, %v14086
    %v14088 = vpop.f32.mrf.mxu0
    %v14089 = vadd.f32 0.0, %v14088
    %v14090 = vpop.f32.mrf.mxu0
    %v14091 = vadd.f32 0.0, %v14090
    %14092 = vmatprep.mubr.bf16.mxu0 %v13399
    %14093 = vmatmul.mubr.bf16.gmra.mxu0 %v13398
    %v14094 = vpop.f32.mrf.mxu0
    %v14095 = vadd.f32 0.0, %v14094
    %v14096 = vpop.f32.mrf.mxu0
    %v14097 = vadd.f32 0.0, %v14096
    %v14098 = vpop.f32.mrf.mxu0
    %v14099 = vadd.f32 0.0, %v14098
    %v14100 = vpop.f32.mrf.mxu0
    %v14101 = vadd.f32 0.0, %v14100
    %14102 = vdwg.mxu0
    %14103 = vmatprep.subr.bf16.mxu0 %v13887
    %14104 = vmatpush1.bf16.msra.mxu0 %v13886
    %14105 = vmatprep.subr.bf16.mxu0 %v13883
    %14106 = vmatpush1.bf16.msra.mxu0 %v13882
    %14107 = vmatprep.subr.bf16.mxu0 %v13879
    %14108 = vmatpush1.bf16.msra.mxu0 %v13878
    %14109 = vmatprep.subr.bf16.mxu0 %v13875
    %14110 = vmatpush1.bf16.msra.mxu0 %v13874
    %14111 = vmatprep.subr.bf16.mxu0 %v13871
    %14112 = vmatpush1.bf16.msra.mxu0 %v13870
    %14113 = vmatprep.subr.bf16.mxu0 %v13867
    %14114 = vmatpush1.bf16.msra.mxu0 %v13866
    %14115 = vmatprep.subr.bf16.mxu0 %v13863
    %14116 = vmatpush1.bf16.msra.mxu0 %v13862
    %14117 = vmatprep.subr.bf16.mxu0 %v13859
    %14118 = vmatpush1.bf16.msra.mxu0 %v13858
    %14119 = vmatprep.subr.bf16.mxu0 %v13919
    %14120 = vmatpush2.bf16.msra.mxu0 %v13918
    %14121 = vmatprep.subr.bf16.mxu0 %v13915
    %14122 = vmatpush2.bf16.msra.mxu0 %v13914
    %14123 = vmatprep.subr.bf16.mxu0 %v13911
    %14124 = vmatpush2.bf16.msra.mxu0 %v13910
    %14125 = vmatprep.subr.bf16.mxu0 %v13907
    %14126 = vmatpush2.bf16.msra.mxu0 %v13906
    %14127 = vmatprep.subr.bf16.mxu0 %v13903
    %14128 = vmatpush2.bf16.msra.mxu0 %v13902
    %14129 = vmatprep.subr.bf16.mxu0 %v13899
    %14130 = vmatpush2.bf16.msra.mxu0 %v13898
    %14131 = vmatprep.subr.bf16.mxu0 %v13895
    %14132 = vmatpush2.bf16.msra.mxu0 %v13894
    %14133 = vmatprep.subr.bf16.mxu0 %v13891
    %14134 = vmatpush2.bf16.msra.mxu0 %v13890
    %14135 = vmatprep.mubr.bf16.mxu0 %v13381
    %14136 = vmatmul.mubr.bf16.gmra.mxu0 %v13380
    %v14137 = vpop.f32.mrf.mxu0
    %v14138 = vadd.f32 %v14085, %v14137
    %v14139 = vpop.f32.mrf.mxu0
    %v14140 = vadd.f32 %v14087, %v14139
    %v14141 = vpop.f32.mrf.mxu0
    %v14142 = vadd.f32 %v14089, %v14141
    %v14143 = vpop.f32.mrf.mxu0
    %v14144 = vadd.f32 %v14091, %v14143
    %14145 = vmatprep.mubr.bf16.mxu0 %v13401
    %14146 = vmatmul.mubr.bf16.gmra.mxu0 %v13400
    %v14147 = vpop.f32.mrf.mxu0
    %v14148 = vadd.f32 %v14095, %v14147
    %v14149 = vpop.f32.mrf.mxu0
    %v14150 = vadd.f32 %v14097, %v14149
    %v14151 = vpop.f32.mrf.mxu0
    %v14152 = vadd.f32 %v14099, %v14151
    %v14153 = vpop.f32.mrf.mxu0
    %v14154 = vadd.f32 %v14101, %v14153
    %14155 = vdwg.mxu0
    %14156 = vmatprep.subr.bf16.mxu0 %v13825
    %14157 = vmatpush1.bf16.msra.mxu0 %v13824
    %14158 = vmatprep.subr.bf16.mxu0 %v13821
    %14159 = vmatpush1.bf16.msra.mxu0 %v13820
    %14160 = vmatprep.subr.bf16.mxu0 %v13817
    %14161 = vmatpush1.bf16.msra.mxu0 %v13816
    %14162 = vmatprep.subr.bf16.mxu0 %v13813
    %14163 = vmatpush1.bf16.msra.mxu0 %v13812
    %14164 = vmatprep.subr.bf16.mxu0 %v13809
    %14165 = vmatpush1.bf16.msra.mxu0 %v13808
    %14166 = vmatprep.subr.bf16.mxu0 %v13805
    %14167 = vmatpush1.bf16.msra.mxu0 %v13804
    %14168 = vmatprep.subr.bf16.mxu0 %v13801
    %14169 = vmatpush1.bf16.msra.mxu0 %v13800
    %14170 = vmatprep.subr.bf16.mxu0 %v13797
    %14171 = vmatpush1.bf16.msra.mxu0 %v13796
    %14172 = vmatprep.subr.bf16.mxu0 %v13857
    %14173 = vmatpush2.bf16.msra.mxu0 %v13856
    %14174 = vmatprep.subr.bf16.mxu0 %v13853
    %14175 = vmatpush2.bf16.msra.mxu0 %v13852
    %14176 = vmatprep.subr.bf16.mxu0 %v13849
    %14177 = vmatpush2.bf16.msra.mxu0 %v13848
    %14178 = vmatprep.subr.bf16.mxu0 %v13845
    %14179 = vmatpush2.bf16.msra.mxu0 %v13844
    %14180 = vmatprep.subr.bf16.mxu0 %v13841
    %14181 = vmatpush2.bf16.msra.mxu0 %v13840
    %14182 = vmatprep.subr.bf16.mxu0 %v13837
    %14183 = vmatpush2.bf16.msra.mxu0 %v13836
    %14184 = vmatprep.subr.bf16.mxu0 %v13833
    %14185 = vmatpush2.bf16.msra.mxu0 %v13832
    %14186 = vmatprep.subr.bf16.mxu0 %v13829
    %14187 = vmatpush2.bf16.msra.mxu0 %v13828
    %14188 = vmatprep.mubr.bf16.mxu0 %v13379
    %14189 = vmatmul.mubr.bf16.gmra.mxu0 %v13378
    %v14190 = vpop.f32.mrf.mxu0
    %v14191 = vadd.f32 0.0, %v14190
    %v14192 = vpop.f32.mrf.mxu0
    %v14193 = vadd.f32 0.0, %v14192
    %v14194 = vpop.f32.mrf.mxu0
    %v14195 = vadd.f32 0.0, %v14194
    %v14196 = vpop.f32.mrf.mxu0
    %v14197 = vadd.f32 0.0, %v14196
    %14198 = vmatprep.mubr.bf16.mxu0 %v13399
    %14199 = vmatmul.mubr.bf16.gmra.mxu0 %v13398
    %v14200 = vpop.f32.mrf.mxu0
    %v14201 = vadd.f32 0.0, %v14200
    %v14202 = vpop.f32.mrf.mxu0
    %v14203 = vadd.f32 0.0, %v14202
    %v14204 = vpop.f32.mrf.mxu0
    %v14205 = vadd.f32 0.0, %v14204
    %v14206 = vpop.f32.mrf.mxu0
    %v14207 = vadd.f32 0.0, %v14206
    %14208 = vdwg.mxu0
    %14209 = vmatprep.subr.bf16.mxu0 %v13889
    %14210 = vmatpush1.bf16.msra.mxu0 %v13888
    %14211 = vmatprep.subr.bf16.mxu0 %v13885
    %14212 = vmatpush1.bf16.msra.mxu0 %v13884
    %14213 = vmatprep.subr.bf16.mxu0 %v13881
    %14214 = vmatpush1.bf16.msra.mxu0 %v13880
    %14215 = vmatprep.subr.bf16.mxu0 %v13877
    %14216 = vmatpush1.bf16.msra.mxu0 %v13876
    %14217 = vmatprep.subr.bf16.mxu0 %v13873
    %14218 = vmatpush1.bf16.msra.mxu0 %v13872
    %14219 = vmatprep.subr.bf16.mxu0 %v13869
    %14220 = vmatpush1.bf16.msra.mxu0 %v13868
    %14221 = vmatprep.subr.bf16.mxu0 %v13865
    %14222 = vmatpush1.bf16.msra.mxu0 %v13864
    %14223 = vmatprep.subr.bf16.mxu0 %v13861
    %14224 = vmatpush1.bf16.msra.mxu0 %v13860
    %14225 = vmatprep.subr.bf16.mxu0 %v13921
    %14226 = vmatpush2.bf16.msra.mxu0 %v13920
    %14227 = vmatprep.subr.bf16.mxu0 %v13917
    %14228 = vmatpush2.bf16.msra.mxu0 %v13916
    %14229 = vmatprep.subr.bf16.mxu0 %v13913
    %14230 = vmatpush2.bf16.msra.mxu0 %v13912
    %14231 = vmatprep.subr.bf16.mxu0 %v13909
    %14232 = vmatpush2.bf16.msra.mxu0 %v13908
    %14233 = vmatprep.subr.bf16.mxu0 %v13905
    %14234 = vmatpush2.bf16.msra.mxu0 %v13904
    %14235 = vmatprep.subr.bf16.mxu0 %v13901
    %14236 = vmatpush2.bf16.msra.mxu0 %v13900
    %14237 = vmatprep.subr.bf16.mxu0 %v13897
    %14238 = vmatpush2.bf16.msra.mxu0 %v13896
    %14239 = vmatprep.subr.bf16.mxu0 %v13893
    %14240 = vmatpush2.bf16.msra.mxu0 %v13892
    %14241 = vmatprep.mubr.bf16.mxu0 %v13381
    %14242 = vmatmul.mubr.bf16.gmra.mxu0 %v13380
    %v14243 = vpop.f32.mrf.mxu0
    %v14244 = vadd.f32 %v14191, %v14243
    %v14245 = vpop.f32.mrf.mxu0
    %v14246 = vadd.f32 %v14193, %v14245
    %v14247 = vpop.f32.mrf.mxu0
    %v14248 = vadd.f32 %v14195, %v14247
    %v14249 = vpop.f32.mrf.mxu0
    %v14250 = vadd.f32 %v14197, %v14249
    %14251 = vmatprep.mubr.bf16.mxu0 %v13401
    %14252 = vmatmul.mubr.bf16.gmra.mxu0 %v13400
    %v14253 = vpop.f32.mrf.mxu0
    %v14254 = vadd.f32 %v14201, %v14253
    %v14255 = vpop.f32.mrf.mxu0
    %v14256 = vadd.f32 %v14203, %v14255
    %v14257 = vpop.f32.mrf.mxu0
    %v14258 = vadd.f32 %v14205, %v14257
    %v14259 = vpop.f32.mrf.mxu0
    %v14260 = vadd.f32 %v14207, %v14259
    %14261 = vdwg.mxu0
    %v14262 = vadd.f32 %v13209, %v14138
    %v14263 = vadd.f32 %v13210, %v14140
    %v14264 = vadd.f32 %v13211, %v14244
    %v14265 = vadd.f32 %v13212, %v14246
    %v14266 = vadd.f32 %v13213, %v14142
    %v14267 = vadd.f32 %v13214, %v14144
    %v14268 = vadd.f32 %v13215, %v14248
    %v14269 = vadd.f32 %v13216, %v14250
    %v14270 = vadd.f32 %v13217, %v14148
    %v14271 = vadd.f32 %v13218, %v14150
    %v14272 = vadd.f32 %v13219, %v14254
    %v14273 = vadd.f32 %v13220, %v14256
    %v14274 = vadd.f32 %v13221, %v14152
    %v14275 = vadd.f32 %v13222, %v14154
    %v14276 = vadd.f32 %v13223, %v14258
    %v14277 = vadd.f32 %v13224, %v14260
    %v14278 = vld [vmem:[#allocation9] sm:$0xf]
    %v14280 = vlaneseq
    %v14281 = vshrl.u32 %v14280, 7
    %v14282 = vsub.s32 0, %v14281
    %v14283 = vrot.slane %v14278, %v14282
    %v14284 = vlaneseq
    %v14285 = vshrl.u32 %v14284, 7
    %v14286 = vsub.s32 1, %v14285
    %v14287 = vrot.slane %v14278, %v14286
    %v14288 = vlaneseq
    %v14289 = vshrl.u32 %v14288, 7
    %v14290 = vsub.s32 2, %v14289
    %v14291 = vrot.slane %v14278, %v14290
    %v14292 = vlaneseq
    %v14293 = vshrl.u32 %v14292, 7
    %v14294 = vsub.s32 3, %v14293
    %v14295 = vrot.slane %v14278, %v14294
    %v14300 = vadd.f32 %v14262, %v14283
    %v14301 = vadd.f32 %v14263, %v14287
    %v14302 = vadd.f32 %v14264, %v14291
    %v14303 = vadd.f32 %v14265, %v14295
    %v14304 = vadd.f32 %v14266, %v14283
    %v14305 = vadd.f32 %v14267, %v14287
    %v14306 = vadd.f32 %v14268, %v14291
    %v14307 = vadd.f32 %v14269, %v14295
    %v14308 = vadd.f32 %v14270, %v14283
    %v14309 = vadd.f32 %v14271, %v14287
    %v14310 = vadd.f32 %v14272, %v14291
    %v14311 = vadd.f32 %v14273, %v14295
    %v14312 = vadd.f32 %v14274, %v14283
    %v14313 = vadd.f32 %v14275, %v14287
    %v14314 = vadd.f32 %v14276, %v14291
    %v14315 = vadd.f32 %v14277, %v14295
    %v14316 = vmul.f32 %v14300, 0.2
    %v14317 = vmul.f32 %v14301, 0.2
    %v14318 = vmul.f32 %v14302, 0.2
    %v14319 = vmul.f32 %v14303, 0.2
    %v14320 = vmul.f32 %v14304, 0.2
    %v14321 = vmul.f32 %v14305, 0.2
    %v14322 = vmul.f32 %v14306, 0.2
    %v14323 = vmul.f32 %v14307, 0.2
    %v14324 = vmul.f32 %v14308, 0.2
    %v14325 = vmul.f32 %v14309, 0.2
    %v14326 = vmul.f32 %v14310, 0.2
    %v14327 = vmul.f32 %v14311, 0.2
    %v14328 = vmul.f32 %v14312, 0.2
    %v14329 = vmul.f32 %v14313, 0.2
    %v14330 = vmul.f32 %v14314, 0.2
    %v14331 = vmul.f32 %v14315, 0.2
    %v14332 = vmax.f32 %v14300, %v14316
    %v14333 = vmax.f32 %v14301, %v14317
    %v14334 = vmax.f32 %v14302, %v14318
    %v14335 = vmax.f32 %v14303, %v14319
    %v14336 = vmax.f32 %v14304, %v14320
    %v14337 = vmax.f32 %v14305, %v14321
    %v14338 = vmax.f32 %v14306, %v14322
    %v14339 = vmax.f32 %v14307, %v14323
    %v14340 = vmax.f32 %v14308, %v14324
    %v14341 = vmax.f32 %v14309, %v14325
    %v14342 = vmax.f32 %v14310, %v14326
    %v14343 = vmax.f32 %v14311, %v14327
    %v14344 = vmax.f32 %v14312, %v14328
    %v14345 = vmax.f32 %v14313, %v14329
    %v14346 = vmax.f32 %v14314, %v14330
    %v14347 = vmax.f32 %v14315, %v14331
    %v14364 = vcombine.low %v14332, %v14333
    %v14365 = vcombine.high %v14332, %v14333
    %v14366 = vcombine.low %v14334, %v14335
    %v14367 = vcombine.high %v14334, %v14335
    %v14368 = vcombine.low %v14336, %v14337
    %v14369 = vcombine.high %v14336, %v14337
    %v14370 = vcombine.low %v14338, %v14339
    %v14371 = vcombine.high %v14338, %v14339
    %v14372 = vcombine.low %v14340, %v14341
    %v14373 = vcombine.high %v14340, %v14341
    %v14374 = vcombine.low %v14342, %v14343
    %v14375 = vcombine.high %v14342, %v14343
    %v14376 = vcombine.low %v14344, %v14345
    %v14377 = vcombine.high %v14344, %v14345
    %v14378 = vcombine.low %v14346, %v14347
    %v14379 = vcombine.high %v14346, %v14347
    %14396 = vst [vmem:[#allocation11] sm:$0xff] %v14364
    %14397 = vst [vmem:[#allocation11 + $0x8] sm:$0xff] %v14366
    %14398 = vst [vmem:[#allocation11 + $0x10] sm:$0xff] %v14365
    %14399 = vst [vmem:[#allocation11 + $0x18] sm:$0xff] %v14367
    %14400 = vst [vmem:[#allocation11 + $0x20] sm:$0xff] %v14368
    %14401 = vst [vmem:[#allocation11 + $0x28] sm:$0xff] %v14370
    %14402 = vst [vmem:[#allocation11 + $0x30] sm:$0xff] %v14369
    %14403 = vst [vmem:[#allocation11 + $0x38] sm:$0xff] %v14371
    %14404 = vst [vmem:[#allocation11 + $0x40] sm:$0xff] %v14372
    %14405 = vst [vmem:[#allocation11 + $0x48] sm:$0xff] %v14374
    %14406 = vst [vmem:[#allocation11 + $0x50] sm:$0xff] %v14373
    %14407 = vst [vmem:[#allocation11 + $0x58] sm:$0xff] %v14375
    %14408 = vst [vmem:[#allocation11 + $0x60] sm:$0xff] %v14376
    %14409 = vst [vmem:[#allocation11 + $0x68] sm:$0xff] %v14378
    %14410 = vst [vmem:[#allocation11 + $0x70] sm:$0xff] %v14377
    %14411 = vst [vmem:[#allocation11 + $0x78] sm:$0xff] %v14379
    // Predicated region
    $region38: #{generator_first_block.1} parent=1 // pred_check
      _
    $region39: #{generator_first_block.1} parent=1 // pred_check_branch
      %14413 = sbr.rel (0) target = $region41
    $region40: #{generator_first_block.1} parent=1 // pred_region
      %s14415 = ssub.s32 2048, 2048
      %14416 = vsyncadd [#allocation5], %s14415
      %s14417 = sshll.u32 [#allocation11], 4
      %s14418 = int_to_ptr.vmem [resolvable:$true] %s14417
      %14423 = dma.vmem_to_hbm [thread:$0]  %s14418, 2048, %s5, [#allocation5], 256, 256, 16
    $region41: #{generator_first_block.1} parent=1 // pred_fallthru
      _
    // Predicated region
    $region42: #{generator_first_block.1} parent=1 // pred_check
      _
    $region43: #{generator_first_block.1} parent=1 // pred_check_branch
      %14425 = sbr.rel (0) target = $region45
    $region44: #{generator_first_block.1} parent=1 // pred_region
      %14426 = dma.done [#allocation5], 2048
    $region45: #{generator_first_block.1} parent=1 // pred_fallthru
      _
    %14427 = vsyncpa [#allocation4], 1
    %14428 = vsyncpa [#allocation7], 1
    %14429 = vsyncpa [#allocation10], 1
    %14430 = vsyncpa [#allocation5], 1

</llo_original>
